<compile_context>
chip_gen: v6e
topology: v6e:2x2x1
jax: 0.10.0
libtpu: 0.0.40
codegen_flags: <defaults>
</compile_context>

<pallas_src>
import functools

import jax
import jax.numpy as jnp
from jax.experimental import pallas as pl
from jax.experimental.pallas import tpu as pltpu


def _layer_config(input_dim):
    """List of (in_dim, out_dim, has_bn_relu) for encoder+decoder, plus the
    index of the last encoder layer (whose post-activation output is z)."""
    enc = [(input_dim, 256, True)] + [(256, 256, True)] * 4 + [(256, 16, True)]
    dec = [(16, 256, True)] + [(256, 256, True)] * 4 + [(256, input_dim, False)]
    cfg = enc + dec
    return cfg, len(enc) - 1


def _make_kernel(cfg, z_layer_idx, bn_eps):
    def kernel(*refs):
        # refs = [x,
        #         per layer: W(bf16), then (gamma, beta) if BN else (b,),
        #         out_dec, out_z]
        x_ref = refs[0]
        dec_ref = refs[-2]
        z_ref = refs[-1]

        h = x_ref[...]  # f32 activations
        idx = 1
        for li, (_din, _dout, has_bn) in enumerate(cfg):
            w = refs[idx][...]
            idx += 1
            # Linear (bias omitted when BN follows -- mean subtraction cancels it):
            # bf16 x bf16 matmul on the MXU, f32 accumulation.
            y = jnp.dot(h.astype(jnp.bfloat16), w,
                        preferred_element_type=jnp.float32)
            if has_bn:
                gamma = refs[idx][...]
                beta = refs[idx + 1][...]
                idx += 2
                # BatchNorm1d (training mode), single-pass stats + single FMA.
                mean = jnp.mean(y, axis=0, keepdims=True)
                mean_sq = jnp.mean(y * y, axis=0, keepdims=True)
                var = jnp.maximum(mean_sq - mean * mean, 0.0)
                scale = gamma * jax.lax.rsqrt(var + bn_eps)
                shift = beta - mean * scale
                # ReLU fused into the same elementwise block.
                h = jnp.maximum(y * scale + shift, 0.0)
            else:
                b = refs[idx][...]
                idx += 1
                h = y + b
            if li == z_layer_idx:
                z_ref[...] = h
        dec_ref[...] = h

    return kernel


def init_params(key, input_dim):
    """Deterministic synthetic parameters.

    Per layer: W (bf16, (in, out)); gamma/beta (f32, (1, out)) if BN follows,
    else bias b (f32, (1, out)).  Biases of BN-preceded layers are omitted
    because training-mode BN cancels them exactly."""
    cfg, _ = _layer_config(input_dim)
    params = []
    for (din, dout, has_bn) in cfg:
        key, kw, kb, kg, kbe = jax.random.split(key, 5)
        w = (jax.random.normal(kw, (din, dout), jnp.float32) * 0.05)
        params.append(w.astype(jnp.bfloat16))
        if has_bn:
            gamma = 1.0 + 0.1 * jax.random.normal(kg, (1, dout), jnp.float32)
            beta = 0.05 * jax.random.normal(kbe, (1, dout), jnp.float32)
            params += [gamma, beta]
        else:
            b = jax.random.normal(kb, (1, dout), jnp.float32) * 0.01
            params.append(b)
    return params


@functools.partial(jax.jit, static_argnames=("input_dim",))
def aenet_forward(x, params, *, input_dim):
    """x: any shape reshapable to (-1, input_dim). Returns (decoded, z)."""
    cfg, z_idx = _layer_config(input_dim)
    x2 = x.reshape(-1, input_dim).astype(jnp.float32)  # x.view(-1, input_dim)
    n = x2.shape[0]

    kernel = _make_kernel(cfg, z_idx, bn_eps=1e-3)
    inputs = [x2] + list(params)
    vmem_spec = pl.BlockSpec(memory_space=pltpu.MemorySpace.VMEM)

    # Rough VMEM footprint: params + a few live (N, 256)/(N, input_dim) f32
    # activation buffers + both outputs.  Cap well below v7x's 64 MiB.
    param_bytes = sum(int(p.size) * p.dtype.itemsize for p in params)
    act_bytes = (4 * n * max(input_dim, 256) * 4) + (n * input_dim * 4) + (n * 16 * 4)
    vmem_limit = int(min(max(16 * 2**20, 2 * (param_bytes + act_bytes)), 56 * 2**20))

    out = pl.pallas_call(
        kernel,
        out_shape=(
            jax.ShapeDtypeStruct((n, input_dim), jnp.float32),  # decoder output
            jax.ShapeDtypeStruct((n, 16), jnp.float32),          # latent z
        ),
        in_specs=[vmem_spec] * len(inputs),
        out_specs=(vmem_spec, vmem_spec),
        compiler_params=pltpu.CompilerParams(vmem_limit_bytes=vmem_limit),
    )(*inputs)
    return out


if __name__ == "__main__":
    input_dim = 128
    block_size = 8   # cov_source / cov_target are (block_size, block_size); unused in forward
    batch = 128      # >= 128 rows so the MXU sees a full M dimension

    key = jax.random.PRNGKey(0)
    kx, kp = jax.random.split(key)

    # Example input shaped like flattened spectrogram frames: (batch, input_dim)
    x = jax.random.normal(kx, (batch, input_dim), jnp.float32)

    params = init_params(kp, input_dim)
    # Unused (requires_grad=False) covariance parameters, kept for shape parity.
    cov_source = jnp.zeros((block_size, block_size), jnp.float32)
    cov_target = jnp.zeros((block_size, block_size), jnp.float32)

    decoded, z = aenet_forward(x, params, input_dim=input_dim)
    jax.block_until_ready((decoded, z))

    assert decoded.shape == (batch, input_dim)
    assert z.shape == (batch, 16)
    assert bool(jnp.all(jnp.isfinite(decoded))) and bool(jnp.all(jnp.isfinite(z)))
    print("KERNEL_OK")
</pallas_src>

<mosaic_0001>
module attributes {stable_mosaic.version = 11 : i64} {
  func.func @kernel(%arg0: memref<128x128xf32, #tpu.memory_space<vmem>>, %arg1: memref<128x256xbf16, #tpu.memory_space<vmem>>, %arg2: memref<1x256xf32, #tpu.memory_space<vmem>>, %arg3: memref<1x256xf32, #tpu.memory_space<vmem>>, %arg4: memref<256x256xbf16, #tpu.memory_space<vmem>>, %arg5: memref<1x256xf32, #tpu.memory_space<vmem>>, %arg6: memref<1x256xf32, #tpu.memory_space<vmem>>, %arg7: memref<256x256xbf16, #tpu.memory_space<vmem>>, %arg8: memref<1x256xf32, #tpu.memory_space<vmem>>, %arg9: memref<1x256xf32, #tpu.memory_space<vmem>>, %arg10: memref<256x256xbf16, #tpu.memory_space<vmem>>, %arg11: memref<1x256xf32, #tpu.memory_space<vmem>>, %arg12: memref<1x256xf32, #tpu.memory_space<vmem>>, %arg13: memref<256x256xbf16, #tpu.memory_space<vmem>>, %arg14: memref<1x256xf32, #tpu.memory_space<vmem>>, %arg15: memref<1x256xf32, #tpu.memory_space<vmem>>, %arg16: memref<256x16xbf16, #tpu.memory_space<vmem>>, %arg17: memref<1x16xf32, #tpu.memory_space<vmem>>, %arg18: memref<1x16xf32, #tpu.memory_space<vmem>>, %arg19: memref<16x256xbf16, #tpu.memory_space<vmem>>, %arg20: memref<1x256xf32, #tpu.memory_space<vmem>>, %arg21: memref<1x256xf32, #tpu.memory_space<vmem>>, %arg22: memref<256x256xbf16, #tpu.memory_space<vmem>>, %arg23: memref<1x256xf32, #tpu.memory_space<vmem>>, %arg24: memref<1x256xf32, #tpu.memory_space<vmem>>, %arg25: memref<256x256xbf16, #tpu.memory_space<vmem>>, %arg26: memref<1x256xf32, #tpu.memory_space<vmem>>, %arg27: memref<1x256xf32, #tpu.memory_space<vmem>>, %arg28: memref<256x256xbf16, #tpu.memory_space<vmem>>, %arg29: memref<1x256xf32, #tpu.memory_space<vmem>>, %arg30: memref<1x256xf32, #tpu.memory_space<vmem>>, %arg31: memref<256x256xbf16, #tpu.memory_space<vmem>>, %arg32: memref<1x256xf32, #tpu.memory_space<vmem>>, %arg33: memref<1x256xf32, #tpu.memory_space<vmem>>, %arg34: memref<256x128xbf16, #tpu.memory_space<vmem>>, %arg35: memref<1x128xf32, #tpu.memory_space<vmem>>, %arg36: memref<128x128xf32, #tpu.memory_space<vmem>>, %arg37: memref<128x16xf32, #tpu.memory_space<vmem>>) attributes {dimension_semantics = [], scalar_prefetch = 0 : i64, scratch_operands = 0 : i64, tpu.core_type = #tpu.core_type<tc>} {
    %c0 = arith.constant 0 : index
    %c0_0 = arith.constant 0 : index
    %0 = vector.load %arg0[%c0, %c0_0] : memref<128x128xf32, #tpu.memory_space<vmem>>, vector<128x128xf32>
    %c0_1 = arith.constant 0 : index
    %c0_2 = arith.constant 0 : index
    %1 = vector.load %arg1[%c0_1, %c0_2] : memref<128x256xbf16, #tpu.memory_space<vmem>>, vector<128x256xbf16>
    %2 = arith.truncf %0 : vector<128x128xf32> to vector<128x128xbf16>
    %cst = arith.constant dense<0.000000e+00> : vector<128x256xf32>
    %3 = tpu.matmul %2, %1, %cst {dimension_numbers = #tpu.dot_dimension_numbers<[1], [0], [0], [1], [0, 0, 1, 1], [], []>} : vector<128x128xbf16>, vector<128x256xbf16>, vector<128x256xf32> -> vector<128x256xf32>
    %c0_3 = arith.constant 0 : index
    %c0_4 = arith.constant 0 : index
    %4 = vector.load %arg2[%c0_3, %c0_4] : memref<1x256xf32, #tpu.memory_space<vmem>>, vector<1x256xf32>
    %c0_5 = arith.constant 0 : index
    %c0_6 = arith.constant 0 : index
    %5 = vector.load %arg3[%c0_5, %c0_6] : memref<1x256xf32, #tpu.memory_space<vmem>>, vector<1x256xf32>
    %cst_7 = arith.constant dense<0.000000e+00> : vector<256xf32>
    %6 = vector.multi_reduction <add>, %3, %cst_7 [0] : vector<128x256xf32> to vector<256xf32>
    %7 = vector.shape_cast %6 : vector<256xf32> to vector<1x256xf32>
    %cst_8 = arith.constant 1.280000e+02 : f32
    %8 = vector.broadcast %cst_8 : f32 to vector<1x256xf32>
    %9 = arith.divf %7, %8 : vector<1x256xf32>
    %10 = arith.mulf %3, %3 : vector<128x256xf32>
    %cst_9 = arith.constant dense<0.000000e+00> : vector<256xf32>
    %11 = vector.multi_reduction <add>, %10, %cst_9 [0] : vector<128x256xf32> to vector<256xf32>
    %12 = vector.shape_cast %11 : vector<256xf32> to vector<1x256xf32>
    %cst_10 = arith.constant 1.280000e+02 : f32
    %13 = vector.broadcast %cst_10 : f32 to vector<1x256xf32>
    %14 = arith.divf %12, %13 : vector<1x256xf32>
    %15 = arith.mulf %9, %9 : vector<1x256xf32>
    %16 = arith.subf %14, %15 : vector<1x256xf32>
    %cst_11 = arith.constant 0.000000e+00 : f32
    %17 = vector.broadcast %cst_11 : f32 to vector<1x256xf32>
    %18 = arith.maximumf %16, %17 : vector<1x256xf32>
    %cst_12 = arith.constant 1.000000e-03 : f32
    %19 = vector.broadcast %cst_12 : f32 to vector<1x256xf32>
    %20 = arith.addf %18, %19 : vector<1x256xf32>
    %21 = math.rsqrt %20 : vector<1x256xf32>
    %22 = arith.mulf %4, %21 : vector<1x256xf32>
    %23 = arith.mulf %9, %22 : vector<1x256xf32>
    %24 = arith.subf %5, %23 : vector<1x256xf32>
    %25 = vector.broadcast %22 : vector<1x256xf32> to vector<128x256xf32>
    %26 = arith.mulf %3, %25 : vector<128x256xf32>
    %27 = vector.broadcast %24 : vector<1x256xf32> to vector<128x256xf32>
    %28 = arith.addf %26, %27 : vector<128x256xf32>
    %cst_13 = arith.constant 0.000000e+00 : f32
    %29 = vector.broadcast %cst_13 : f32 to vector<128x256xf32>
    %30 = arith.maximumf %28, %29 : vector<128x256xf32>
    %c0_14 = arith.constant 0 : index
    %c0_15 = arith.constant 0 : index
    %31 = vector.load %arg4[%c0_14, %c0_15] : memref<256x256xbf16, #tpu.memory_space<vmem>>, vector<256x256xbf16>
    %32 = arith.truncf %30 : vector<128x256xf32> to vector<128x256xbf16>
    %cst_16 = arith.constant dense<0.000000e+00> : vector<128x256xf32>
    %33 = tpu.matmul %32, %31, %cst_16 {dimension_numbers = #tpu.dot_dimension_numbers<[1], [0], [0], [1], [0, 0, 1, 1], [], []>} : vector<128x256xbf16>, vector<256x256xbf16>, vector<128x256xf32> -> vector<128x256xf32>
    %c0_17 = arith.constant 0 : index
    %c0_18 = arith.constant 0 : index
    %34 = vector.load %arg5[%c0_17, %c0_18] : memref<1x256xf32, #tpu.memory_space<vmem>>, vector<1x256xf32>
    %c0_19 = arith.constant 0 : index
    %c0_20 = arith.constant 0 : index
    %35 = vector.load %arg6[%c0_19, %c0_20] : memref<1x256xf32, #tpu.memory_space<vmem>>, vector<1x256xf32>
    %cst_21 = arith.constant dense<0.000000e+00> : vector<256xf32>
    %36 = vector.multi_reduction <add>, %33, %cst_21 [0] : vector<128x256xf32> to vector<256xf32>
    %37 = vector.shape_cast %36 : vector<256xf32> to vector<1x256xf32>
    %cst_22 = arith.constant 1.280000e+02 : f32
    %38 = vector.broadcast %cst_22 : f32 to vector<1x256xf32>
    %39 = arith.divf %37, %38 : vector<1x256xf32>
    %40 = arith.mulf %33, %33 : vector<128x256xf32>
    %cst_23 = arith.constant dense<0.000000e+00> : vector<256xf32>
    %41 = vector.multi_reduction <add>, %40, %cst_23 [0] : vector<128x256xf32> to vector<256xf32>
    %42 = vector.shape_cast %41 : vector<256xf32> to vector<1x256xf32>
    %cst_24 = arith.constant 1.280000e+02 : f32
    %43 = vector.broadcast %cst_24 : f32 to vector<1x256xf32>
    %44 = arith.divf %42, %43 : vector<1x256xf32>
    %45 = arith.mulf %39, %39 : vector<1x256xf32>
    %46 = arith.subf %44, %45 : vector<1x256xf32>
    %cst_25 = arith.constant 0.000000e+00 : f32
    %47 = vector.broadcast %cst_25 : f32 to vector<1x256xf32>
    %48 = arith.maximumf %46, %47 : vector<1x256xf32>
    %cst_26 = arith.constant 1.000000e-03 : f32
    %49 = vector.broadcast %cst_26 : f32 to vector<1x256xf32>
    %50 = arith.addf %48, %49 : vector<1x256xf32>
    %51 = math.rsqrt %50 : vector<1x256xf32>
    %52 = arith.mulf %34, %51 : vector<1x256xf32>
    %53 = arith.mulf %39, %52 : vector<1x256xf32>
    %54 = arith.subf %35, %53 : vector<1x256xf32>
    %55 = vector.broadcast %52 : vector<1x256xf32> to vector<128x256xf32>
    %56 = arith.mulf %33, %55 : vector<128x256xf32>
    %57 = vector.broadcast %54 : vector<1x256xf32> to vector<128x256xf32>
    %58 = arith.addf %56, %57 : vector<128x256xf32>
    %cst_27 = arith.constant 0.000000e+00 : f32
    %59 = vector.broadcast %cst_27 : f32 to vector<128x256xf32>
    %60 = arith.maximumf %58, %59 : vector<128x256xf32>
    %c0_28 = arith.constant 0 : index
    %c0_29 = arith.constant 0 : index
    %61 = vector.load %arg7[%c0_28, %c0_29] : memref<256x256xbf16, #tpu.memory_space<vmem>>, vector<256x256xbf16>
    %62 = arith.truncf %60 : vector<128x256xf32> to vector<128x256xbf16>
    %cst_30 = arith.constant dense<0.000000e+00> : vector<128x256xf32>
    %63 = tpu.matmul %62, %61, %cst_30 {dimension_numbers = #tpu.dot_dimension_numbers<[1], [0], [0], [1], [0, 0, 1, 1], [], []>} : vector<128x256xbf16>, vector<256x256xbf16>, vector<128x256xf32> -> vector<128x256xf32>
    %c0_31 = arith.constant 0 : index
    %c0_32 = arith.constant 0 : index
    %64 = vector.load %arg8[%c0_31, %c0_32] : memref<1x256xf32, #tpu.memory_space<vmem>>, vector<1x256xf32>
    %c0_33 = arith.constant 0 : index
    %c0_34 = arith.constant 0 : index
    %65 = vector.load %arg9[%c0_33, %c0_34] : memref<1x256xf32, #tpu.memory_space<vmem>>, vector<1x256xf32>
    %cst_35 = arith.constant dense<0.000000e+00> : vector<256xf32>
    %66 = vector.multi_reduction <add>, %63, %cst_35 [0] : vector<128x256xf32> to vector<256xf32>
    %67 = vector.shape_cast %66 : vector<256xf32> to vector<1x256xf32>
    %cst_36 = arith.constant 1.280000e+02 : f32
    %68 = vector.broadcast %cst_36 : f32 to vector<1x256xf32>
    %69 = arith.divf %67, %68 : vector<1x256xf32>
    %70 = arith.mulf %63, %63 : vector<128x256xf32>
    %cst_37 = arith.constant dense<0.000000e+00> : vector<256xf32>
    %71 = vector.multi_reduction <add>, %70, %cst_37 [0] : vector<128x256xf32> to vector<256xf32>
    %72 = vector.shape_cast %71 : vector<256xf32> to vector<1x256xf32>
    %cst_38 = arith.constant 1.280000e+02 : f32
    %73 = vector.broadcast %cst_38 : f32 to vector<1x256xf32>
    %74 = arith.divf %72, %73 : vector<1x256xf32>
    %75 = arith.mulf %69, %69 : vector<1x256xf32>
    %76 = arith.subf %74, %75 : vector<1x256xf32>
    %cst_39 = arith.constant 0.000000e+00 : f32
    %77 = vector.broadcast %cst_39 : f32 to vector<1x256xf32>
    %78 = arith.maximumf %76, %77 : vector<1x256xf32>
    %cst_40 = arith.constant 1.000000e-03 : f32
    %79 = vector.broadcast %cst_40 : f32 to vector<1x256xf32>
    %80 = arith.addf %78, %79 : vector<1x256xf32>
    %81 = math.rsqrt %80 : vector<1x256xf32>
    %82 = arith.mulf %64, %81 : vector<1x256xf32>
    %83 = arith.mulf %69, %82 : vector<1x256xf32>
    %84 = arith.subf %65, %83 : vector<1x256xf32>
    %85 = vector.broadcast %82 : vector<1x256xf32> to vector<128x256xf32>
    %86 = arith.mulf %63, %85 : vector<128x256xf32>
    %87 = vector.broadcast %84 : vector<1x256xf32> to vector<128x256xf32>
    %88 = arith.addf %86, %87 : vector<128x256xf32>
    %cst_41 = arith.constant 0.000000e+00 : f32
    %89 = vector.broadcast %cst_41 : f32 to vector<128x256xf32>
    %90 = arith.maximumf %88, %89 : vector<128x256xf32>
    %c0_42 = arith.constant 0 : index
    %c0_43 = arith.constant 0 : index
    %91 = vector.load %arg10[%c0_42, %c0_43] : memref<256x256xbf16, #tpu.memory_space<vmem>>, vector<256x256xbf16>
    %92 = arith.truncf %90 : vector<128x256xf32> to vector<128x256xbf16>
    %cst_44 = arith.constant dense<0.000000e+00> : vector<128x256xf32>
    %93 = tpu.matmul %92, %91, %cst_44 {dimension_numbers = #tpu.dot_dimension_numbers<[1], [0], [0], [1], [0, 0, 1, 1], [], []>} : vector<128x256xbf16>, vector<256x256xbf16>, vector<128x256xf32> -> vector<128x256xf32>
    %c0_45 = arith.constant 0 : index
    %c0_46 = arith.constant 0 : index
    %94 = vector.load %arg11[%c0_45, %c0_46] : memref<1x256xf32, #tpu.memory_space<vmem>>, vector<1x256xf32>
    %c0_47 = arith.constant 0 : index
    %c0_48 = arith.constant 0 : index
    %95 = vector.load %arg12[%c0_47, %c0_48] : memref<1x256xf32, #tpu.memory_space<vmem>>, vector<1x256xf32>
    %cst_49 = arith.constant dense<0.000000e+00> : vector<256xf32>
    %96 = vector.multi_reduction <add>, %93, %cst_49 [0] : vector<128x256xf32> to vector<256xf32>
    %97 = vector.shape_cast %96 : vector<256xf32> to vector<1x256xf32>
    %cst_50 = arith.constant 1.280000e+02 : f32
    %98 = vector.broadcast %cst_50 : f32 to vector<1x256xf32>
    %99 = arith.divf %97, %98 : vector<1x256xf32>
    %100 = arith.mulf %93, %93 : vector<128x256xf32>
    %cst_51 = arith.constant dense<0.000000e+00> : vector<256xf32>
    %101 = vector.multi_reduction <add>, %100, %cst_51 [0] : vector<128x256xf32> to vector<256xf32>
    %102 = vector.shape_cast %101 : vector<256xf32> to vector<1x256xf32>
    %cst_52 = arith.constant 1.280000e+02 : f32
    %103 = vector.broadcast %cst_52 : f32 to vector<1x256xf32>
    %104 = arith.divf %102, %103 : vector<1x256xf32>
    %105 = arith.mulf %99, %99 : vector<1x256xf32>
    %106 = arith.subf %104, %105 : vector<1x256xf32>
    %cst_53 = arith.constant 0.000000e+00 : f32
    %107 = vector.broadcast %cst_53 : f32 to vector<1x256xf32>
    %108 = arith.maximumf %106, %107 : vector<1x256xf32>
    %cst_54 = arith.constant 1.000000e-03 : f32
    %109 = vector.broadcast %cst_54 : f32 to vector<1x256xf32>
    %110 = arith.addf %108, %109 : vector<1x256xf32>
    %111 = math.rsqrt %110 : vector<1x256xf32>
    %112 = arith.mulf %94, %111 : vector<1x256xf32>
    %113 = arith.mulf %99, %112 : vector<1x256xf32>
    %114 = arith.subf %95, %113 : vector<1x256xf32>
    %115 = vector.broadcast %112 : vector<1x256xf32> to vector<128x256xf32>
    %116 = arith.mulf %93, %115 : vector<128x256xf32>
    %117 = vector.broadcast %114 : vector<1x256xf32> to vector<128x256xf32>
    %118 = arith.addf %116, %117 : vector<128x256xf32>
    %cst_55 = arith.constant 0.000000e+00 : f32
    %119 = vector.broadcast %cst_55 : f32 to vector<128x256xf32>
    %120 = arith.maximumf %118, %119 : vector<128x256xf32>
    %c0_56 = arith.constant 0 : index
    %c0_57 = arith.constant 0 : index
    %121 = vector.load %arg13[%c0_56, %c0_57] : memref<256x256xbf16, #tpu.memory_space<vmem>>, vector<256x256xbf16>
    %122 = arith.truncf %120 : vector<128x256xf32> to vector<128x256xbf16>
    %cst_58 = arith.constant dense<0.000000e+00> : vector<128x256xf32>
    %123 = tpu.matmul %122, %121, %cst_58 {dimension_numbers = #tpu.dot_dimension_numbers<[1], [0], [0], [1], [0, 0, 1, 1], [], []>} : vector<128x256xbf16>, vector<256x256xbf16>, vector<128x256xf32> -> vector<128x256xf32>
    %c0_59 = arith.constant 0 : index
    %c0_60 = arith.constant 0 : index
    %124 = vector.load %arg14[%c0_59, %c0_60] : memref<1x256xf32, #tpu.memory_space<vmem>>, vector<1x256xf32>
    %c0_61 = arith.constant 0 : index
    %c0_62 = arith.constant 0 : index
    %125 = vector.load %arg15[%c0_61, %c0_62] : memref<1x256xf32, #tpu.memory_space<vmem>>, vector<1x256xf32>
    %cst_63 = arith.constant dense<0.000000e+00> : vector<256xf32>
    %126 = vector.multi_reduction <add>, %123, %cst_63 [0] : vector<128x256xf32> to vector<256xf32>
    %127 = vector.shape_cast %126 : vector<256xf32> to vector<1x256xf32>
    %cst_64 = arith.constant 1.280000e+02 : f32
    %128 = vector.broadcast %cst_64 : f32 to vector<1x256xf32>
    %129 = arith.divf %127, %128 : vector<1x256xf32>
    %130 = arith.mulf %123, %123 : vector<128x256xf32>
    %cst_65 = arith.constant dense<0.000000e+00> : vector<256xf32>
    %131 = vector.multi_reduction <add>, %130, %cst_65 [0] : vector<128x256xf32> to vector<256xf32>
    %132 = vector.shape_cast %131 : vector<256xf32> to vector<1x256xf32>
    %cst_66 = arith.constant 1.280000e+02 : f32
    %133 = vector.broadcast %cst_66 : f32 to vector<1x256xf32>
    %134 = arith.divf %132, %133 : vector<1x256xf32>
    %135 = arith.mulf %129, %129 : vector<1x256xf32>
    %136 = arith.subf %134, %135 : vector<1x256xf32>
    %cst_67 = arith.constant 0.000000e+00 : f32
    %137 = vector.broadcast %cst_67 : f32 to vector<1x256xf32>
    %138 = arith.maximumf %136, %137 : vector<1x256xf32>
    %cst_68 = arith.constant 1.000000e-03 : f32
    %139 = vector.broadcast %cst_68 : f32 to vector<1x256xf32>
    %140 = arith.addf %138, %139 : vector<1x256xf32>
    %141 = math.rsqrt %140 : vector<1x256xf32>
    %142 = arith.mulf %124, %141 : vector<1x256xf32>
    %143 = arith.mulf %129, %142 : vector<1x256xf32>
    %144 = arith.subf %125, %143 : vector<1x256xf32>
    %145 = vector.broadcast %142 : vector<1x256xf32> to vector<128x256xf32>
    %146 = arith.mulf %123, %145 : vector<128x256xf32>
    %147 = vector.broadcast %144 : vector<1x256xf32> to vector<128x256xf32>
    %148 = arith.addf %146, %147 : vector<128x256xf32>
    %cst_69 = arith.constant 0.000000e+00 : f32
    %149 = vector.broadcast %cst_69 : f32 to vector<128x256xf32>
    %150 = arith.maximumf %148, %149 : vector<128x256xf32>
    %c0_70 = arith.constant 0 : index
    %c0_71 = arith.constant 0 : index
    %151 = vector.load %arg16[%c0_70, %c0_71] : memref<256x16xbf16, #tpu.memory_space<vmem>>, vector<256x16xbf16>
    %152 = arith.truncf %150 : vector<128x256xf32> to vector<128x256xbf16>
    %cst_72 = arith.constant dense<0.000000e+00> : vector<128x16xf32>
    %153 = tpu.matmul %152, %151, %cst_72 {dimension_numbers = #tpu.dot_dimension_numbers<[1], [0], [0], [1], [0, 0, 1, 1], [], []>} : vector<128x256xbf16>, vector<256x16xbf16>, vector<128x16xf32> -> vector<128x16xf32>
    %c0_73 = arith.constant 0 : index
    %c0_74 = arith.constant 0 : index
    %154 = vector.load %arg17[%c0_73, %c0_74] : memref<1x16xf32, #tpu.memory_space<vmem>>, vector<1x16xf32>
    %c0_75 = arith.constant 0 : index
    %c0_76 = arith.constant 0 : index
    %155 = vector.load %arg18[%c0_75, %c0_76] : memref<1x16xf32, #tpu.memory_space<vmem>>, vector<1x16xf32>
    %cst_77 = arith.constant dense<0.000000e+00> : vector<16xf32>
    %156 = vector.multi_reduction <add>, %153, %cst_77 [0] : vector<128x16xf32> to vector<16xf32>
    %157 = vector.shape_cast %156 : vector<16xf32> to vector<1x16xf32>
    %cst_78 = arith.constant 1.280000e+02 : f32
    %158 = vector.broadcast %cst_78 : f32 to vector<1x16xf32>
    %159 = arith.divf %157, %158 : vector<1x16xf32>
    %160 = arith.mulf %153, %153 : vector<128x16xf32>
    %cst_79 = arith.constant dense<0.000000e+00> : vector<16xf32>
    %161 = vector.multi_reduction <add>, %160, %cst_79 [0] : vector<128x16xf32> to vector<16xf32>
    %162 = vector.shape_cast %161 : vector<16xf32> to vector<1x16xf32>
    %cst_80 = arith.constant 1.280000e+02 : f32
    %163 = vector.broadcast %cst_80 : f32 to vector<1x16xf32>
    %164 = arith.divf %162, %163 : vector<1x16xf32>
    %165 = arith.mulf %159, %159 : vector<1x16xf32>
    %166 = arith.subf %164, %165 : vector<1x16xf32>
    %cst_81 = arith.constant 0.000000e+00 : f32
    %167 = vector.broadcast %cst_81 : f32 to vector<1x16xf32>
    %168 = arith.maximumf %166, %167 : vector<1x16xf32>
    %cst_82 = arith.constant 1.000000e-03 : f32
    %169 = vector.broadcast %cst_82 : f32 to vector<1x16xf32>
    %170 = arith.addf %168, %169 : vector<1x16xf32>
    %171 = math.rsqrt %170 : vector<1x16xf32>
    %172 = arith.mulf %154, %171 : vector<1x16xf32>
    %173 = arith.mulf %159, %172 : vector<1x16xf32>
    %174 = arith.subf %155, %173 : vector<1x16xf32>
    %175 = vector.broadcast %172 : vector<1x16xf32> to vector<128x16xf32>
    %176 = arith.mulf %153, %175 : vector<128x16xf32>
    %177 = vector.broadcast %174 : vector<1x16xf32> to vector<128x16xf32>
    %178 = arith.addf %176, %177 : vector<128x16xf32>
    %cst_83 = arith.constant 0.000000e+00 : f32
    %179 = vector.broadcast %cst_83 : f32 to vector<128x16xf32>
    %180 = arith.maximumf %178, %179 : vector<128x16xf32>
    %c0_84 = arith.constant 0 : index
    %c0_85 = arith.constant 0 : index
    %181 = vector.load %arg37[%c0_84, %c0_85] : memref<128x16xf32, #tpu.memory_space<vmem>>, vector<128x16xf32>
    tpu.vector_store %arg37[%c0_84, %c0_85], %180 {strides = array<i32>} : memref<128x16xf32, #tpu.memory_space<vmem>>, vector<128x16xf32>,
    %c0_86 = arith.constant 0 : index
    %c0_87 = arith.constant 0 : index
    %182 = vector.load %arg19[%c0_86, %c0_87] : memref<16x256xbf16, #tpu.memory_space<vmem>>, vector<16x256xbf16>
    %183 = arith.truncf %180 : vector<128x16xf32> to vector<128x16xbf16>
    %cst_88 = arith.constant dense<0.000000e+00> : vector<128x256xf32>
    %184 = tpu.matmul %183, %182, %cst_88 {dimension_numbers = #tpu.dot_dimension_numbers<[1], [0], [0], [1], [0, 0, 1, 1], [], []>} : vector<128x16xbf16>, vector<16x256xbf16>, vector<128x256xf32> -> vector<128x256xf32>
    %c0_89 = arith.constant 0 : index
    %c0_90 = arith.constant 0 : index
    %185 = vector.load %arg20[%c0_89, %c0_90] : memref<1x256xf32, #tpu.memory_space<vmem>>, vector<1x256xf32>
    %c0_91 = arith.constant 0 : index
    %c0_92 = arith.constant 0 : index
    %186 = vector.load %arg21[%c0_91, %c0_92] : memref<1x256xf32, #tpu.memory_space<vmem>>, vector<1x256xf32>
    %cst_93 = arith.constant dense<0.000000e+00> : vector<256xf32>
    %187 = vector.multi_reduction <add>, %184, %cst_93 [0] : vector<128x256xf32> to vector<256xf32>
    %188 = vector.shape_cast %187 : vector<256xf32> to vector<1x256xf32>
    %cst_94 = arith.constant 1.280000e+02 : f32
    %189 = vector.broadcast %cst_94 : f32 to vector<1x256xf32>
    %190 = arith.divf %188, %189 : vector<1x256xf32>
    %191 = arith.mulf %184, %184 : vector<128x256xf32>
    %cst_95 = arith.constant dense<0.000000e+00> : vector<256xf32>
    %192 = vector.multi_reduction <add>, %191, %cst_95 [0] : vector<128x256xf32> to vector<256xf32>
    %193 = vector.shape_cast %192 : vector<256xf32> to vector<1x256xf32>
    %cst_96 = arith.constant 1.280000e+02 : f32
    %194 = vector.broadcast %cst_96 : f32 to vector<1x256xf32>
    %195 = arith.divf %193, %194 : vector<1x256xf32>
    %196 = arith.mulf %190, %190 : vector<1x256xf32>
    %197 = arith.subf %195, %196 : vector<1x256xf32>
    %cst_97 = arith.constant 0.000000e+00 : f32
    %198 = vector.broadcast %cst_97 : f32 to vector<1x256xf32>
    %199 = arith.maximumf %197, %198 : vector<1x256xf32>
    %cst_98 = arith.constant 1.000000e-03 : f32
    %200 = vector.broadcast %cst_98 : f32 to vector<1x256xf32>
    %201 = arith.addf %199, %200 : vector<1x256xf32>
    %202 = math.rsqrt %201 : vector<1x256xf32>
    %203 = arith.mulf %185, %202 : vector<1x256xf32>
    %204 = arith.mulf %190, %203 : vector<1x256xf32>
    %205 = arith.subf %186, %204 : vector<1x256xf32>
    %206 = vector.broadcast %203 : vector<1x256xf32> to vector<128x256xf32>
    %207 = arith.mulf %184, %206 : vector<128x256xf32>
    %208 = vector.broadcast %205 : vector<1x256xf32> to vector<128x256xf32>
    %209 = arith.addf %207, %208 : vector<128x256xf32>
    %cst_99 = arith.constant 0.000000e+00 : f32
    %210 = vector.broadcast %cst_99 : f32 to vector<128x256xf32>
    %211 = arith.maximumf %209, %210 : vector<128x256xf32>
    %c0_100 = arith.constant 0 : index
    %c0_101 = arith.constant 0 : index
    %212 = vector.load %arg22[%c0_100, %c0_101] : memref<256x256xbf16, #tpu.memory_space<vmem>>, vector<256x256xbf16>
    %213 = arith.truncf %211 : vector<128x256xf32> to vector<128x256xbf16>
    %cst_102 = arith.constant dense<0.000000e+00> : vector<128x256xf32>
    %214 = tpu.matmul %213, %212, %cst_102 {dimension_numbers = #tpu.dot_dimension_numbers<[1], [0], [0], [1], [0, 0, 1, 1], [], []>} : vector<128x256xbf16>, vector<256x256xbf16>, vector<128x256xf32> -> vector<128x256xf32>
    %c0_103 = arith.constant 0 : index
    %c0_104 = arith.constant 0 : index
    %215 = vector.load %arg23[%c0_103, %c0_104] : memref<1x256xf32, #tpu.memory_space<vmem>>, vector<1x256xf32>
    %c0_105 = arith.constant 0 : index
    %c0_106 = arith.constant 0 : index
    %216 = vector.load %arg24[%c0_105, %c0_106] : memref<1x256xf32, #tpu.memory_space<vmem>>, vector<1x256xf32>
    %cst_107 = arith.constant dense<0.000000e+00> : vector<256xf32>
    %217 = vector.multi_reduction <add>, %214, %cst_107 [0] : vector<128x256xf32> to vector<256xf32>
    %218 = vector.shape_cast %217 : vector<256xf32> to vector<1x256xf32>
    %cst_108 = arith.constant 1.280000e+02 : f32
    %219 = vector.broadcast %cst_108 : f32 to vector<1x256xf32>
    %220 = arith.divf %218, %219 : vector<1x256xf32>
    %221 = arith.mulf %214, %214 : vector<128x256xf32>
    %cst_109 = arith.constant dense<0.000000e+00> : vector<256xf32>
    %222 = vector.multi_reduction <add>, %221, %cst_109 [0] : vector<128x256xf32> to vector<256xf32>
    %223 = vector.shape_cast %222 : vector<256xf32> to vector<1x256xf32>
    %cst_110 = arith.constant 1.280000e+02 : f32
    %224 = vector.broadcast %cst_110 : f32 to vector<1x256xf32>
    %225 = arith.divf %223, %224 : vector<1x256xf32>
    %226 = arith.mulf %220, %220 : vector<1x256xf32>
    %227 = arith.subf %225, %226 : vector<1x256xf32>
    %cst_111 = arith.constant 0.000000e+00 : f32
    %228 = vector.broadcast %cst_111 : f32 to vector<1x256xf32>
    %229 = arith.maximumf %227, %228 : vector<1x256xf32>
    %cst_112 = arith.constant 1.000000e-03 : f32
    %230 = vector.broadcast %cst_112 : f32 to vector<1x256xf32>
    %231 = arith.addf %229, %230 : vector<1x256xf32>
    %232 = math.rsqrt %231 : vector<1x256xf32>
    %233 = arith.mulf %215, %232 : vector<1x256xf32>
    %234 = arith.mulf %220, %233 : vector<1x256xf32>
    %235 = arith.subf %216, %234 : vector<1x256xf32>
    %236 = vector.broadcast %233 : vector<1x256xf32> to vector<128x256xf32>
    %237 = arith.mulf %214, %236 : vector<128x256xf32>
    %238 = vector.broadcast %235 : vector<1x256xf32> to vector<128x256xf32>
    %239 = arith.addf %237, %238 : vector<128x256xf32>
    %cst_113 = arith.constant 0.000000e+00 : f32
    %240 = vector.broadcast %cst_113 : f32 to vector<128x256xf32>
    %241 = arith.maximumf %239, %240 : vector<128x256xf32>
    %c0_114 = arith.constant 0 : index
    %c0_115 = arith.constant 0 : index
    %242 = vector.load %arg25[%c0_114, %c0_115] : memref<256x256xbf16, #tpu.memory_space<vmem>>, vector<256x256xbf16>
    %243 = arith.truncf %241 : vector<128x256xf32> to vector<128x256xbf16>
    %cst_116 = arith.constant dense<0.000000e+00> : vector<128x256xf32>
    %244 = tpu.matmul %243, %242, %cst_116 {dimension_numbers = #tpu.dot_dimension_numbers<[1], [0], [0], [1], [0, 0, 1, 1], [], []>} : vector<128x256xbf16>, vector<256x256xbf16>, vector<128x256xf32> -> vector<128x256xf32>
    %c0_117 = arith.constant 0 : index
    %c0_118 = arith.constant 0 : index
    %245 = vector.load %arg26[%c0_117, %c0_118] : memref<1x256xf32, #tpu.memory_space<vmem>>, vector<1x256xf32>
    %c0_119 = arith.constant 0 : index
    %c0_120 = arith.constant 0 : index
    %246 = vector.load %arg27[%c0_119, %c0_120] : memref<1x256xf32, #tpu.memory_space<vmem>>, vector<1x256xf32>
    %cst_121 = arith.constant dense<0.000000e+00> : vector<256xf32>
    %247 = vector.multi_reduction <add>, %244, %cst_121 [0] : vector<128x256xf32> to vector<256xf32>
    %248 = vector.shape_cast %247 : vector<256xf32> to vector<1x256xf32>
    %cst_122 = arith.constant 1.280000e+02 : f32
    %249 = vector.broadcast %cst_122 : f32 to vector<1x256xf32>
    %250 = arith.divf %248, %249 : vector<1x256xf32>
    %251 = arith.mulf %244, %244 : vector<128x256xf32>
    %cst_123 = arith.constant dense<0.000000e+00> : vector<256xf32>
    %252 = vector.multi_reduction <add>, %251, %cst_123 [0] : vector<128x256xf32> to vector<256xf32>
    %253 = vector.shape_cast %252 : vector<256xf32> to vector<1x256xf32>
    %cst_124 = arith.constant 1.280000e+02 : f32
    %254 = vector.broadcast %cst_124 : f32 to vector<1x256xf32>
    %255 = arith.divf %253, %254 : vector<1x256xf32>
    %256 = arith.mulf %250, %250 : vector<1x256xf32>
    %257 = arith.subf %255, %256 : vector<1x256xf32>
    %cst_125 = arith.constant 0.000000e+00 : f32
    %258 = vector.broadcast %cst_125 : f32 to vector<1x256xf32>
    %259 = arith.maximumf %257, %258 : vector<1x256xf32>
    %cst_126 = arith.constant 1.000000e-03 : f32
    %260 = vector.broadcast %cst_126 : f32 to vector<1x256xf32>
    %261 = arith.addf %259, %260 : vector<1x256xf32>
    %262 = math.rsqrt %261 : vector<1x256xf32>
    %263 = arith.mulf %245, %262 : vector<1x256xf32>
    %264 = arith.mulf %250, %263 : vector<1x256xf32>
    %265 = arith.subf %246, %264 : vector<1x256xf32>
    %266 = vector.broadcast %263 : vector<1x256xf32> to vector<128x256xf32>
    %267 = arith.mulf %244, %266 : vector<128x256xf32>
    %268 = vector.broadcast %265 : vector<1x256xf32> to vector<128x256xf32>
    %269 = arith.addf %267, %268 : vector<128x256xf32>
    %cst_127 = arith.constant 0.000000e+00 : f32
    %270 = vector.broadcast %cst_127 : f32 to vector<128x256xf32>
    %271 = arith.maximumf %269, %270 : vector<128x256xf32>
    %c0_128 = arith.constant 0 : index
    %c0_129 = arith.constant 0 : index
    %272 = vector.load %arg28[%c0_128, %c0_129] : memref<256x256xbf16, #tpu.memory_space<vmem>>, vector<256x256xbf16>
    %273 = arith.truncf %271 : vector<128x256xf32> to vector<128x256xbf16>
    %cst_130 = arith.constant dense<0.000000e+00> : vector<128x256xf32>
    %274 = tpu.matmul %273, %272, %cst_130 {dimension_numbers = #tpu.dot_dimension_numbers<[1], [0], [0], [1], [0, 0, 1, 1], [], []>} : vector<128x256xbf16>, vector<256x256xbf16>, vector<128x256xf32> -> vector<128x256xf32>
    %c0_131 = arith.constant 0 : index
    %c0_132 = arith.constant 0 : index
    %275 = vector.load %arg29[%c0_131, %c0_132] : memref<1x256xf32, #tpu.memory_space<vmem>>, vector<1x256xf32>
    %c0_133 = arith.constant 0 : index
    %c0_134 = arith.constant 0 : index
    %276 = vector.load %arg30[%c0_133, %c0_134] : memref<1x256xf32, #tpu.memory_space<vmem>>, vector<1x256xf32>
    %cst_135 = arith.constant dense<0.000000e+00> : vector<256xf32>
    %277 = vector.multi_reduction <add>, %274, %cst_135 [0] : vector<128x256xf32> to vector<256xf32>
    %278 = vector.shape_cast %277 : vector<256xf32> to vector<1x256xf32>
    %cst_136 = arith.constant 1.280000e+02 : f32
    %279 = vector.broadcast %cst_136 : f32 to vector<1x256xf32>
    %280 = arith.divf %278, %279 : vector<1x256xf32>
    %281 = arith.mulf %274, %274 : vector<128x256xf32>
    %cst_137 = arith.constant dense<0.000000e+00> : vector<256xf32>
    %282 = vector.multi_reduction <add>, %281, %cst_137 [0] : vector<128x256xf32> to vector<256xf32>
    %283 = vector.shape_cast %282 : vector<256xf32> to vector<1x256xf32>
    %cst_138 = arith.constant 1.280000e+02 : f32
    %284 = vector.broadcast %cst_138 : f32 to vector<1x256xf32>
    %285 = arith.divf %283, %284 : vector<1x256xf32>
    %286 = arith.mulf %280, %280 : vector<1x256xf32>
    %287 = arith.subf %285, %286 : vector<1x256xf32>
    %cst_139 = arith.constant 0.000000e+00 : f32
    %288 = vector.broadcast %cst_139 : f32 to vector<1x256xf32>
    %289 = arith.maximumf %287, %288 : vector<1x256xf32>
    %cst_140 = arith.constant 1.000000e-03 : f32
    %290 = vector.broadcast %cst_140 : f32 to vector<1x256xf32>
    %291 = arith.addf %289, %290 : vector<1x256xf32>
    %292 = math.rsqrt %291 : vector<1x256xf32>
    %293 = arith.mulf %275, %292 : vector<1x256xf32>
    %294 = arith.mulf %280, %293 : vector<1x256xf32>
    %295 = arith.subf %276, %294 : vector<1x256xf32>
    %296 = vector.broadcast %293 : vector<1x256xf32> to vector<128x256xf32>
    %297 = arith.mulf %274, %296 : vector<128x256xf32>
    %298 = vector.broadcast %295 : vector<1x256xf32> to vector<128x256xf32>
    %299 = arith.addf %297, %298 : vector<128x256xf32>
    %cst_141 = arith.constant 0.000000e+00 : f32
    %300 = vector.broadcast %cst_141 : f32 to vector<128x256xf32>
    %301 = arith.maximumf %299, %300 : vector<128x256xf32>
    %c0_142 = arith.constant 0 : index
    %c0_143 = arith.constant 0 : index
    %302 = vector.load %arg31[%c0_142, %c0_143] : memref<256x256xbf16, #tpu.memory_space<vmem>>, vector<256x256xbf16>
    %303 = arith.truncf %301 : vector<128x256xf32> to vector<128x256xbf16>
    %cst_144 = arith.constant dense<0.000000e+00> : vector<128x256xf32>
    %304 = tpu.matmul %303, %302, %cst_144 {dimension_numbers = #tpu.dot_dimension_numbers<[1], [0], [0], [1], [0, 0, 1, 1], [], []>} : vector<128x256xbf16>, vector<256x256xbf16>, vector<128x256xf32> -> vector<128x256xf32>
    %c0_145 = arith.constant 0 : index
    %c0_146 = arith.constant 0 : index
    %305 = vector.load %arg32[%c0_145, %c0_146] : memref<1x256xf32, #tpu.memory_space<vmem>>, vector<1x256xf32>
    %c0_147 = arith.constant 0 : index
    %c0_148 = arith.constant 0 : index
    %306 = vector.load %arg33[%c0_147, %c0_148] : memref<1x256xf32, #tpu.memory_space<vmem>>, vector<1x256xf32>
    %cst_149 = arith.constant dense<0.000000e+00> : vector<256xf32>
    %307 = vector.multi_reduction <add>, %304, %cst_149 [0] : vector<128x256xf32> to vector<256xf32>
    %308 = vector.shape_cast %307 : vector<256xf32> to vector<1x256xf32>
    %cst_150 = arith.constant 1.280000e+02 : f32
    %309 = vector.broadcast %cst_150 : f32 to vector<1x256xf32>
    %310 = arith.divf %308, %309 : vector<1x256xf32>
    %311 = arith.mulf %304, %304 : vector<128x256xf32>
    %cst_151 = arith.constant dense<0.000000e+00> : vector<256xf32>
    %312 = vector.multi_reduction <add>, %311, %cst_151 [0] : vector<128x256xf32> to vector<256xf32>
    %313 = vector.shape_cast %312 : vector<256xf32> to vector<1x256xf32>
    %cst_152 = arith.constant 1.280000e+02 : f32
    %314 = vector.broadcast %cst_152 : f32 to vector<1x256xf32>
    %315 = arith.divf %313, %314 : vector<1x256xf32>
    %316 = arith.mulf %310, %310 : vector<1x256xf32>
    %317 = arith.subf %315, %316 : vector<1x256xf32>
    %cst_153 = arith.constant 0.000000e+00 : f32
    %318 = vector.broadcast %cst_153 : f32 to vector<1x256xf32>
    %319 = arith.maximumf %317, %318 : vector<1x256xf32>
    %cst_154 = arith.constant 1.000000e-03 : f32
    %320 = vector.broadcast %cst_154 : f32 to vector<1x256xf32>
    %321 = arith.addf %319, %320 : vector<1x256xf32>
    %322 = math.rsqrt %321 : vector<1x256xf32>
    %323 = arith.mulf %305, %322 : vector<1x256xf32>
    %324 = arith.mulf %310, %323 : vector<1x256xf32>
    %325 = arith.subf %306, %324 : vector<1x256xf32>
    %326 = vector.broadcast %323 : vector<1x256xf32> to vector<128x256xf32>
    %327 = arith.mulf %304, %326 : vector<128x256xf32>
    %328 = vector.broadcast %325 : vector<1x256xf32> to vector<128x256xf32>
    %329 = arith.addf %327, %328 : vector<128x256xf32>
    %cst_155 = arith.constant 0.000000e+00 : f32
    %330 = vector.broadcast %cst_155 : f32 to vector<128x256xf32>
    %331 = arith.maximumf %329, %330 : vector<128x256xf32>
    %c0_156 = arith.constant 0 : index
    %c0_157 = arith.constant 0 : index
    %332 = vector.load %arg34[%c0_156, %c0_157] : memref<256x128xbf16, #tpu.memory_space<vmem>>, vector<256x128xbf16>
    %333 = arith.truncf %331 : vector<128x256xf32> to vector<128x256xbf16>
    %cst_158 = arith.constant dense<0.000000e+00> : vector<128x128xf32>
    %334 = tpu.matmul %333, %332, %cst_158 {dimension_numbers = #tpu.dot_dimension_numbers<[1], [0], [0], [1], [0, 0, 1, 1], [], []>} : vector<128x256xbf16>, vector<256x128xbf16>, vector<128x128xf32> -> vector<128x128xf32>
    %c0_159 = arith.constant 0 : index
    %c0_160 = arith.constant 0 : index
    %335 = vector.load %arg35[%c0_159, %c0_160] : memref<1x128xf32, #tpu.memory_space<vmem>>, vector<1x128xf32>
    %336 = vector.broadcast %335 : vector<1x128xf32> to vector<128x128xf32>
    %337 = arith.addf %334, %336 : vector<128x128xf32>
    %c0_161 = arith.constant 0 : index
    %c0_162 = arith.constant 0 : index
    %338 = vector.load %arg36[%c0_161, %c0_162] : memref<128x128xf32, #tpu.memory_space<vmem>>, vector<128x128xf32>
    tpu.vector_store %arg36[%c0_161, %c0_162], %337 {strides = array<i32>} : memref<128x128xf32, #tpu.memory_space<vmem>>, vector<128x128xf32>,
    return
  }
}

</mosaic_0001>

<llo_original>
// kernel: aenet_forward.1
$region0: #{aenet_forward.1}
  #allocation0 [shape = 'u32[]', space=smem, size = 0x4, offset = 0x4, fixed_abs, tag = 'smem constant byte address 0x4 - core index']
  #allocation1 [shape = 'u32[144,128]{1,0:T(1,128)}', space=vmem, size = 0x12000, scoped, tag = 'internal scratch']
  %s0 = inlined_call_operand.smem [shape: u32[38], index: -1, kind: input, shape index: {}]
  %s1 = sld [smem:[%s0]]
  %s2 = scalar_lea.smem %s0, 1
  %s3 = sld [smem:[%s2]]
  %s4 = scalar_lea.smem %s0, 2
  %s5 = sld [smem:[%s4]]
  %s6 = scalar_lea.smem %s0, 3
  %s7 = sld [smem:[%s6]]
  %s8 = scalar_lea.smem %s0, 4
  %s9 = sld [smem:[%s8]]
  %s10 = scalar_lea.smem %s0, 5
  %s11 = sld [smem:[%s10]]
  %s12 = scalar_lea.smem %s0, 6
  %s13 = sld [smem:[%s12]]
  %s14 = scalar_lea.smem %s0, 7
  %s15 = sld [smem:[%s14]]
  %s16 = scalar_lea.smem %s0, 8
  %s17 = sld [smem:[%s16]]
  %s18 = scalar_lea.smem %s0, 9
  %s19 = sld [smem:[%s18]]
  %s20 = scalar_lea.smem %s0, 10
  %s21 = sld [smem:[%s20]]
  %s22 = scalar_lea.smem %s0, 11
  %s23 = sld [smem:[%s22]]
  %s24 = scalar_lea.smem %s0, 12
  %s25 = sld [smem:[%s24]]
  %s26 = scalar_lea.smem %s0, 13
  %s27 = sld [smem:[%s26]]
  %s28 = scalar_lea.smem %s0, 14
  %s29 = sld [smem:[%s28]]
  %s30 = scalar_lea.smem %s0, 15
  %s31 = sld [smem:[%s30]]
  %s32 = scalar_lea.smem %s0, 16
  %s33 = sld [smem:[%s32]]
  %s34 = scalar_lea.smem %s0, 17
  %s35 = sld [smem:[%s34]]
  %s36 = scalar_lea.smem %s0, 18
  %s37 = sld [smem:[%s36]]
  %s38 = scalar_lea.smem %s0, 19
  %s39 = sld [smem:[%s38]]
  %s40 = scalar_lea.smem %s0, 20
  %s41 = sld [smem:[%s40]]
  %s42 = scalar_lea.smem %s0, 21
  %s43 = sld [smem:[%s42]]
  %s44 = scalar_lea.smem %s0, 22
  %s45 = sld [smem:[%s44]]
  %s46 = scalar_lea.smem %s0, 23
  %s47 = sld [smem:[%s46]]
  %s48 = scalar_lea.smem %s0, 24
  %s49 = sld [smem:[%s48]]
  %s50 = scalar_lea.smem %s0, 25
  %s51 = sld [smem:[%s50]]
  %s52 = scalar_lea.smem %s0, 26
  %s53 = sld [smem:[%s52]]
  %s54 = scalar_lea.smem %s0, 27
  %s55 = sld [smem:[%s54]]
  %s56 = scalar_lea.smem %s0, 28
  %s57 = sld [smem:[%s56]]
  %s58 = scalar_lea.smem %s0, 29
  %s59 = sld [smem:[%s58]]
  %s60 = scalar_lea.smem %s0, 30
  %s61 = sld [smem:[%s60]]
  %s62 = scalar_lea.smem %s0, 31
  %s63 = sld [smem:[%s62]]
  %s64 = scalar_lea.smem %s0, 32
  %s65 = sld [smem:[%s64]]
  %s66 = scalar_lea.smem %s0, 33
  %s67 = sld [smem:[%s66]]
  %s68 = scalar_lea.smem %s0, 34
  %s69 = sld [smem:[%s68]]
  %s70 = scalar_lea.smem %s0, 35
  %s71 = sld [smem:[%s70]]
  %s72 = scalar_lea.smem %s0, 36
  %s73 = sld [smem:[%s72]]
  %s74 = scalar_lea.smem %s0, 37
  %s75 = sld [smem:[%s74]]
  %76 = xla_tuple %s73, %s75
  %s77 = sld [smem:[#allocation0]]
  $region226: #{aenet_forward.1} parent=0
    _
  %s79 = ssub.s32 1, %s77
  %s80 = scalar_select 0, %s79, %s77
  $region1: #{aenet_forward.1} parent=0
    #allocation2 [shape = 'u8[65536]{0}', space=vmem, size = 0x10000, scoped, tag = 'input window, operand 1, single buffered']
    #allocation3 [shape = 's32[1]{0}', space=sflag, size = 0x4, scoped, tag = 'scoped memory for aenet_forward.1']
    #allocation4 [shape = 's32[1]{0}', space=sflag, size = 0x4, scoped, tag = 'scoped memory for aenet_forward.1']
    #allocation5 [shape = 'u8[131072]{0}', space=vmem, size = 0x20000, scoped, tag = 'input window, operand 4, single buffered']
    #allocation6 [shape = 's32[1]{0}', space=sflag, size = 0x4, scoped, tag = 'scoped memory for aenet_forward.1']
    #allocation7 [shape = 'u8[131072]{0}', space=vmem, size = 0x20000, scoped, tag = 'input window, operand 7, single buffered']
    #allocation8 [shape = 'u8[131072]{0}', space=vmem, size = 0x20000, scoped, tag = 'input window, operand 10, single buffered']
    #allocation9 [shape = 's32[1]{0}', space=sflag, size = 0x4, scoped, tag = 'scoped memory for aenet_forward.1']
    #allocation10 [shape = 'u8[1024]{0}', space=vmem, size = 0x400, scoped, tag = 'input window, operand 11, single buffered']
    #allocation11 [shape = 'u8[1024]{0}', space=vmem, size = 0x400, scoped, tag = 'input window, operand 12, single buffered']
    #allocation12 [shape = 's32[1]{0}', space=sflag, size = 0x4, scoped, tag = 'scoped memory for aenet_forward.1']
    #allocation13 [shape = 'u8[131072]{0}', space=vmem, size = 0x20000, scoped, tag = 'input window, operand 13, single buffered']
    #allocation14 [shape = 'u8[1024]{0}', space=vmem, size = 0x400, scoped, tag = 'input window, operand 14, single buffered']
    #allocation15 [shape = 's32[1]{0}', space=sflag, size = 0x4, scoped, tag = 'scoped memory for aenet_forward.1']
    #allocation16 [shape = 'u8[1024]{0}', space=vmem, size = 0x400, scoped, tag = 'input window, operand 15, single buffered']
    #allocation17 [shape = 'u8[512]{0}', space=vmem, size = 0x400, scoped, tag = 'input window, operand 17, single buffered']
    #allocation18 [shape = 's32[1]{0}', space=sflag, size = 0x4, scoped, tag = 'scoped memory for aenet_forward.1']
    #allocation19 [shape = 'u8[512]{0}', space=vmem, size = 0x400, scoped, tag = 'input window, operand 18, single buffered']
    #allocation20 [shape = 'u8[131072]{0}', space=vmem, size = 0x20000, scoped, tag = 'input window, operand 22, single buffered']
    #allocation21 [shape = 's32[1]{0}', space=sflag, size = 0x4, scoped, tag = 'scoped memory for aenet_forward.1']
    #allocation22 [shape = 'u8[131072]{0}', space=vmem, size = 0x20000, scoped, tag = 'input window, operand 25, single buffered']
    #allocation23 [shape = 'u8[131072]{0}', space=vmem, size = 0x20000, scoped, tag = 'input window, operand 28, single buffered']
    #allocation24 [shape = 's32[1]{0}', space=sflag, size = 0x4, scoped, tag = 'scoped memory for aenet_forward.1']
    #allocation25 [shape = 'u8[131072]{0}', space=vmem, size = 0x20000, scoped, tag = 'input window, operand 31, single buffered']
    #allocation26 [shape = 'u8[65536]{0}', space=vmem, size = 0x10000, scoped, tag = 'input window, operand 34, single buffered']
    #allocation27 [shape = 's32[1]{0}', space=sflag, size = 0x4, scoped, tag = 'scoped memory for aenet_forward.1']
    #allocation28 [shape = 'u8[65536]{0}', space=vmem, size = 0x10000, scoped, tag = 'output window, operand 0, single buffered']
    %81 = vsyncpa [#allocation3], 0
    %82 = vsyncpa [#allocation6], 0
    %83 = vsyncpa [#allocation9], 0
    %84 = vsyncpa [#allocation12], 0
    %85 = vsyncpa [#allocation15], 0
    %86 = vsyncpa [#allocation18], 0
    %87 = vsyncpa [#allocation21], 0
    %88 = vsyncpa [#allocation24], 0
    %89 = vsyncpa [#allocation27], 0
    %90 = vsyncpa [#allocation4], 0
    // Predicated region
    $region2: #{aenet_forward.1} parent=1 // pred_check
      _
    $region3: #{aenet_forward.1} parent=1 // pred_check_branch
      %92 = sbr.rel (0) target = $region5
    $region4: #{aenet_forward.1} parent=1 // pred_region
      _
    $region5: #{aenet_forward.1} parent=1 // pred_fallthru
      _
    // Predicated region
    $region6: #{aenet_forward.1} parent=1 // pred_check
      _
    $region7: #{aenet_forward.1} parent=1 // pred_check_branch
      %94 = sbr.rel (0) target = $region9
    $region8: #{aenet_forward.1} parent=1 // pred_region
      %s96 = ssub.s32 2048, 2048
      %97 = vsyncadd [#allocation3], %s96
      %s98 = sshll.u32 [#allocation2], 4
      %s99 = int_to_ptr.vmem [resolvable:$true] %s98
      %104 = dma.hbm_to_vmem [thread:$0]  %s3, 2048, %s99, [#allocation3], 128, 128, 8
    $region9: #{aenet_forward.1} parent=1 // pred_fallthru
      _
    // Predicated region
    $region10: #{aenet_forward.1} parent=1 // pred_check
      _
    $region11: #{aenet_forward.1} parent=1 // pred_check_branch
      %106 = sbr.rel (0) target = $region13
    $region12: #{aenet_forward.1} parent=1 // pred_region
      _
    $region13: #{aenet_forward.1} parent=1 // pred_fallthru
      _
    // Predicated region
    $region14: #{aenet_forward.1} parent=1 // pred_check
      _
    $region15: #{aenet_forward.1} parent=1 // pred_check_branch
      %108 = sbr.rel (0) target = $region17
    $region16: #{aenet_forward.1} parent=1 // pred_region
      _
    $region17: #{aenet_forward.1} parent=1 // pred_fallthru
      _
    // Predicated region
    $region18: #{aenet_forward.1} parent=1 // pred_check
      _
    $region19: #{aenet_forward.1} parent=1 // pred_check_branch
      %110 = sbr.rel (0) target = $region21
    $region20: #{aenet_forward.1} parent=1 // pred_region
      %s112 = ssub.s32 4096, 4096
      %113 = vsyncadd [#allocation6], %s112
      %s114 = sshll.u32 [#allocation5], 4
      %s115 = int_to_ptr.vmem [resolvable:$true] %s114
      %120 = dma.hbm_to_vmem [thread:$0]  %s9, 4096, %s115, [#allocation6], 128, 128, 8
    $region21: #{aenet_forward.1} parent=1 // pred_fallthru
      _
    // Predicated region
    $region22: #{aenet_forward.1} parent=1 // pred_check
      _
    $region23: #{aenet_forward.1} parent=1 // pred_check_branch
      %122 = sbr.rel (0) target = $region25
    $region24: #{aenet_forward.1} parent=1 // pred_region
      _
    $region25: #{aenet_forward.1} parent=1 // pred_fallthru
      _
    // Predicated region
    $region26: #{aenet_forward.1} parent=1 // pred_check
      _
    $region27: #{aenet_forward.1} parent=1 // pred_check_branch
      %124 = sbr.rel (0) target = $region29
    $region28: #{aenet_forward.1} parent=1 // pred_region
      _
    $region29: #{aenet_forward.1} parent=1 // pred_fallthru
      _
    // Predicated region
    $region30: #{aenet_forward.1} parent=1 // pred_check
      _
    $region31: #{aenet_forward.1} parent=1 // pred_check_branch
      %126 = sbr.rel (0) target = $region33
    $region32: #{aenet_forward.1} parent=1 // pred_region
      %s128 = ssub.s32 4096, 4096
      %129 = vsyncadd [#allocation6], %s128
      %s130 = sshll.u32 [#allocation7], 4
      %s131 = int_to_ptr.vmem [resolvable:$true] %s130
      %136 = dma.hbm_to_vmem [thread:$0]  %s15, 4096, %s131, [#allocation6], 128, 128, 8
    $region33: #{aenet_forward.1} parent=1 // pred_fallthru
      _
    // Predicated region
    $region34: #{aenet_forward.1} parent=1 // pred_check
      _
    $region35: #{aenet_forward.1} parent=1 // pred_check_branch
      %138 = sbr.rel (0) target = $region37
    $region36: #{aenet_forward.1} parent=1 // pred_region
      _
    $region37: #{aenet_forward.1} parent=1 // pred_fallthru
      _
    // Predicated region
    $region38: #{aenet_forward.1} parent=1 // pred_check
      _
    $region39: #{aenet_forward.1} parent=1 // pred_check_branch
      %140 = sbr.rel (0) target = $region41
    $region40: #{aenet_forward.1} parent=1 // pred_region
      _
    $region41: #{aenet_forward.1} parent=1 // pred_fallthru
      _
    // Predicated region
    $region42: #{aenet_forward.1} parent=1 // pred_check
      _
    $region43: #{aenet_forward.1} parent=1 // pred_check_branch
      %142 = sbr.rel (0) target = $region45
    $region44: #{aenet_forward.1} parent=1 // pred_region
      %s144 = ssub.s32 4096, 4096
      %145 = vsyncadd [#allocation9], %s144
      %s146 = sshll.u32 [#allocation8], 4
      %s147 = int_to_ptr.vmem [resolvable:$true] %s146
      %152 = dma.hbm_to_vmem [thread:$0]  %s21, 4096, %s147, [#allocation9], 128, 128, 8
    $region45: #{aenet_forward.1} parent=1 // pred_fallthru
      _
    // Predicated region
    $region46: #{aenet_forward.1} parent=1 // pred_check
      _
    $region47: #{aenet_forward.1} parent=1 // pred_check_branch
      %154 = sbr.rel (0) target = $region49
    $region48: #{aenet_forward.1} parent=1 // pred_region
      %s156 = ssub.s32 32, 32
      %157 = vsyncadd [#allocation9], %s156
      %s159 = sshll.u32 [#allocation10], 4
      %s160 = int_to_ptr.vmem [resolvable:$true] %s159
      %162 = dma.hbm_to_vmem [thread:$0]  %s23, 32, %s160, [#allocation9]
    $region49: #{aenet_forward.1} parent=1 // pred_fallthru
      _
    // Predicated region
    $region50: #{aenet_forward.1} parent=1 // pred_check
      _
    $region51: #{aenet_forward.1} parent=1 // pred_check_branch
      %164 = sbr.rel (0) target = $region53
    $region52: #{aenet_forward.1} parent=1 // pred_region
      %s166 = ssub.s32 32, 32
      %167 = vsyncadd [#allocation12], %s166
      %s169 = sshll.u32 [#allocation11], 4
      %s170 = int_to_ptr.vmem [resolvable:$true] %s169
      %172 = dma.hbm_to_vmem [thread:$0]  %s25, 32, %s170, [#allocation12]
    $region53: #{aenet_forward.1} parent=1 // pred_fallthru
      _
    // Predicated region
    $region54: #{aenet_forward.1} parent=1 // pred_check
      _
    $region55: #{aenet_forward.1} parent=1 // pred_check_branch
      %174 = sbr.rel (0) target = $region57
    $region56: #{aenet_forward.1} parent=1 // pred_region
      %s176 = ssub.s32 4096, 4096
      %177 = vsyncadd [#allocation12], %s176
      %s178 = sshll.u32 [#allocation13], 4
      %s179 = int_to_ptr.vmem [resolvable:$true] %s178
      %184 = dma.hbm_to_vmem [thread:$0]  %s27, 4096, %s179, [#allocation12], 128, 128, 8
    $region57: #{aenet_forward.1} parent=1 // pred_fallthru
      _
    // Predicated region
    $region58: #{aenet_forward.1} parent=1 // pred_check
      _
    $region59: #{aenet_forward.1} parent=1 // pred_check_branch
      %186 = sbr.rel (0) target = $region61
    $region60: #{aenet_forward.1} parent=1 // pred_region
      %s188 = ssub.s32 32, 32
      %189 = vsyncadd [#allocation15], %s188
      %s191 = sshll.u32 [#allocation14], 4
      %s192 = int_to_ptr.vmem [resolvable:$true] %s191
      %194 = dma.hbm_to_vmem [thread:$0]  %s29, 32, %s192, [#allocation15]
    $region61: #{aenet_forward.1} parent=1 // pred_fallthru
      _
    // Predicated region
    $region62: #{aenet_forward.1} parent=1 // pred_check
      _
    $region63: #{aenet_forward.1} parent=1 // pred_check_branch
      %196 = sbr.rel (0) target = $region65
    $region64: #{aenet_forward.1} parent=1 // pred_region
      %s198 = ssub.s32 32, 32
      %199 = vsyncadd [#allocation15], %s198
      %s201 = sshll.u32 [#allocation16], 4
      %s202 = int_to_ptr.vmem [resolvable:$true] %s201
      %204 = dma.hbm_to_vmem [thread:$0]  %s31, 32, %s202, [#allocation15]
    $region65: #{aenet_forward.1} parent=1 // pred_fallthru
      _
    // Predicated region
    $region66: #{aenet_forward.1} parent=1 // pred_check
      _
    $region67: #{aenet_forward.1} parent=1 // pred_check_branch
      %206 = sbr.rel (0) target = $region69
    $region68: #{aenet_forward.1} parent=1 // pred_region
      _
    $region69: #{aenet_forward.1} parent=1 // pred_fallthru
      _
    // Predicated region
    $region70: #{aenet_forward.1} parent=1 // pred_check
      _
    $region71: #{aenet_forward.1} parent=1 // pred_check_branch
      %208 = sbr.rel (0) target = $region73
    $region72: #{aenet_forward.1} parent=1 // pred_region
      %s210 = ssub.s32 16, 16
      %211 = vsyncadd [#allocation18], %s210
      %s213 = sshll.u32 [#allocation17], 4
      %s214 = int_to_ptr.vmem [resolvable:$true] %s213
      %216 = dma.hbm_to_vmem [thread:$0]  %s35, 16, %s214, [#allocation18]
    $region73: #{aenet_forward.1} parent=1 // pred_fallthru
      _
    // Predicated region
    $region74: #{aenet_forward.1} parent=1 // pred_check
      _
    $region75: #{aenet_forward.1} parent=1 // pred_check_branch
      %218 = sbr.rel (0) target = $region77
    $region76: #{aenet_forward.1} parent=1 // pred_region
      %s220 = ssub.s32 16, 16
      %221 = vsyncadd [#allocation18], %s220
      %s223 = sshll.u32 [#allocation19], 4
      %s224 = int_to_ptr.vmem [resolvable:$true] %s223
      %226 = dma.hbm_to_vmem [thread:$0]  %s37, 16, %s224, [#allocation18]
    $region77: #{aenet_forward.1} parent=1 // pred_fallthru
      _
    // Predicated region
    $region78: #{aenet_forward.1} parent=1 // pred_check
      _
    $region79: #{aenet_forward.1} parent=1 // pred_check_branch
      %228 = sbr.rel (0) target = $region81
    $region80: #{aenet_forward.1} parent=1 // pred_region
      _
    $region81: #{aenet_forward.1} parent=1 // pred_fallthru
      _
    // Predicated region
    $region82: #{aenet_forward.1} parent=1 // pred_check
      _
    $region83: #{aenet_forward.1} parent=1 // pred_check_branch
      %230 = sbr.rel (0) target = $region85
    $region84: #{aenet_forward.1} parent=1 // pred_region
      _
    $region85: #{aenet_forward.1} parent=1 // pred_fallthru
      _
    // Predicated region
    $region86: #{aenet_forward.1} parent=1 // pred_check
      _
    $region87: #{aenet_forward.1} parent=1 // pred_check_branch
      %232 = sbr.rel (0) target = $region89
    $region88: #{aenet_forward.1} parent=1 // pred_region
      _
    $region89: #{aenet_forward.1} parent=1 // pred_fallthru
      _
    // Predicated region
    $region90: #{aenet_forward.1} parent=1 // pred_check
      _
    $region91: #{aenet_forward.1} parent=1 // pred_check_branch
      %234 = sbr.rel (0) target = $region93
    $region92: #{aenet_forward.1} parent=1 // pred_region
      %s236 = ssub.s32 4096, 4096
      %237 = vsyncadd [#allocation21], %s236
      %s238 = sshll.u32 [#allocation20], 4
      %s239 = int_to_ptr.vmem [resolvable:$true] %s238
      %244 = dma.hbm_to_vmem [thread:$0]  %s45, 4096, %s239, [#allocation21], 128, 128, 8
    $region93: #{aenet_forward.1} parent=1 // pred_fallthru
      _
    // Predicated region
    $region94: #{aenet_forward.1} parent=1 // pred_check
      _
    $region95: #{aenet_forward.1} parent=1 // pred_check_branch
      %246 = sbr.rel (0) target = $region97
    $region96: #{aenet_forward.1} parent=1 // pred_region
      _
    $region97: #{aenet_forward.1} parent=1 // pred_fallthru
      _
    // Predicated region
    $region98: #{aenet_forward.1} parent=1 // pred_check
      _
    $region99: #{aenet_forward.1} parent=1 // pred_check_branch
      %248 = sbr.rel (0) target = $region101
    $region100: #{aenet_forward.1} parent=1 // pred_region
      _
    $region101: #{aenet_forward.1} parent=1 // pred_fallthru
      _
    // Predicated region
    $region102: #{aenet_forward.1} parent=1 // pred_check
      _
    $region103: #{aenet_forward.1} parent=1 // pred_check_branch
      %250 = sbr.rel (0) target = $region105
    $region104: #{aenet_forward.1} parent=1 // pred_region
      %s252 = ssub.s32 4096, 4096
      %253 = vsyncadd [#allocation21], %s252
      %s254 = sshll.u32 [#allocation22], 4
      %s255 = int_to_ptr.vmem [resolvable:$true] %s254
      %260 = dma.hbm_to_vmem [thread:$0]  %s51, 4096, %s255, [#allocation21], 128, 128, 8
    $region105: #{aenet_forward.1} parent=1 // pred_fallthru
      _
    // Predicated region
    $region106: #{aenet_forward.1} parent=1 // pred_check
      _
    $region107: #{aenet_forward.1} parent=1 // pred_check_branch
      %262 = sbr.rel (0) target = $region109
    $region108: #{aenet_forward.1} parent=1 // pred_region
      _
    $region109: #{aenet_forward.1} parent=1 // pred_fallthru
      _
    // Predicated region
    $region110: #{aenet_forward.1} parent=1 // pred_check
      _
    $region111: #{aenet_forward.1} parent=1 // pred_check_branch
      %264 = sbr.rel (0) target = $region113
    $region112: #{aenet_forward.1} parent=1 // pred_region
      _
    $region113: #{aenet_forward.1} parent=1 // pred_fallthru
      _
    // Predicated region
    $region114: #{aenet_forward.1} parent=1 // pred_check
      _
    $region115: #{aenet_forward.1} parent=1 // pred_check_branch
      %266 = sbr.rel (0) target = $region117
    $region116: #{aenet_forward.1} parent=1 // pred_region
      %s268 = ssub.s32 4096, 4096
      %269 = vsyncadd [#allocation24], %s268
      %s270 = sshll.u32 [#allocation23], 4
      %s271 = int_to_ptr.vmem [resolvable:$true] %s270
      %276 = dma.hbm_to_vmem [thread:$0]  %s57, 4096, %s271, [#allocation24], 128, 128, 8
    $region117: #{aenet_forward.1} parent=1 // pred_fallthru
      _
    // Predicated region
    $region118: #{aenet_forward.1} parent=1 // pred_check
      _
    $region119: #{aenet_forward.1} parent=1 // pred_check_branch
      %278 = sbr.rel (0) target = $region121
    $region120: #{aenet_forward.1} parent=1 // pred_region
      _
    $region121: #{aenet_forward.1} parent=1 // pred_fallthru
      _
    // Predicated region
    $region122: #{aenet_forward.1} parent=1 // pred_check
      _
    $region123: #{aenet_forward.1} parent=1 // pred_check_branch
      %280 = sbr.rel (0) target = $region125
    $region124: #{aenet_forward.1} parent=1 // pred_region
      _
    $region125: #{aenet_forward.1} parent=1 // pred_fallthru
      _
    // Predicated region
    $region126: #{aenet_forward.1} parent=1 // pred_check
      _
    $region127: #{aenet_forward.1} parent=1 // pred_check_branch
      %282 = sbr.rel (0) target = $region129
    $region128: #{aenet_forward.1} parent=1 // pred_region
      %s284 = ssub.s32 4096, 4096
      %285 = vsyncadd [#allocation24], %s284
      %s286 = sshll.u32 [#allocation25], 4
      %s287 = int_to_ptr.vmem [resolvable:$true] %s286
      %292 = dma.hbm_to_vmem [thread:$0]  %s63, 4096, %s287, [#allocation24], 128, 128, 8
    $region129: #{aenet_forward.1} parent=1 // pred_fallthru
      _
    // Predicated region
    $region130: #{aenet_forward.1} parent=1 // pred_check
      _
    $region131: #{aenet_forward.1} parent=1 // pred_check_branch
      %294 = sbr.rel (0) target = $region133
    $region132: #{aenet_forward.1} parent=1 // pred_region
      _
    $region133: #{aenet_forward.1} parent=1 // pred_fallthru
      _
    // Predicated region
    $region134: #{aenet_forward.1} parent=1 // pred_check
      _
    $region135: #{aenet_forward.1} parent=1 // pred_check_branch
      %296 = sbr.rel (0) target = $region137
    $region136: #{aenet_forward.1} parent=1 // pred_region
      _
    $region137: #{aenet_forward.1} parent=1 // pred_fallthru
      _
    // Predicated region
    $region138: #{aenet_forward.1} parent=1 // pred_check
      _
    $region139: #{aenet_forward.1} parent=1 // pred_check_branch
      %298 = sbr.rel (0) target = $region141
    $region140: #{aenet_forward.1} parent=1 // pred_region
      %s300 = ssub.s32 2048, 2048
      %301 = vsyncadd [#allocation27], %s300
      %s302 = sshll.u32 [#allocation26], 4
      %s303 = int_to_ptr.vmem [resolvable:$true] %s302
      %308 = dma.hbm_to_vmem [thread:$0]  %s69, 2048, %s303, [#allocation27], 64, 64, 4
    $region141: #{aenet_forward.1} parent=1 // pred_fallthru
      _
    // Predicated region
    $region142: #{aenet_forward.1} parent=1 // pred_check
      _
    $region143: #{aenet_forward.1} parent=1 // pred_check_branch
      %310 = sbr.rel (0) target = $region145
    $region144: #{aenet_forward.1} parent=1 // pred_region
      _
    $region145: #{aenet_forward.1} parent=1 // pred_fallthru
      _
    // Predicated region
    $region146: #{aenet_forward.1} parent=1 // pred_check
      _
    $region147: #{aenet_forward.1} parent=1 // pred_check_branch
      %312 = sbr.rel (0) target = $region149
    $region148: #{aenet_forward.1} parent=1 // pred_region
      %313 = dma.done [#allocation3], 2048
    $region149: #{aenet_forward.1} parent=1 // pred_fallthru
      _
    // Predicated region
    $region150: #{aenet_forward.1} parent=1 // pred_check
      _
    $region151: #{aenet_forward.1} parent=1 // pred_check_branch
      %315 = sbr.rel (0) target = $region153
    $region152: #{aenet_forward.1} parent=1 // pred_region
      %316 = dma.done [#allocation6], 4096
    $region153: #{aenet_forward.1} parent=1 // pred_fallthru
      _
    // Predicated region
    $region154: #{aenet_forward.1} parent=1 // pred_check
      _
    $region155: #{aenet_forward.1} parent=1 // pred_check_branch
      %318 = sbr.rel (0) target = $region157
    $region156: #{aenet_forward.1} parent=1 // pred_region
      %319 = dma.done [#allocation6], 4096
    $region157: #{aenet_forward.1} parent=1 // pred_fallthru
      _
    // Predicated region
    $region158: #{aenet_forward.1} parent=1 // pred_check
      _
    $region159: #{aenet_forward.1} parent=1 // pred_check_branch
      %321 = sbr.rel (0) target = $region161
    $region160: #{aenet_forward.1} parent=1 // pred_region
      %322 = dma.done [#allocation9], 4096
    $region161: #{aenet_forward.1} parent=1 // pred_fallthru
      _
    // Predicated region
    $region162: #{aenet_forward.1} parent=1 // pred_check
      _
    $region163: #{aenet_forward.1} parent=1 // pred_check_branch
      %324 = sbr.rel (0) target = $region165
    $region164: #{aenet_forward.1} parent=1 // pred_region
      %325 = dma.done [#allocation9], 32
    $region165: #{aenet_forward.1} parent=1 // pred_fallthru
      _
    // Predicated region
    $region166: #{aenet_forward.1} parent=1 // pred_check
      _
    $region167: #{aenet_forward.1} parent=1 // pred_check_branch
      %327 = sbr.rel (0) target = $region169
    $region168: #{aenet_forward.1} parent=1 // pred_region
      %328 = dma.done [#allocation12], 32
    $region169: #{aenet_forward.1} parent=1 // pred_fallthru
      _
    // Predicated region
    $region170: #{aenet_forward.1} parent=1 // pred_check
      _
    $region171: #{aenet_forward.1} parent=1 // pred_check_branch
      %330 = sbr.rel (0) target = $region173
    $region172: #{aenet_forward.1} parent=1 // pred_region
      %331 = dma.done [#allocation12], 4096
    $region173: #{aenet_forward.1} parent=1 // pred_fallthru
      _
    // Predicated region
    $region174: #{aenet_forward.1} parent=1 // pred_check
      _
    $region175: #{aenet_forward.1} parent=1 // pred_check_branch
      %333 = sbr.rel (0) target = $region177
    $region176: #{aenet_forward.1} parent=1 // pred_region
      %334 = dma.done [#allocation15], 32
    $region177: #{aenet_forward.1} parent=1 // pred_fallthru
      _
    // Predicated region
    $region178: #{aenet_forward.1} parent=1 // pred_check
      _
    $region179: #{aenet_forward.1} parent=1 // pred_check_branch
      %336 = sbr.rel (0) target = $region181
    $region180: #{aenet_forward.1} parent=1 // pred_region
      %337 = dma.done [#allocation15], 32
    $region181: #{aenet_forward.1} parent=1 // pred_fallthru
      _
    // Predicated region
    $region182: #{aenet_forward.1} parent=1 // pred_check
      _
    $region183: #{aenet_forward.1} parent=1 // pred_check_branch
      %339 = sbr.rel (0) target = $region185
    $region184: #{aenet_forward.1} parent=1 // pred_region
      %340 = dma.done [#allocation18], 16
    $region185: #{aenet_forward.1} parent=1 // pred_fallthru
      _
    // Predicated region
    $region186: #{aenet_forward.1} parent=1 // pred_check
      _
    $region187: #{aenet_forward.1} parent=1 // pred_check_branch
      %342 = sbr.rel (0) target = $region189
    $region188: #{aenet_forward.1} parent=1 // pred_region
      %343 = dma.done [#allocation18], 16
    $region189: #{aenet_forward.1} parent=1 // pred_fallthru
      _
    // Predicated region
    $region190: #{aenet_forward.1} parent=1 // pred_check
      _
    $region191: #{aenet_forward.1} parent=1 // pred_check_branch
      %345 = sbr.rel (0) target = $region193
    $region192: #{aenet_forward.1} parent=1 // pred_region
      %346 = dma.done [#allocation21], 4096
    $region193: #{aenet_forward.1} parent=1 // pred_fallthru
      _
    // Predicated region
    $region194: #{aenet_forward.1} parent=1 // pred_check
      _
    $region195: #{aenet_forward.1} parent=1 // pred_check_branch
      %348 = sbr.rel (0) target = $region197
    $region196: #{aenet_forward.1} parent=1 // pred_region
      %349 = dma.done [#allocation21], 4096
    $region197: #{aenet_forward.1} parent=1 // pred_fallthru
      _
    // Predicated region
    $region198: #{aenet_forward.1} parent=1 // pred_check
      _
    $region199: #{aenet_forward.1} parent=1 // pred_check_branch
      %351 = sbr.rel (0) target = $region201
    $region200: #{aenet_forward.1} parent=1 // pred_region
      %352 = dma.done [#allocation24], 4096
    $region201: #{aenet_forward.1} parent=1 // pred_fallthru
      _
    // Predicated region
    $region202: #{aenet_forward.1} parent=1 // pred_check
      _
    $region203: #{aenet_forward.1} parent=1 // pred_check_branch
      %354 = sbr.rel (0) target = $region205
    $region204: #{aenet_forward.1} parent=1 // pred_region
      %355 = dma.done [#allocation24], 4096
    $region205: #{aenet_forward.1} parent=1 // pred_fallthru
      _
    // Predicated region
    $region206: #{aenet_forward.1} parent=1 // pred_check
      _
    $region207: #{aenet_forward.1} parent=1 // pred_check_branch
      %357 = sbr.rel (0) target = $region209
    $region208: #{aenet_forward.1} parent=1 // pred_region
      %358 = dma.done [#allocation27], 2048
    $region209: #{aenet_forward.1} parent=1 // pred_fallthru
      _
    %v360 = vld [vmem:[%s1] sm:$0xff]
    %v361 = vld [vmem:[%s1 + $0x8] sm:$0xff]
    %v362 = vld [vmem:[%s1 + $0x10] sm:$0xff]
    %v363 = vld [vmem:[%s1 + $0x18] sm:$0xff]
    %v364 = vld [vmem:[%s1 + $0x20] sm:$0xff]
    %v365 = vld [vmem:[%s1 + $0x28] sm:$0xff]
    %v366 = vld [vmem:[%s1 + $0x30] sm:$0xff]
    %v367 = vld [vmem:[%s1 + $0x38] sm:$0xff]
    %v368 = vld [vmem:[%s1 + $0x40] sm:$0xff]
    %v369 = vld [vmem:[%s1 + $0x48] sm:$0xff]
    %v370 = vld [vmem:[%s1 + $0x50] sm:$0xff]
    %v371 = vld [vmem:[%s1 + $0x58] sm:$0xff]
    %v372 = vld [vmem:[%s1 + $0x60] sm:$0xff]
    %v373 = vld [vmem:[%s1 + $0x68] sm:$0xff]
    %v374 = vld [vmem:[%s1 + $0x70] sm:$0xff]
    %v375 = vld [vmem:[%s1 + $0x78] sm:$0xff]
    %v376 = vld [vmem:[#allocation2] sm:$0xff]
    %v377 = vld [vmem:[#allocation2 + $0x8] sm:$0xff]
    %v378 = vld [vmem:[#allocation2 + $0x10] sm:$0xff]
    %v379 = vld [vmem:[#allocation2 + $0x18] sm:$0xff]
    %v380 = vld [vmem:[#allocation2 + $0x20] sm:$0xff]
    %v381 = vld [vmem:[#allocation2 + $0x28] sm:$0xff]
    %v382 = vld [vmem:[#allocation2 + $0x30] sm:$0xff]
    %v383 = vld [vmem:[#allocation2 + $0x38] sm:$0xff]
    %v384 = vld [vmem:[#allocation2 + $0x40] sm:$0xff]
    %v385 = vld [vmem:[#allocation2 + $0x48] sm:$0xff]
    %v386 = vld [vmem:[#allocation2 + $0x50] sm:$0xff]
    %v387 = vld [vmem:[#allocation2 + $0x58] sm:$0xff]
    %v388 = vld [vmem:[#allocation2 + $0x60] sm:$0xff]
    %v389 = vld [vmem:[#allocation2 + $0x68] sm:$0xff]
    %v390 = vld [vmem:[#allocation2 + $0x70] sm:$0xff]
    %v391 = vld [vmem:[#allocation2 + $0x78] sm:$0xff]
    %v392 = vpack.c.bf16 %v361, %v360
    %v393 = vpack.c.bf16 %v363, %v362
    %v394 = vpack.c.bf16 %v365, %v364
    %v395 = vpack.c.bf16 %v367, %v366
    %v396 = vpack.c.bf16 %v369, %v368
    %v397 = vpack.c.bf16 %v371, %v370
    %v398 = vpack.c.bf16 %v373, %v372
    %v399 = vpack.c.bf16 %v375, %v374
    %v416 = vunpack.c.l.b16 %v376
    %v417 = vunpack.c.h.b16 %v376
    %v418 = vunpack.c.l.b16 %v377
    %v419 = vunpack.c.h.b16 %v377
    %v420 = vunpack.c.l.b16 %v378
    %v421 = vunpack.c.h.b16 %v378
    %v422 = vunpack.c.l.b16 %v379
    %v423 = vunpack.c.h.b16 %v379
    %v424 = vunpack.c.l.b16 %v380
    %v425 = vunpack.c.h.b16 %v380
    %v426 = vunpack.c.l.b16 %v381
    %v427 = vunpack.c.h.b16 %v381
    %v428 = vunpack.c.l.b16 %v382
    %v429 = vunpack.c.h.b16 %v382
    %v430 = vunpack.c.l.b16 %v383
    %v431 = vunpack.c.h.b16 %v383
    %v432 = vunpack.c.l.b16 %v384
    %v433 = vunpack.c.h.b16 %v384
    %v434 = vunpack.c.l.b16 %v385
    %v435 = vunpack.c.h.b16 %v385
    %v436 = vunpack.c.l.b16 %v386
    %v437 = vunpack.c.h.b16 %v386
    %v438 = vunpack.c.l.b16 %v387
    %v439 = vunpack.c.h.b16 %v387
    %v440 = vunpack.c.l.b16 %v388
    %v441 = vunpack.c.h.b16 %v388
    %v442 = vunpack.c.l.b16 %v389
    %v443 = vunpack.c.h.b16 %v389
    %v444 = vunpack.c.l.b16 %v390
    %v445 = vunpack.c.h.b16 %v390
    %v446 = vunpack.c.l.b16 %v391
    %v447 = vunpack.c.h.b16 %v391
    %v448 = vpack.c.b16 %v418, %v416
    %v449 = vpack.c.b16 %v419, %v417
    %v450 = vpack.c.b16 %v422, %v420
    %v451 = vpack.c.b16 %v423, %v421
    %v452 = vpack.c.b16 %v426, %v424
    %v453 = vpack.c.b16 %v427, %v425
    %v454 = vpack.c.b16 %v430, %v428
    %v455 = vpack.c.b16 %v431, %v429
    %v456 = vpack.c.b16 %v434, %v432
    %v457 = vpack.c.b16 %v435, %v433
    %v458 = vpack.c.b16 %v438, %v436
    %v459 = vpack.c.b16 %v439, %v437
    %v460 = vpack.c.b16 %v442, %v440
    %v461 = vpack.c.b16 %v443, %v441
    %v462 = vpack.c.b16 %v446, %v444
    %v463 = vpack.c.b16 %v447, %v445
    %480 = vmatprep.subr.bf16.mxu0 %v463
    %481 = vmatpush1.bf16.msra.mxu0 %v462
    %482 = vmatprep.subr.bf16.mxu0 %v461
    %483 = vmatpush1.bf16.msra.mxu0 %v460
    %484 = vmatprep.subr.bf16.mxu0 %v459
    %485 = vmatpush1.bf16.msra.mxu0 %v458
    %486 = vmatprep.subr.bf16.mxu0 %v457
    %487 = vmatpush1.bf16.msra.mxu0 %v456
    %488 = vmatprep.subr.bf16.mxu0 %v455
    %489 = vmatpush1.bf16.msra.mxu0 %v454
    %490 = vmatprep.subr.bf16.mxu0 %v453
    %491 = vmatpush1.bf16.msra.mxu0 %v452
    %492 = vmatprep.subr.bf16.mxu0 %v451
    %493 = vmatpush1.bf16.msra.mxu0 %v450
    %494 = vmatprep.subr.bf16.mxu0 %v449
    %495 = vmatpush1.bf16.msra.mxu0 %v448
    %496 = vmatprep.subr.bf16.mxu0 0
    %497 = vmatpush2.bf16.msra.mxu0 0
    %498 = vmatprep.subr.bf16.mxu0 0
    %499 = vmatpush2.bf16.msra.mxu0 0
    %500 = vmatprep.subr.bf16.mxu0 0
    %501 = vmatpush2.bf16.msra.mxu0 0
    %502 = vmatprep.subr.bf16.mxu0 0
    %503 = vmatpush2.bf16.msra.mxu0 0
    %504 = vmatprep.subr.bf16.mxu0 0
    %505 = vmatpush2.bf16.msra.mxu0 0
    %506 = vmatprep.subr.bf16.mxu0 0
    %507 = vmatpush2.bf16.msra.mxu0 0
    %508 = vmatprep.subr.bf16.mxu0 0
    %509 = vmatpush2.bf16.msra.mxu0 0
    %510 = vmatprep.subr.bf16.mxu0 0
    %511 = vmatpush2.bf16.msra.mxu0 0
    %512 = vmatprep.mubr.bf16.mxu0 0
    %513 = vmatmul.mubr.bf16.gmra.mxu0 %v392
    %v514 = vpop.f32.mrf.mxu0
    %v515 = vadd.f32 0.0, %v514
    %v516 = vpop.f32.mrf.mxu0
    %v517 = vadd.f32 0.0, %v516
    %v518 = vpop.f32.mrf.mxu0
    %v519 = vadd.f32 0.0, %v518
    %v520 = vpop.f32.mrf.mxu0
    %v521 = vadd.f32 0.0, %v520
    %522 = vmatprep.mubr.bf16.mxu0 0
    %523 = vmatmul.mubr.bf16.gmra.mxu0 %v393
    %v524 = vpop.f32.mrf.mxu0
    %v525 = vadd.f32 0.0, %v524
    %v526 = vpop.f32.mrf.mxu0
    %v527 = vadd.f32 0.0, %v526
    %v528 = vpop.f32.mrf.mxu0
    %v529 = vadd.f32 0.0, %v528
    %v530 = vpop.f32.mrf.mxu0
    %v531 = vadd.f32 0.0, %v530
    %532 = vmatprep.mubr.bf16.mxu0 0
    %533 = vmatmul.mubr.bf16.gmra.mxu0 %v394
    %v534 = vpop.f32.mrf.mxu0
    %v535 = vadd.f32 0.0, %v534
    %v536 = vpop.f32.mrf.mxu0
    %v537 = vadd.f32 0.0, %v536
    %v538 = vpop.f32.mrf.mxu0
    %v539 = vadd.f32 0.0, %v538
    %v540 = vpop.f32.mrf.mxu0
    %v541 = vadd.f32 0.0, %v540
    %542 = vmatprep.mubr.bf16.mxu0 0
    %543 = vmatmul.mubr.bf16.gmra.mxu0 %v395
    %v544 = vpop.f32.mrf.mxu0
    %v545 = vadd.f32 0.0, %v544
    %v546 = vpop.f32.mrf.mxu0
    %v547 = vadd.f32 0.0, %v546
    %v548 = vpop.f32.mrf.mxu0
    %v549 = vadd.f32 0.0, %v548
    %v550 = vpop.f32.mrf.mxu0
    %v551 = vadd.f32 0.0, %v550
    %552 = vmatprep.mubr.bf16.mxu0 0
    %553 = vmatmul.mubr.bf16.gmra.mxu0 %v396
    %v554 = vpop.f32.mrf.mxu0
    %v555 = vadd.f32 0.0, %v554
    %v556 = vpop.f32.mrf.mxu0
    %v557 = vadd.f32 0.0, %v556
    %v558 = vpop.f32.mrf.mxu0
    %v559 = vadd.f32 0.0, %v558
    %v560 = vpop.f32.mrf.mxu0
    %v561 = vadd.f32 0.0, %v560
    %562 = vmatprep.mubr.bf16.mxu0 0
    %563 = vmatmul.mubr.bf16.gmra.mxu0 %v397
    %v564 = vpop.f32.mrf.mxu0
    %v565 = vadd.f32 0.0, %v564
    %v566 = vpop.f32.mrf.mxu0
    %v567 = vadd.f32 0.0, %v566
    %v568 = vpop.f32.mrf.mxu0
    %v569 = vadd.f32 0.0, %v568
    %v570 = vpop.f32.mrf.mxu0
    %v571 = vadd.f32 0.0, %v570
    %572 = vmatprep.mubr.bf16.mxu0 0
    %573 = vmatmul.mubr.bf16.gmra.mxu0 %v398
    %v574 = vpop.f32.mrf.mxu0
    %v575 = vadd.f32 0.0, %v574
    %v576 = vpop.f32.mrf.mxu0
    %v577 = vadd.f32 0.0, %v576
    %v578 = vpop.f32.mrf.mxu0
    %v579 = vadd.f32 0.0, %v578
    %v580 = vpop.f32.mrf.mxu0
    %v581 = vadd.f32 0.0, %v580
    %582 = vmatprep.mubr.bf16.mxu0 0
    %583 = vmatmul.mubr.bf16.gmra.mxu0 %v399
    %v584 = vpop.f32.mrf.mxu0
    %v585 = vadd.f32 0.0, %v584
    %v586 = vpop.f32.mrf.mxu0
    %v587 = vadd.f32 0.0, %v586
    %v588 = vpop.f32.mrf.mxu0
    %v589 = vadd.f32 0.0, %v588
    %v590 = vpop.f32.mrf.mxu0
    %v591 = vadd.f32 0.0, %v590
    %592 = vdwg.mxu0
    %v593 = vld [vmem:[%s5] sm:$0x3]
    %v594 = vld [vmem:[%s7] sm:$0x3]
    %v595 = vadd.f32 %v515, %v519
    %v596 = vadd.f32 %v595, %v525
    %v597 = vadd.f32 %v596, %v529
    %v598 = vadd.f32 %v597, %v535
    %v599 = vadd.f32 %v598, %v539
    %v600 = vadd.f32 %v599, %v545
    %v601 = vadd.f32 %v600, %v549
    %v602 = vadd.f32 %v601, %v555
    %v603 = vadd.f32 %v602, %v559
    %v604 = vadd.f32 %v603, %v565
    %v605 = vadd.f32 %v604, %v569
    %v606 = vadd.f32 %v605, %v575
    %v607 = vadd.f32 %v606, %v579
    %v608 = vadd.f32 %v607, %v585
    %v609 = vadd.f32 %v608, %v589
    %v610 = vrot.slane %v609, 4
    %v611 = vadd.f32 %v609, %v610
    %v612 = vrot.slane %v611, 2
    %v613 = vadd.f32 %v611, %v612
    %v614 = vrot.slane %v613, 1
    %v615 = vadd.f32 %v613, %v614
    %v616 = vadd.f32 %v517, %v521
    %v617 = vadd.f32 %v616, %v527
    %v618 = vadd.f32 %v617, %v531
    %v619 = vadd.f32 %v618, %v537
    %v620 = vadd.f32 %v619, %v541
    %v621 = vadd.f32 %v620, %v547
    %v622 = vadd.f32 %v621, %v551
    %v623 = vadd.f32 %v622, %v557
    %v624 = vadd.f32 %v623, %v561
    %v625 = vadd.f32 %v624, %v567
    %v626 = vadd.f32 %v625, %v571
    %v627 = vadd.f32 %v626, %v577
    %v628 = vadd.f32 %v627, %v581
    %v629 = vadd.f32 %v628, %v587
    %v630 = vadd.f32 %v629, %v591
    %v631 = vrot.slane %v630, 4
    %v632 = vadd.f32 %v630, %v631
    %v633 = vrot.slane %v632, 2
    %v634 = vadd.f32 %v632, %v633
    %v635 = vrot.slane %v634, 1
    %v636 = vadd.f32 %v634, %v635
    %v637 = vrcp.pop 128.0
    %v638 = vmul.f32 %v615, %v637
    %v639 = vmul.f32 %v636, %v637
    %v640 = vmul.f32 %v515, %v515
    %v641 = vmul.f32 %v517, %v517
    %v642 = vmul.f32 %v519, %v519
    %v643 = vmul.f32 %v521, %v521
    %v644 = vmul.f32 %v525, %v525
    %v645 = vmul.f32 %v527, %v527
    %v646 = vmul.f32 %v529, %v529
    %v647 = vmul.f32 %v531, %v531
    %v648 = vmul.f32 %v535, %v535
    %v649 = vmul.f32 %v537, %v537
    %v650 = vmul.f32 %v539, %v539
    %v651 = vmul.f32 %v541, %v541
    %v652 = vmul.f32 %v545, %v545
    %v653 = vmul.f32 %v547, %v547
    %v654 = vmul.f32 %v549, %v549
    %v655 = vmul.f32 %v551, %v551
    %v656 = vmul.f32 %v555, %v555
    %v657 = vmul.f32 %v557, %v557
    %v658 = vmul.f32 %v559, %v559
    %v659 = vmul.f32 %v561, %v561
    %v660 = vmul.f32 %v565, %v565
    %v661 = vmul.f32 %v567, %v567
    %v662 = vmul.f32 %v569, %v569
    %v663 = vmul.f32 %v571, %v571
    %v664 = vmul.f32 %v575, %v575
    %v665 = vmul.f32 %v577, %v577
    %v666 = vmul.f32 %v579, %v579
    %v667 = vmul.f32 %v581, %v581
    %v668 = vmul.f32 %v585, %v585
    %v669 = vmul.f32 %v587, %v587
    %v670 = vmul.f32 %v589, %v589
    %v671 = vmul.f32 %v591, %v591
    %v672 = vadd.f32 %v640, %v642
    %v673 = vadd.f32 %v672, %v644
    %v674 = vadd.f32 %v673, %v646
    %v675 = vadd.f32 %v674, %v648
    %v676 = vadd.f32 %v675, %v650
    %v677 = vadd.f32 %v676, %v652
    %v678 = vadd.f32 %v677, %v654
    %v679 = vadd.f32 %v678, %v656
    %v680 = vadd.f32 %v679, %v658
    %v681 = vadd.f32 %v680, %v660
    %v682 = vadd.f32 %v681, %v662
    %v683 = vadd.f32 %v682, %v664
    %v684 = vadd.f32 %v683, %v666
    %v685 = vadd.f32 %v684, %v668
    %v686 = vadd.f32 %v685, %v670
    %v687 = vrot.slane %v686, 4
    %v688 = vadd.f32 %v686, %v687
    %v689 = vrot.slane %v688, 2
    %v690 = vadd.f32 %v688, %v689
    %v691 = vrot.slane %v690, 1
    %v692 = vadd.f32 %v690, %v691
    %v693 = vadd.f32 %v641, %v643
    %v694 = vadd.f32 %v693, %v645
    %v695 = vadd.f32 %v694, %v647
    %v696 = vadd.f32 %v695, %v649
    %v697 = vadd.f32 %v696, %v651
    %v698 = vadd.f32 %v697, %v653
    %v699 = vadd.f32 %v698, %v655
    %v700 = vadd.f32 %v699, %v657
    %v701 = vadd.f32 %v700, %v659
    %v702 = vadd.f32 %v701, %v661
    %v703 = vadd.f32 %v702, %v663
    %v704 = vadd.f32 %v703, %v665
    %v705 = vadd.f32 %v704, %v667
    %v706 = vadd.f32 %v705, %v669
    %v707 = vadd.f32 %v706, %v671
    %v708 = vrot.slane %v707, 4
    %v709 = vadd.f32 %v707, %v708
    %v710 = vrot.slane %v709, 2
    %v711 = vadd.f32 %v709, %v710
    %v712 = vrot.slane %v711, 1
    %v713 = vadd.f32 %v711, %v712
    %v714 = vmul.f32 %v692, %v637
    %v715 = vmul.f32 %v713, %v637
    %v716 = vmul.f32 %v638, %v638
    %v717 = vmul.f32 %v639, %v639
    %v718 = vsub.f32 %v714, %v716
    %v719 = vsub.f32 %v715, %v717
    %v720 = vmax.f32 %v718, 0.0
    %v721 = vmax.f32 %v719, 0.0
    %v722 = vadd.f32 %v720, 0.001
    %v723 = vadd.f32 %v721, 0.001
    %v724 = vrsqrt.pop %v722
    %v725 = vrsqrt.pop %v723
    %v728 = vcombine.low %v724, %v725
    %v730 = vunpack.c.l.s4 1966171168
    %v731 = vunpack.c.0.s8 %v730
    %v732 = vlaneseq
    %v733 = vshrl.u32 %v732, 7
    %v734 = vsub.s32 %v731, %v733
    %v735 = vrot.slane %v728, %v734
    %v737 = vunpack.c.l.s4 1966171168
    %v738 = vunpack.c.0.s8 %v737
    %v739 = vlaneseq
    %v740 = vshrl.u32 %v739, 7
    %v741 = vsub.s32 %v738, %v740
    %v742 = vrot.slane %v735, %v741
    %v744 = vmul.f32 %v593, %v742
    %v746 = vlaneseq
    %v747 = vshrl.u32 %v746, 7
    %v748 = vsub.s32 0, %v747
    %v749 = vrot.slane %v744, %v748
    %v750 = vlaneseq
    %v751 = vshrl.u32 %v750, 7
    %v752 = vsub.s32 1, %v751
    %v753 = vrot.slane %v744, %v752
    %v756 = vmul.f32 %v638, %v749
    %v757 = vmul.f32 %v639, %v753
    %v760 = vcombine.low %v756, %v757
    %v762 = vunpack.c.l.s4 1966171168
    %v763 = vunpack.c.0.s8 %v762
    %v764 = vlaneseq
    %v765 = vshrl.u32 %v764, 7
    %v766 = vsub.s32 %v763, %v765
    %v767 = vrot.slane %v760, %v766
    %v769 = vunpack.c.l.s4 1966171168
    %v770 = vunpack.c.0.s8 %v769
    %v771 = vlaneseq
    %v772 = vshrl.u32 %v771, 7
    %v773 = vsub.s32 %v770, %v772
    %v774 = vrot.slane %v767, %v773
    %v776 = vsub.f32 %v594, %v774
    %v777 = vmul.f32 %v515, %v749
    %v778 = vmul.f32 %v517, %v753
    %v779 = vmul.f32 %v519, %v749
    %v780 = vmul.f32 %v521, %v753
    %v781 = vmul.f32 %v525, %v749
    %v782 = vmul.f32 %v527, %v753
    %v783 = vmul.f32 %v529, %v749
    %v784 = vmul.f32 %v531, %v753
    %v785 = vmul.f32 %v535, %v749
    %v786 = vmul.f32 %v537, %v753
    %v787 = vmul.f32 %v539, %v749
    %v788 = vmul.f32 %v541, %v753
    %v789 = vmul.f32 %v545, %v749
    %v790 = vmul.f32 %v547, %v753
    %v791 = vmul.f32 %v549, %v749
    %v792 = vmul.f32 %v551, %v753
    %v793 = vmul.f32 %v555, %v749
    %v794 = vmul.f32 %v557, %v753
    %v795 = vmul.f32 %v559, %v749
    %v796 = vmul.f32 %v561, %v753
    %v797 = vmul.f32 %v565, %v749
    %v798 = vmul.f32 %v567, %v753
    %v799 = vmul.f32 %v569, %v749
    %v800 = vmul.f32 %v571, %v753
    %v801 = vmul.f32 %v575, %v749
    %v802 = vmul.f32 %v577, %v753
    %v803 = vmul.f32 %v579, %v749
    %v804 = vmul.f32 %v581, %v753
    %v805 = vmul.f32 %v585, %v749
    %v806 = vmul.f32 %v587, %v753
    %v807 = vmul.f32 %v589, %v749
    %v808 = vmul.f32 %v591, %v753
    %v810 = vlaneseq
    %v811 = vshrl.u32 %v810, 7
    %v812 = vsub.s32 0, %v811
    %v813 = vrot.slane %v776, %v812
    %v814 = vlaneseq
    %v815 = vshrl.u32 %v814, 7
    %v816 = vsub.s32 1, %v815
    %v817 = vrot.slane %v776, %v816
    %v820 = vadd.f32 %v777, %v813
    %v821 = vadd.f32 %v778, %v817
    %v822 = vadd.f32 %v779, %v813
    %v823 = vadd.f32 %v780, %v817
    %v824 = vadd.f32 %v781, %v813
    %v825 = vadd.f32 %v782, %v817
    %v826 = vadd.f32 %v783, %v813
    %v827 = vadd.f32 %v784, %v817
    %v828 = vadd.f32 %v785, %v813
    %v829 = vadd.f32 %v786, %v817
    %v830 = vadd.f32 %v787, %v813
    %v831 = vadd.f32 %v788, %v817
    %v832 = vadd.f32 %v789, %v813
    %v833 = vadd.f32 %v790, %v817
    %v834 = vadd.f32 %v791, %v813
    %v835 = vadd.f32 %v792, %v817
    %v836 = vadd.f32 %v793, %v813
    %v837 = vadd.f32 %v794, %v817
    %v838 = vadd.f32 %v795, %v813
    %v839 = vadd.f32 %v796, %v817
    %v840 = vadd.f32 %v797, %v813
    %v841 = vadd.f32 %v798, %v817
    %v842 = vadd.f32 %v799, %v813
    %v843 = vadd.f32 %v800, %v817
    %v844 = vadd.f32 %v801, %v813
    %v845 = vadd.f32 %v802, %v817
    %v846 = vadd.f32 %v803, %v813
    %v847 = vadd.f32 %v804, %v817
    %v848 = vadd.f32 %v805, %v813
    %v849 = vadd.f32 %v806, %v817
    %v850 = vadd.f32 %v807, %v813
    %v851 = vadd.f32 %v808, %v817
    %v852 = vmax.f32 %v820, 0.0
    %v853 = vmax.f32 %v821, 0.0
    %v854 = vmax.f32 %v822, 0.0
    %v855 = vmax.f32 %v823, 0.0
    %v856 = vmax.f32 %v824, 0.0
    %v857 = vmax.f32 %v825, 0.0
    %v858 = vmax.f32 %v826, 0.0
    %v859 = vmax.f32 %v827, 0.0
    %v860 = vmax.f32 %v828, 0.0
    %v861 = vmax.f32 %v829, 0.0
    %v862 = vmax.f32 %v830, 0.0
    %v863 = vmax.f32 %v831, 0.0
    %v864 = vmax.f32 %v832, 0.0
    %v865 = vmax.f32 %v833, 0.0
    %v866 = vmax.f32 %v834, 0.0
    %v867 = vmax.f32 %v835, 0.0
    %v868 = vmax.f32 %v836, 0.0
    %v869 = vmax.f32 %v837, 0.0
    %v870 = vmax.f32 %v838, 0.0
    %v871 = vmax.f32 %v839, 0.0
    %v872 = vmax.f32 %v840, 0.0
    %v873 = vmax.f32 %v841, 0.0
    %v874 = vmax.f32 %v842, 0.0
    %v875 = vmax.f32 %v843, 0.0
    %v876 = vmax.f32 %v844, 0.0
    %v877 = vmax.f32 %v845, 0.0
    %v878 = vmax.f32 %v846, 0.0
    %v879 = vmax.f32 %v847, 0.0
    %v880 = vmax.f32 %v848, 0.0
    %v881 = vmax.f32 %v849, 0.0
    %v882 = vmax.f32 %v850, 0.0
    %v883 = vmax.f32 %v851, 0.0
    %v884 = vld [vmem:[#allocation5] sm:$0xff]
    %v885 = vld [vmem:[#allocation5 + $0x8] sm:$0xff]
    %v886 = vld [vmem:[#allocation5 + $0x10] sm:$0xff]
    %v887 = vld [vmem:[#allocation5 + $0x18] sm:$0xff]
    %v888 = vld [vmem:[#allocation5 + $0x20] sm:$0xff]
    %v889 = vld [vmem:[#allocation5 + $0x28] sm:$0xff]
    %v890 = vld [vmem:[#allocation5 + $0x30] sm:$0xff]
    %v891 = vld [vmem:[#allocation5 + $0x38] sm:$0xff]
    %v892 = vld [vmem:[#allocation5 + $0x40] sm:$0xff]
    %v893 = vld [vmem:[#allocation5 + $0x48] sm:$0xff]
    %v894 = vld [vmem:[#allocation5 + $0x50] sm:$0xff]
    %v895 = vld [vmem:[#allocation5 + $0x58] sm:$0xff]
    %v896 = vld [vmem:[#allocation5 + $0x60] sm:$0xff]
    %v897 = vld [vmem:[#allocation5 + $0x68] sm:$0xff]
    %v898 = vld [vmem:[#allocation5 + $0x70] sm:$0xff]
    %v899 = vld [vmem:[#allocation5 + $0x78] sm:$0xff]
    %v900 = vld [vmem:[#allocation5 + $0x80] sm:$0xff]
    %v901 = vld [vmem:[#allocation5 + $0x88] sm:$0xff]
    %v902 = vld [vmem:[#allocation5 + $0x90] sm:$0xff]
    %v903 = vld [vmem:[#allocation5 + $0x98] sm:$0xff]
    %v904 = vld [vmem:[#allocation5 + $0xa0] sm:$0xff]
    %v905 = vld [vmem:[#allocation5 + $0xa8] sm:$0xff]
    %v906 = vld [vmem:[#allocation5 + $0xb0] sm:$0xff]
    %v907 = vld [vmem:[#allocation5 + $0xb8] sm:$0xff]
    %v908 = vld [vmem:[#allocation5 + $0xc0] sm:$0xff]
    %v909 = vld [vmem:[#allocation5 + $0xc8] sm:$0xff]
    %v910 = vld [vmem:[#allocation5 + $0xd0] sm:$0xff]
    %v911 = vld [vmem:[#allocation5 + $0xd8] sm:$0xff]
    %v912 = vld [vmem:[#allocation5 + $0xe0] sm:$0xff]
    %v913 = vld [vmem:[#allocation5 + $0xe8] sm:$0xff]
    %v914 = vld [vmem:[#allocation5 + $0xf0] sm:$0xff]
    %v915 = vld [vmem:[#allocation5 + $0xf8] sm:$0xff]
    %v916 = vpack.c.bf16 %v854, %v852
    %v917 = vpack.c.bf16 %v855, %v853
    %v918 = vpack.c.bf16 %v858, %v856
    %v919 = vpack.c.bf16 %v859, %v857
    %v920 = vpack.c.bf16 %v862, %v860
    %v921 = vpack.c.bf16 %v863, %v861
    %v922 = vpack.c.bf16 %v866, %v864
    %v923 = vpack.c.bf16 %v867, %v865
    %v924 = vpack.c.bf16 %v870, %v868
    %v925 = vpack.c.bf16 %v871, %v869
    %v926 = vpack.c.bf16 %v874, %v872
    %v927 = vpack.c.bf16 %v875, %v873
    %v928 = vpack.c.bf16 %v878, %v876
    %v929 = vpack.c.bf16 %v879, %v877
    %v930 = vpack.c.bf16 %v882, %v880
    %v931 = vpack.c.bf16 %v883, %v881
    %v964 = vunpack.c.l.b16 %v884
    %v965 = vunpack.c.h.b16 %v884
    %v966 = vunpack.c.l.b16 %v885
    %v967 = vunpack.c.h.b16 %v885
    %v968 = vunpack.c.l.b16 %v886
    %v969 = vunpack.c.h.b16 %v886
    %v970 = vunpack.c.l.b16 %v887
    %v971 = vunpack.c.h.b16 %v887
    %v972 = vunpack.c.l.b16 %v888
    %v973 = vunpack.c.h.b16 %v888
    %v974 = vunpack.c.l.b16 %v889
    %v975 = vunpack.c.h.b16 %v889
    %v976 = vunpack.c.l.b16 %v890
    %v977 = vunpack.c.h.b16 %v890
    %v978 = vunpack.c.l.b16 %v891
    %v979 = vunpack.c.h.b16 %v891
    %v980 = vunpack.c.l.b16 %v892
    %v981 = vunpack.c.h.b16 %v892
    %v982 = vunpack.c.l.b16 %v893
    %v983 = vunpack.c.h.b16 %v893
    %v984 = vunpack.c.l.b16 %v894
    %v985 = vunpack.c.h.b16 %v894
    %v986 = vunpack.c.l.b16 %v895
    %v987 = vunpack.c.h.b16 %v895
    %v988 = vunpack.c.l.b16 %v896
    %v989 = vunpack.c.h.b16 %v896
    %v990 = vunpack.c.l.b16 %v897
    %v991 = vunpack.c.h.b16 %v897
    %v992 = vunpack.c.l.b16 %v898
    %v993 = vunpack.c.h.b16 %v898
    %v994 = vunpack.c.l.b16 %v899
    %v995 = vunpack.c.h.b16 %v899
    %v996 = vunpack.c.l.b16 %v900
    %v997 = vunpack.c.h.b16 %v900
    %v998 = vunpack.c.l.b16 %v901
    %v999 = vunpack.c.h.b16 %v901
    %v1000 = vunpack.c.l.b16 %v902
    %v1001 = vunpack.c.h.b16 %v902
    %v1002 = vunpack.c.l.b16 %v903
    %v1003 = vunpack.c.h.b16 %v903
    %v1004 = vunpack.c.l.b16 %v904
    %v1005 = vunpack.c.h.b16 %v904
    %v1006 = vunpack.c.l.b16 %v905
    %v1007 = vunpack.c.h.b16 %v905
    %v1008 = vunpack.c.l.b16 %v906
    %v1009 = vunpack.c.h.b16 %v906
    %v1010 = vunpack.c.l.b16 %v907
    %v1011 = vunpack.c.h.b16 %v907
    %v1012 = vunpack.c.l.b16 %v908
    %v1013 = vunpack.c.h.b16 %v908
    %v1014 = vunpack.c.l.b16 %v909
    %v1015 = vunpack.c.h.b16 %v909
    %v1016 = vunpack.c.l.b16 %v910
    %v1017 = vunpack.c.h.b16 %v910
    %v1018 = vunpack.c.l.b16 %v911
    %v1019 = vunpack.c.h.b16 %v911
    %v1020 = vunpack.c.l.b16 %v912
    %v1021 = vunpack.c.h.b16 %v912
    %v1022 = vunpack.c.l.b16 %v913
    %v1023 = vunpack.c.h.b16 %v913
    %v1024 = vunpack.c.l.b16 %v914
    %v1025 = vunpack.c.h.b16 %v914
    %v1026 = vunpack.c.l.b16 %v915
    %v1027 = vunpack.c.h.b16 %v915
    %v1028 = vpack.c.b16 %v966, %v964
    %v1029 = vpack.c.b16 %v967, %v965
    %v1030 = vpack.c.b16 %v970, %v968
    %v1031 = vpack.c.b16 %v971, %v969
    %v1032 = vpack.c.b16 %v974, %v972
    %v1033 = vpack.c.b16 %v975, %v973
    %v1034 = vpack.c.b16 %v978, %v976
    %v1035 = vpack.c.b16 %v979, %v977
    %v1036 = vpack.c.b16 %v982, %v980
    %v1037 = vpack.c.b16 %v983, %v981
    %v1038 = vpack.c.b16 %v986, %v984
    %v1039 = vpack.c.b16 %v987, %v985
    %v1040 = vpack.c.b16 %v990, %v988
    %v1041 = vpack.c.b16 %v991, %v989
    %v1042 = vpack.c.b16 %v994, %v992
    %v1043 = vpack.c.b16 %v995, %v993
    %v1044 = vpack.c.b16 %v998, %v996
    %v1045 = vpack.c.b16 %v999, %v997
    %v1046 = vpack.c.b16 %v1002, %v1000
    %v1047 = vpack.c.b16 %v1003, %v1001
    %v1048 = vpack.c.b16 %v1006, %v1004
    %v1049 = vpack.c.b16 %v1007, %v1005
    %v1050 = vpack.c.b16 %v1010, %v1008
    %v1051 = vpack.c.b16 %v1011, %v1009
    %v1052 = vpack.c.b16 %v1014, %v1012
    %v1053 = vpack.c.b16 %v1015, %v1013
    %v1054 = vpack.c.b16 %v1018, %v1016
    %v1055 = vpack.c.b16 %v1019, %v1017
    %v1056 = vpack.c.b16 %v1022, %v1020
    %v1057 = vpack.c.b16 %v1023, %v1021
    %v1058 = vpack.c.b16 %v1026, %v1024
    %v1059 = vpack.c.b16 %v1027, %v1025
    %1092 = vmatprep.subr.bf16.mxu0 %v1043
    %1093 = vmatpush1.bf16.msra.mxu0 %v1042
    %1094 = vmatprep.subr.bf16.mxu0 %v1041
    %1095 = vmatpush1.bf16.msra.mxu0 %v1040
    %1096 = vmatprep.subr.bf16.mxu0 %v1039
    %1097 = vmatpush1.bf16.msra.mxu0 %v1038
    %1098 = vmatprep.subr.bf16.mxu0 %v1037
    %1099 = vmatpush1.bf16.msra.mxu0 %v1036
    %1100 = vmatprep.subr.bf16.mxu0 %v1035
    %1101 = vmatpush1.bf16.msra.mxu0 %v1034
    %1102 = vmatprep.subr.bf16.mxu0 %v1033
    %1103 = vmatpush1.bf16.msra.mxu0 %v1032
    %1104 = vmatprep.subr.bf16.mxu0 %v1031
    %1105 = vmatpush1.bf16.msra.mxu0 %v1030
    %1106 = vmatprep.subr.bf16.mxu0 %v1029
    %1107 = vmatpush1.bf16.msra.mxu0 %v1028
    %1108 = vmatprep.subr.bf16.mxu0 %v1059
    %1109 = vmatpush2.bf16.msra.mxu0 %v1058
    %1110 = vmatprep.subr.bf16.mxu0 %v1057
    %1111 = vmatpush2.bf16.msra.mxu0 %v1056
    %1112 = vmatprep.subr.bf16.mxu0 %v1055
    %1113 = vmatpush2.bf16.msra.mxu0 %v1054
    %1114 = vmatprep.subr.bf16.mxu0 %v1053
    %1115 = vmatpush2.bf16.msra.mxu0 %v1052
    %1116 = vmatprep.subr.bf16.mxu0 %v1051
    %1117 = vmatpush2.bf16.msra.mxu0 %v1050
    %1118 = vmatprep.subr.bf16.mxu0 %v1049
    %1119 = vmatpush2.bf16.msra.mxu0 %v1048
    %1120 = vmatprep.subr.bf16.mxu0 %v1047
    %1121 = vmatpush2.bf16.msra.mxu0 %v1046
    %1122 = vmatprep.subr.bf16.mxu0 %v1045
    %1123 = vmatpush2.bf16.msra.mxu0 %v1044
    %1124 = vmatprep.mubr.bf16.mxu0 %v917
    %1125 = vmatmul.mubr.bf16.gmra.mxu0 %v916
    %v1126 = vpop.f32.mrf.mxu0
    %v1127 = vadd.f32 0.0, %v1126
    %v1128 = vpop.f32.mrf.mxu0
    %v1129 = vadd.f32 0.0, %v1128
    %v1130 = vpop.f32.mrf.mxu0
    %v1131 = vadd.f32 0.0, %v1130
    %v1132 = vpop.f32.mrf.mxu0
    %v1133 = vadd.f32 0.0, %v1132
    %1134 = vmatprep.mubr.bf16.mxu0 %v919
    %1135 = vmatmul.mubr.bf16.gmra.mxu0 %v918
    %v1136 = vpop.f32.mrf.mxu0
    %v1137 = vadd.f32 0.0, %v1136
    %v1138 = vpop.f32.mrf.mxu0
    %v1139 = vadd.f32 0.0, %v1138
    %v1140 = vpop.f32.mrf.mxu0
    %v1141 = vadd.f32 0.0, %v1140
    %v1142 = vpop.f32.mrf.mxu0
    %v1143 = vadd.f32 0.0, %v1142
    %1144 = vmatprep.mubr.bf16.mxu0 %v921
    %1145 = vmatmul.mubr.bf16.gmra.mxu0 %v920
    %v1146 = vpop.f32.mrf.mxu0
    %v1147 = vadd.f32 0.0, %v1146
    %v1148 = vpop.f32.mrf.mxu0
    %v1149 = vadd.f32 0.0, %v1148
    %v1150 = vpop.f32.mrf.mxu0
    %v1151 = vadd.f32 0.0, %v1150
    %v1152 = vpop.f32.mrf.mxu0
    %v1153 = vadd.f32 0.0, %v1152
    %1154 = vmatprep.mubr.bf16.mxu0 %v923
    %1155 = vmatmul.mubr.bf16.gmra.mxu0 %v922
    %v1156 = vpop.f32.mrf.mxu0
    %v1157 = vadd.f32 0.0, %v1156
    %v1158 = vpop.f32.mrf.mxu0
    %v1159 = vadd.f32 0.0, %v1158
    %v1160 = vpop.f32.mrf.mxu0
    %v1161 = vadd.f32 0.0, %v1160
    %v1162 = vpop.f32.mrf.mxu0
    %v1163 = vadd.f32 0.0, %v1162
    %1164 = vmatprep.mubr.bf16.mxu0 %v925
    %1165 = vmatmul.mubr.bf16.gmra.mxu0 %v924
    %v1166 = vpop.f32.mrf.mxu0
    %v1167 = vadd.f32 0.0, %v1166
    %v1168 = vpop.f32.mrf.mxu0
    %v1169 = vadd.f32 0.0, %v1168
    %v1170 = vpop.f32.mrf.mxu0
    %v1171 = vadd.f32 0.0, %v1170
    %v1172 = vpop.f32.mrf.mxu0
    %v1173 = vadd.f32 0.0, %v1172
    %1174 = vmatprep.mubr.bf16.mxu0 %v927
    %1175 = vmatmul.mubr.bf16.gmra.mxu0 %v926
    %v1176 = vpop.f32.mrf.mxu0
    %v1177 = vadd.f32 0.0, %v1176
    %v1178 = vpop.f32.mrf.mxu0
    %v1179 = vadd.f32 0.0, %v1178
    %v1180 = vpop.f32.mrf.mxu0
    %v1181 = vadd.f32 0.0, %v1180
    %v1182 = vpop.f32.mrf.mxu0
    %v1183 = vadd.f32 0.0, %v1182
    %1184 = vmatprep.mubr.bf16.mxu0 %v929
    %1185 = vmatmul.mubr.bf16.gmra.mxu0 %v928
    %v1186 = vpop.f32.mrf.mxu0
    %v1187 = vadd.f32 0.0, %v1186
    %v1188 = vpop.f32.mrf.mxu0
    %v1189 = vadd.f32 0.0, %v1188
    %v1190 = vpop.f32.mrf.mxu0
    %v1191 = vadd.f32 0.0, %v1190
    %v1192 = vpop.f32.mrf.mxu0
    %v1193 = vadd.f32 0.0, %v1192
    %1194 = vmatprep.mubr.bf16.mxu0 %v931
    %1195 = vmatmul.mubr.bf16.gmra.mxu0 %v930
    %v1196 = vpop.f32.mrf.mxu0
    %v1197 = vadd.f32 0.0, %v1196
    %v1198 = vpop.f32.mrf.mxu0
    %v1199 = vadd.f32 0.0, %v1198
    %v1200 = vpop.f32.mrf.mxu0
    %v1201 = vadd.f32 0.0, %v1200
    %v1202 = vpop.f32.mrf.mxu0
    %v1203 = vadd.f32 0.0, %v1202
    %1204 = vdwg.mxu0
    %v1205 = vld [vmem:[%s11] sm:$0x3]
    %v1206 = vld [vmem:[%s13] sm:$0x3]
    %v1207 = vadd.f32 %v1127, %v1131
    %v1208 = vadd.f32 %v1207, %v1137
    %v1209 = vadd.f32 %v1208, %v1141
    %v1210 = vadd.f32 %v1209, %v1147
    %v1211 = vadd.f32 %v1210, %v1151
    %v1212 = vadd.f32 %v1211, %v1157
    %v1213 = vadd.f32 %v1212, %v1161
    %v1214 = vadd.f32 %v1213, %v1167
    %v1215 = vadd.f32 %v1214, %v1171
    %v1216 = vadd.f32 %v1215, %v1177
    %v1217 = vadd.f32 %v1216, %v1181
    %v1218 = vadd.f32 %v1217, %v1187
    %v1219 = vadd.f32 %v1218, %v1191
    %v1220 = vadd.f32 %v1219, %v1197
    %v1221 = vadd.f32 %v1220, %v1201
    %v1222 = vrot.slane %v1221, 4
    %v1223 = vadd.f32 %v1221, %v1222
    %v1224 = vrot.slane %v1223, 2
    %v1225 = vadd.f32 %v1223, %v1224
    %v1226 = vrot.slane %v1225, 1
    %v1227 = vadd.f32 %v1225, %v1226
    %v1228 = vadd.f32 %v1129, %v1133
    %v1229 = vadd.f32 %v1228, %v1139
    %v1230 = vadd.f32 %v1229, %v1143
    %v1231 = vadd.f32 %v1230, %v1149
    %v1232 = vadd.f32 %v1231, %v1153
    %v1233 = vadd.f32 %v1232, %v1159
    %v1234 = vadd.f32 %v1233, %v1163
    %v1235 = vadd.f32 %v1234, %v1169
    %v1236 = vadd.f32 %v1235, %v1173
    %v1237 = vadd.f32 %v1236, %v1179
    %v1238 = vadd.f32 %v1237, %v1183
    %v1239 = vadd.f32 %v1238, %v1189
    %v1240 = vadd.f32 %v1239, %v1193
    %v1241 = vadd.f32 %v1240, %v1199
    %v1242 = vadd.f32 %v1241, %v1203
    %v1243 = vrot.slane %v1242, 4
    %v1244 = vadd.f32 %v1242, %v1243
    %v1245 = vrot.slane %v1244, 2
    %v1246 = vadd.f32 %v1244, %v1245
    %v1247 = vrot.slane %v1246, 1
    %v1248 = vadd.f32 %v1246, %v1247
    %v1249 = vmul.f32 %v1227, %v637
    %v1250 = vmul.f32 %v1248, %v637
    %v1251 = vmul.f32 %v1127, %v1127
    %v1252 = vmul.f32 %v1129, %v1129
    %v1253 = vmul.f32 %v1131, %v1131
    %v1254 = vmul.f32 %v1133, %v1133
    %v1255 = vmul.f32 %v1137, %v1137
    %v1256 = vmul.f32 %v1139, %v1139
    %v1257 = vmul.f32 %v1141, %v1141
    %v1258 = vmul.f32 %v1143, %v1143
    %v1259 = vmul.f32 %v1147, %v1147
    %v1260 = vmul.f32 %v1149, %v1149
    %v1261 = vmul.f32 %v1151, %v1151
    %v1262 = vmul.f32 %v1153, %v1153
    %v1263 = vmul.f32 %v1157, %v1157
    %v1264 = vmul.f32 %v1159, %v1159
    %v1265 = vmul.f32 %v1161, %v1161
    %v1266 = vmul.f32 %v1163, %v1163
    %v1267 = vmul.f32 %v1167, %v1167
    %v1268 = vmul.f32 %v1169, %v1169
    %v1269 = vmul.f32 %v1171, %v1171
    %v1270 = vmul.f32 %v1173, %v1173
    %v1271 = vmul.f32 %v1177, %v1177
    %v1272 = vmul.f32 %v1179, %v1179
    %v1273 = vmul.f32 %v1181, %v1181
    %v1274 = vmul.f32 %v1183, %v1183
    %v1275 = vmul.f32 %v1187, %v1187
    %v1276 = vmul.f32 %v1189, %v1189
    %v1277 = vmul.f32 %v1191, %v1191
    %v1278 = vmul.f32 %v1193, %v1193
    %v1279 = vmul.f32 %v1197, %v1197
    %v1280 = vmul.f32 %v1199, %v1199
    %v1281 = vmul.f32 %v1201, %v1201
    %v1282 = vmul.f32 %v1203, %v1203
    %v1283 = vadd.f32 %v1251, %v1253
    %v1284 = vadd.f32 %v1283, %v1255
    %v1285 = vadd.f32 %v1284, %v1257
    %v1286 = vadd.f32 %v1285, %v1259
    %v1287 = vadd.f32 %v1286, %v1261
    %v1288 = vadd.f32 %v1287, %v1263
    %v1289 = vadd.f32 %v1288, %v1265
    %v1290 = vadd.f32 %v1289, %v1267
    %v1291 = vadd.f32 %v1290, %v1269
    %v1292 = vadd.f32 %v1291, %v1271
    %v1293 = vadd.f32 %v1292, %v1273
    %v1294 = vadd.f32 %v1293, %v1275
    %v1295 = vadd.f32 %v1294, %v1277
    %v1296 = vadd.f32 %v1295, %v1279
    %v1297 = vadd.f32 %v1296, %v1281
    %v1298 = vrot.slane %v1297, 4
    %v1299 = vadd.f32 %v1297, %v1298
    %v1300 = vrot.slane %v1299, 2
    %v1301 = vadd.f32 %v1299, %v1300
    %v1302 = vrot.slane %v1301, 1
    %v1303 = vadd.f32 %v1301, %v1302
    %v1304 = vadd.f32 %v1252, %v1254
    %v1305 = vadd.f32 %v1304, %v1256
    %v1306 = vadd.f32 %v1305, %v1258
    %v1307 = vadd.f32 %v1306, %v1260
    %v1308 = vadd.f32 %v1307, %v1262
    %v1309 = vadd.f32 %v1308, %v1264
    %v1310 = vadd.f32 %v1309, %v1266
    %v1311 = vadd.f32 %v1310, %v1268
    %v1312 = vadd.f32 %v1311, %v1270
    %v1313 = vadd.f32 %v1312, %v1272
    %v1314 = vadd.f32 %v1313, %v1274
    %v1315 = vadd.f32 %v1314, %v1276
    %v1316 = vadd.f32 %v1315, %v1278
    %v1317 = vadd.f32 %v1316, %v1280
    %v1318 = vadd.f32 %v1317, %v1282
    %v1319 = vrot.slane %v1318, 4
    %v1320 = vadd.f32 %v1318, %v1319
    %v1321 = vrot.slane %v1320, 2
    %v1322 = vadd.f32 %v1320, %v1321
    %v1323 = vrot.slane %v1322, 1
    %v1324 = vadd.f32 %v1322, %v1323
    %v1325 = vmul.f32 %v1303, %v637
    %v1326 = vmul.f32 %v1324, %v637
    %v1327 = vmul.f32 %v1249, %v1249
    %v1328 = vmul.f32 %v1250, %v1250
    %v1329 = vsub.f32 %v1325, %v1327
    %v1330 = vsub.f32 %v1326, %v1328
    %v1331 = vmax.f32 %v1329, 0.0
    %v1332 = vmax.f32 %v1330, 0.0
    %v1333 = vadd.f32 %v1331, 0.001
    %v1334 = vadd.f32 %v1332, 0.001
    %v1335 = vrsqrt.pop %v1333
    %v1336 = vrsqrt.pop %v1334
    %v1339 = vcombine.low %v1335, %v1336
    %v1341 = vunpack.c.l.s4 1966171168
    %v1342 = vunpack.c.0.s8 %v1341
    %v1343 = vlaneseq
    %v1344 = vshrl.u32 %v1343, 7
    %v1345 = vsub.s32 %v1342, %v1344
    %v1346 = vrot.slane %v1339, %v1345
    %v1348 = vunpack.c.l.s4 1966171168
    %v1349 = vunpack.c.0.s8 %v1348
    %v1350 = vlaneseq
    %v1351 = vshrl.u32 %v1350, 7
    %v1352 = vsub.s32 %v1349, %v1351
    %v1353 = vrot.slane %v1346, %v1352
    %v1355 = vmul.f32 %v1205, %v1353
    %v1357 = vlaneseq
    %v1358 = vshrl.u32 %v1357, 7
    %v1359 = vsub.s32 0, %v1358
    %v1360 = vrot.slane %v1355, %v1359
    %v1361 = vlaneseq
    %v1362 = vshrl.u32 %v1361, 7
    %v1363 = vsub.s32 1, %v1362
    %v1364 = vrot.slane %v1355, %v1363
    %v1367 = vmul.f32 %v1249, %v1360
    %v1368 = vmul.f32 %v1250, %v1364
    %v1371 = vcombine.low %v1367, %v1368
    %v1373 = vunpack.c.l.s4 1966171168
    %v1374 = vunpack.c.0.s8 %v1373
    %v1375 = vlaneseq
    %v1376 = vshrl.u32 %v1375, 7
    %v1377 = vsub.s32 %v1374, %v1376
    %v1378 = vrot.slane %v1371, %v1377
    %v1380 = vunpack.c.l.s4 1966171168
    %v1381 = vunpack.c.0.s8 %v1380
    %v1382 = vlaneseq
    %v1383 = vshrl.u32 %v1382, 7
    %v1384 = vsub.s32 %v1381, %v1383
    %v1385 = vrot.slane %v1378, %v1384
    %v1387 = vsub.f32 %v1206, %v1385
    %v1388 = vmul.f32 %v1127, %v1360
    %v1389 = vmul.f32 %v1129, %v1364
    %v1390 = vmul.f32 %v1131, %v1360
    %v1391 = vmul.f32 %v1133, %v1364
    %v1392 = vmul.f32 %v1137, %v1360
    %v1393 = vmul.f32 %v1139, %v1364
    %v1394 = vmul.f32 %v1141, %v1360
    %v1395 = vmul.f32 %v1143, %v1364
    %v1396 = vmul.f32 %v1147, %v1360
    %v1397 = vmul.f32 %v1149, %v1364
    %v1398 = vmul.f32 %v1151, %v1360
    %v1399 = vmul.f32 %v1153, %v1364
    %v1400 = vmul.f32 %v1157, %v1360
    %v1401 = vmul.f32 %v1159, %v1364
    %v1402 = vmul.f32 %v1161, %v1360
    %v1403 = vmul.f32 %v1163, %v1364
    %v1404 = vmul.f32 %v1167, %v1360
    %v1405 = vmul.f32 %v1169, %v1364
    %v1406 = vmul.f32 %v1171, %v1360
    %v1407 = vmul.f32 %v1173, %v1364
    %v1408 = vmul.f32 %v1177, %v1360
    %v1409 = vmul.f32 %v1179, %v1364
    %v1410 = vmul.f32 %v1181, %v1360
    %v1411 = vmul.f32 %v1183, %v1364
    %v1412 = vmul.f32 %v1187, %v1360
    %v1413 = vmul.f32 %v1189, %v1364
    %v1414 = vmul.f32 %v1191, %v1360
    %v1415 = vmul.f32 %v1193, %v1364
    %v1416 = vmul.f32 %v1197, %v1360
    %v1417 = vmul.f32 %v1199, %v1364
    %v1418 = vmul.f32 %v1201, %v1360
    %v1419 = vmul.f32 %v1203, %v1364
    %v1421 = vlaneseq
    %v1422 = vshrl.u32 %v1421, 7
    %v1423 = vsub.s32 0, %v1422
    %v1424 = vrot.slane %v1387, %v1423
    %v1425 = vlaneseq
    %v1426 = vshrl.u32 %v1425, 7
    %v1427 = vsub.s32 1, %v1426
    %v1428 = vrot.slane %v1387, %v1427
    %v1431 = vadd.f32 %v1388, %v1424
    %v1432 = vadd.f32 %v1389, %v1428
    %v1433 = vadd.f32 %v1390, %v1424
    %v1434 = vadd.f32 %v1391, %v1428
    %v1435 = vadd.f32 %v1392, %v1424
    %v1436 = vadd.f32 %v1393, %v1428
    %v1437 = vadd.f32 %v1394, %v1424
    %v1438 = vadd.f32 %v1395, %v1428
    %v1439 = vadd.f32 %v1396, %v1424
    %v1440 = vadd.f32 %v1397, %v1428
    %v1441 = vadd.f32 %v1398, %v1424
    %v1442 = vadd.f32 %v1399, %v1428
    %v1443 = vadd.f32 %v1400, %v1424
    %v1444 = vadd.f32 %v1401, %v1428
    %v1445 = vadd.f32 %v1402, %v1424
    %v1446 = vadd.f32 %v1403, %v1428
    %v1447 = vadd.f32 %v1404, %v1424
    %v1448 = vadd.f32 %v1405, %v1428
    %v1449 = vadd.f32 %v1406, %v1424
    %v1450 = vadd.f32 %v1407, %v1428
    %v1451 = vadd.f32 %v1408, %v1424
    %v1452 = vadd.f32 %v1409, %v1428
    %v1453 = vadd.f32 %v1410, %v1424
    %v1454 = vadd.f32 %v1411, %v1428
    %v1455 = vadd.f32 %v1412, %v1424
    %v1456 = vadd.f32 %v1413, %v1428
    %v1457 = vadd.f32 %v1414, %v1424
    %v1458 = vadd.f32 %v1415, %v1428
    %v1459 = vadd.f32 %v1416, %v1424
    %v1460 = vadd.f32 %v1417, %v1428
    %v1461 = vadd.f32 %v1418, %v1424
    %v1462 = vadd.f32 %v1419, %v1428
    %v1463 = vmax.f32 %v1431, 0.0
    %v1464 = vmax.f32 %v1432, 0.0
    %v1465 = vmax.f32 %v1433, 0.0
    %v1466 = vmax.f32 %v1434, 0.0
    %v1467 = vmax.f32 %v1435, 0.0
    %v1468 = vmax.f32 %v1436, 0.0
    %v1469 = vmax.f32 %v1437, 0.0
    %v1470 = vmax.f32 %v1438, 0.0
    %v1471 = vmax.f32 %v1439, 0.0
    %v1472 = vmax.f32 %v1440, 0.0
    %v1473 = vmax.f32 %v1441, 0.0
    %v1474 = vmax.f32 %v1442, 0.0
    %v1475 = vmax.f32 %v1443, 0.0
    %v1476 = vmax.f32 %v1444, 0.0
    %v1477 = vmax.f32 %v1445, 0.0
    %v1478 = vmax.f32 %v1446, 0.0
    %v1479 = vmax.f32 %v1447, 0.0
    %v1480 = vmax.f32 %v1448, 0.0
    %v1481 = vmax.f32 %v1449, 0.0
    %v1482 = vmax.f32 %v1450, 0.0
    %v1483 = vmax.f32 %v1451, 0.0
    %v1484 = vmax.f32 %v1452, 0.0
    %v1485 = vmax.f32 %v1453, 0.0
    %v1486 = vmax.f32 %v1454, 0.0
    %v1487 = vmax.f32 %v1455, 0.0
    %v1488 = vmax.f32 %v1456, 0.0
    %v1489 = vmax.f32 %v1457, 0.0
    %v1490 = vmax.f32 %v1458, 0.0
    %v1491 = vmax.f32 %v1459, 0.0
    %v1492 = vmax.f32 %v1460, 0.0
    %v1493 = vmax.f32 %v1461, 0.0
    %v1494 = vmax.f32 %v1462, 0.0
    %v1495 = vld [vmem:[#allocation7] sm:$0xff]
    %v1496 = vld [vmem:[#allocation7 + $0x8] sm:$0xff]
    %v1497 = vld [vmem:[#allocation7 + $0x10] sm:$0xff]
    %v1498 = vld [vmem:[#allocation7 + $0x18] sm:$0xff]
    %v1499 = vld [vmem:[#allocation7 + $0x20] sm:$0xff]
    %v1500 = vld [vmem:[#allocation7 + $0x28] sm:$0xff]
    %v1501 = vld [vmem:[#allocation7 + $0x30] sm:$0xff]
    %v1502 = vld [vmem:[#allocation7 + $0x38] sm:$0xff]
    %v1503 = vld [vmem:[#allocation7 + $0x40] sm:$0xff]
    %v1504 = vld [vmem:[#allocation7 + $0x48] sm:$0xff]
    %v1505 = vld [vmem:[#allocation7 + $0x50] sm:$0xff]
    %v1506 = vld [vmem:[#allocation7 + $0x58] sm:$0xff]
    %v1507 = vld [vmem:[#allocation7 + $0x60] sm:$0xff]
    %v1508 = vld [vmem:[#allocation7 + $0x68] sm:$0xff]
    %v1509 = vld [vmem:[#allocation7 + $0x70] sm:$0xff]
    %v1510 = vld [vmem:[#allocation7 + $0x78] sm:$0xff]
    %v1511 = vld [vmem:[#allocation7 + $0x80] sm:$0xff]
    %v1512 = vld [vmem:[#allocation7 + $0x88] sm:$0xff]
    %v1513 = vld [vmem:[#allocation7 + $0x90] sm:$0xff]
    %v1514 = vld [vmem:[#allocation7 + $0x98] sm:$0xff]
    %v1515 = vld [vmem:[#allocation7 + $0xa0] sm:$0xff]
    %v1516 = vld [vmem:[#allocation7 + $0xa8] sm:$0xff]
    %v1517 = vld [vmem:[#allocation7 + $0xb0] sm:$0xff]
    %v1518 = vld [vmem:[#allocation7 + $0xb8] sm:$0xff]
    %v1519 = vld [vmem:[#allocation7 + $0xc0] sm:$0xff]
    %v1520 = vld [vmem:[#allocation7 + $0xc8] sm:$0xff]
    %v1521 = vld [vmem:[#allocation7 + $0xd0] sm:$0xff]
    %v1522 = vld [vmem:[#allocation7 + $0xd8] sm:$0xff]
    %v1523 = vld [vmem:[#allocation7 + $0xe0] sm:$0xff]
    %v1524 = vld [vmem:[#allocation7 + $0xe8] sm:$0xff]
    %v1525 = vld [vmem:[#allocation7 + $0xf0] sm:$0xff]
    %v1526 = vld [vmem:[#allocation7 + $0xf8] sm:$0xff]
    %v1527 = vpack.c.bf16 %v1465, %v1463
    %v1528 = vpack.c.bf16 %v1466, %v1464
    %v1529 = vpack.c.bf16 %v1469, %v1467
    %v1530 = vpack.c.bf16 %v1470, %v1468
    %v1531 = vpack.c.bf16 %v1473, %v1471
    %v1532 = vpack.c.bf16 %v1474, %v1472
    %v1533 = vpack.c.bf16 %v1477, %v1475
    %v1534 = vpack.c.bf16 %v1478, %v1476
    %v1535 = vpack.c.bf16 %v1481, %v1479
    %v1536 = vpack.c.bf16 %v1482, %v1480
    %v1537 = vpack.c.bf16 %v1485, %v1483
    %v1538 = vpack.c.bf16 %v1486, %v1484
    %v1539 = vpack.c.bf16 %v1489, %v1487
    %v1540 = vpack.c.bf16 %v1490, %v1488
    %v1541 = vpack.c.bf16 %v1493, %v1491
    %v1542 = vpack.c.bf16 %v1494, %v1492
    %v1575 = vunpack.c.l.b16 %v1495
    %v1576 = vunpack.c.h.b16 %v1495
    %v1577 = vunpack.c.l.b16 %v1496
    %v1578 = vunpack.c.h.b16 %v1496
    %v1579 = vunpack.c.l.b16 %v1497
    %v1580 = vunpack.c.h.b16 %v1497
    %v1581 = vunpack.c.l.b16 %v1498
    %v1582 = vunpack.c.h.b16 %v1498
    %v1583 = vunpack.c.l.b16 %v1499
    %v1584 = vunpack.c.h.b16 %v1499
    %v1585 = vunpack.c.l.b16 %v1500
    %v1586 = vunpack.c.h.b16 %v1500
    %v1587 = vunpack.c.l.b16 %v1501
    %v1588 = vunpack.c.h.b16 %v1501
    %v1589 = vunpack.c.l.b16 %v1502
    %v1590 = vunpack.c.h.b16 %v1502
    %v1591 = vunpack.c.l.b16 %v1503
    %v1592 = vunpack.c.h.b16 %v1503
    %v1593 = vunpack.c.l.b16 %v1504
    %v1594 = vunpack.c.h.b16 %v1504
    %v1595 = vunpack.c.l.b16 %v1505
    %v1596 = vunpack.c.h.b16 %v1505
    %v1597 = vunpack.c.l.b16 %v1506
    %v1598 = vunpack.c.h.b16 %v1506
    %v1599 = vunpack.c.l.b16 %v1507
    %v1600 = vunpack.c.h.b16 %v1507
    %v1601 = vunpack.c.l.b16 %v1508
    %v1602 = vunpack.c.h.b16 %v1508
    %v1603 = vunpack.c.l.b16 %v1509
    %v1604 = vunpack.c.h.b16 %v1509
    %v1605 = vunpack.c.l.b16 %v1510
    %v1606 = vunpack.c.h.b16 %v1510
    %v1607 = vunpack.c.l.b16 %v1511
    %v1608 = vunpack.c.h.b16 %v1511
    %v1609 = vunpack.c.l.b16 %v1512
    %v1610 = vunpack.c.h.b16 %v1512
    %v1611 = vunpack.c.l.b16 %v1513
    %v1612 = vunpack.c.h.b16 %v1513
    %v1613 = vunpack.c.l.b16 %v1514
    %v1614 = vunpack.c.h.b16 %v1514
    %v1615 = vunpack.c.l.b16 %v1515
    %v1616 = vunpack.c.h.b16 %v1515
    %v1617 = vunpack.c.l.b16 %v1516
    %v1618 = vunpack.c.h.b16 %v1516
    %v1619 = vunpack.c.l.b16 %v1517
    %v1620 = vunpack.c.h.b16 %v1517
    %v1621 = vunpack.c.l.b16 %v1518
    %v1622 = vunpack.c.h.b16 %v1518
    %v1623 = vunpack.c.l.b16 %v1519
    %v1624 = vunpack.c.h.b16 %v1519
    %v1625 = vunpack.c.l.b16 %v1520
    %v1626 = vunpack.c.h.b16 %v1520
    %v1627 = vunpack.c.l.b16 %v1521
    %v1628 = vunpack.c.h.b16 %v1521
    %v1629 = vunpack.c.l.b16 %v1522
    %v1630 = vunpack.c.h.b16 %v1522
    %v1631 = vunpack.c.l.b16 %v1523
    %v1632 = vunpack.c.h.b16 %v1523
    %v1633 = vunpack.c.l.b16 %v1524
    %v1634 = vunpack.c.h.b16 %v1524
    %v1635 = vunpack.c.l.b16 %v1525
    %v1636 = vunpack.c.h.b16 %v1525
    %v1637 = vunpack.c.l.b16 %v1526
    %v1638 = vunpack.c.h.b16 %v1526
    %v1639 = vpack.c.b16 %v1577, %v1575
    %v1640 = vpack.c.b16 %v1578, %v1576
    %v1641 = vpack.c.b16 %v1581, %v1579
    %v1642 = vpack.c.b16 %v1582, %v1580
    %v1643 = vpack.c.b16 %v1585, %v1583
    %v1644 = vpack.c.b16 %v1586, %v1584
    %v1645 = vpack.c.b16 %v1589, %v1587
    %v1646 = vpack.c.b16 %v1590, %v1588
    %v1647 = vpack.c.b16 %v1593, %v1591
    %v1648 = vpack.c.b16 %v1594, %v1592
    %v1649 = vpack.c.b16 %v1597, %v1595
    %v1650 = vpack.c.b16 %v1598, %v1596
    %v1651 = vpack.c.b16 %v1601, %v1599
    %v1652 = vpack.c.b16 %v1602, %v1600
    %v1653 = vpack.c.b16 %v1605, %v1603
    %v1654 = vpack.c.b16 %v1606, %v1604
    %v1655 = vpack.c.b16 %v1609, %v1607
    %v1656 = vpack.c.b16 %v1610, %v1608
    %v1657 = vpack.c.b16 %v1613, %v1611
    %v1658 = vpack.c.b16 %v1614, %v1612
    %v1659 = vpack.c.b16 %v1617, %v1615
    %v1660 = vpack.c.b16 %v1618, %v1616
    %v1661 = vpack.c.b16 %v1621, %v1619
    %v1662 = vpack.c.b16 %v1622, %v1620
    %v1663 = vpack.c.b16 %v1625, %v1623
    %v1664 = vpack.c.b16 %v1626, %v1624
    %v1665 = vpack.c.b16 %v1629, %v1627
    %v1666 = vpack.c.b16 %v1630, %v1628
    %v1667 = vpack.c.b16 %v1633, %v1631
    %v1668 = vpack.c.b16 %v1634, %v1632
    %v1669 = vpack.c.b16 %v1637, %v1635
    %v1670 = vpack.c.b16 %v1638, %v1636
    %1703 = vmatprep.subr.bf16.mxu0 %v1654
    %1704 = vmatpush1.bf16.msra.mxu0 %v1653
    %1705 = vmatprep.subr.bf16.mxu0 %v1652
    %1706 = vmatpush1.bf16.msra.mxu0 %v1651
    %1707 = vmatprep.subr.bf16.mxu0 %v1650
    %1708 = vmatpush1.bf16.msra.mxu0 %v1649
    %1709 = vmatprep.subr.bf16.mxu0 %v1648
    %1710 = vmatpush1.bf16.msra.mxu0 %v1647
    %1711 = vmatprep.subr.bf16.mxu0 %v1646
    %1712 = vmatpush1.bf16.msra.mxu0 %v1645
    %1713 = vmatprep.subr.bf16.mxu0 %v1644
    %1714 = vmatpush1.bf16.msra.mxu0 %v1643
    %1715 = vmatprep.subr.bf16.mxu0 %v1642
    %1716 = vmatpush1.bf16.msra.mxu0 %v1641
    %1717 = vmatprep.subr.bf16.mxu0 %v1640
    %1718 = vmatpush1.bf16.msra.mxu0 %v1639
    %1719 = vmatprep.subr.bf16.mxu0 %v1670
    %1720 = vmatpush2.bf16.msra.mxu0 %v1669
    %1721 = vmatprep.subr.bf16.mxu0 %v1668
    %1722 = vmatpush2.bf16.msra.mxu0 %v1667
    %1723 = vmatprep.subr.bf16.mxu0 %v1666
    %1724 = vmatpush2.bf16.msra.mxu0 %v1665
    %1725 = vmatprep.subr.bf16.mxu0 %v1664
    %1726 = vmatpush2.bf16.msra.mxu0 %v1663
    %1727 = vmatprep.subr.bf16.mxu0 %v1662
    %1728 = vmatpush2.bf16.msra.mxu0 %v1661
    %1729 = vmatprep.subr.bf16.mxu0 %v1660
    %1730 = vmatpush2.bf16.msra.mxu0 %v1659
    %1731 = vmatprep.subr.bf16.mxu0 %v1658
    %1732 = vmatpush2.bf16.msra.mxu0 %v1657
    %1733 = vmatprep.subr.bf16.mxu0 %v1656
    %1734 = vmatpush2.bf16.msra.mxu0 %v1655
    %1735 = vmatprep.mubr.bf16.mxu0 %v1528
    %1736 = vmatmul.mubr.bf16.gmra.mxu0 %v1527
    %v1737 = vpop.f32.mrf.mxu0
    %v1738 = vadd.f32 0.0, %v1737
    %v1739 = vpop.f32.mrf.mxu0
    %v1740 = vadd.f32 0.0, %v1739
    %v1741 = vpop.f32.mrf.mxu0
    %v1742 = vadd.f32 0.0, %v1741
    %v1743 = vpop.f32.mrf.mxu0
    %v1744 = vadd.f32 0.0, %v1743
    %1745 = vmatprep.mubr.bf16.mxu0 %v1530
    %1746 = vmatmul.mubr.bf16.gmra.mxu0 %v1529
    %v1747 = vpop.f32.mrf.mxu0
    %v1748 = vadd.f32 0.0, %v1747
    %v1749 = vpop.f32.mrf.mxu0
    %v1750 = vadd.f32 0.0, %v1749
    %v1751 = vpop.f32.mrf.mxu0
    %v1752 = vadd.f32 0.0, %v1751
    %v1753 = vpop.f32.mrf.mxu0
    %v1754 = vadd.f32 0.0, %v1753
    %1755 = vmatprep.mubr.bf16.mxu0 %v1532
    %1756 = vmatmul.mubr.bf16.gmra.mxu0 %v1531
    %v1757 = vpop.f32.mrf.mxu0
    %v1758 = vadd.f32 0.0, %v1757
    %v1759 = vpop.f32.mrf.mxu0
    %v1760 = vadd.f32 0.0, %v1759
    %v1761 = vpop.f32.mrf.mxu0
    %v1762 = vadd.f32 0.0, %v1761
    %v1763 = vpop.f32.mrf.mxu0
    %v1764 = vadd.f32 0.0, %v1763
    %1765 = vmatprep.mubr.bf16.mxu0 %v1534
    %1766 = vmatmul.mubr.bf16.gmra.mxu0 %v1533
    %v1767 = vpop.f32.mrf.mxu0
    %v1768 = vadd.f32 0.0, %v1767
    %v1769 = vpop.f32.mrf.mxu0
    %v1770 = vadd.f32 0.0, %v1769
    %v1771 = vpop.f32.mrf.mxu0
    %v1772 = vadd.f32 0.0, %v1771
    %v1773 = vpop.f32.mrf.mxu0
    %v1774 = vadd.f32 0.0, %v1773
    %1775 = vmatprep.mubr.bf16.mxu0 %v1536
    %1776 = vmatmul.mubr.bf16.gmra.mxu0 %v1535
    %v1777 = vpop.f32.mrf.mxu0
    %v1778 = vadd.f32 0.0, %v1777
    %v1779 = vpop.f32.mrf.mxu0
    %v1780 = vadd.f32 0.0, %v1779
    %v1781 = vpop.f32.mrf.mxu0
    %v1782 = vadd.f32 0.0, %v1781
    %v1783 = vpop.f32.mrf.mxu0
    %v1784 = vadd.f32 0.0, %v1783
    %1785 = vmatprep.mubr.bf16.mxu0 %v1538
    %1786 = vmatmul.mubr.bf16.gmra.mxu0 %v1537
    %v1787 = vpop.f32.mrf.mxu0
    %v1788 = vadd.f32 0.0, %v1787
    %v1789 = vpop.f32.mrf.mxu0
    %v1790 = vadd.f32 0.0, %v1789
    %v1791 = vpop.f32.mrf.mxu0
    %v1792 = vadd.f32 0.0, %v1791
    %v1793 = vpop.f32.mrf.mxu0
    %v1794 = vadd.f32 0.0, %v1793
    %1795 = vmatprep.mubr.bf16.mxu0 %v1540
    %1796 = vmatmul.mubr.bf16.gmra.mxu0 %v1539
    %v1797 = vpop.f32.mrf.mxu0
    %v1798 = vadd.f32 0.0, %v1797
    %v1799 = vpop.f32.mrf.mxu0
    %v1800 = vadd.f32 0.0, %v1799
    %v1801 = vpop.f32.mrf.mxu0
    %v1802 = vadd.f32 0.0, %v1801
    %v1803 = vpop.f32.mrf.mxu0
    %v1804 = vadd.f32 0.0, %v1803
    %1805 = vmatprep.mubr.bf16.mxu0 %v1542
    %1806 = vmatmul.mubr.bf16.gmra.mxu0 %v1541
    %v1807 = vpop.f32.mrf.mxu0
    %v1808 = vadd.f32 0.0, %v1807
    %v1809 = vpop.f32.mrf.mxu0
    %v1810 = vadd.f32 0.0, %v1809
    %v1811 = vpop.f32.mrf.mxu0
    %v1812 = vadd.f32 0.0, %v1811
    %v1813 = vpop.f32.mrf.mxu0
    %v1814 = vadd.f32 0.0, %v1813
    %1815 = vdwg.mxu0
    %v1816 = vld [vmem:[%s17] sm:$0x3]
    %v1817 = vld [vmem:[%s19] sm:$0x3]
    %v1818 = vadd.f32 %v1738, %v1742
    %v1819 = vadd.f32 %v1818, %v1748
    %v1820 = vadd.f32 %v1819, %v1752
    %v1821 = vadd.f32 %v1820, %v1758
    %v1822 = vadd.f32 %v1821, %v1762
    %v1823 = vadd.f32 %v1822, %v1768
    %v1824 = vadd.f32 %v1823, %v1772
    %v1825 = vadd.f32 %v1824, %v1778
    %v1826 = vadd.f32 %v1825, %v1782
    %v1827 = vadd.f32 %v1826, %v1788
    %v1828 = vadd.f32 %v1827, %v1792
    %v1829 = vadd.f32 %v1828, %v1798
    %v1830 = vadd.f32 %v1829, %v1802
    %v1831 = vadd.f32 %v1830, %v1808
    %v1832 = vadd.f32 %v1831, %v1812
    %v1833 = vrot.slane %v1832, 4
    %v1834 = vadd.f32 %v1832, %v1833
    %v1835 = vrot.slane %v1834, 2
    %v1836 = vadd.f32 %v1834, %v1835
    %v1837 = vrot.slane %v1836, 1
    %v1838 = vadd.f32 %v1836, %v1837
    %v1839 = vadd.f32 %v1740, %v1744
    %v1840 = vadd.f32 %v1839, %v1750
    %v1841 = vadd.f32 %v1840, %v1754
    %v1842 = vadd.f32 %v1841, %v1760
    %v1843 = vadd.f32 %v1842, %v1764
    %v1844 = vadd.f32 %v1843, %v1770
    %v1845 = vadd.f32 %v1844, %v1774
    %v1846 = vadd.f32 %v1845, %v1780
    %v1847 = vadd.f32 %v1846, %v1784
    %v1848 = vadd.f32 %v1847, %v1790
    %v1849 = vadd.f32 %v1848, %v1794
    %v1850 = vadd.f32 %v1849, %v1800
    %v1851 = vadd.f32 %v1850, %v1804
    %v1852 = vadd.f32 %v1851, %v1810
    %v1853 = vadd.f32 %v1852, %v1814
    %v1854 = vrot.slane %v1853, 4
    %v1855 = vadd.f32 %v1853, %v1854
    %v1856 = vrot.slane %v1855, 2
    %v1857 = vadd.f32 %v1855, %v1856
    %v1858 = vrot.slane %v1857, 1
    %v1859 = vadd.f32 %v1857, %v1858
    %v1860 = vmul.f32 %v1838, %v637
    %v1861 = vmul.f32 %v1859, %v637
    %v1862 = vmul.f32 %v1738, %v1738
    %v1863 = vmul.f32 %v1740, %v1740
    %v1864 = vmul.f32 %v1742, %v1742
    %v1865 = vmul.f32 %v1744, %v1744
    %v1866 = vmul.f32 %v1748, %v1748
    %v1867 = vmul.f32 %v1750, %v1750
    %v1868 = vmul.f32 %v1752, %v1752
    %v1869 = vmul.f32 %v1754, %v1754
    %v1870 = vmul.f32 %v1758, %v1758
    %v1871 = vmul.f32 %v1760, %v1760
    %v1872 = vmul.f32 %v1762, %v1762
    %v1873 = vmul.f32 %v1764, %v1764
    %v1874 = vmul.f32 %v1768, %v1768
    %v1875 = vmul.f32 %v1770, %v1770
    %v1876 = vmul.f32 %v1772, %v1772
    %v1877 = vmul.f32 %v1774, %v1774
    %v1878 = vmul.f32 %v1778, %v1778
    %v1879 = vmul.f32 %v1780, %v1780
    %v1880 = vmul.f32 %v1782, %v1782
    %v1881 = vmul.f32 %v1784, %v1784
    %v1882 = vmul.f32 %v1788, %v1788
    %v1883 = vmul.f32 %v1790, %v1790
    %v1884 = vmul.f32 %v1792, %v1792
    %v1885 = vmul.f32 %v1794, %v1794
    %v1886 = vmul.f32 %v1798, %v1798
    %v1887 = vmul.f32 %v1800, %v1800
    %v1888 = vmul.f32 %v1802, %v1802
    %v1889 = vmul.f32 %v1804, %v1804
    %v1890 = vmul.f32 %v1808, %v1808
    %v1891 = vmul.f32 %v1810, %v1810
    %v1892 = vmul.f32 %v1812, %v1812
    %v1893 = vmul.f32 %v1814, %v1814
    %v1894 = vadd.f32 %v1862, %v1864
    %v1895 = vadd.f32 %v1894, %v1866
    %v1896 = vadd.f32 %v1895, %v1868
    %v1897 = vadd.f32 %v1896, %v1870
    %v1898 = vadd.f32 %v1897, %v1872
    %v1899 = vadd.f32 %v1898, %v1874
    %v1900 = vadd.f32 %v1899, %v1876
    %v1901 = vadd.f32 %v1900, %v1878
    %v1902 = vadd.f32 %v1901, %v1880
    %v1903 = vadd.f32 %v1902, %v1882
    %v1904 = vadd.f32 %v1903, %v1884
    %v1905 = vadd.f32 %v1904, %v1886
    %v1906 = vadd.f32 %v1905, %v1888
    %v1907 = vadd.f32 %v1906, %v1890
    %v1908 = vadd.f32 %v1907, %v1892
    %v1909 = vrot.slane %v1908, 4
    %v1910 = vadd.f32 %v1908, %v1909
    %v1911 = vrot.slane %v1910, 2
    %v1912 = vadd.f32 %v1910, %v1911
    %v1913 = vrot.slane %v1912, 1
    %v1914 = vadd.f32 %v1912, %v1913
    %v1915 = vadd.f32 %v1863, %v1865
    %v1916 = vadd.f32 %v1915, %v1867
    %v1917 = vadd.f32 %v1916, %v1869
    %v1918 = vadd.f32 %v1917, %v1871
    %v1919 = vadd.f32 %v1918, %v1873
    %v1920 = vadd.f32 %v1919, %v1875
    %v1921 = vadd.f32 %v1920, %v1877
    %v1922 = vadd.f32 %v1921, %v1879
    %v1923 = vadd.f32 %v1922, %v1881
    %v1924 = vadd.f32 %v1923, %v1883
    %v1925 = vadd.f32 %v1924, %v1885
    %v1926 = vadd.f32 %v1925, %v1887
    %v1927 = vadd.f32 %v1926, %v1889
    %v1928 = vadd.f32 %v1927, %v1891
    %v1929 = vadd.f32 %v1928, %v1893
    %v1930 = vrot.slane %v1929, 4
    %v1931 = vadd.f32 %v1929, %v1930
    %v1932 = vrot.slane %v1931, 2
    %v1933 = vadd.f32 %v1931, %v1932
    %v1934 = vrot.slane %v1933, 1
    %v1935 = vadd.f32 %v1933, %v1934
    %v1936 = vmul.f32 %v1914, %v637
    %v1937 = vmul.f32 %v1935, %v637
    %v1938 = vmul.f32 %v1860, %v1860
    %v1939 = vmul.f32 %v1861, %v1861
    %v1940 = vsub.f32 %v1936, %v1938
    %v1941 = vsub.f32 %v1937, %v1939
    %v1942 = vmax.f32 %v1940, 0.0
    %v1943 = vmax.f32 %v1941, 0.0
    %v1944 = vadd.f32 %v1942, 0.001
    %v1945 = vadd.f32 %v1943, 0.001
    %v1946 = vrsqrt.pop %v1944
    %v1947 = vrsqrt.pop %v1945
    %v1950 = vcombine.low %v1946, %v1947
    %v1952 = vunpack.c.l.s4 1966171168
    %v1953 = vunpack.c.0.s8 %v1952
    %v1954 = vlaneseq
    %v1955 = vshrl.u32 %v1954, 7
    %v1956 = vsub.s32 %v1953, %v1955
    %v1957 = vrot.slane %v1950, %v1956
    %v1959 = vunpack.c.l.s4 1966171168
    %v1960 = vunpack.c.0.s8 %v1959
    %v1961 = vlaneseq
    %v1962 = vshrl.u32 %v1961, 7
    %v1963 = vsub.s32 %v1960, %v1962
    %v1964 = vrot.slane %v1957, %v1963
    %v1966 = vmul.f32 %v1816, %v1964
    %v1968 = vlaneseq
    %v1969 = vshrl.u32 %v1968, 7
    %v1970 = vsub.s32 0, %v1969
    %v1971 = vrot.slane %v1966, %v1970
    %v1972 = vlaneseq
    %v1973 = vshrl.u32 %v1972, 7
    %v1974 = vsub.s32 1, %v1973
    %v1975 = vrot.slane %v1966, %v1974
    %v1978 = vmul.f32 %v1860, %v1971
    %v1979 = vmul.f32 %v1861, %v1975
    %v1982 = vcombine.low %v1978, %v1979
    %v1984 = vunpack.c.l.s4 1966171168
    %v1985 = vunpack.c.0.s8 %v1984
    %v1986 = vlaneseq
    %v1987 = vshrl.u32 %v1986, 7
    %v1988 = vsub.s32 %v1985, %v1987
    %v1989 = vrot.slane %v1982, %v1988
    %v1991 = vunpack.c.l.s4 1966171168
    %v1992 = vunpack.c.0.s8 %v1991
    %v1993 = vlaneseq
    %v1994 = vshrl.u32 %v1993, 7
    %v1995 = vsub.s32 %v1992, %v1994
    %v1996 = vrot.slane %v1989, %v1995
    %v1998 = vsub.f32 %v1817, %v1996
    %v1999 = vmul.f32 %v1738, %v1971
    %v2000 = vmul.f32 %v1740, %v1975
    %v2001 = vmul.f32 %v1742, %v1971
    %v2002 = vmul.f32 %v1744, %v1975
    %v2003 = vmul.f32 %v1748, %v1971
    %v2004 = vmul.f32 %v1750, %v1975
    %v2005 = vmul.f32 %v1752, %v1971
    %v2006 = vmul.f32 %v1754, %v1975
    %v2007 = vmul.f32 %v1758, %v1971
    %v2008 = vmul.f32 %v1760, %v1975
    %v2009 = vmul.f32 %v1762, %v1971
    %v2010 = vmul.f32 %v1764, %v1975
    %v2011 = vmul.f32 %v1768, %v1971
    %v2012 = vmul.f32 %v1770, %v1975
    %v2013 = vmul.f32 %v1772, %v1971
    %v2014 = vmul.f32 %v1774, %v1975
    %v2015 = vmul.f32 %v1778, %v1971
    %v2016 = vmul.f32 %v1780, %v1975
    %v2017 = vmul.f32 %v1782, %v1971
    %v2018 = vmul.f32 %v1784, %v1975
    %v2019 = vmul.f32 %v1788, %v1971
    %v2020 = vmul.f32 %v1790, %v1975
    %v2021 = vmul.f32 %v1792, %v1971
    %v2022 = vmul.f32 %v1794, %v1975
    %v2023 = vmul.f32 %v1798, %v1971
    %v2024 = vmul.f32 %v1800, %v1975
    %v2025 = vmul.f32 %v1802, %v1971
    %v2026 = vmul.f32 %v1804, %v1975
    %v2027 = vmul.f32 %v1808, %v1971
    %v2028 = vmul.f32 %v1810, %v1975
    %v2029 = vmul.f32 %v1812, %v1971
    %v2030 = vmul.f32 %v1814, %v1975
    %v2032 = vlaneseq
    %v2033 = vshrl.u32 %v2032, 7
    %v2034 = vsub.s32 0, %v2033
    %v2035 = vrot.slane %v1998, %v2034
    %v2036 = vlaneseq
    %v2037 = vshrl.u32 %v2036, 7
    %v2038 = vsub.s32 1, %v2037
    %v2039 = vrot.slane %v1998, %v2038
    %v2042 = vadd.f32 %v1999, %v2035
    %v2043 = vadd.f32 %v2000, %v2039
    %v2044 = vadd.f32 %v2001, %v2035
    %v2045 = vadd.f32 %v2002, %v2039
    %v2046 = vadd.f32 %v2003, %v2035
    %v2047 = vadd.f32 %v2004, %v2039
    %v2048 = vadd.f32 %v2005, %v2035
    %v2049 = vadd.f32 %v2006, %v2039
    %v2050 = vadd.f32 %v2007, %v2035
    %v2051 = vadd.f32 %v2008, %v2039
    %v2052 = vadd.f32 %v2009, %v2035
    %v2053 = vadd.f32 %v2010, %v2039
    %v2054 = vadd.f32 %v2011, %v2035
    %v2055 = vadd.f32 %v2012, %v2039
    %v2056 = vadd.f32 %v2013, %v2035
    %v2057 = vadd.f32 %v2014, %v2039
    %v2058 = vadd.f32 %v2015, %v2035
    %v2059 = vadd.f32 %v2016, %v2039
    %v2060 = vadd.f32 %v2017, %v2035
    %v2061 = vadd.f32 %v2018, %v2039
    %v2062 = vadd.f32 %v2019, %v2035
    %v2063 = vadd.f32 %v2020, %v2039
    %v2064 = vadd.f32 %v2021, %v2035
    %v2065 = vadd.f32 %v2022, %v2039
    %v2066 = vadd.f32 %v2023, %v2035
    %v2067 = vadd.f32 %v2024, %v2039
    %v2068 = vadd.f32 %v2025, %v2035
    %v2069 = vadd.f32 %v2026, %v2039
    %v2070 = vadd.f32 %v2027, %v2035
    %v2071 = vadd.f32 %v2028, %v2039
    %v2072 = vadd.f32 %v2029, %v2035
    %v2073 = vadd.f32 %v2030, %v2039
    %v2074 = vmax.f32 %v2042, 0.0
    %v2075 = vmax.f32 %v2043, 0.0
    %v2076 = vmax.f32 %v2044, 0.0
    %v2077 = vmax.f32 %v2045, 0.0
    %v2078 = vmax.f32 %v2046, 0.0
    %v2079 = vmax.f32 %v2047, 0.0
    %v2080 = vmax.f32 %v2048, 0.0
    %v2081 = vmax.f32 %v2049, 0.0
    %v2082 = vmax.f32 %v2050, 0.0
    %v2083 = vmax.f32 %v2051, 0.0
    %v2084 = vmax.f32 %v2052, 0.0
    %v2085 = vmax.f32 %v2053, 0.0
    %v2086 = vmax.f32 %v2054, 0.0
    %v2087 = vmax.f32 %v2055, 0.0
    %v2088 = vmax.f32 %v2056, 0.0
    %v2089 = vmax.f32 %v2057, 0.0
    %v2090 = vmax.f32 %v2058, 0.0
    %v2091 = vmax.f32 %v2059, 0.0
    %v2092 = vmax.f32 %v2060, 0.0
    %v2093 = vmax.f32 %v2061, 0.0
    %v2094 = vmax.f32 %v2062, 0.0
    %v2095 = vmax.f32 %v2063, 0.0
    %v2096 = vmax.f32 %v2064, 0.0
    %v2097 = vmax.f32 %v2065, 0.0
    %v2098 = vmax.f32 %v2066, 0.0
    %v2099 = vmax.f32 %v2067, 0.0
    %v2100 = vmax.f32 %v2068, 0.0
    %v2101 = vmax.f32 %v2069, 0.0
    %v2102 = vmax.f32 %v2070, 0.0
    %v2103 = vmax.f32 %v2071, 0.0
    %v2104 = vmax.f32 %v2072, 0.0
    %v2105 = vmax.f32 %v2073, 0.0
    %v2106 = vld [vmem:[#allocation8] sm:$0xff]
    %v2107 = vld [vmem:[#allocation8 + $0x8] sm:$0xff]
    %v2108 = vld [vmem:[#allocation8 + $0x10] sm:$0xff]
    %v2109 = vld [vmem:[#allocation8 + $0x18] sm:$0xff]
    %v2110 = vld [vmem:[#allocation8 + $0x20] sm:$0xff]
    %v2111 = vld [vmem:[#allocation8 + $0x28] sm:$0xff]
    %v2112 = vld [vmem:[#allocation8 + $0x30] sm:$0xff]
    %v2113 = vld [vmem:[#allocation8 + $0x38] sm:$0xff]
    %v2114 = vld [vmem:[#allocation8 + $0x40] sm:$0xff]
    %v2115 = vld [vmem:[#allocation8 + $0x48] sm:$0xff]
    %v2116 = vld [vmem:[#allocation8 + $0x50] sm:$0xff]
    %v2117 = vld [vmem:[#allocation8 + $0x58] sm:$0xff]
    %v2118 = vld [vmem:[#allocation8 + $0x60] sm:$0xff]
    %v2119 = vld [vmem:[#allocation8 + $0x68] sm:$0xff]
    %v2120 = vld [vmem:[#allocation8 + $0x70] sm:$0xff]
    %v2121 = vld [vmem:[#allocation8 + $0x78] sm:$0xff]
    %v2122 = vld [vmem:[#allocation8 + $0x80] sm:$0xff]
    %v2123 = vld [vmem:[#allocation8 + $0x88] sm:$0xff]
    %v2124 = vld [vmem:[#allocation8 + $0x90] sm:$0xff]
    %v2125 = vld [vmem:[#allocation8 + $0x98] sm:$0xff]
    %v2126 = vld [vmem:[#allocation8 + $0xa0] sm:$0xff]
    %v2127 = vld [vmem:[#allocation8 + $0xa8] sm:$0xff]
    %v2128 = vld [vmem:[#allocation8 + $0xb0] sm:$0xff]
    %v2129 = vld [vmem:[#allocation8 + $0xb8] sm:$0xff]
    %v2130 = vld [vmem:[#allocation8 + $0xc0] sm:$0xff]
    %v2131 = vld [vmem:[#allocation8 + $0xc8] sm:$0xff]
    %v2132 = vld [vmem:[#allocation8 + $0xd0] sm:$0xff]
    %v2133 = vld [vmem:[#allocation8 + $0xd8] sm:$0xff]
    %v2134 = vld [vmem:[#allocation8 + $0xe0] sm:$0xff]
    %v2135 = vld [vmem:[#allocation8 + $0xe8] sm:$0xff]
    %v2136 = vld [vmem:[#allocation8 + $0xf0] sm:$0xff]
    %v2137 = vld [vmem:[#allocation8 + $0xf8] sm:$0xff]
    %v2138 = vpack.c.bf16 %v2076, %v2074
    %v2139 = vpack.c.bf16 %v2077, %v2075
    %v2140 = vpack.c.bf16 %v2080, %v2078
    %v2141 = vpack.c.bf16 %v2081, %v2079
    %v2142 = vpack.c.bf16 %v2084, %v2082
    %v2143 = vpack.c.bf16 %v2085, %v2083
    %v2144 = vpack.c.bf16 %v2088, %v2086
    %v2145 = vpack.c.bf16 %v2089, %v2087
    %v2146 = vpack.c.bf16 %v2092, %v2090
    %v2147 = vpack.c.bf16 %v2093, %v2091
    %v2148 = vpack.c.bf16 %v2096, %v2094
    %v2149 = vpack.c.bf16 %v2097, %v2095
    %v2150 = vpack.c.bf16 %v2100, %v2098
    %v2151 = vpack.c.bf16 %v2101, %v2099
    %v2152 = vpack.c.bf16 %v2104, %v2102
    %v2153 = vpack.c.bf16 %v2105, %v2103
    %v2186 = vunpack.c.l.b16 %v2106
    %v2187 = vunpack.c.h.b16 %v2106
    %v2188 = vunpack.c.l.b16 %v2107
    %v2189 = vunpack.c.h.b16 %v2107
    %v2190 = vunpack.c.l.b16 %v2108
    %v2191 = vunpack.c.h.b16 %v2108
    %v2192 = vunpack.c.l.b16 %v2109
    %v2193 = vunpack.c.h.b16 %v2109
    %v2194 = vunpack.c.l.b16 %v2110
    %v2195 = vunpack.c.h.b16 %v2110
    %v2196 = vunpack.c.l.b16 %v2111
    %v2197 = vunpack.c.h.b16 %v2111
    %v2198 = vunpack.c.l.b16 %v2112
    %v2199 = vunpack.c.h.b16 %v2112
    %v2200 = vunpack.c.l.b16 %v2113
    %v2201 = vunpack.c.h.b16 %v2113
    %v2202 = vunpack.c.l.b16 %v2114
    %v2203 = vunpack.c.h.b16 %v2114
    %v2204 = vunpack.c.l.b16 %v2115
    %v2205 = vunpack.c.h.b16 %v2115
    %v2206 = vunpack.c.l.b16 %v2116
    %v2207 = vunpack.c.h.b16 %v2116
    %v2208 = vunpack.c.l.b16 %v2117
    %v2209 = vunpack.c.h.b16 %v2117
    %v2210 = vunpack.c.l.b16 %v2118
    %v2211 = vunpack.c.h.b16 %v2118
    %v2212 = vunpack.c.l.b16 %v2119
    %v2213 = vunpack.c.h.b16 %v2119
    %v2214 = vunpack.c.l.b16 %v2120
    %v2215 = vunpack.c.h.b16 %v2120
    %v2216 = vunpack.c.l.b16 %v2121
    %v2217 = vunpack.c.h.b16 %v2121
    %v2218 = vunpack.c.l.b16 %v2122
    %v2219 = vunpack.c.h.b16 %v2122
    %v2220 = vunpack.c.l.b16 %v2123
    %v2221 = vunpack.c.h.b16 %v2123
    %v2222 = vunpack.c.l.b16 %v2124
    %v2223 = vunpack.c.h.b16 %v2124
    %v2224 = vunpack.c.l.b16 %v2125
    %v2225 = vunpack.c.h.b16 %v2125
    %v2226 = vunpack.c.l.b16 %v2126
    %v2227 = vunpack.c.h.b16 %v2126
    %v2228 = vunpack.c.l.b16 %v2127
    %v2229 = vunpack.c.h.b16 %v2127
    %v2230 = vunpack.c.l.b16 %v2128
    %v2231 = vunpack.c.h.b16 %v2128
    %v2232 = vunpack.c.l.b16 %v2129
    %v2233 = vunpack.c.h.b16 %v2129
    %v2234 = vunpack.c.l.b16 %v2130
    %v2235 = vunpack.c.h.b16 %v2130
    %v2236 = vunpack.c.l.b16 %v2131
    %v2237 = vunpack.c.h.b16 %v2131
    %v2238 = vunpack.c.l.b16 %v2132
    %v2239 = vunpack.c.h.b16 %v2132
    %v2240 = vunpack.c.l.b16 %v2133
    %v2241 = vunpack.c.h.b16 %v2133
    %v2242 = vunpack.c.l.b16 %v2134
    %v2243 = vunpack.c.h.b16 %v2134
    %v2244 = vunpack.c.l.b16 %v2135
    %v2245 = vunpack.c.h.b16 %v2135
    %v2246 = vunpack.c.l.b16 %v2136
    %v2247 = vunpack.c.h.b16 %v2136
    %v2248 = vunpack.c.l.b16 %v2137
    %v2249 = vunpack.c.h.b16 %v2137
    %v2250 = vpack.c.b16 %v2188, %v2186
    %v2251 = vpack.c.b16 %v2189, %v2187
    %v2252 = vpack.c.b16 %v2192, %v2190
    %v2253 = vpack.c.b16 %v2193, %v2191
    %v2254 = vpack.c.b16 %v2196, %v2194
    %v2255 = vpack.c.b16 %v2197, %v2195
    %v2256 = vpack.c.b16 %v2200, %v2198
    %v2257 = vpack.c.b16 %v2201, %v2199
    %v2258 = vpack.c.b16 %v2204, %v2202
    %v2259 = vpack.c.b16 %v2205, %v2203
    %v2260 = vpack.c.b16 %v2208, %v2206
    %v2261 = vpack.c.b16 %v2209, %v2207
    %v2262 = vpack.c.b16 %v2212, %v2210
    %v2263 = vpack.c.b16 %v2213, %v2211
    %v2264 = vpack.c.b16 %v2216, %v2214
    %v2265 = vpack.c.b16 %v2217, %v2215
    %v2266 = vpack.c.b16 %v2220, %v2218
    %v2267 = vpack.c.b16 %v2221, %v2219
    %v2268 = vpack.c.b16 %v2224, %v2222
    %v2269 = vpack.c.b16 %v2225, %v2223
    %v2270 = vpack.c.b16 %v2228, %v2226
    %v2271 = vpack.c.b16 %v2229, %v2227
    %v2272 = vpack.c.b16 %v2232, %v2230
    %v2273 = vpack.c.b16 %v2233, %v2231
    %v2274 = vpack.c.b16 %v2236, %v2234
    %v2275 = vpack.c.b16 %v2237, %v2235
    %v2276 = vpack.c.b16 %v2240, %v2238
    %v2277 = vpack.c.b16 %v2241, %v2239
    %v2278 = vpack.c.b16 %v2244, %v2242
    %v2279 = vpack.c.b16 %v2245, %v2243
    %v2280 = vpack.c.b16 %v2248, %v2246
    %v2281 = vpack.c.b16 %v2249, %v2247
    %2314 = vmatprep.subr.bf16.mxu0 %v2265
    %2315 = vmatpush1.bf16.msra.mxu0 %v2264
    %2316 = vmatprep.subr.bf16.mxu0 %v2263
    %2317 = vmatpush1.bf16.msra.mxu0 %v2262
    %2318 = vmatprep.subr.bf16.mxu0 %v2261
    %2319 = vmatpush1.bf16.msra.mxu0 %v2260
    %2320 = vmatprep.subr.bf16.mxu0 %v2259
    %2321 = vmatpush1.bf16.msra.mxu0 %v2258
    %2322 = vmatprep.subr.bf16.mxu0 %v2257
    %2323 = vmatpush1.bf16.msra.mxu0 %v2256
    %2324 = vmatprep.subr.bf16.mxu0 %v2255
    %2325 = vmatpush1.bf16.msra.mxu0 %v2254
    %2326 = vmatprep.subr.bf16.mxu0 %v2253
    %2327 = vmatpush1.bf16.msra.mxu0 %v2252
    %2328 = vmatprep.subr.bf16.mxu0 %v2251
    %2329 = vmatpush1.bf16.msra.mxu0 %v2250
    %2330 = vmatprep.subr.bf16.mxu0 %v2281
    %2331 = vmatpush2.bf16.msra.mxu0 %v2280
    %2332 = vmatprep.subr.bf16.mxu0 %v2279
    %2333 = vmatpush2.bf16.msra.mxu0 %v2278
    %2334 = vmatprep.subr.bf16.mxu0 %v2277
    %2335 = vmatpush2.bf16.msra.mxu0 %v2276
    %2336 = vmatprep.subr.bf16.mxu0 %v2275
    %2337 = vmatpush2.bf16.msra.mxu0 %v2274
    %2338 = vmatprep.subr.bf16.mxu0 %v2273
    %2339 = vmatpush2.bf16.msra.mxu0 %v2272
    %2340 = vmatprep.subr.bf16.mxu0 %v2271
    %2341 = vmatpush2.bf16.msra.mxu0 %v2270
    %2342 = vmatprep.subr.bf16.mxu0 %v2269
    %2343 = vmatpush2.bf16.msra.mxu0 %v2268
    %2344 = vmatprep.subr.bf16.mxu0 %v2267
    %2345 = vmatpush2.bf16.msra.mxu0 %v2266
    %2346 = vmatprep.mubr.bf16.mxu0 %v2139
    %2347 = vmatmul.mubr.bf16.gmra.mxu0 %v2138
    %v2348 = vpop.f32.mrf.mxu0
    %v2349 = vadd.f32 0.0, %v2348
    %v2350 = vpop.f32.mrf.mxu0
    %v2351 = vadd.f32 0.0, %v2350
    %v2352 = vpop.f32.mrf.mxu0
    %v2353 = vadd.f32 0.0, %v2352
    %v2354 = vpop.f32.mrf.mxu0
    %v2355 = vadd.f32 0.0, %v2354
    %2356 = vmatprep.mubr.bf16.mxu0 %v2141
    %2357 = vmatmul.mubr.bf16.gmra.mxu0 %v2140
    %v2358 = vpop.f32.mrf.mxu0
    %v2359 = vadd.f32 0.0, %v2358
    %v2360 = vpop.f32.mrf.mxu0
    %v2361 = vadd.f32 0.0, %v2360
    %v2362 = vpop.f32.mrf.mxu0
    %v2363 = vadd.f32 0.0, %v2362
    %v2364 = vpop.f32.mrf.mxu0
    %v2365 = vadd.f32 0.0, %v2364
    %2366 = vmatprep.mubr.bf16.mxu0 %v2143
    %2367 = vmatmul.mubr.bf16.gmra.mxu0 %v2142
    %v2368 = vpop.f32.mrf.mxu0
    %v2369 = vadd.f32 0.0, %v2368
    %v2370 = vpop.f32.mrf.mxu0
    %v2371 = vadd.f32 0.0, %v2370
    %v2372 = vpop.f32.mrf.mxu0
    %v2373 = vadd.f32 0.0, %v2372
    %v2374 = vpop.f32.mrf.mxu0
    %v2375 = vadd.f32 0.0, %v2374
    %2376 = vmatprep.mubr.bf16.mxu0 %v2145
    %2377 = vmatmul.mubr.bf16.gmra.mxu0 %v2144
    %v2378 = vpop.f32.mrf.mxu0
    %v2379 = vadd.f32 0.0, %v2378
    %v2380 = vpop.f32.mrf.mxu0
    %v2381 = vadd.f32 0.0, %v2380
    %v2382 = vpop.f32.mrf.mxu0
    %v2383 = vadd.f32 0.0, %v2382
    %v2384 = vpop.f32.mrf.mxu0
    %v2385 = vadd.f32 0.0, %v2384
    %2386 = vmatprep.mubr.bf16.mxu0 %v2147
    %2387 = vmatmul.mubr.bf16.gmra.mxu0 %v2146
    %v2388 = vpop.f32.mrf.mxu0
    %v2389 = vadd.f32 0.0, %v2388
    %v2390 = vpop.f32.mrf.mxu0
    %v2391 = vadd.f32 0.0, %v2390
    %v2392 = vpop.f32.mrf.mxu0
    %v2393 = vadd.f32 0.0, %v2392
    %v2394 = vpop.f32.mrf.mxu0
    %v2395 = vadd.f32 0.0, %v2394
    %2396 = vmatprep.mubr.bf16.mxu0 %v2149
    %2397 = vmatmul.mubr.bf16.gmra.mxu0 %v2148
    %v2398 = vpop.f32.mrf.mxu0
    %v2399 = vadd.f32 0.0, %v2398
    %v2400 = vpop.f32.mrf.mxu0
    %v2401 = vadd.f32 0.0, %v2400
    %v2402 = vpop.f32.mrf.mxu0
    %v2403 = vadd.f32 0.0, %v2402
    %v2404 = vpop.f32.mrf.mxu0
    %v2405 = vadd.f32 0.0, %v2404
    %2406 = vmatprep.mubr.bf16.mxu0 %v2151
    %2407 = vmatmul.mubr.bf16.gmra.mxu0 %v2150
    %v2408 = vpop.f32.mrf.mxu0
    %v2409 = vadd.f32 0.0, %v2408
    %v2410 = vpop.f32.mrf.mxu0
    %v2411 = vadd.f32 0.0, %v2410
    %v2412 = vpop.f32.mrf.mxu0
    %v2413 = vadd.f32 0.0, %v2412
    %v2414 = vpop.f32.mrf.mxu0
    %v2415 = vadd.f32 0.0, %v2414
    %2416 = vmatprep.mubr.bf16.mxu0 %v2153
    %2417 = vmatmul.mubr.bf16.gmra.mxu0 %v2152
    %v2418 = vpop.f32.mrf.mxu0
    %v2419 = vadd.f32 0.0, %v2418
    %v2420 = vpop.f32.mrf.mxu0
    %v2421 = vadd.f32 0.0, %v2420
    %v2422 = vpop.f32.mrf.mxu0
    %v2423 = vadd.f32 0.0, %v2422
    %v2424 = vpop.f32.mrf.mxu0
    %v2425 = vadd.f32 0.0, %v2424
    %2426 = vdwg.mxu0
    %v2427 = vld [vmem:[#allocation10] sm:$0x3]
    %v2428 = vld [vmem:[#allocation11] sm:$0x3]
    %v2429 = vadd.f32 %v2349, %v2353
    %v2430 = vadd.f32 %v2429, %v2359
    %v2431 = vadd.f32 %v2430, %v2363
    %v2432 = vadd.f32 %v2431, %v2369
    %v2433 = vadd.f32 %v2432, %v2373
    %v2434 = vadd.f32 %v2433, %v2379
    %v2435 = vadd.f32 %v2434, %v2383
    %v2436 = vadd.f32 %v2435, %v2389
    %v2437 = vadd.f32 %v2436, %v2393
    %v2438 = vadd.f32 %v2437, %v2399
    %v2439 = vadd.f32 %v2438, %v2403
    %v2440 = vadd.f32 %v2439, %v2409
    %v2441 = vadd.f32 %v2440, %v2413
    %v2442 = vadd.f32 %v2441, %v2419
    %v2443 = vadd.f32 %v2442, %v2423
    %v2444 = vrot.slane %v2443, 4
    %v2445 = vadd.f32 %v2443, %v2444
    %v2446 = vrot.slane %v2445, 2
    %v2447 = vadd.f32 %v2445, %v2446
    %v2448 = vrot.slane %v2447, 1
    %v2449 = vadd.f32 %v2447, %v2448
    %v2450 = vadd.f32 %v2351, %v2355
    %v2451 = vadd.f32 %v2450, %v2361
    %v2452 = vadd.f32 %v2451, %v2365
    %v2453 = vadd.f32 %v2452, %v2371
    %v2454 = vadd.f32 %v2453, %v2375
    %v2455 = vadd.f32 %v2454, %v2381
    %v2456 = vadd.f32 %v2455, %v2385
    %v2457 = vadd.f32 %v2456, %v2391
    %v2458 = vadd.f32 %v2457, %v2395
    %v2459 = vadd.f32 %v2458, %v2401
    %v2460 = vadd.f32 %v2459, %v2405
    %v2461 = vadd.f32 %v2460, %v2411
    %v2462 = vadd.f32 %v2461, %v2415
    %v2463 = vadd.f32 %v2462, %v2421
    %v2464 = vadd.f32 %v2463, %v2425
    %v2465 = vrot.slane %v2464, 4
    %v2466 = vadd.f32 %v2464, %v2465
    %v2467 = vrot.slane %v2466, 2
    %v2468 = vadd.f32 %v2466, %v2467
    %v2469 = vrot.slane %v2468, 1
    %v2470 = vadd.f32 %v2468, %v2469
    %v2471 = vmul.f32 %v2449, %v637
    %v2472 = vmul.f32 %v2470, %v637
    %v2473 = vmul.f32 %v2349, %v2349
    %v2474 = vmul.f32 %v2351, %v2351
    %v2475 = vmul.f32 %v2353, %v2353
    %v2476 = vmul.f32 %v2355, %v2355
    %v2477 = vmul.f32 %v2359, %v2359
    %v2478 = vmul.f32 %v2361, %v2361
    %v2479 = vmul.f32 %v2363, %v2363
    %v2480 = vmul.f32 %v2365, %v2365
    %v2481 = vmul.f32 %v2369, %v2369
    %v2482 = vmul.f32 %v2371, %v2371
    %v2483 = vmul.f32 %v2373, %v2373
    %v2484 = vmul.f32 %v2375, %v2375
    %v2485 = vmul.f32 %v2379, %v2379
    %v2486 = vmul.f32 %v2381, %v2381
    %v2487 = vmul.f32 %v2383, %v2383
    %v2488 = vmul.f32 %v2385, %v2385
    %v2489 = vmul.f32 %v2389, %v2389
    %v2490 = vmul.f32 %v2391, %v2391
    %v2491 = vmul.f32 %v2393, %v2393
    %v2492 = vmul.f32 %v2395, %v2395
    %v2493 = vmul.f32 %v2399, %v2399
    %v2494 = vmul.f32 %v2401, %v2401
    %v2495 = vmul.f32 %v2403, %v2403
    %v2496 = vmul.f32 %v2405, %v2405
    %v2497 = vmul.f32 %v2409, %v2409
    %v2498 = vmul.f32 %v2411, %v2411
    %v2499 = vmul.f32 %v2413, %v2413
    %v2500 = vmul.f32 %v2415, %v2415
    %v2501 = vmul.f32 %v2419, %v2419
    %v2502 = vmul.f32 %v2421, %v2421
    %v2503 = vmul.f32 %v2423, %v2423
    %v2504 = vmul.f32 %v2425, %v2425
    %v2505 = vadd.f32 %v2473, %v2475
    %v2506 = vadd.f32 %v2505, %v2477
    %v2507 = vadd.f32 %v2506, %v2479
    %v2508 = vadd.f32 %v2507, %v2481
    %v2509 = vadd.f32 %v2508, %v2483
    %v2510 = vadd.f32 %v2509, %v2485
    %v2511 = vadd.f32 %v2510, %v2487
    %v2512 = vadd.f32 %v2511, %v2489
    %v2513 = vadd.f32 %v2512, %v2491
    %v2514 = vadd.f32 %v2513, %v2493
    %v2515 = vadd.f32 %v2514, %v2495
    %v2516 = vadd.f32 %v2515, %v2497
    %v2517 = vadd.f32 %v2516, %v2499
    %v2518 = vadd.f32 %v2517, %v2501
    %v2519 = vadd.f32 %v2518, %v2503
    %v2520 = vrot.slane %v2519, 4
    %v2521 = vadd.f32 %v2519, %v2520
    %v2522 = vrot.slane %v2521, 2
    %v2523 = vadd.f32 %v2521, %v2522
    %v2524 = vrot.slane %v2523, 1
    %v2525 = vadd.f32 %v2523, %v2524
    %v2526 = vadd.f32 %v2474, %v2476
    %v2527 = vadd.f32 %v2526, %v2478
    %v2528 = vadd.f32 %v2527, %v2480
    %v2529 = vadd.f32 %v2528, %v2482
    %v2530 = vadd.f32 %v2529, %v2484
    %v2531 = vadd.f32 %v2530, %v2486
    %v2532 = vadd.f32 %v2531, %v2488
    %v2533 = vadd.f32 %v2532, %v2490
    %v2534 = vadd.f32 %v2533, %v2492
    %v2535 = vadd.f32 %v2534, %v2494
    %v2536 = vadd.f32 %v2535, %v2496
    %v2537 = vadd.f32 %v2536, %v2498
    %v2538 = vadd.f32 %v2537, %v2500
    %v2539 = vadd.f32 %v2538, %v2502
    %v2540 = vadd.f32 %v2539, %v2504
    %v2541 = vrot.slane %v2540, 4
    %v2542 = vadd.f32 %v2540, %v2541
    %v2543 = vrot.slane %v2542, 2
    %v2544 = vadd.f32 %v2542, %v2543
    %v2545 = vrot.slane %v2544, 1
    %v2546 = vadd.f32 %v2544, %v2545
    %v2547 = vmul.f32 %v2525, %v637
    %v2548 = vmul.f32 %v2546, %v637
    %v2549 = vmul.f32 %v2471, %v2471
    %v2550 = vmul.f32 %v2472, %v2472
    %v2551 = vsub.f32 %v2547, %v2549
    %v2552 = vsub.f32 %v2548, %v2550
    %v2553 = vmax.f32 %v2551, 0.0
    %v2554 = vmax.f32 %v2552, 0.0
    %v2555 = vadd.f32 %v2553, 0.001
    %v2556 = vadd.f32 %v2554, 0.001
    %v2557 = vrsqrt.pop %v2555
    %v2558 = vrsqrt.pop %v2556
    %v2561 = vcombine.low %v2557, %v2558
    %v2563 = vunpack.c.l.s4 1966171168
    %v2564 = vunpack.c.0.s8 %v2563
    %v2565 = vlaneseq
    %v2566 = vshrl.u32 %v2565, 7
    %v2567 = vsub.s32 %v2564, %v2566
    %v2568 = vrot.slane %v2561, %v2567
    %v2570 = vunpack.c.l.s4 1966171168
    %v2571 = vunpack.c.0.s8 %v2570
    %v2572 = vlaneseq
    %v2573 = vshrl.u32 %v2572, 7
    %v2574 = vsub.s32 %v2571, %v2573
    %v2575 = vrot.slane %v2568, %v2574
    %v2577 = vmul.f32 %v2427, %v2575
    %v2579 = vlaneseq
    %v2580 = vshrl.u32 %v2579, 7
    %v2581 = vsub.s32 0, %v2580
    %v2582 = vrot.slane %v2577, %v2581
    %v2583 = vlaneseq
    %v2584 = vshrl.u32 %v2583, 7
    %v2585 = vsub.s32 1, %v2584
    %v2586 = vrot.slane %v2577, %v2585
    %v2589 = vmul.f32 %v2471, %v2582
    %v2590 = vmul.f32 %v2472, %v2586
    %v2593 = vcombine.low %v2589, %v2590
    %v2595 = vunpack.c.l.s4 1966171168
    %v2596 = vunpack.c.0.s8 %v2595
    %v2597 = vlaneseq
    %v2598 = vshrl.u32 %v2597, 7
    %v2599 = vsub.s32 %v2596, %v2598
    %v2600 = vrot.slane %v2593, %v2599
    %v2602 = vunpack.c.l.s4 1966171168
    %v2603 = vunpack.c.0.s8 %v2602
    %v2604 = vlaneseq
    %v2605 = vshrl.u32 %v2604, 7
    %v2606 = vsub.s32 %v2603, %v2605
    %v2607 = vrot.slane %v2600, %v2606
    %v2609 = vsub.f32 %v2428, %v2607
    %v2610 = vmul.f32 %v2349, %v2582
    %v2611 = vmul.f32 %v2351, %v2586
    %v2612 = vmul.f32 %v2353, %v2582
    %v2613 = vmul.f32 %v2355, %v2586
    %v2614 = vmul.f32 %v2359, %v2582
    %v2615 = vmul.f32 %v2361, %v2586
    %v2616 = vmul.f32 %v2363, %v2582
    %v2617 = vmul.f32 %v2365, %v2586
    %v2618 = vmul.f32 %v2369, %v2582
    %v2619 = vmul.f32 %v2371, %v2586
    %v2620 = vmul.f32 %v2373, %v2582
    %v2621 = vmul.f32 %v2375, %v2586
    %v2622 = vmul.f32 %v2379, %v2582
    %v2623 = vmul.f32 %v2381, %v2586
    %v2624 = vmul.f32 %v2383, %v2582
    %v2625 = vmul.f32 %v2385, %v2586
    %v2626 = vmul.f32 %v2389, %v2582
    %v2627 = vmul.f32 %v2391, %v2586
    %v2628 = vmul.f32 %v2393, %v2582
    %v2629 = vmul.f32 %v2395, %v2586
    %v2630 = vmul.f32 %v2399, %v2582
    %v2631 = vmul.f32 %v2401, %v2586
    %v2632 = vmul.f32 %v2403, %v2582
    %v2633 = vmul.f32 %v2405, %v2586
    %v2634 = vmul.f32 %v2409, %v2582
    %v2635 = vmul.f32 %v2411, %v2586
    %v2636 = vmul.f32 %v2413, %v2582
    %v2637 = vmul.f32 %v2415, %v2586
    %v2638 = vmul.f32 %v2419, %v2582
    %v2639 = vmul.f32 %v2421, %v2586
    %v2640 = vmul.f32 %v2423, %v2582
    %v2641 = vmul.f32 %v2425, %v2586
    %v2643 = vlaneseq
    %v2644 = vshrl.u32 %v2643, 7
    %v2645 = vsub.s32 0, %v2644
    %v2646 = vrot.slane %v2609, %v2645
    %v2647 = vlaneseq
    %v2648 = vshrl.u32 %v2647, 7
    %v2649 = vsub.s32 1, %v2648
    %v2650 = vrot.slane %v2609, %v2649
    %v2653 = vadd.f32 %v2610, %v2646
    %v2654 = vadd.f32 %v2611, %v2650
    %v2655 = vadd.f32 %v2612, %v2646
    %v2656 = vadd.f32 %v2613, %v2650
    %v2657 = vadd.f32 %v2614, %v2646
    %v2658 = vadd.f32 %v2615, %v2650
    %v2659 = vadd.f32 %v2616, %v2646
    %v2660 = vadd.f32 %v2617, %v2650
    %v2661 = vadd.f32 %v2618, %v2646
    %v2662 = vadd.f32 %v2619, %v2650
    %v2663 = vadd.f32 %v2620, %v2646
    %v2664 = vadd.f32 %v2621, %v2650
    %v2665 = vadd.f32 %v2622, %v2646
    %v2666 = vadd.f32 %v2623, %v2650
    %v2667 = vadd.f32 %v2624, %v2646
    %v2668 = vadd.f32 %v2625, %v2650
    %v2669 = vadd.f32 %v2626, %v2646
    %v2670 = vadd.f32 %v2627, %v2650
    %v2671 = vadd.f32 %v2628, %v2646
    %v2672 = vadd.f32 %v2629, %v2650
    %v2673 = vadd.f32 %v2630, %v2646
    %v2674 = vadd.f32 %v2631, %v2650
    %v2675 = vadd.f32 %v2632, %v2646
    %v2676 = vadd.f32 %v2633, %v2650
    %v2677 = vadd.f32 %v2634, %v2646
    %v2678 = vadd.f32 %v2635, %v2650
    %v2679 = vadd.f32 %v2636, %v2646
    %v2680 = vadd.f32 %v2637, %v2650
    %v2681 = vadd.f32 %v2638, %v2646
    %v2682 = vadd.f32 %v2639, %v2650
    %v2683 = vadd.f32 %v2640, %v2646
    %v2684 = vadd.f32 %v2641, %v2650
    %v2685 = vmax.f32 %v2653, 0.0
    %v2686 = vmax.f32 %v2654, 0.0
    %v2687 = vmax.f32 %v2655, 0.0
    %v2688 = vmax.f32 %v2656, 0.0
    %v2689 = vmax.f32 %v2657, 0.0
    %v2690 = vmax.f32 %v2658, 0.0
    %v2691 = vmax.f32 %v2659, 0.0
    %v2692 = vmax.f32 %v2660, 0.0
    %v2693 = vmax.f32 %v2661, 0.0
    %v2694 = vmax.f32 %v2662, 0.0
    %v2695 = vmax.f32 %v2663, 0.0
    %v2696 = vmax.f32 %v2664, 0.0
    %v2697 = vmax.f32 %v2665, 0.0
    %v2698 = vmax.f32 %v2666, 0.0
    %v2699 = vmax.f32 %v2667, 0.0
    %v2700 = vmax.f32 %v2668, 0.0
    %v2701 = vmax.f32 %v2669, 0.0
    %v2702 = vmax.f32 %v2670, 0.0
    %v2703 = vmax.f32 %v2671, 0.0
    %v2704 = vmax.f32 %v2672, 0.0
    %v2705 = vmax.f32 %v2673, 0.0
    %v2706 = vmax.f32 %v2674, 0.0
    %v2707 = vmax.f32 %v2675, 0.0
    %v2708 = vmax.f32 %v2676, 0.0
    %v2709 = vmax.f32 %v2677, 0.0
    %v2710 = vmax.f32 %v2678, 0.0
    %v2711 = vmax.f32 %v2679, 0.0
    %v2712 = vmax.f32 %v2680, 0.0
    %v2713 = vmax.f32 %v2681, 0.0
    %v2714 = vmax.f32 %v2682, 0.0
    %v2715 = vmax.f32 %v2683, 0.0
    %v2716 = vmax.f32 %v2684, 0.0
    %v2717 = vld [vmem:[#allocation13] sm:$0xff]
    %v2718 = vld [vmem:[#allocation13 + $0x8] sm:$0xff]
    %v2719 = vld [vmem:[#allocation13 + $0x10] sm:$0xff]
    %v2720 = vld [vmem:[#allocation13 + $0x18] sm:$0xff]
    %v2721 = vld [vmem:[#allocation13 + $0x20] sm:$0xff]
    %v2722 = vld [vmem:[#allocation13 + $0x28] sm:$0xff]
    %v2723 = vld [vmem:[#allocation13 + $0x30] sm:$0xff]
    %v2724 = vld [vmem:[#allocation13 + $0x38] sm:$0xff]
    %v2725 = vld [vmem:[#allocation13 + $0x40] sm:$0xff]
    %v2726 = vld [vmem:[#allocation13 + $0x48] sm:$0xff]
    %v2727 = vld [vmem:[#allocation13 + $0x50] sm:$0xff]
    %v2728 = vld [vmem:[#allocation13 + $0x58] sm:$0xff]
    %v2729 = vld [vmem:[#allocation13 + $0x60] sm:$0xff]
    %v2730 = vld [vmem:[#allocation13 + $0x68] sm:$0xff]
    %v2731 = vld [vmem:[#allocation13 + $0x70] sm:$0xff]
    %v2732 = vld [vmem:[#allocation13 + $0x78] sm:$0xff]
    %v2733 = vld [vmem:[#allocation13 + $0x80] sm:$0xff]
    %v2734 = vld [vmem:[#allocation13 + $0x88] sm:$0xff]
    %v2735 = vld [vmem:[#allocation13 + $0x90] sm:$0xff]
    %v2736 = vld [vmem:[#allocation13 + $0x98] sm:$0xff]
    %v2737 = vld [vmem:[#allocation13 + $0xa0] sm:$0xff]
    %v2738 = vld [vmem:[#allocation13 + $0xa8] sm:$0xff]
    %v2739 = vld [vmem:[#allocation13 + $0xb0] sm:$0xff]
    %v2740 = vld [vmem:[#allocation13 + $0xb8] sm:$0xff]
    %v2741 = vld [vmem:[#allocation13 + $0xc0] sm:$0xff]
    %v2742 = vld [vmem:[#allocation13 + $0xc8] sm:$0xff]
    %v2743 = vld [vmem:[#allocation13 + $0xd0] sm:$0xff]
    %v2744 = vld [vmem:[#allocation13 + $0xd8] sm:$0xff]
    %v2745 = vld [vmem:[#allocation13 + $0xe0] sm:$0xff]
    %v2746 = vld [vmem:[#allocation13 + $0xe8] sm:$0xff]
    %v2747 = vld [vmem:[#allocation13 + $0xf0] sm:$0xff]
    %v2748 = vld [vmem:[#allocation13 + $0xf8] sm:$0xff]
    %v2749 = vpack.c.bf16 %v2687, %v2685
    %v2750 = vpack.c.bf16 %v2688, %v2686
    %v2751 = vpack.c.bf16 %v2691, %v2689
    %v2752 = vpack.c.bf16 %v2692, %v2690
    %v2753 = vpack.c.bf16 %v2695, %v2693
    %v2754 = vpack.c.bf16 %v2696, %v2694
    %v2755 = vpack.c.bf16 %v2699, %v2697
    %v2756 = vpack.c.bf16 %v2700, %v2698
    %v2757 = vpack.c.bf16 %v2703, %v2701
    %v2758 = vpack.c.bf16 %v2704, %v2702
    %v2759 = vpack.c.bf16 %v2707, %v2705
    %v2760 = vpack.c.bf16 %v2708, %v2706
    %v2761 = vpack.c.bf16 %v2711, %v2709
    %v2762 = vpack.c.bf16 %v2712, %v2710
    %v2763 = vpack.c.bf16 %v2715, %v2713
    %v2764 = vpack.c.bf16 %v2716, %v2714
    %v2797 = vunpack.c.l.b16 %v2717
    %v2798 = vunpack.c.h.b16 %v2717
    %v2799 = vunpack.c.l.b16 %v2718
    %v2800 = vunpack.c.h.b16 %v2718
    %v2801 = vunpack.c.l.b16 %v2719
    %v2802 = vunpack.c.h.b16 %v2719
    %v2803 = vunpack.c.l.b16 %v2720
    %v2804 = vunpack.c.h.b16 %v2720
    %v2805 = vunpack.c.l.b16 %v2721
    %v2806 = vunpack.c.h.b16 %v2721
    %v2807 = vunpack.c.l.b16 %v2722
    %v2808 = vunpack.c.h.b16 %v2722
    %v2809 = vunpack.c.l.b16 %v2723
    %v2810 = vunpack.c.h.b16 %v2723
    %v2811 = vunpack.c.l.b16 %v2724
    %v2812 = vunpack.c.h.b16 %v2724
    %v2813 = vunpack.c.l.b16 %v2725
    %v2814 = vunpack.c.h.b16 %v2725
    %v2815 = vunpack.c.l.b16 %v2726
    %v2816 = vunpack.c.h.b16 %v2726
    %v2817 = vunpack.c.l.b16 %v2727
    %v2818 = vunpack.c.h.b16 %v2727
    %v2819 = vunpack.c.l.b16 %v2728
    %v2820 = vunpack.c.h.b16 %v2728
    %v2821 = vunpack.c.l.b16 %v2729
    %v2822 = vunpack.c.h.b16 %v2729
    %v2823 = vunpack.c.l.b16 %v2730
    %v2824 = vunpack.c.h.b16 %v2730
    %v2825 = vunpack.c.l.b16 %v2731
    %v2826 = vunpack.c.h.b16 %v2731
    %v2827 = vunpack.c.l.b16 %v2732
    %v2828 = vunpack.c.h.b16 %v2732
    %v2829 = vunpack.c.l.b16 %v2733
    %v2830 = vunpack.c.h.b16 %v2733
    %v2831 = vunpack.c.l.b16 %v2734
    %v2832 = vunpack.c.h.b16 %v2734
    %v2833 = vunpack.c.l.b16 %v2735
    %v2834 = vunpack.c.h.b16 %v2735
    %v2835 = vunpack.c.l.b16 %v2736
    %v2836 = vunpack.c.h.b16 %v2736
    %v2837 = vunpack.c.l.b16 %v2737
    %v2838 = vunpack.c.h.b16 %v2737
    %v2839 = vunpack.c.l.b16 %v2738
    %v2840 = vunpack.c.h.b16 %v2738
    %v2841 = vunpack.c.l.b16 %v2739
    %v2842 = vunpack.c.h.b16 %v2739
    %v2843 = vunpack.c.l.b16 %v2740
    %v2844 = vunpack.c.h.b16 %v2740
    %v2845 = vunpack.c.l.b16 %v2741
    %v2846 = vunpack.c.h.b16 %v2741
    %v2847 = vunpack.c.l.b16 %v2742
    %v2848 = vunpack.c.h.b16 %v2742
    %v2849 = vunpack.c.l.b16 %v2743
    %v2850 = vunpack.c.h.b16 %v2743
    %v2851 = vunpack.c.l.b16 %v2744
    %v2852 = vunpack.c.h.b16 %v2744
    %v2853 = vunpack.c.l.b16 %v2745
    %v2854 = vunpack.c.h.b16 %v2745
    %v2855 = vunpack.c.l.b16 %v2746
    %v2856 = vunpack.c.h.b16 %v2746
    %v2857 = vunpack.c.l.b16 %v2747
    %v2858 = vunpack.c.h.b16 %v2747
    %v2859 = vunpack.c.l.b16 %v2748
    %v2860 = vunpack.c.h.b16 %v2748
    %v2861 = vpack.c.b16 %v2799, %v2797
    %v2862 = vpack.c.b16 %v2800, %v2798
    %v2863 = vpack.c.b16 %v2803, %v2801
    %v2864 = vpack.c.b16 %v2804, %v2802
    %v2865 = vpack.c.b16 %v2807, %v2805
    %v2866 = vpack.c.b16 %v2808, %v2806
    %v2867 = vpack.c.b16 %v2811, %v2809
    %v2868 = vpack.c.b16 %v2812, %v2810
    %v2869 = vpack.c.b16 %v2815, %v2813
    %v2870 = vpack.c.b16 %v2816, %v2814
    %v2871 = vpack.c.b16 %v2819, %v2817
    %v2872 = vpack.c.b16 %v2820, %v2818
    %v2873 = vpack.c.b16 %v2823, %v2821
    %v2874 = vpack.c.b16 %v2824, %v2822
    %v2875 = vpack.c.b16 %v2827, %v2825
    %v2876 = vpack.c.b16 %v2828, %v2826
    %v2877 = vpack.c.b16 %v2831, %v2829
    %v2878 = vpack.c.b16 %v2832, %v2830
    %v2879 = vpack.c.b16 %v2835, %v2833
    %v2880 = vpack.c.b16 %v2836, %v2834
    %v2881 = vpack.c.b16 %v2839, %v2837
    %v2882 = vpack.c.b16 %v2840, %v2838
    %v2883 = vpack.c.b16 %v2843, %v2841
    %v2884 = vpack.c.b16 %v2844, %v2842
    %v2885 = vpack.c.b16 %v2847, %v2845
    %v2886 = vpack.c.b16 %v2848, %v2846
    %v2887 = vpack.c.b16 %v2851, %v2849
    %v2888 = vpack.c.b16 %v2852, %v2850
    %v2889 = vpack.c.b16 %v2855, %v2853
    %v2890 = vpack.c.b16 %v2856, %v2854
    %v2891 = vpack.c.b16 %v2859, %v2857
    %v2892 = vpack.c.b16 %v2860, %v2858
    %2925 = vmatprep.subr.bf16.mxu0 %v2876
    %2926 = vmatpush1.bf16.msra.mxu0 %v2875
    %2927 = vmatprep.subr.bf16.mxu0 %v2874
    %2928 = vmatpush1.bf16.msra.mxu0 %v2873
    %2929 = vmatprep.subr.bf16.mxu0 %v2872
    %2930 = vmatpush1.bf16.msra.mxu0 %v2871
    %2931 = vmatprep.subr.bf16.mxu0 %v2870
    %2932 = vmatpush1.bf16.msra.mxu0 %v2869
    %2933 = vmatprep.subr.bf16.mxu0 %v2868
    %2934 = vmatpush1.bf16.msra.mxu0 %v2867
    %2935 = vmatprep.subr.bf16.mxu0 %v2866
    %2936 = vmatpush1.bf16.msra.mxu0 %v2865
    %2937 = vmatprep.subr.bf16.mxu0 %v2864
    %2938 = vmatpush1.bf16.msra.mxu0 %v2863
    %2939 = vmatprep.subr.bf16.mxu0 %v2862
    %2940 = vmatpush1.bf16.msra.mxu0 %v2861
    %2941 = vmatprep.subr.bf16.mxu0 %v2892
    %2942 = vmatpush2.bf16.msra.mxu0 %v2891
    %2943 = vmatprep.subr.bf16.mxu0 %v2890
    %2944 = vmatpush2.bf16.msra.mxu0 %v2889
    %2945 = vmatprep.subr.bf16.mxu0 %v2888
    %2946 = vmatpush2.bf16.msra.mxu0 %v2887
    %2947 = vmatprep.subr.bf16.mxu0 %v2886
    %2948 = vmatpush2.bf16.msra.mxu0 %v2885
    %2949 = vmatprep.subr.bf16.mxu0 %v2884
    %2950 = vmatpush2.bf16.msra.mxu0 %v2883
    %2951 = vmatprep.subr.bf16.mxu0 %v2882
    %2952 = vmatpush2.bf16.msra.mxu0 %v2881
    %2953 = vmatprep.subr.bf16.mxu0 %v2880
    %2954 = vmatpush2.bf16.msra.mxu0 %v2879
    %2955 = vmatprep.subr.bf16.mxu0 %v2878
    %2956 = vmatpush2.bf16.msra.mxu0 %v2877
    %2957 = vmatprep.mubr.bf16.mxu0 %v2750
    %2958 = vmatmul.mubr.bf16.gmra.mxu0 %v2749
    %v2959 = vpop.f32.mrf.mxu0
    %v2960 = vadd.f32 0.0, %v2959
    %v2961 = vpop.f32.mrf.mxu0
    %v2962 = vadd.f32 0.0, %v2961
    %v2963 = vpop.f32.mrf.mxu0
    %v2964 = vadd.f32 0.0, %v2963
    %v2965 = vpop.f32.mrf.mxu0
    %v2966 = vadd.f32 0.0, %v2965
    %2967 = vmatprep.mubr.bf16.mxu0 %v2752
    %2968 = vmatmul.mubr.bf16.gmra.mxu0 %v2751
    %v2969 = vpop.f32.mrf.mxu0
    %v2970 = vadd.f32 0.0, %v2969
    %v2971 = vpop.f32.mrf.mxu0
    %v2972 = vadd.f32 0.0, %v2971
    %v2973 = vpop.f32.mrf.mxu0
    %v2974 = vadd.f32 0.0, %v2973
    %v2975 = vpop.f32.mrf.mxu0
    %v2976 = vadd.f32 0.0, %v2975
    %2977 = vmatprep.mubr.bf16.mxu0 %v2754
    %2978 = vmatmul.mubr.bf16.gmra.mxu0 %v2753
    %v2979 = vpop.f32.mrf.mxu0
    %v2980 = vadd.f32 0.0, %v2979
    %v2981 = vpop.f32.mrf.mxu0
    %v2982 = vadd.f32 0.0, %v2981
    %v2983 = vpop.f32.mrf.mxu0
    %v2984 = vadd.f32 0.0, %v2983
    %v2985 = vpop.f32.mrf.mxu0
    %v2986 = vadd.f32 0.0, %v2985
    %2987 = vmatprep.mubr.bf16.mxu0 %v2756
    %2988 = vmatmul.mubr.bf16.gmra.mxu0 %v2755
    %v2989 = vpop.f32.mrf.mxu0
    %v2990 = vadd.f32 0.0, %v2989
    %v2991 = vpop.f32.mrf.mxu0
    %v2992 = vadd.f32 0.0, %v2991
    %v2993 = vpop.f32.mrf.mxu0
    %v2994 = vadd.f32 0.0, %v2993
    %v2995 = vpop.f32.mrf.mxu0
    %v2996 = vadd.f32 0.0, %v2995
    %2997 = vmatprep.mubr.bf16.mxu0 %v2758
    %2998 = vmatmul.mubr.bf16.gmra.mxu0 %v2757
    %v2999 = vpop.f32.mrf.mxu0
    %v3000 = vadd.f32 0.0, %v2999
    %v3001 = vpop.f32.mrf.mxu0
    %v3002 = vadd.f32 0.0, %v3001
    %v3003 = vpop.f32.mrf.mxu0
    %v3004 = vadd.f32 0.0, %v3003
    %v3005 = vpop.f32.mrf.mxu0
    %v3006 = vadd.f32 0.0, %v3005
    %3007 = vmatprep.mubr.bf16.mxu0 %v2760
    %3008 = vmatmul.mubr.bf16.gmra.mxu0 %v2759
    %v3009 = vpop.f32.mrf.mxu0
    %v3010 = vadd.f32 0.0, %v3009
    %v3011 = vpop.f32.mrf.mxu0
    %v3012 = vadd.f32 0.0, %v3011
    %v3013 = vpop.f32.mrf.mxu0
    %v3014 = vadd.f32 0.0, %v3013
    %v3015 = vpop.f32.mrf.mxu0
    %v3016 = vadd.f32 0.0, %v3015
    %3017 = vmatprep.mubr.bf16.mxu0 %v2762
    %3018 = vmatmul.mubr.bf16.gmra.mxu0 %v2761
    %v3019 = vpop.f32.mrf.mxu0
    %v3020 = vadd.f32 0.0, %v3019
    %v3021 = vpop.f32.mrf.mxu0
    %v3022 = vadd.f32 0.0, %v3021
    %v3023 = vpop.f32.mrf.mxu0
    %v3024 = vadd.f32 0.0, %v3023
    %v3025 = vpop.f32.mrf.mxu0
    %v3026 = vadd.f32 0.0, %v3025
    %3027 = vmatprep.mubr.bf16.mxu0 %v2764
    %3028 = vmatmul.mubr.bf16.gmra.mxu0 %v2763
    %v3029 = vpop.f32.mrf.mxu0
    %v3030 = vadd.f32 0.0, %v3029
    %v3031 = vpop.f32.mrf.mxu0
    %v3032 = vadd.f32 0.0, %v3031
    %v3033 = vpop.f32.mrf.mxu0
    %v3034 = vadd.f32 0.0, %v3033
    %v3035 = vpop.f32.mrf.mxu0
    %v3036 = vadd.f32 0.0, %v3035
    %3037 = vdwg.mxu0
    %v3038 = vld [vmem:[#allocation14] sm:$0x3]
    %v3039 = vld [vmem:[#allocation16] sm:$0x3]
    %v3040 = vadd.f32 %v2960, %v2964
    %v3041 = vadd.f32 %v3040, %v2970
    %v3042 = vadd.f32 %v3041, %v2974
    %v3043 = vadd.f32 %v3042, %v2980
    %v3044 = vadd.f32 %v3043, %v2984
    %v3045 = vadd.f32 %v3044, %v2990
    %v3046 = vadd.f32 %v3045, %v2994
    %v3047 = vadd.f32 %v3046, %v3000
    %v3048 = vadd.f32 %v3047, %v3004
    %v3049 = vadd.f32 %v3048, %v3010
    %v3050 = vadd.f32 %v3049, %v3014
    %v3051 = vadd.f32 %v3050, %v3020
    %v3052 = vadd.f32 %v3051, %v3024
    %v3053 = vadd.f32 %v3052, %v3030
    %v3054 = vadd.f32 %v3053, %v3034
    %v3055 = vrot.slane %v3054, 4
    %v3056 = vadd.f32 %v3054, %v3055
    %v3057 = vrot.slane %v3056, 2
    %v3058 = vadd.f32 %v3056, %v3057
    %v3059 = vrot.slane %v3058, 1
    %v3060 = vadd.f32 %v3058, %v3059
    %v3061 = vadd.f32 %v2962, %v2966
    %v3062 = vadd.f32 %v3061, %v2972
    %v3063 = vadd.f32 %v3062, %v2976
    %v3064 = vadd.f32 %v3063, %v2982
    %v3065 = vadd.f32 %v3064, %v2986
    %v3066 = vadd.f32 %v3065, %v2992
    %v3067 = vadd.f32 %v3066, %v2996
    %v3068 = vadd.f32 %v3067, %v3002
    %v3069 = vadd.f32 %v3068, %v3006
    %v3070 = vadd.f32 %v3069, %v3012
    %v3071 = vadd.f32 %v3070, %v3016
    %v3072 = vadd.f32 %v3071, %v3022
    %v3073 = vadd.f32 %v3072, %v3026
    %v3074 = vadd.f32 %v3073, %v3032
    %v3075 = vadd.f32 %v3074, %v3036
    %v3076 = vrot.slane %v3075, 4
    %v3077 = vadd.f32 %v3075, %v3076
    %v3078 = vrot.slane %v3077, 2
    %v3079 = vadd.f32 %v3077, %v3078
    %v3080 = vrot.slane %v3079, 1
    %v3081 = vadd.f32 %v3079, %v3080
    %v3082 = vmul.f32 %v3060, %v637
    %v3083 = vmul.f32 %v3081, %v637
    %v3084 = vmul.f32 %v2960, %v2960
    %v3085 = vmul.f32 %v2962, %v2962
    %v3086 = vmul.f32 %v2964, %v2964
    %v3087 = vmul.f32 %v2966, %v2966
    %v3088 = vmul.f32 %v2970, %v2970
    %v3089 = vmul.f32 %v2972, %v2972
    %v3090 = vmul.f32 %v2974, %v2974
    %v3091 = vmul.f32 %v2976, %v2976
    %v3092 = vmul.f32 %v2980, %v2980
    %v3093 = vmul.f32 %v2982, %v2982
    %v3094 = vmul.f32 %v2984, %v2984
    %v3095 = vmul.f32 %v2986, %v2986
    %v3096 = vmul.f32 %v2990, %v2990
    %v3097 = vmul.f32 %v2992, %v2992
    %v3098 = vmul.f32 %v2994, %v2994
    %v3099 = vmul.f32 %v2996, %v2996
    %v3100 = vmul.f32 %v3000, %v3000
    %v3101 = vmul.f32 %v3002, %v3002
    %v3102 = vmul.f32 %v3004, %v3004
    %v3103 = vmul.f32 %v3006, %v3006
    %v3104 = vmul.f32 %v3010, %v3010
    %v3105 = vmul.f32 %v3012, %v3012
    %v3106 = vmul.f32 %v3014, %v3014
    %v3107 = vmul.f32 %v3016, %v3016
    %v3108 = vmul.f32 %v3020, %v3020
    %v3109 = vmul.f32 %v3022, %v3022
    %v3110 = vmul.f32 %v3024, %v3024
    %v3111 = vmul.f32 %v3026, %v3026
    %v3112 = vmul.f32 %v3030, %v3030
    %v3113 = vmul.f32 %v3032, %v3032
    %v3114 = vmul.f32 %v3034, %v3034
    %v3115 = vmul.f32 %v3036, %v3036
    %v3116 = vadd.f32 %v3084, %v3086
    %v3117 = vadd.f32 %v3116, %v3088
    %v3118 = vadd.f32 %v3117, %v3090
    %v3119 = vadd.f32 %v3118, %v3092
    %v3120 = vadd.f32 %v3119, %v3094
    %v3121 = vadd.f32 %v3120, %v3096
    %v3122 = vadd.f32 %v3121, %v3098
    %v3123 = vadd.f32 %v3122, %v3100
    %v3124 = vadd.f32 %v3123, %v3102
    %v3125 = vadd.f32 %v3124, %v3104
    %v3126 = vadd.f32 %v3125, %v3106
    %v3127 = vadd.f32 %v3126, %v3108
    %v3128 = vadd.f32 %v3127, %v3110
    %v3129 = vadd.f32 %v3128, %v3112
    %v3130 = vadd.f32 %v3129, %v3114
    %v3131 = vrot.slane %v3130, 4
    %v3132 = vadd.f32 %v3130, %v3131
    %v3133 = vrot.slane %v3132, 2
    %v3134 = vadd.f32 %v3132, %v3133
    %v3135 = vrot.slane %v3134, 1
    %v3136 = vadd.f32 %v3134, %v3135
    %v3137 = vadd.f32 %v3085, %v3087
    %v3138 = vadd.f32 %v3137, %v3089
    %v3139 = vadd.f32 %v3138, %v3091
    %v3140 = vadd.f32 %v3139, %v3093
    %v3141 = vadd.f32 %v3140, %v3095
    %v3142 = vadd.f32 %v3141, %v3097
    %v3143 = vadd.f32 %v3142, %v3099
    %v3144 = vadd.f32 %v3143, %v3101
    %v3145 = vadd.f32 %v3144, %v3103
    %v3146 = vadd.f32 %v3145, %v3105
    %v3147 = vadd.f32 %v3146, %v3107
    %v3148 = vadd.f32 %v3147, %v3109
    %v3149 = vadd.f32 %v3148, %v3111
    %v3150 = vadd.f32 %v3149, %v3113
    %v3151 = vadd.f32 %v3150, %v3115
    %v3152 = vrot.slane %v3151, 4
    %v3153 = vadd.f32 %v3151, %v3152
    %v3154 = vrot.slane %v3153, 2
    %v3155 = vadd.f32 %v3153, %v3154
    %v3156 = vrot.slane %v3155, 1
    %v3157 = vadd.f32 %v3155, %v3156
    %v3158 = vmul.f32 %v3136, %v637
    %v3159 = vmul.f32 %v3157, %v637
    %v3160 = vmul.f32 %v3082, %v3082
    %v3161 = vmul.f32 %v3083, %v3083
    %v3162 = vsub.f32 %v3158, %v3160
    %v3163 = vsub.f32 %v3159, %v3161
    %v3164 = vmax.f32 %v3162, 0.0
    %v3165 = vmax.f32 %v3163, 0.0
    %v3166 = vadd.f32 %v3164, 0.001
    %v3167 = vadd.f32 %v3165, 0.001
    %v3168 = vrsqrt.pop %v3166
    %v3169 = vrsqrt.pop %v3167
    %v3172 = vcombine.low %v3168, %v3169
    %v3174 = vunpack.c.l.s4 1966171168
    %v3175 = vunpack.c.0.s8 %v3174
    %v3176 = vlaneseq
    %v3177 = vshrl.u32 %v3176, 7
    %v3178 = vsub.s32 %v3175, %v3177
    %v3179 = vrot.slane %v3172, %v3178
    %v3181 = vunpack.c.l.s4 1966171168
    %v3182 = vunpack.c.0.s8 %v3181
    %v3183 = vlaneseq
    %v3184 = vshrl.u32 %v3183, 7
    %v3185 = vsub.s32 %v3182, %v3184
    %v3186 = vrot.slane %v3179, %v3185
    %v3188 = vmul.f32 %v3038, %v3186
    %v3190 = vlaneseq
    %v3191 = vshrl.u32 %v3190, 7
    %v3192 = vsub.s32 0, %v3191
    %v3193 = vrot.slane %v3188, %v3192
    %v3194 = vlaneseq
    %v3195 = vshrl.u32 %v3194, 7
    %v3196 = vsub.s32 1, %v3195
    %v3197 = vrot.slane %v3188, %v3196
    %v3200 = vmul.f32 %v3082, %v3193
    %v3201 = vmul.f32 %v3083, %v3197
    %v3204 = vcombine.low %v3200, %v3201
    %v3206 = vunpack.c.l.s4 1966171168
    %v3207 = vunpack.c.0.s8 %v3206
    %v3208 = vlaneseq
    %v3209 = vshrl.u32 %v3208, 7
    %v3210 = vsub.s32 %v3207, %v3209
    %v3211 = vrot.slane %v3204, %v3210
    %v3213 = vunpack.c.l.s4 1966171168
    %v3214 = vunpack.c.0.s8 %v3213
    %v3215 = vlaneseq
    %v3216 = vshrl.u32 %v3215, 7
    %v3217 = vsub.s32 %v3214, %v3216
    %v3218 = vrot.slane %v3211, %v3217
    %v3220 = vsub.f32 %v3039, %v3218
    %v3221 = vmul.f32 %v2960, %v3193
    %v3222 = vmul.f32 %v2962, %v3197
    %v3223 = vmul.f32 %v2964, %v3193
    %v3224 = vmul.f32 %v2966, %v3197
    %v3225 = vmul.f32 %v2970, %v3193
    %v3226 = vmul.f32 %v2972, %v3197
    %v3227 = vmul.f32 %v2974, %v3193
    %v3228 = vmul.f32 %v2976, %v3197
    %v3229 = vmul.f32 %v2980, %v3193
    %v3230 = vmul.f32 %v2982, %v3197
    %v3231 = vmul.f32 %v2984, %v3193
    %v3232 = vmul.f32 %v2986, %v3197
    %v3233 = vmul.f32 %v2990, %v3193
    %v3234 = vmul.f32 %v2992, %v3197
    %v3235 = vmul.f32 %v2994, %v3193
    %v3236 = vmul.f32 %v2996, %v3197
    %v3237 = vmul.f32 %v3000, %v3193
    %v3238 = vmul.f32 %v3002, %v3197
    %v3239 = vmul.f32 %v3004, %v3193
    %v3240 = vmul.f32 %v3006, %v3197
    %v3241 = vmul.f32 %v3010, %v3193
    %v3242 = vmul.f32 %v3012, %v3197
    %v3243 = vmul.f32 %v3014, %v3193
    %v3244 = vmul.f32 %v3016, %v3197
    %v3245 = vmul.f32 %v3020, %v3193
    %v3246 = vmul.f32 %v3022, %v3197
    %v3247 = vmul.f32 %v3024, %v3193
    %v3248 = vmul.f32 %v3026, %v3197
    %v3249 = vmul.f32 %v3030, %v3193
    %v3250 = vmul.f32 %v3032, %v3197
    %v3251 = vmul.f32 %v3034, %v3193
    %v3252 = vmul.f32 %v3036, %v3197
    %v3254 = vlaneseq
    %v3255 = vshrl.u32 %v3254, 7
    %v3256 = vsub.s32 0, %v3255
    %v3257 = vrot.slane %v3220, %v3256
    %v3258 = vlaneseq
    %v3259 = vshrl.u32 %v3258, 7
    %v3260 = vsub.s32 1, %v3259
    %v3261 = vrot.slane %v3220, %v3260
    %v3264 = vadd.f32 %v3221, %v3257
    %v3265 = vadd.f32 %v3222, %v3261
    %v3266 = vadd.f32 %v3223, %v3257
    %v3267 = vadd.f32 %v3224, %v3261
    %v3268 = vadd.f32 %v3225, %v3257
    %v3269 = vadd.f32 %v3226, %v3261
    %v3270 = vadd.f32 %v3227, %v3257
    %v3271 = vadd.f32 %v3228, %v3261
    %v3272 = vadd.f32 %v3229, %v3257
    %v3273 = vadd.f32 %v3230, %v3261
    %v3274 = vadd.f32 %v3231, %v3257
    %v3275 = vadd.f32 %v3232, %v3261
    %v3276 = vadd.f32 %v3233, %v3257
    %v3277 = vadd.f32 %v3234, %v3261
    %v3278 = vadd.f32 %v3235, %v3257
    %v3279 = vadd.f32 %v3236, %v3261
    %v3280 = vadd.f32 %v3237, %v3257
    %v3281 = vadd.f32 %v3238, %v3261
    %v3282 = vadd.f32 %v3239, %v3257
    %v3283 = vadd.f32 %v3240, %v3261
    %v3284 = vadd.f32 %v3241, %v3257
    %v3285 = vadd.f32 %v3242, %v3261
    %v3286 = vadd.f32 %v3243, %v3257
    %v3287 = vadd.f32 %v3244, %v3261
    %v3288 = vadd.f32 %v3245, %v3257
    %v3289 = vadd.f32 %v3246, %v3261
    %v3290 = vadd.f32 %v3247, %v3257
    %v3291 = vadd.f32 %v3248, %v3261
    %v3292 = vadd.f32 %v3249, %v3257
    %v3293 = vadd.f32 %v3250, %v3261
    %v3294 = vadd.f32 %v3251, %v3257
    %v3295 = vadd.f32 %v3252, %v3261
    %v3296 = vmax.f32 %v3264, 0.0
    %v3297 = vmax.f32 %v3265, 0.0
    %v3298 = vmax.f32 %v3266, 0.0
    %v3299 = vmax.f32 %v3267, 0.0
    %v3300 = vmax.f32 %v3268, 0.0
    %v3301 = vmax.f32 %v3269, 0.0
    %v3302 = vmax.f32 %v3270, 0.0
    %v3303 = vmax.f32 %v3271, 0.0
    %v3304 = vmax.f32 %v3272, 0.0
    %v3305 = vmax.f32 %v3273, 0.0
    %v3306 = vmax.f32 %v3274, 0.0
    %v3307 = vmax.f32 %v3275, 0.0
    %v3308 = vmax.f32 %v3276, 0.0
    %v3309 = vmax.f32 %v3277, 0.0
    %v3310 = vmax.f32 %v3278, 0.0
    %v3311 = vmax.f32 %v3279, 0.0
    %v3312 = vmax.f32 %v3280, 0.0
    %v3313 = vmax.f32 %v3281, 0.0
    %v3314 = vmax.f32 %v3282, 0.0
    %v3315 = vmax.f32 %v3283, 0.0
    %v3316 = vmax.f32 %v3284, 0.0
    %v3317 = vmax.f32 %v3285, 0.0
    %v3318 = vmax.f32 %v3286, 0.0
    %v3319 = vmax.f32 %v3287, 0.0
    %v3320 = vmax.f32 %v3288, 0.0
    %v3321 = vmax.f32 %v3289, 0.0
    %v3322 = vmax.f32 %v3290, 0.0
    %v3323 = vmax.f32 %v3291, 0.0
    %v3324 = vmax.f32 %v3292, 0.0
    %v3325 = vmax.f32 %v3293, 0.0
    %v3326 = vmax.f32 %v3294, 0.0
    %v3327 = vmax.f32 %v3295, 0.0
    %v3328 = vld [vmem:[%s33] sm:$0xf]
    %v3329 = vld [vmem:[%s33 + $0x4] sm:$0xf]
    %v3330 = vld [vmem:[%s33 + $0x8] sm:$0xf]
    %v3331 = vld [vmem:[%s33 + $0xc] sm:$0xf]
    %v3332 = vld [vmem:[%s33 + $0x10] sm:$0xf]
    %v3333 = vld [vmem:[%s33 + $0x14] sm:$0xf]
    %v3334 = vld [vmem:[%s33 + $0x18] sm:$0xf]
    %v3335 = vld [vmem:[%s33 + $0x1c] sm:$0xf]
    %v3336 = vld [vmem:[%s33 + $0x20] sm:$0xf]
    %v3337 = vld [vmem:[%s33 + $0x24] sm:$0xf]
    %v3338 = vld [vmem:[%s33 + $0x28] sm:$0xf]
    %v3339 = vld [vmem:[%s33 + $0x2c] sm:$0xf]
    %v3340 = vld [vmem:[%s33 + $0x30] sm:$0xf]
    %v3341 = vld [vmem:[%s33 + $0x34] sm:$0xf]
    %v3342 = vld [vmem:[%s33 + $0x38] sm:$0xf]
    %v3343 = vld [vmem:[%s33 + $0x3c] sm:$0xf]
    %v3344 = vld [vmem:[%s33 + $0x40] sm:$0xf]
    %v3345 = vld [vmem:[%s33 + $0x44] sm:$0xf]
    %v3346 = vld [vmem:[%s33 + $0x48] sm:$0xf]
    %v3347 = vld [vmem:[%s33 + $0x4c] sm:$0xf]
    %v3348 = vld [vmem:[%s33 + $0x50] sm:$0xf]
    %v3349 = vld [vmem:[%s33 + $0x54] sm:$0xf]
    %v3350 = vld [vmem:[%s33 + $0x58] sm:$0xf]
    %v3351 = vld [vmem:[%s33 + $0x5c] sm:$0xf]
    %v3352 = vld [vmem:[%s33 + $0x60] sm:$0xf]
    %v3353 = vld [vmem:[%s33 + $0x64] sm:$0xf]
    %v3354 = vld [vmem:[%s33 + $0x68] sm:$0xf]
    %v3355 = vld [vmem:[%s33 + $0x6c] sm:$0xf]
    %v3356 = vld [vmem:[%s33 + $0x70] sm:$0xf]
    %v3357 = vld [vmem:[%s33 + $0x74] sm:$0xf]
    %v3358 = vld [vmem:[%s33 + $0x78] sm:$0xf]
    %v3359 = vld [vmem:[%s33 + $0x7c] sm:$0xf]
    %v3360 = vpack.c.bf16 %v3298, %v3296
    %v3361 = vpack.c.bf16 %v3299, %v3297
    %v3362 = vpack.c.bf16 %v3302, %v3300
    %v3363 = vpack.c.bf16 %v3303, %v3301
    %v3364 = vpack.c.bf16 %v3306, %v3304
    %v3365 = vpack.c.bf16 %v3307, %v3305
    %v3366 = vpack.c.bf16 %v3310, %v3308
    %v3367 = vpack.c.bf16 %v3311, %v3309
    %v3368 = vpack.c.bf16 %v3314, %v3312
    %v3369 = vpack.c.bf16 %v3315, %v3313
    %v3370 = vpack.c.bf16 %v3318, %v3316
    %v3371 = vpack.c.bf16 %v3319, %v3317
    %v3372 = vpack.c.bf16 %v3322, %v3320
    %v3373 = vpack.c.bf16 %v3323, %v3321
    %v3374 = vpack.c.bf16 %v3326, %v3324
    %v3375 = vpack.c.bf16 %v3327, %v3325
    %v3408 = vunpack.c.l.b16 %v3328
    %v3409 = vunpack.c.l.b16 %v3329
    %v3410 = vunpack.c.l.b16 %v3330
    %v3411 = vunpack.c.l.b16 %v3331
    %v3412 = vunpack.c.l.b16 %v3332
    %v3413 = vunpack.c.l.b16 %v3333
    %v3414 = vunpack.c.l.b16 %v3334
    %v3415 = vunpack.c.l.b16 %v3335
    %v3416 = vunpack.c.l.b16 %v3336
    %v3417 = vunpack.c.l.b16 %v3337
    %v3418 = vunpack.c.l.b16 %v3338
    %v3419 = vunpack.c.l.b16 %v3339
    %v3420 = vunpack.c.l.b16 %v3340
    %v3421 = vunpack.c.l.b16 %v3341
    %v3422 = vunpack.c.l.b16 %v3342
    %v3423 = vunpack.c.l.b16 %v3343
    %v3424 = vunpack.c.l.b16 %v3344
    %v3425 = vunpack.c.l.b16 %v3345
    %v3426 = vunpack.c.l.b16 %v3346
    %v3427 = vunpack.c.l.b16 %v3347
    %v3428 = vunpack.c.l.b16 %v3348
    %v3429 = vunpack.c.l.b16 %v3349
    %v3430 = vunpack.c.l.b16 %v3350
    %v3431 = vunpack.c.l.b16 %v3351
    %v3432 = vunpack.c.l.b16 %v3352
    %v3433 = vunpack.c.l.b16 %v3353
    %v3434 = vunpack.c.l.b16 %v3354
    %v3435 = vunpack.c.l.b16 %v3355
    %v3436 = vunpack.c.l.b16 %v3356
    %v3437 = vunpack.c.l.b16 %v3357
    %v3438 = vunpack.c.l.b16 %v3358
    %v3439 = vunpack.c.l.b16 %v3359
    %v3440 = vpack.c.b16 %v3409, %v3408
    %v3441 = vpack.c.b16 %v3411, %v3410
    %v3442 = vpack.c.b16 %v3413, %v3412
    %v3443 = vpack.c.b16 %v3415, %v3414
    %v3444 = vpack.c.b16 %v3417, %v3416
    %v3445 = vpack.c.b16 %v3419, %v3418
    %v3446 = vpack.c.b16 %v3421, %v3420
    %v3447 = vpack.c.b16 %v3423, %v3422
    %v3448 = vpack.c.b16 %v3425, %v3424
    %v3449 = vpack.c.b16 %v3427, %v3426
    %v3450 = vpack.c.b16 %v3429, %v3428
    %v3451 = vpack.c.b16 %v3431, %v3430
    %v3452 = vpack.c.b16 %v3433, %v3432
    %v3453 = vpack.c.b16 %v3435, %v3434
    %v3454 = vpack.c.b16 %v3437, %v3436
    %v3455 = vpack.c.b16 %v3439, %v3438
    %3472 = vmatprep.subr.bf16.mxu0 0
    %3473 = vmatpush1.bf16.msra.mxu0 %v3447
    %3474 = vmatprep.subr.bf16.mxu0 0
    %3475 = vmatpush1.bf16.msra.mxu0 %v3446
    %3476 = vmatprep.subr.bf16.mxu0 0
    %3477 = vmatpush1.bf16.msra.mxu0 %v3445
    %3478 = vmatprep.subr.bf16.mxu0 0
    %3479 = vmatpush1.bf16.msra.mxu0 %v3444
    %3480 = vmatprep.subr.bf16.mxu0 0
    %3481 = vmatpush1.bf16.msra.mxu0 %v3443
    %3482 = vmatprep.subr.bf16.mxu0 0
    %3483 = vmatpush1.bf16.msra.mxu0 %v3442
    %3484 = vmatprep.subr.bf16.mxu0 0
    %3485 = vmatpush1.bf16.msra.mxu0 %v3441
    %3486 = vmatprep.subr.bf16.mxu0 0
    %3487 = vmatpush1.bf16.msra.mxu0 %v3440
    %3488 = vmatprep.subr.bf16.mxu0 0
    %3489 = vmatpush2.bf16.msra.mxu0 %v3455
    %3490 = vmatprep.subr.bf16.mxu0 0
    %3491 = vmatpush2.bf16.msra.mxu0 %v3454
    %3492 = vmatprep.subr.bf16.mxu0 0
    %3493 = vmatpush2.bf16.msra.mxu0 %v3453
    %3494 = vmatprep.subr.bf16.mxu0 0
    %3495 = vmatpush2.bf16.msra.mxu0 %v3452
    %3496 = vmatprep.subr.bf16.mxu0 0
    %3497 = vmatpush2.bf16.msra.mxu0 %v3451
    %3498 = vmatprep.subr.bf16.mxu0 0
    %3499 = vmatpush2.bf16.msra.mxu0 %v3450
    %3500 = vmatprep.subr.bf16.mxu0 0
    %3501 = vmatpush2.bf16.msra.mxu0 %v3449
    %3502 = vmatprep.subr.bf16.mxu0 0
    %3503 = vmatpush2.bf16.msra.mxu0 %v3448
    %3504 = vmatprep.mubr.bf16.mxu0 %v3361
    %3505 = vmatmul.mubr.bf16.gmra.mxu0 %v3360
    %v3506 = vpop.f32.mrf.mxu0
    %v3507 = vadd.f32 0.0, %v3506
    %v3508 = vpop.f32.mrf.mxu0
    %v3509 = vpop.f32.mrf.mxu0
    %v3510 = vadd.f32 0.0, %v3509
    %v3511 = vpop.f32.mrf.mxu0
    %3512 = vmatprep.mubr.bf16.mxu0 %v3363
    %3513 = vmatmul.mubr.bf16.gmra.mxu0 %v3362
    %v3514 = vpop.f32.mrf.mxu0
    %v3515 = vadd.f32 0.0, %v3514
    %v3516 = vpop.f32.mrf.mxu0
    %v3517 = vpop.f32.mrf.mxu0
    %v3518 = vadd.f32 0.0, %v3517
    %v3519 = vpop.f32.mrf.mxu0
    %3520 = vmatprep.mubr.bf16.mxu0 %v3365
    %3521 = vmatmul.mubr.bf16.gmra.mxu0 %v3364
    %v3522 = vpop.f32.mrf.mxu0
    %v3523 = vadd.f32 0.0, %v3522
    %v3524 = vpop.f32.mrf.mxu0
    %v3525 = vpop.f32.mrf.mxu0
    %v3526 = vadd.f32 0.0, %v3525
    %v3527 = vpop.f32.mrf.mxu0
    %3528 = vmatprep.mubr.bf16.mxu0 %v3367
    %3529 = vmatmul.mubr.bf16.gmra.mxu0 %v3366
    %v3530 = vpop.f32.mrf.mxu0
    %v3531 = vadd.f32 0.0, %v3530
    %v3532 = vpop.f32.mrf.mxu0
    %v3533 = vpop.f32.mrf.mxu0
    %v3534 = vadd.f32 0.0, %v3533
    %v3535 = vpop.f32.mrf.mxu0
    %3536 = vmatprep.mubr.bf16.mxu0 %v3369
    %3537 = vmatmul.mubr.bf16.gmra.mxu0 %v3368
    %v3538 = vpop.f32.mrf.mxu0
    %v3539 = vadd.f32 0.0, %v3538
    %v3540 = vpop.f32.mrf.mxu0
    %v3541 = vpop.f32.mrf.mxu0
    %v3542 = vadd.f32 0.0, %v3541
    %v3543 = vpop.f32.mrf.mxu0
    %3544 = vmatprep.mubr.bf16.mxu0 %v3371
    %3545 = vmatmul.mubr.bf16.gmra.mxu0 %v3370
    %v3546 = vpop.f32.mrf.mxu0
    %v3547 = vadd.f32 0.0, %v3546
    %v3548 = vpop.f32.mrf.mxu0
    %v3549 = vpop.f32.mrf.mxu0
    %v3550 = vadd.f32 0.0, %v3549
    %v3551 = vpop.f32.mrf.mxu0
    %3552 = vmatprep.mubr.bf16.mxu0 %v3373
    %3553 = vmatmul.mubr.bf16.gmra.mxu0 %v3372
    %v3554 = vpop.f32.mrf.mxu0
    %v3555 = vadd.f32 0.0, %v3554
    %v3556 = vpop.f32.mrf.mxu0
    %v3557 = vpop.f32.mrf.mxu0
    %v3558 = vadd.f32 0.0, %v3557
    %v3559 = vpop.f32.mrf.mxu0
    %3560 = vmatprep.mubr.bf16.mxu0 %v3375
    %3561 = vmatmul.mubr.bf16.gmra.mxu0 %v3374
    %v3562 = vpop.f32.mrf.mxu0
    %v3563 = vadd.f32 0.0, %v3562
    %v3564 = vpop.f32.mrf.mxu0
    %v3565 = vpop.f32.mrf.mxu0
    %v3566 = vadd.f32 0.0, %v3565
    %v3567 = vpop.f32.mrf.mxu0
    %3568 = vdwg.mxu0
    %v3569 = vld [vmem:[#allocation17] sm:$0x1]
    %v3570 = vld [vmem:[#allocation19] sm:$0x1]
    %vm3571 = vcmask 130048
    %v3572 = vsel %vm3571, %v3507, 0.0
    %v3573 = vsel %vm3571, %v3510, 0.0
    %v3574 = vadd.f32 %v3572, %v3573
    %v3575 = vsel %vm3571, %v3515, 0.0
    %v3576 = vadd.f32 %v3574, %v3575
    %v3577 = vsel %vm3571, %v3518, 0.0
    %v3578 = vadd.f32 %v3576, %v3577
    %v3579 = vsel %vm3571, %v3523, 0.0
    %v3580 = vadd.f32 %v3578, %v3579
    %v3581 = vsel %vm3571, %v3526, 0.0
    %v3582 = vadd.f32 %v3580, %v3581
    %v3583 = vsel %vm3571, %v3531, 0.0
    %v3584 = vadd.f32 %v3582, %v3583
    %v3585 = vsel %vm3571, %v3534, 0.0
    %v3586 = vadd.f32 %v3584, %v3585
    %v3587 = vsel %vm3571, %v3539, 0.0
    %v3588 = vadd.f32 %v3586, %v3587
    %v3589 = vsel %vm3571, %v3542, 0.0
    %v3590 = vadd.f32 %v3588, %v3589
    %v3591 = vsel %vm3571, %v3547, 0.0
    %v3592 = vadd.f32 %v3590, %v3591
    %v3593 = vsel %vm3571, %v3550, 0.0
    %v3594 = vadd.f32 %v3592, %v3593
    %v3595 = vsel %vm3571, %v3555, 0.0
    %v3596 = vadd.f32 %v3594, %v3595
    %v3597 = vsel %vm3571, %v3558, 0.0
    %v3598 = vadd.f32 %v3596, %v3597
    %v3599 = vsel %vm3571, %v3563, 0.0
    %v3600 = vadd.f32 %v3598, %v3599
    %v3601 = vsel %vm3571, %v3566, 0.0
    %v3602 = vadd.f32 %v3600, %v3601
    %v3603 = vrot.slane %v3602, 4
    %v3604 = vadd.f32 %v3602, %v3603
    %v3605 = vrot.slane %v3604, 2
    %v3606 = vadd.f32 %v3604, %v3605
    %v3607 = vrot.slane %v3606, 1
    %v3608 = vadd.f32 %v3606, %v3607
    %v3609 = vmul.f32 %v3608, %v637
    %v3610 = vmul.f32 %v3507, %v3507
    %v3611 = vmul.f32 %v3510, %v3510
    %v3612 = vmul.f32 %v3515, %v3515
    %v3613 = vmul.f32 %v3518, %v3518
    %v3614 = vmul.f32 %v3523, %v3523
    %v3615 = vmul.f32 %v3526, %v3526
    %v3616 = vmul.f32 %v3531, %v3531
    %v3617 = vmul.f32 %v3534, %v3534
    %v3618 = vmul.f32 %v3539, %v3539
    %v3619 = vmul.f32 %v3542, %v3542
    %v3620 = vmul.f32 %v3547, %v3547
    %v3621 = vmul.f32 %v3550, %v3550
    %v3622 = vmul.f32 %v3555, %v3555
    %v3623 = vmul.f32 %v3558, %v3558
    %v3624 = vmul.f32 %v3563, %v3563
    %v3625 = vmul.f32 %v3566, %v3566
    %v3626 = vsel %vm3571, %v3610, 0.0
    %v3627 = vsel %vm3571, %v3611, 0.0
    %v3628 = vadd.f32 %v3626, %v3627
    %v3629 = vsel %vm3571, %v3612, 0.0
    %v3630 = vadd.f32 %v3628, %v3629
    %v3631 = vsel %vm3571, %v3613, 0.0
    %v3632 = vadd.f32 %v3630, %v3631
    %v3633 = vsel %vm3571, %v3614, 0.0
    %v3634 = vadd.f32 %v3632, %v3633
    %v3635 = vsel %vm3571, %v3615, 0.0
    %v3636 = vadd.f32 %v3634, %v3635
    %v3637 = vsel %vm3571, %v3616, 0.0
    %v3638 = vadd.f32 %v3636, %v3637
    %v3639 = vsel %vm3571, %v3617, 0.0
    %v3640 = vadd.f32 %v3638, %v3639
    %v3641 = vsel %vm3571, %v3618, 0.0
    %v3642 = vadd.f32 %v3640, %v3641
    %v3643 = vsel %vm3571, %v3619, 0.0
    %v3644 = vadd.f32 %v3642, %v3643
    %v3645 = vsel %vm3571, %v3620, 0.0
    %v3646 = vadd.f32 %v3644, %v3645
    %v3647 = vsel %vm3571, %v3621, 0.0
    %v3648 = vadd.f32 %v3646, %v3647
    %v3649 = vsel %vm3571, %v3622, 0.0
    %v3650 = vadd.f32 %v3648, %v3649
    %v3651 = vsel %vm3571, %v3623, 0.0
    %v3652 = vadd.f32 %v3650, %v3651
    %v3653 = vsel %vm3571, %v3624, 0.0
    %v3654 = vadd.f32 %v3652, %v3653
    %v3655 = vsel %vm3571, %v3625, 0.0
    %v3656 = vadd.f32 %v3654, %v3655
    %v3657 = vrot.slane %v3656, 4
    %v3658 = vadd.f32 %v3656, %v3657
    %v3659 = vrot.slane %v3658, 2
    %v3660 = vadd.f32 %v3658, %v3659
    %v3661 = vrot.slane %v3660, 1
    %v3662 = vadd.f32 %v3660, %v3661
    %v3663 = vmul.f32 %v3662, %v637
    %v3664 = vmul.f32 %v3609, %v3609
    %v3665 = vsub.f32 %v3663, %v3664
    %v3666 = vmax.f32 %v3665, 0.0
    %v3667 = vadd.f32 %v3666, 0.001
    %v3668 = vrsqrt.pop %v3667
    %v3669 = vmul.f32 %v3569, %v3668
    %v3670 = vmul.f32 %v3609, %v3669
    %v3671 = vsub.f32 %v3570, %v3670
    %v3673 = vlaneseq
    %v3674 = vshrl.u32 %v3673, 7
    %v3675 = vsub.s32 0, %v3674
    %v3676 = vrot.slane %v3669, %v3675
    %v3678 = vmul.f32 %v3507, %v3676
    %v3679 = vmul.f32 %v3510, %v3676
    %v3680 = vmul.f32 %v3515, %v3676
    %v3681 = vmul.f32 %v3518, %v3676
    %v3682 = vmul.f32 %v3523, %v3676
    %v3683 = vmul.f32 %v3526, %v3676
    %v3684 = vmul.f32 %v3531, %v3676
    %v3685 = vmul.f32 %v3534, %v3676
    %v3686 = vmul.f32 %v3539, %v3676
    %v3687 = vmul.f32 %v3542, %v3676
    %v3688 = vmul.f32 %v3547, %v3676
    %v3689 = vmul.f32 %v3550, %v3676
    %v3690 = vmul.f32 %v3555, %v3676
    %v3691 = vmul.f32 %v3558, %v3676
    %v3692 = vmul.f32 %v3563, %v3676
    %v3693 = vmul.f32 %v3566, %v3676
    %v3695 = vlaneseq
    %v3696 = vshrl.u32 %v3695, 7
    %v3697 = vsub.s32 0, %v3696
    %v3698 = vrot.slane %v3671, %v3697
    %v3700 = vadd.f32 %v3678, %v3698
    %v3701 = vadd.f32 %v3679, %v3698
    %v3702 = vadd.f32 %v3680, %v3698
    %v3703 = vadd.f32 %v3681, %v3698
    %v3704 = vadd.f32 %v3682, %v3698
    %v3705 = vadd.f32 %v3683, %v3698
    %v3706 = vadd.f32 %v3684, %v3698
    %v3707 = vadd.f32 %v3685, %v3698
    %v3708 = vadd.f32 %v3686, %v3698
    %v3709 = vadd.f32 %v3687, %v3698
    %v3710 = vadd.f32 %v3688, %v3698
    %v3711 = vadd.f32 %v3689, %v3698
    %v3712 = vadd.f32 %v3690, %v3698
    %v3713 = vadd.f32 %v3691, %v3698
    %v3714 = vadd.f32 %v3692, %v3698
    %v3715 = vadd.f32 %v3693, %v3698
    %v3716 = vmax.f32 %v3700, 0.0
    %v3717 = vmax.f32 %v3701, 0.0
    %v3718 = vmax.f32 %v3702, 0.0
    %v3719 = vmax.f32 %v3703, 0.0
    %v3720 = vmax.f32 %v3704, 0.0
    %v3721 = vmax.f32 %v3705, 0.0
    %v3722 = vmax.f32 %v3706, 0.0
    %v3723 = vmax.f32 %v3707, 0.0
    %v3724 = vmax.f32 %v3708, 0.0
    %v3725 = vmax.f32 %v3709, 0.0
    %v3726 = vmax.f32 %v3710, 0.0
    %v3727 = vmax.f32 %v3711, 0.0
    %v3728 = vmax.f32 %v3712, 0.0
    %v3729 = vmax.f32 %v3713, 0.0
    %v3730 = vmax.f32 %v3714, 0.0
    %v3731 = vmax.f32 %v3715, 0.0
    %3732 = vst.msk [vmem:[%s75] sm:$0xff] %vm3571, %v3716
    %3733 = vst.msk [vmem:[%s75 + $0x8] sm:$0xff] %vm3571, %v3717
    %3734 = vst.msk [vmem:[%s75 + $0x10] sm:$0xff] %vm3571, %v3718
    %3735 = vst.msk [vmem:[%s75 + $0x18] sm:$0xff] %vm3571, %v3719
    %3736 = vst.msk [vmem:[%s75 + $0x20] sm:$0xff] %vm3571, %v3720
    %3737 = vst.msk [vmem:[%s75 + $0x28] sm:$0xff] %vm3571, %v3721
    %3738 = vst.msk [vmem:[%s75 + $0x30] sm:$0xff] %vm3571, %v3722
    %3739 = vst.msk [vmem:[%s75 + $0x38] sm:$0xff] %vm3571, %v3723
    %3740 = vst.msk [vmem:[%s75 + $0x40] sm:$0xff] %vm3571, %v3724
    %3741 = vst.msk [vmem:[%s75 + $0x48] sm:$0xff] %vm3571, %v3725
    %3742 = vst.msk [vmem:[%s75 + $0x50] sm:$0xff] %vm3571, %v3726
    %3743 = vst.msk [vmem:[%s75 + $0x58] sm:$0xff] %vm3571, %v3727
    %3744 = vst.msk [vmem:[%s75 + $0x60] sm:$0xff] %vm3571, %v3728
    %3745 = vst.msk [vmem:[%s75 + $0x68] sm:$0xff] %vm3571, %v3729
    %3746 = vst.msk [vmem:[%s75 + $0x70] sm:$0xff] %vm3571, %v3730
    %3747 = vst.msk [vmem:[%s75 + $0x78] sm:$0xff] %vm3571, %v3731
    %v3748 = vld [vmem:[%s39] sm:$0xff]
    %v3749 = vld [vmem:[%s39 + $0x8] sm:$0xff]
    %v3750 = vpack.c.bf16 %v3717, %v3716
    %v3751 = vpack.c.bf16 %v3719, %v3718
    %v3752 = vpack.c.bf16 %v3721, %v3720
    %v3753 = vpack.c.bf16 %v3723, %v3722
    %v3754 = vpack.c.bf16 %v3725, %v3724
    %v3755 = vpack.c.bf16 %v3727, %v3726
    %v3756 = vpack.c.bf16 %v3729, %v3728
    %v3757 = vpack.c.bf16 %v3731, %v3730
    %v3760 = vunpack.c.l.b16 %v3748
    %v3761 = vunpack.c.h.b16 %v3748
    %v3762 = vunpack.c.l.b16 %v3749
    %v3763 = vunpack.c.h.b16 %v3749
    %v3764 = vpack.c.b16 %v3762, %v3760
    %v3765 = vpack.c.b16 %v3763, %v3761
    %v3769 = vsel %vm3571, %v3750, 0
    %v3772 = vsel %vm3571, %v3751, 0
    %v3775 = vsel %vm3571, %v3752, 0
    %v3778 = vsel %vm3571, %v3753, 0
    %v3781 = vsel %vm3571, %v3754, 0
    %v3784 = vsel %vm3571, %v3755, 0
    %v3787 = vsel %vm3571, %v3756, 0
    %v3790 = vsel %vm3571, %v3757, 0
    %3792 = vmatprep.subr.bf16.mxu0 0
    %3793 = vmatpush1.bf16.msra.mxu0 0
    %3794 = vmatprep.subr.bf16.mxu0 0
    %3795 = vmatpush1.bf16.msra.mxu0 0
    %3796 = vmatprep.subr.bf16.mxu0 0
    %3797 = vmatpush1.bf16.msra.mxu0 0
    %3798 = vmatprep.subr.bf16.mxu0 0
    %3799 = vmatpush1.bf16.msra.mxu0 0
    %3800 = vmatprep.subr.bf16.mxu0 0
    %3801 = vmatpush1.bf16.msra.mxu0 0
    %3802 = vmatprep.subr.bf16.mxu0 0
    %3803 = vmatpush1.bf16.msra.mxu0 0
    %3804 = vmatprep.subr.bf16.mxu0 0
    %3805 = vmatpush1.bf16.msra.mxu0 0
    %3806 = vmatprep.subr.bf16.mxu0 %v3765
    %3807 = vmatpush1.bf16.msra.mxu0 %v3764
    %3808 = vmatprep.subr.bf16.mxu0 0
    %3809 = vmatpush2.bf16.msra.mxu0 0
    %3810 = vmatprep.subr.bf16.mxu0 0
    %3811 = vmatpush2.bf16.msra.mxu0 0
    %3812 = vmatprep.subr.bf16.mxu0 0
    %3813 = vmatpush2.bf16.msra.mxu0 0
    %3814 = vmatprep.subr.bf16.mxu0 0
    %3815 = vmatpush2.bf16.msra.mxu0 0
    %3816 = vmatprep.subr.bf16.mxu0 0
    %3817 = vmatpush2.bf16.msra.mxu0 0
    %3818 = vmatprep.subr.bf16.mxu0 0
    %3819 = vmatpush2.bf16.msra.mxu0 0
    %3820 = vmatprep.subr.bf16.mxu0 0
    %3821 = vmatpush2.bf16.msra.mxu0 0
    %3822 = vmatprep.subr.bf16.mxu0 0
    %3823 = vmatpush2.bf16.msra.mxu0 0
    %3824 = vmatprep.mubr.bf16.mxu0 0
    %3825 = vmatmul.mubr.bf16.gmra.mxu0 %v3769
    %v3826 = vpop.f32.mrf.mxu0
    %v3827 = vadd.f32 0.0, %v3826
    %v3828 = vpop.f32.mrf.mxu0
    %v3829 = vadd.f32 0.0, %v3828
    %v3830 = vpop.f32.mrf.mxu0
    %v3831 = vadd.f32 0.0, %v3830
    %v3832 = vpop.f32.mrf.mxu0
    %v3833 = vadd.f32 0.0, %v3832
    %3834 = vmatprep.mubr.bf16.mxu0 0
    %3835 = vmatmul.mubr.bf16.gmra.mxu0 %v3772
    %v3836 = vpop.f32.mrf.mxu0
    %v3837 = vadd.f32 0.0, %v3836
    %v3838 = vpop.f32.mrf.mxu0
    %v3839 = vadd.f32 0.0, %v3838
    %v3840 = vpop.f32.mrf.mxu0
    %v3841 = vadd.f32 0.0, %v3840
    %v3842 = vpop.f32.mrf.mxu0
    %v3843 = vadd.f32 0.0, %v3842
    %3844 = vmatprep.mubr.bf16.mxu0 0
    %3845 = vmatmul.mubr.bf16.gmra.mxu0 %v3775
    %v3846 = vpop.f32.mrf.mxu0
    %v3847 = vadd.f32 0.0, %v3846
    %v3848 = vpop.f32.mrf.mxu0
    %v3849 = vadd.f32 0.0, %v3848
    %v3850 = vpop.f32.mrf.mxu0
    %v3851 = vadd.f32 0.0, %v3850
    %v3852 = vpop.f32.mrf.mxu0
    %v3853 = vadd.f32 0.0, %v3852
    %3854 = vmatprep.mubr.bf16.mxu0 0
    %3855 = vmatmul.mubr.bf16.gmra.mxu0 %v3778
    %v3856 = vpop.f32.mrf.mxu0
    %v3857 = vadd.f32 0.0, %v3856
    %v3858 = vpop.f32.mrf.mxu0
    %v3859 = vadd.f32 0.0, %v3858
    %v3860 = vpop.f32.mrf.mxu0
    %v3861 = vadd.f32 0.0, %v3860
    %v3862 = vpop.f32.mrf.mxu0
    %v3863 = vadd.f32 0.0, %v3862
    %3864 = vmatprep.mubr.bf16.mxu0 0
    %3865 = vmatmul.mubr.bf16.gmra.mxu0 %v3781
    %v3866 = vpop.f32.mrf.mxu0
    %v3867 = vadd.f32 0.0, %v3866
    %v3868 = vpop.f32.mrf.mxu0
    %v3869 = vadd.f32 0.0, %v3868
    %v3870 = vpop.f32.mrf.mxu0
    %v3871 = vadd.f32 0.0, %v3870
    %v3872 = vpop.f32.mrf.mxu0
    %v3873 = vadd.f32 0.0, %v3872
    %3874 = vmatprep.mubr.bf16.mxu0 0
    %3875 = vmatmul.mubr.bf16.gmra.mxu0 %v3784
    %v3876 = vpop.f32.mrf.mxu0
    %v3877 = vadd.f32 0.0, %v3876
    %v3878 = vpop.f32.mrf.mxu0
    %v3879 = vadd.f32 0.0, %v3878
    %v3880 = vpop.f32.mrf.mxu0
    %v3881 = vadd.f32 0.0, %v3880
    %v3882 = vpop.f32.mrf.mxu0
    %v3883 = vadd.f32 0.0, %v3882
    %3884 = vmatprep.mubr.bf16.mxu0 0
    %3885 = vmatmul.mubr.bf16.gmra.mxu0 %v3787
    %v3886 = vpop.f32.mrf.mxu0
    %v3887 = vadd.f32 0.0, %v3886
    %v3888 = vpop.f32.mrf.mxu0
    %v3889 = vadd.f32 0.0, %v3888
    %v3890 = vpop.f32.mrf.mxu0
    %v3891 = vadd.f32 0.0, %v3890
    %v3892 = vpop.f32.mrf.mxu0
    %v3893 = vadd.f32 0.0, %v3892
    %3894 = vmatprep.mubr.bf16.mxu0 0
    %3895 = vmatmul.mubr.bf16.gmra.mxu0 %v3790
    %v3896 = vpop.f32.mrf.mxu0
    %v3897 = vadd.f32 0.0, %v3896
    %v3898 = vpop.f32.mrf.mxu0
    %v3899 = vadd.f32 0.0, %v3898
    %v3900 = vpop.f32.mrf.mxu0
    %v3901 = vadd.f32 0.0, %v3900
    %v3902 = vpop.f32.mrf.mxu0
    %v3903 = vadd.f32 0.0, %v3902
    %3904 = vdwg.mxu0
    %v3905 = vld [vmem:[%s41] sm:$0x3]
    %v3906 = vld [vmem:[%s43] sm:$0x3]
    %v3907 = vadd.f32 %v3827, %v3831
    %v3908 = vadd.f32 %v3907, %v3837
    %v3909 = vadd.f32 %v3908, %v3841
    %v3910 = vadd.f32 %v3909, %v3847
    %v3911 = vadd.f32 %v3910, %v3851
    %v3912 = vadd.f32 %v3911, %v3857
    %v3913 = vadd.f32 %v3912, %v3861
    %v3914 = vadd.f32 %v3913, %v3867
    %v3915 = vadd.f32 %v3914, %v3871
    %v3916 = vadd.f32 %v3915, %v3877
    %v3917 = vadd.f32 %v3916, %v3881
    %v3918 = vadd.f32 %v3917, %v3887
    %v3919 = vadd.f32 %v3918, %v3891
    %v3920 = vadd.f32 %v3919, %v3897
    %v3921 = vadd.f32 %v3920, %v3901
    %v3922 = vrot.slane %v3921, 4
    %v3923 = vadd.f32 %v3921, %v3922
    %v3924 = vrot.slane %v3923, 2
    %v3925 = vadd.f32 %v3923, %v3924
    %v3926 = vrot.slane %v3925, 1
    %v3927 = vadd.f32 %v3925, %v3926
    %v3928 = vadd.f32 %v3829, %v3833
    %v3929 = vadd.f32 %v3928, %v3839
    %v3930 = vadd.f32 %v3929, %v3843
    %v3931 = vadd.f32 %v3930, %v3849
    %v3932 = vadd.f32 %v3931, %v3853
    %v3933 = vadd.f32 %v3932, %v3859
    %v3934 = vadd.f32 %v3933, %v3863
    %v3935 = vadd.f32 %v3934, %v3869
    %v3936 = vadd.f32 %v3935, %v3873
    %v3937 = vadd.f32 %v3936, %v3879
    %v3938 = vadd.f32 %v3937, %v3883
    %v3939 = vadd.f32 %v3938, %v3889
    %v3940 = vadd.f32 %v3939, %v3893
    %v3941 = vadd.f32 %v3940, %v3899
    %v3942 = vadd.f32 %v3941, %v3903
    %v3943 = vrot.slane %v3942, 4
    %v3944 = vadd.f32 %v3942, %v3943
    %v3945 = vrot.slane %v3944, 2
    %v3946 = vadd.f32 %v3944, %v3945
    %v3947 = vrot.slane %v3946, 1
    %v3948 = vadd.f32 %v3946, %v3947
    %v3949 = vmul.f32 %v3927, %v637
    %v3950 = vmul.f32 %v3948, %v637
    %v3951 = vmul.f32 %v3827, %v3827
    %v3952 = vmul.f32 %v3829, %v3829
    %v3953 = vmul.f32 %v3831, %v3831
    %v3954 = vmul.f32 %v3833, %v3833
    %v3955 = vmul.f32 %v3837, %v3837
    %v3956 = vmul.f32 %v3839, %v3839
    %v3957 = vmul.f32 %v3841, %v3841
    %v3958 = vmul.f32 %v3843, %v3843
    %v3959 = vmul.f32 %v3847, %v3847
    %v3960 = vmul.f32 %v3849, %v3849
    %v3961 = vmul.f32 %v3851, %v3851
    %v3962 = vmul.f32 %v3853, %v3853
    %v3963 = vmul.f32 %v3857, %v3857
    %v3964 = vmul.f32 %v3859, %v3859
    %v3965 = vmul.f32 %v3861, %v3861
    %v3966 = vmul.f32 %v3863, %v3863
    %v3967 = vmul.f32 %v3867, %v3867
    %v3968 = vmul.f32 %v3869, %v3869
    %v3969 = vmul.f32 %v3871, %v3871
    %v3970 = vmul.f32 %v3873, %v3873
    %v3971 = vmul.f32 %v3877, %v3877
    %v3972 = vmul.f32 %v3879, %v3879
    %v3973 = vmul.f32 %v3881, %v3881
    %v3974 = vmul.f32 %v3883, %v3883
    %v3975 = vmul.f32 %v3887, %v3887
    %v3976 = vmul.f32 %v3889, %v3889
    %v3977 = vmul.f32 %v3891, %v3891
    %v3978 = vmul.f32 %v3893, %v3893
    %v3979 = vmul.f32 %v3897, %v3897
    %v3980 = vmul.f32 %v3899, %v3899
    %v3981 = vmul.f32 %v3901, %v3901
    %v3982 = vmul.f32 %v3903, %v3903
    %v3983 = vadd.f32 %v3951, %v3953
    %v3984 = vadd.f32 %v3983, %v3955
    %v3985 = vadd.f32 %v3984, %v3957
    %v3986 = vadd.f32 %v3985, %v3959
    %v3987 = vadd.f32 %v3986, %v3961
    %v3988 = vadd.f32 %v3987, %v3963
    %v3989 = vadd.f32 %v3988, %v3965
    %v3990 = vadd.f32 %v3989, %v3967
    %v3991 = vadd.f32 %v3990, %v3969
    %v3992 = vadd.f32 %v3991, %v3971
    %v3993 = vadd.f32 %v3992, %v3973
    %v3994 = vadd.f32 %v3993, %v3975
    %v3995 = vadd.f32 %v3994, %v3977
    %v3996 = vadd.f32 %v3995, %v3979
    %v3997 = vadd.f32 %v3996, %v3981
    %v3998 = vrot.slane %v3997, 4
    %v3999 = vadd.f32 %v3997, %v3998
    %v4000 = vrot.slane %v3999, 2
    %v4001 = vadd.f32 %v3999, %v4000
    %v4002 = vrot.slane %v4001, 1
    %v4003 = vadd.f32 %v4001, %v4002
    %v4004 = vadd.f32 %v3952, %v3954
    %v4005 = vadd.f32 %v4004, %v3956
    %v4006 = vadd.f32 %v4005, %v3958
    %v4007 = vadd.f32 %v4006, %v3960
    %v4008 = vadd.f32 %v4007, %v3962
    %v4009 = vadd.f32 %v4008, %v3964
    %v4010 = vadd.f32 %v4009, %v3966
    %v4011 = vadd.f32 %v4010, %v3968
    %v4012 = vadd.f32 %v4011, %v3970
    %v4013 = vadd.f32 %v4012, %v3972
    %v4014 = vadd.f32 %v4013, %v3974
    %v4015 = vadd.f32 %v4014, %v3976
    %v4016 = vadd.f32 %v4015, %v3978
    %v4017 = vadd.f32 %v4016, %v3980
    %v4018 = vadd.f32 %v4017, %v3982
    %v4019 = vrot.slane %v4018, 4
    %v4020 = vadd.f32 %v4018, %v4019
    %v4021 = vrot.slane %v4020, 2
    %v4022 = vadd.f32 %v4020, %v4021
    %v4023 = vrot.slane %v4022, 1
    %v4024 = vadd.f32 %v4022, %v4023
    %v4025 = vmul.f32 %v4003, %v637
    %v4026 = vmul.f32 %v4024, %v637
    %v4027 = vmul.f32 %v3949, %v3949
    %v4028 = vmul.f32 %v3950, %v3950
    %v4029 = vsub.f32 %v4025, %v4027
    %v4030 = vsub.f32 %v4026, %v4028
    %v4031 = vmax.f32 %v4029, 0.0
    %v4032 = vmax.f32 %v4030, 0.0
    %v4033 = vadd.f32 %v4031, 0.001
    %v4034 = vadd.f32 %v4032, 0.001
    %v4035 = vrsqrt.pop %v4033
    %v4036 = vrsqrt.pop %v4034
    %v4039 = vcombine.low %v4035, %v4036
    %v4041 = vunpack.c.l.s4 1966171168
    %v4042 = vunpack.c.0.s8 %v4041
    %v4043 = vlaneseq
    %v4044 = vshrl.u32 %v4043, 7
    %v4045 = vsub.s32 %v4042, %v4044
    %v4046 = vrot.slane %v4039, %v4045
    %v4048 = vunpack.c.l.s4 1966171168
    %v4049 = vunpack.c.0.s8 %v4048
    %v4050 = vlaneseq
    %v4051 = vshrl.u32 %v4050, 7
    %v4052 = vsub.s32 %v4049, %v4051
    %v4053 = vrot.slane %v4046, %v4052
    %v4055 = vmul.f32 %v3905, %v4053
    %v4057 = vlaneseq
    %v4058 = vshrl.u32 %v4057, 7
    %v4059 = vsub.s32 0, %v4058
    %v4060 = vrot.slane %v4055, %v4059
    %v4061 = vlaneseq
    %v4062 = vshrl.u32 %v4061, 7
    %v4063 = vsub.s32 1, %v4062
    %v4064 = vrot.slane %v4055, %v4063
    %v4067 = vmul.f32 %v3949, %v4060
    %v4068 = vmul.f32 %v3950, %v4064
    %v4071 = vcombine.low %v4067, %v4068
    %v4073 = vunpack.c.l.s4 1966171168
    %v4074 = vunpack.c.0.s8 %v4073
    %v4075 = vlaneseq
    %v4076 = vshrl.u32 %v4075, 7
    %v4077 = vsub.s32 %v4074, %v4076
    %v4078 = vrot.slane %v4071, %v4077
    %v4080 = vunpack.c.l.s4 1966171168
    %v4081 = vunpack.c.0.s8 %v4080
    %v4082 = vlaneseq
    %v4083 = vshrl.u32 %v4082, 7
    %v4084 = vsub.s32 %v4081, %v4083
    %v4085 = vrot.slane %v4078, %v4084
    %v4087 = vsub.f32 %v3906, %v4085
    %v4088 = vmul.f32 %v3827, %v4060
    %v4089 = vmul.f32 %v3829, %v4064
    %v4090 = vmul.f32 %v3831, %v4060
    %v4091 = vmul.f32 %v3833, %v4064
    %v4092 = vmul.f32 %v3837, %v4060
    %v4093 = vmul.f32 %v3839, %v4064
    %v4094 = vmul.f32 %v3841, %v4060
    %v4095 = vmul.f32 %v3843, %v4064
    %v4096 = vmul.f32 %v3847, %v4060
    %v4097 = vmul.f32 %v3849, %v4064
    %v4098 = vmul.f32 %v3851, %v4060
    %v4099 = vmul.f32 %v3853, %v4064
    %v4100 = vmul.f32 %v3857, %v4060
    %v4101 = vmul.f32 %v3859, %v4064
    %v4102 = vmul.f32 %v3861, %v4060
    %v4103 = vmul.f32 %v3863, %v4064
    %v4104 = vmul.f32 %v3867, %v4060
    %v4105 = vmul.f32 %v3869, %v4064
    %v4106 = vmul.f32 %v3871, %v4060
    %v4107 = vmul.f32 %v3873, %v4064
    %v4108 = vmul.f32 %v3877, %v4060
    %v4109 = vmul.f32 %v3879, %v4064
    %v4110 = vmul.f32 %v3881, %v4060
    %v4111 = vmul.f32 %v3883, %v4064
    %v4112 = vmul.f32 %v3887, %v4060
    %v4113 = vmul.f32 %v3889, %v4064
    %v4114 = vmul.f32 %v3891, %v4060
    %v4115 = vmul.f32 %v3893, %v4064
    %v4116 = vmul.f32 %v3897, %v4060
    %v4117 = vmul.f32 %v3899, %v4064
    %v4118 = vmul.f32 %v3901, %v4060
    %v4119 = vmul.f32 %v3903, %v4064
    %v4121 = vlaneseq
    %v4122 = vshrl.u32 %v4121, 7
    %v4123 = vsub.s32 0, %v4122
    %v4124 = vrot.slane %v4087, %v4123
    %v4125 = vlaneseq
    %v4126 = vshrl.u32 %v4125, 7
    %v4127 = vsub.s32 1, %v4126
    %v4128 = vrot.slane %v4087, %v4127
    %v4131 = vadd.f32 %v4088, %v4124
    %v4132 = vadd.f32 %v4089, %v4128
    %v4133 = vadd.f32 %v4090, %v4124
    %v4134 = vadd.f32 %v4091, %v4128
    %v4135 = vadd.f32 %v4092, %v4124
    %v4136 = vadd.f32 %v4093, %v4128
    %v4137 = vadd.f32 %v4094, %v4124
    %v4138 = vadd.f32 %v4095, %v4128
    %v4139 = vadd.f32 %v4096, %v4124
    %v4140 = vadd.f32 %v4097, %v4128
    %v4141 = vadd.f32 %v4098, %v4124
    %v4142 = vadd.f32 %v4099, %v4128
    %v4143 = vadd.f32 %v4100, %v4124
    %v4144 = vadd.f32 %v4101, %v4128
    %v4145 = vadd.f32 %v4102, %v4124
    %v4146 = vadd.f32 %v4103, %v4128
    %v4147 = vadd.f32 %v4104, %v4124
    %v4148 = vadd.f32 %v4105, %v4128
    %v4149 = vadd.f32 %v4106, %v4124
    %v4150 = vadd.f32 %v4107, %v4128
    %v4151 = vadd.f32 %v4108, %v4124
    %v4152 = vadd.f32 %v4109, %v4128
    %v4153 = vadd.f32 %v4110, %v4124
    %v4154 = vadd.f32 %v4111, %v4128
    %v4155 = vadd.f32 %v4112, %v4124
    %v4156 = vadd.f32 %v4113, %v4128
    %v4157 = vadd.f32 %v4114, %v4124
    %v4158 = vadd.f32 %v4115, %v4128
    %v4159 = vadd.f32 %v4116, %v4124
    %v4160 = vadd.f32 %v4117, %v4128
    %v4161 = vadd.f32 %v4118, %v4124
    %v4162 = vadd.f32 %v4119, %v4128
    %v4163 = vmax.f32 %v4131, 0.0
    %v4164 = vmax.f32 %v4132, 0.0
    %v4165 = vmax.f32 %v4133, 0.0
    %v4166 = vmax.f32 %v4134, 0.0
    %v4167 = vmax.f32 %v4135, 0.0
    %v4168 = vmax.f32 %v4136, 0.0
    %v4169 = vmax.f32 %v4137, 0.0
    %v4170 = vmax.f32 %v4138, 0.0
    %v4171 = vmax.f32 %v4139, 0.0
    %v4172 = vmax.f32 %v4140, 0.0
    %v4173 = vmax.f32 %v4141, 0.0
    %v4174 = vmax.f32 %v4142, 0.0
    %v4175 = vmax.f32 %v4143, 0.0
    %v4176 = vmax.f32 %v4144, 0.0
    %v4177 = vmax.f32 %v4145, 0.0
    %v4178 = vmax.f32 %v4146, 0.0
    %v4179 = vmax.f32 %v4147, 0.0
    %v4180 = vmax.f32 %v4148, 0.0
    %v4181 = vmax.f32 %v4149, 0.0
    %v4182 = vmax.f32 %v4150, 0.0
    %v4183 = vmax.f32 %v4151, 0.0
    %v4184 = vmax.f32 %v4152, 0.0
    %v4185 = vmax.f32 %v4153, 0.0
    %v4186 = vmax.f32 %v4154, 0.0
    %v4187 = vmax.f32 %v4155, 0.0
    %v4188 = vmax.f32 %v4156, 0.0
    %v4189 = vmax.f32 %v4157, 0.0
    %v4190 = vmax.f32 %v4158, 0.0
    %v4191 = vmax.f32 %v4159, 0.0
    %v4192 = vmax.f32 %v4160, 0.0
    %v4193 = vmax.f32 %v4161, 0.0
    %v4194 = vmax.f32 %v4162, 0.0
    %v4195 = vld [vmem:[#allocation20] sm:$0xff]
    %v4196 = vld [vmem:[#allocation20 + $0x8] sm:$0xff]
    %v4197 = vld [vmem:[#allocation20 + $0x10] sm:$0xff]
    %v4198 = vld [vmem:[#allocation20 + $0x18] sm:$0xff]
    %v4199 = vld [vmem:[#allocation20 + $0x20] sm:$0xff]
    %v4200 = vld [vmem:[#allocation20 + $0x28] sm:$0xff]
    %v4201 = vld [vmem:[#allocation20 + $0x30] sm:$0xff]
    %v4202 = vld [vmem:[#allocation20 + $0x38] sm:$0xff]
    %v4203 = vld [vmem:[#allocation20 + $0x40] sm:$0xff]
    %v4204 = vld [vmem:[#allocation20 + $0x48] sm:$0xff]
    %v4205 = vld [vmem:[#allocation20 + $0x50] sm:$0xff]
    %v4206 = vld [vmem:[#allocation20 + $0x58] sm:$0xff]
    %v4207 = vld [vmem:[#allocation20 + $0x60] sm:$0xff]
    %v4208 = vld [vmem:[#allocation20 + $0x68] sm:$0xff]
    %v4209 = vld [vmem:[#allocation20 + $0x70] sm:$0xff]
    %v4210 = vld [vmem:[#allocation20 + $0x78] sm:$0xff]
    %v4211 = vld [vmem:[#allocation20 + $0x80] sm:$0xff]
    %v4212 = vld [vmem:[#allocation20 + $0x88] sm:$0xff]
    %v4213 = vld [vmem:[#allocation20 + $0x90] sm:$0xff]
    %v4214 = vld [vmem:[#allocation20 + $0x98] sm:$0xff]
    %v4215 = vld [vmem:[#allocation20 + $0xa0] sm:$0xff]
    %v4216 = vld [vmem:[#allocation20 + $0xa8] sm:$0xff]
    %v4217 = vld [vmem:[#allocation20 + $0xb0] sm:$0xff]
    %v4218 = vld [vmem:[#allocation20 + $0xb8] sm:$0xff]
    %v4219 = vld [vmem:[#allocation20 + $0xc0] sm:$0xff]
    %v4220 = vld [vmem:[#allocation20 + $0xc8] sm:$0xff]
    %v4221 = vld [vmem:[#allocation20 + $0xd0] sm:$0xff]
    %v4222 = vld [vmem:[#allocation20 + $0xd8] sm:$0xff]
    %v4223 = vld [vmem:[#allocation20 + $0xe0] sm:$0xff]
    %v4224 = vld [vmem:[#allocation20 + $0xe8] sm:$0xff]
    %v4225 = vld [vmem:[#allocation20 + $0xf0] sm:$0xff]
    %v4226 = vld [vmem:[#allocation20 + $0xf8] sm:$0xff]
    %v4227 = vpack.c.bf16 %v4165, %v4163
    %v4228 = vpack.c.bf16 %v4166, %v4164
    %v4229 = vpack.c.bf16 %v4169, %v4167
    %v4230 = vpack.c.bf16 %v4170, %v4168
    %v4231 = vpack.c.bf16 %v4173, %v4171
    %v4232 = vpack.c.bf16 %v4174, %v4172
    %v4233 = vpack.c.bf16 %v4177, %v4175
    %v4234 = vpack.c.bf16 %v4178, %v4176
    %v4235 = vpack.c.bf16 %v4181, %v4179
    %v4236 = vpack.c.bf16 %v4182, %v4180
    %v4237 = vpack.c.bf16 %v4185, %v4183
    %v4238 = vpack.c.bf16 %v4186, %v4184
    %v4239 = vpack.c.bf16 %v4189, %v4187
    %v4240 = vpack.c.bf16 %v4190, %v4188
    %v4241 = vpack.c.bf16 %v4193, %v4191
    %v4242 = vpack.c.bf16 %v4194, %v4192
    %v4275 = vunpack.c.l.b16 %v4195
    %v4276 = vunpack.c.h.b16 %v4195
    %v4277 = vunpack.c.l.b16 %v4196
    %v4278 = vunpack.c.h.b16 %v4196
    %v4279 = vunpack.c.l.b16 %v4197
    %v4280 = vunpack.c.h.b16 %v4197
    %v4281 = vunpack.c.l.b16 %v4198
    %v4282 = vunpack.c.h.b16 %v4198
    %v4283 = vunpack.c.l.b16 %v4199
    %v4284 = vunpack.c.h.b16 %v4199
    %v4285 = vunpack.c.l.b16 %v4200
    %v4286 = vunpack.c.h.b16 %v4200
    %v4287 = vunpack.c.l.b16 %v4201
    %v4288 = vunpack.c.h.b16 %v4201
    %v4289 = vunpack.c.l.b16 %v4202
    %v4290 = vunpack.c.h.b16 %v4202
    %v4291 = vunpack.c.l.b16 %v4203
    %v4292 = vunpack.c.h.b16 %v4203
    %v4293 = vunpack.c.l.b16 %v4204
    %v4294 = vunpack.c.h.b16 %v4204
    %v4295 = vunpack.c.l.b16 %v4205
    %v4296 = vunpack.c.h.b16 %v4205
    %v4297 = vunpack.c.l.b16 %v4206
    %v4298 = vunpack.c.h.b16 %v4206
    %v4299 = vunpack.c.l.b16 %v4207
    %v4300 = vunpack.c.h.b16 %v4207
    %v4301 = vunpack.c.l.b16 %v4208
    %v4302 = vunpack.c.h.b16 %v4208
    %v4303 = vunpack.c.l.b16 %v4209
    %v4304 = vunpack.c.h.b16 %v4209
    %v4305 = vunpack.c.l.b16 %v4210
    %v4306 = vunpack.c.h.b16 %v4210
    %v4307 = vunpack.c.l.b16 %v4211
    %v4308 = vunpack.c.h.b16 %v4211
    %v4309 = vunpack.c.l.b16 %v4212
    %v4310 = vunpack.c.h.b16 %v4212
    %v4311 = vunpack.c.l.b16 %v4213
    %v4312 = vunpack.c.h.b16 %v4213
    %v4313 = vunpack.c.l.b16 %v4214
    %v4314 = vunpack.c.h.b16 %v4214
    %v4315 = vunpack.c.l.b16 %v4215
    %v4316 = vunpack.c.h.b16 %v4215
    %v4317 = vunpack.c.l.b16 %v4216
    %v4318 = vunpack.c.h.b16 %v4216
    %v4319 = vunpack.c.l.b16 %v4217
    %v4320 = vunpack.c.h.b16 %v4217
    %v4321 = vunpack.c.l.b16 %v4218
    %v4322 = vunpack.c.h.b16 %v4218
    %v4323 = vunpack.c.l.b16 %v4219
    %v4324 = vunpack.c.h.b16 %v4219
    %v4325 = vunpack.c.l.b16 %v4220
    %v4326 = vunpack.c.h.b16 %v4220
    %v4327 = vunpack.c.l.b16 %v4221
    %v4328 = vunpack.c.h.b16 %v4221
    %v4329 = vunpack.c.l.b16 %v4222
    %v4330 = vunpack.c.h.b16 %v4222
    %v4331 = vunpack.c.l.b16 %v4223
    %v4332 = vunpack.c.h.b16 %v4223
    %v4333 = vunpack.c.l.b16 %v4224
    %v4334 = vunpack.c.h.b16 %v4224
    %v4335 = vunpack.c.l.b16 %v4225
    %v4336 = vunpack.c.h.b16 %v4225
    %v4337 = vunpack.c.l.b16 %v4226
    %v4338 = vunpack.c.h.b16 %v4226
    %v4339 = vpack.c.b16 %v4277, %v4275
    %v4340 = vpack.c.b16 %v4278, %v4276
    %v4341 = vpack.c.b16 %v4281, %v4279
    %v4342 = vpack.c.b16 %v4282, %v4280
    %v4343 = vpack.c.b16 %v4285, %v4283
    %v4344 = vpack.c.b16 %v4286, %v4284
    %v4345 = vpack.c.b16 %v4289, %v4287
    %v4346 = vpack.c.b16 %v4290, %v4288
    %v4347 = vpack.c.b16 %v4293, %v4291
    %v4348 = vpack.c.b16 %v4294, %v4292
    %v4349 = vpack.c.b16 %v4297, %v4295
    %v4350 = vpack.c.b16 %v4298, %v4296
    %v4351 = vpack.c.b16 %v4301, %v4299
    %v4352 = vpack.c.b16 %v4302, %v4300
    %v4353 = vpack.c.b16 %v4305, %v4303
    %v4354 = vpack.c.b16 %v4306, %v4304
    %v4355 = vpack.c.b16 %v4309, %v4307
    %v4356 = vpack.c.b16 %v4310, %v4308
    %v4357 = vpack.c.b16 %v4313, %v4311
    %v4358 = vpack.c.b16 %v4314, %v4312
    %v4359 = vpack.c.b16 %v4317, %v4315
    %v4360 = vpack.c.b16 %v4318, %v4316
    %v4361 = vpack.c.b16 %v4321, %v4319
    %v4362 = vpack.c.b16 %v4322, %v4320
    %v4363 = vpack.c.b16 %v4325, %v4323
    %v4364 = vpack.c.b16 %v4326, %v4324
    %v4365 = vpack.c.b16 %v4329, %v4327
    %v4366 = vpack.c.b16 %v4330, %v4328
    %v4367 = vpack.c.b16 %v4333, %v4331
    %v4368 = vpack.c.b16 %v4334, %v4332
    %v4369 = vpack.c.b16 %v4337, %v4335
    %v4370 = vpack.c.b16 %v4338, %v4336
    %4403 = vmatprep.subr.bf16.mxu0 %v4354
    %4404 = vmatpush1.bf16.msra.mxu0 %v4353
    %4405 = vmatprep.subr.bf16.mxu0 %v4352
    %4406 = vmatpush1.bf16.msra.mxu0 %v4351
    %4407 = vmatprep.subr.bf16.mxu0 %v4350
    %4408 = vmatpush1.bf16.msra.mxu0 %v4349
    %4409 = vmatprep.subr.bf16.mxu0 %v4348
    %4410 = vmatpush1.bf16.msra.mxu0 %v4347
    %4411 = vmatprep.subr.bf16.mxu0 %v4346
    %4412 = vmatpush1.bf16.msra.mxu0 %v4345
    %4413 = vmatprep.subr.bf16.mxu0 %v4344
    %4414 = vmatpush1.bf16.msra.mxu0 %v4343
    %4415 = vmatprep.subr.bf16.mxu0 %v4342
    %4416 = vmatpush1.bf16.msra.mxu0 %v4341
    %4417 = vmatprep.subr.bf16.mxu0 %v4340
    %4418 = vmatpush1.bf16.msra.mxu0 %v4339
    %4419 = vmatprep.subr.bf16.mxu0 %v4370
    %4420 = vmatpush2.bf16.msra.mxu0 %v4369
    %4421 = vmatprep.subr.bf16.mxu0 %v4368
    %4422 = vmatpush2.bf16.msra.mxu0 %v4367
    %4423 = vmatprep.subr.bf16.mxu0 %v4366
    %4424 = vmatpush2.bf16.msra.mxu0 %v4365
    %4425 = vmatprep.subr.bf16.mxu0 %v4364
    %4426 = vmatpush2.bf16.msra.mxu0 %v4363
    %4427 = vmatprep.subr.bf16.mxu0 %v4362
    %4428 = vmatpush2.bf16.msra.mxu0 %v4361
    %4429 = vmatprep.subr.bf16.mxu0 %v4360
    %4430 = vmatpush2.bf16.msra.mxu0 %v4359
    %4431 = vmatprep.subr.bf16.mxu0 %v4358
    %4432 = vmatpush2.bf16.msra.mxu0 %v4357
    %4433 = vmatprep.subr.bf16.mxu0 %v4356
    %4434 = vmatpush2.bf16.msra.mxu0 %v4355
    %4435 = vmatprep.mubr.bf16.mxu0 %v4228
    %4436 = vmatmul.mubr.bf16.gmra.mxu0 %v4227
    %v4437 = vpop.f32.mrf.mxu0
    %v4438 = vadd.f32 0.0, %v4437
    %v4439 = vpop.f32.mrf.mxu0
    %v4440 = vadd.f32 0.0, %v4439
    %v4441 = vpop.f32.mrf.mxu0
    %v4442 = vadd.f32 0.0, %v4441
    %v4443 = vpop.f32.mrf.mxu0
    %v4444 = vadd.f32 0.0, %v4443
    %4445 = vmatprep.mubr.bf16.mxu0 %v4230
    %4446 = vmatmul.mubr.bf16.gmra.mxu0 %v4229
    %v4447 = vpop.f32.mrf.mxu0
    %v4448 = vadd.f32 0.0, %v4447
    %v4449 = vpop.f32.mrf.mxu0
    %v4450 = vadd.f32 0.0, %v4449
    %v4451 = vpop.f32.mrf.mxu0
    %v4452 = vadd.f32 0.0, %v4451
    %v4453 = vpop.f32.mrf.mxu0
    %v4454 = vadd.f32 0.0, %v4453
    %4455 = vmatprep.mubr.bf16.mxu0 %v4232
    %4456 = vmatmul.mubr.bf16.gmra.mxu0 %v4231
    %v4457 = vpop.f32.mrf.mxu0
    %v4458 = vadd.f32 0.0, %v4457
    %v4459 = vpop.f32.mrf.mxu0
    %v4460 = vadd.f32 0.0, %v4459
    %v4461 = vpop.f32.mrf.mxu0
    %v4462 = vadd.f32 0.0, %v4461
    %v4463 = vpop.f32.mrf.mxu0
    %v4464 = vadd.f32 0.0, %v4463
    %4465 = vmatprep.mubr.bf16.mxu0 %v4234
    %4466 = vmatmul.mubr.bf16.gmra.mxu0 %v4233
    %v4467 = vpop.f32.mrf.mxu0
    %v4468 = vadd.f32 0.0, %v4467
    %v4469 = vpop.f32.mrf.mxu0
    %v4470 = vadd.f32 0.0, %v4469
    %v4471 = vpop.f32.mrf.mxu0
    %v4472 = vadd.f32 0.0, %v4471
    %v4473 = vpop.f32.mrf.mxu0
    %v4474 = vadd.f32 0.0, %v4473
    %4475 = vmatprep.mubr.bf16.mxu0 %v4236
    %4476 = vmatmul.mubr.bf16.gmra.mxu0 %v4235
    %v4477 = vpop.f32.mrf.mxu0
    %v4478 = vadd.f32 0.0, %v4477
    %v4479 = vpop.f32.mrf.mxu0
    %v4480 = vadd.f32 0.0, %v4479
    %v4481 = vpop.f32.mrf.mxu0
    %v4482 = vadd.f32 0.0, %v4481
    %v4483 = vpop.f32.mrf.mxu0
    %v4484 = vadd.f32 0.0, %v4483
    %4485 = vmatprep.mubr.bf16.mxu0 %v4238
    %4486 = vmatmul.mubr.bf16.gmra.mxu0 %v4237
    %v4487 = vpop.f32.mrf.mxu0
    %v4488 = vadd.f32 0.0, %v4487
    %v4489 = vpop.f32.mrf.mxu0
    %v4490 = vadd.f32 0.0, %v4489
    %v4491 = vpop.f32.mrf.mxu0
    %v4492 = vadd.f32 0.0, %v4491
    %v4493 = vpop.f32.mrf.mxu0
    %v4494 = vadd.f32 0.0, %v4493
    %4495 = vmatprep.mubr.bf16.mxu0 %v4240
    %4496 = vmatmul.mubr.bf16.gmra.mxu0 %v4239
    %v4497 = vpop.f32.mrf.mxu0
    %v4498 = vadd.f32 0.0, %v4497
    %v4499 = vpop.f32.mrf.mxu0
    %v4500 = vadd.f32 0.0, %v4499
    %v4501 = vpop.f32.mrf.mxu0
    %v4502 = vadd.f32 0.0, %v4501
    %v4503 = vpop.f32.mrf.mxu0
    %v4504 = vadd.f32 0.0, %v4503
    %4505 = vmatprep.mubr.bf16.mxu0 %v4242
    %4506 = vmatmul.mubr.bf16.gmra.mxu0 %v4241
    %v4507 = vpop.f32.mrf.mxu0
    %v4508 = vadd.f32 0.0, %v4507
    %v4509 = vpop.f32.mrf.mxu0
    %v4510 = vadd.f32 0.0, %v4509
    %v4511 = vpop.f32.mrf.mxu0
    %v4512 = vadd.f32 0.0, %v4511
    %v4513 = vpop.f32.mrf.mxu0
    %v4514 = vadd.f32 0.0, %v4513
    %4515 = vdwg.mxu0
    %v4516 = vld [vmem:[%s47] sm:$0x3]
    %v4517 = vld [vmem:[%s49] sm:$0x3]
    %v4518 = vadd.f32 %v4438, %v4442
    %v4519 = vadd.f32 %v4518, %v4448
    %v4520 = vadd.f32 %v4519, %v4452
    %v4521 = vadd.f32 %v4520, %v4458
    %v4522 = vadd.f32 %v4521, %v4462
    %v4523 = vadd.f32 %v4522, %v4468
    %v4524 = vadd.f32 %v4523, %v4472
    %v4525 = vadd.f32 %v4524, %v4478
    %v4526 = vadd.f32 %v4525, %v4482
    %v4527 = vadd.f32 %v4526, %v4488
    %v4528 = vadd.f32 %v4527, %v4492
    %v4529 = vadd.f32 %v4528, %v4498
    %v4530 = vadd.f32 %v4529, %v4502
    %v4531 = vadd.f32 %v4530, %v4508
    %v4532 = vadd.f32 %v4531, %v4512
    %v4533 = vrot.slane %v4532, 4
    %v4534 = vadd.f32 %v4532, %v4533
    %v4535 = vrot.slane %v4534, 2
    %v4536 = vadd.f32 %v4534, %v4535
    %v4537 = vrot.slane %v4536, 1
    %v4538 = vadd.f32 %v4536, %v4537
    %v4539 = vadd.f32 %v4440, %v4444
    %v4540 = vadd.f32 %v4539, %v4450
    %v4541 = vadd.f32 %v4540, %v4454
    %v4542 = vadd.f32 %v4541, %v4460
    %v4543 = vadd.f32 %v4542, %v4464
    %v4544 = vadd.f32 %v4543, %v4470
    %v4545 = vadd.f32 %v4544, %v4474
    %v4546 = vadd.f32 %v4545, %v4480
    %v4547 = vadd.f32 %v4546, %v4484
    %v4548 = vadd.f32 %v4547, %v4490
    %v4549 = vadd.f32 %v4548, %v4494
    %v4550 = vadd.f32 %v4549, %v4500
    %v4551 = vadd.f32 %v4550, %v4504
    %v4552 = vadd.f32 %v4551, %v4510
    %v4553 = vadd.f32 %v4552, %v4514
    %v4554 = vrot.slane %v4553, 4
    %v4555 = vadd.f32 %v4553, %v4554
    %v4556 = vrot.slane %v4555, 2
    %v4557 = vadd.f32 %v4555, %v4556
    %v4558 = vrot.slane %v4557, 1
    %v4559 = vadd.f32 %v4557, %v4558
    %v4560 = vmul.f32 %v4538, %v637
    %v4561 = vmul.f32 %v4559, %v637
    %v4562 = vmul.f32 %v4438, %v4438
    %v4563 = vmul.f32 %v4440, %v4440
    %v4564 = vmul.f32 %v4442, %v4442
    %v4565 = vmul.f32 %v4444, %v4444
    %v4566 = vmul.f32 %v4448, %v4448
    %v4567 = vmul.f32 %v4450, %v4450
    %v4568 = vmul.f32 %v4452, %v4452
    %v4569 = vmul.f32 %v4454, %v4454
    %v4570 = vmul.f32 %v4458, %v4458
    %v4571 = vmul.f32 %v4460, %v4460
    %v4572 = vmul.f32 %v4462, %v4462
    %v4573 = vmul.f32 %v4464, %v4464
    %v4574 = vmul.f32 %v4468, %v4468
    %v4575 = vmul.f32 %v4470, %v4470
    %v4576 = vmul.f32 %v4472, %v4472
    %v4577 = vmul.f32 %v4474, %v4474
    %v4578 = vmul.f32 %v4478, %v4478
    %v4579 = vmul.f32 %v4480, %v4480
    %v4580 = vmul.f32 %v4482, %v4482
    %v4581 = vmul.f32 %v4484, %v4484
    %v4582 = vmul.f32 %v4488, %v4488
    %v4583 = vmul.f32 %v4490, %v4490
    %v4584 = vmul.f32 %v4492, %v4492
    %v4585 = vmul.f32 %v4494, %v4494
    %v4586 = vmul.f32 %v4498, %v4498
    %v4587 = vmul.f32 %v4500, %v4500
    %v4588 = vmul.f32 %v4502, %v4502
    %v4589 = vmul.f32 %v4504, %v4504
    %v4590 = vmul.f32 %v4508, %v4508
    %v4591 = vmul.f32 %v4510, %v4510
    %v4592 = vmul.f32 %v4512, %v4512
    %v4593 = vmul.f32 %v4514, %v4514
    %v4594 = vadd.f32 %v4562, %v4564
    %v4595 = vadd.f32 %v4594, %v4566
    %v4596 = vadd.f32 %v4595, %v4568
    %v4597 = vadd.f32 %v4596, %v4570
    %v4598 = vadd.f32 %v4597, %v4572
    %v4599 = vadd.f32 %v4598, %v4574
    %v4600 = vadd.f32 %v4599, %v4576
    %v4601 = vadd.f32 %v4600, %v4578
    %v4602 = vadd.f32 %v4601, %v4580
    %v4603 = vadd.f32 %v4602, %v4582
    %v4604 = vadd.f32 %v4603, %v4584
    %v4605 = vadd.f32 %v4604, %v4586
    %v4606 = vadd.f32 %v4605, %v4588
    %v4607 = vadd.f32 %v4606, %v4590
    %v4608 = vadd.f32 %v4607, %v4592
    %v4609 = vrot.slane %v4608, 4
    %v4610 = vadd.f32 %v4608, %v4609
    %v4611 = vrot.slane %v4610, 2
    %v4612 = vadd.f32 %v4610, %v4611
    %v4613 = vrot.slane %v4612, 1
    %v4614 = vadd.f32 %v4612, %v4613
    %v4615 = vadd.f32 %v4563, %v4565
    %v4616 = vadd.f32 %v4615, %v4567
    %v4617 = vadd.f32 %v4616, %v4569
    %v4618 = vadd.f32 %v4617, %v4571
    %v4619 = vadd.f32 %v4618, %v4573
    %v4620 = vadd.f32 %v4619, %v4575
    %v4621 = vadd.f32 %v4620, %v4577
    %v4622 = vadd.f32 %v4621, %v4579
    %v4623 = vadd.f32 %v4622, %v4581
    %v4624 = vadd.f32 %v4623, %v4583
    %v4625 = vadd.f32 %v4624, %v4585
    %v4626 = vadd.f32 %v4625, %v4587
    %v4627 = vadd.f32 %v4626, %v4589
    %v4628 = vadd.f32 %v4627, %v4591
    %v4629 = vadd.f32 %v4628, %v4593
    %v4630 = vrot.slane %v4629, 4
    %v4631 = vadd.f32 %v4629, %v4630
    %v4632 = vrot.slane %v4631, 2
    %v4633 = vadd.f32 %v4631, %v4632
    %v4634 = vrot.slane %v4633, 1
    %v4635 = vadd.f32 %v4633, %v4634
    %v4636 = vmul.f32 %v4614, %v637
    %v4637 = vmul.f32 %v4635, %v637
    %v4638 = vmul.f32 %v4560, %v4560
    %v4639 = vmul.f32 %v4561, %v4561
    %v4640 = vsub.f32 %v4636, %v4638
    %v4641 = vsub.f32 %v4637, %v4639
    %v4642 = vmax.f32 %v4640, 0.0
    %v4643 = vmax.f32 %v4641, 0.0
    %v4644 = vadd.f32 %v4642, 0.001
    %v4645 = vadd.f32 %v4643, 0.001
    %v4646 = vrsqrt.pop %v4644
    %v4647 = vrsqrt.pop %v4645
    %v4650 = vcombine.low %v4646, %v4647
    %v4652 = vunpack.c.l.s4 1966171168
    %v4653 = vunpack.c.0.s8 %v4652
    %v4654 = vlaneseq
    %v4655 = vshrl.u32 %v4654, 7
    %v4656 = vsub.s32 %v4653, %v4655
    %v4657 = vrot.slane %v4650, %v4656
    %v4659 = vunpack.c.l.s4 1966171168
    %v4660 = vunpack.c.0.s8 %v4659
    %v4661 = vlaneseq
    %v4662 = vshrl.u32 %v4661, 7
    %v4663 = vsub.s32 %v4660, %v4662
    %v4664 = vrot.slane %v4657, %v4663
    %v4666 = vmul.f32 %v4516, %v4664
    %v4668 = vlaneseq
    %v4669 = vshrl.u32 %v4668, 7
    %v4670 = vsub.s32 0, %v4669
    %v4671 = vrot.slane %v4666, %v4670
    %v4672 = vlaneseq
    %v4673 = vshrl.u32 %v4672, 7
    %v4674 = vsub.s32 1, %v4673
    %v4675 = vrot.slane %v4666, %v4674
    %v4678 = vmul.f32 %v4560, %v4671
    %v4679 = vmul.f32 %v4561, %v4675
    %v4682 = vcombine.low %v4678, %v4679
    %v4684 = vunpack.c.l.s4 1966171168
    %v4685 = vunpack.c.0.s8 %v4684
    %v4686 = vlaneseq
    %v4687 = vshrl.u32 %v4686, 7
    %v4688 = vsub.s32 %v4685, %v4687
    %v4689 = vrot.slane %v4682, %v4688
    %v4691 = vunpack.c.l.s4 1966171168
    %v4692 = vunpack.c.0.s8 %v4691
    %v4693 = vlaneseq
    %v4694 = vshrl.u32 %v4693, 7
    %v4695 = vsub.s32 %v4692, %v4694
    %v4696 = vrot.slane %v4689, %v4695
    %v4698 = vsub.f32 %v4517, %v4696
    %v4699 = vmul.f32 %v4438, %v4671
    %v4700 = vmul.f32 %v4440, %v4675
    %v4701 = vmul.f32 %v4442, %v4671
    %v4702 = vmul.f32 %v4444, %v4675
    %v4703 = vmul.f32 %v4448, %v4671
    %v4704 = vmul.f32 %v4450, %v4675
    %v4705 = vmul.f32 %v4452, %v4671
    %v4706 = vmul.f32 %v4454, %v4675
    %v4707 = vmul.f32 %v4458, %v4671
    %v4708 = vmul.f32 %v4460, %v4675
    %v4709 = vmul.f32 %v4462, %v4671
    %v4710 = vmul.f32 %v4464, %v4675
    %v4711 = vmul.f32 %v4468, %v4671
    %v4712 = vmul.f32 %v4470, %v4675
    %v4713 = vmul.f32 %v4472, %v4671
    %v4714 = vmul.f32 %v4474, %v4675
    %v4715 = vmul.f32 %v4478, %v4671
    %v4716 = vmul.f32 %v4480, %v4675
    %v4717 = vmul.f32 %v4482, %v4671
    %v4718 = vmul.f32 %v4484, %v4675
    %v4719 = vmul.f32 %v4488, %v4671
    %v4720 = vmul.f32 %v4490, %v4675
    %v4721 = vmul.f32 %v4492, %v4671
    %v4722 = vmul.f32 %v4494, %v4675
    %v4723 = vmul.f32 %v4498, %v4671
    %v4724 = vmul.f32 %v4500, %v4675
    %v4725 = vmul.f32 %v4502, %v4671
    %v4726 = vmul.f32 %v4504, %v4675
    %v4727 = vmul.f32 %v4508, %v4671
    %v4728 = vmul.f32 %v4510, %v4675
    %v4729 = vmul.f32 %v4512, %v4671
    %v4730 = vmul.f32 %v4514, %v4675
    %v4732 = vlaneseq
    %v4733 = vshrl.u32 %v4732, 7
    %v4734 = vsub.s32 0, %v4733
    %v4735 = vrot.slane %v4698, %v4734
    %v4736 = vlaneseq
    %v4737 = vshrl.u32 %v4736, 7
    %v4738 = vsub.s32 1, %v4737
    %v4739 = vrot.slane %v4698, %v4738
    %v4742 = vadd.f32 %v4699, %v4735
    %v4743 = vadd.f32 %v4700, %v4739
    %v4744 = vadd.f32 %v4701, %v4735
    %v4745 = vadd.f32 %v4702, %v4739
    %v4746 = vadd.f32 %v4703, %v4735
    %v4747 = vadd.f32 %v4704, %v4739
    %v4748 = vadd.f32 %v4705, %v4735
    %v4749 = vadd.f32 %v4706, %v4739
    %v4750 = vadd.f32 %v4707, %v4735
    %v4751 = vadd.f32 %v4708, %v4739
    %v4752 = vadd.f32 %v4709, %v4735
    %v4753 = vadd.f32 %v4710, %v4739
    %v4754 = vadd.f32 %v4711, %v4735
    %v4755 = vadd.f32 %v4712, %v4739
    %v4756 = vadd.f32 %v4713, %v4735
    %v4757 = vadd.f32 %v4714, %v4739
    %v4758 = vadd.f32 %v4715, %v4735
    %v4759 = vadd.f32 %v4716, %v4739
    %v4760 = vadd.f32 %v4717, %v4735
    %v4761 = vadd.f32 %v4718, %v4739
    %v4762 = vadd.f32 %v4719, %v4735
    %v4763 = vadd.f32 %v4720, %v4739
    %v4764 = vadd.f32 %v4721, %v4735
    %v4765 = vadd.f32 %v4722, %v4739
    %v4766 = vadd.f32 %v4723, %v4735
    %v4767 = vadd.f32 %v4724, %v4739
    %v4768 = vadd.f32 %v4725, %v4735
    %v4769 = vadd.f32 %v4726, %v4739
    %v4770 = vadd.f32 %v4727, %v4735
    %v4771 = vadd.f32 %v4728, %v4739
    %v4772 = vadd.f32 %v4729, %v4735
    %v4773 = vadd.f32 %v4730, %v4739
    %v4774 = vmax.f32 %v4742, 0.0
    %v4775 = vmax.f32 %v4743, 0.0
    %v4776 = vmax.f32 %v4744, 0.0
    %v4777 = vmax.f32 %v4745, 0.0
    %v4778 = vmax.f32 %v4746, 0.0
    %v4779 = vmax.f32 %v4747, 0.0
    %v4780 = vmax.f32 %v4748, 0.0
    %v4781 = vmax.f32 %v4749, 0.0
    %v4782 = vmax.f32 %v4750, 0.0
    %v4783 = vmax.f32 %v4751, 0.0
    %v4784 = vmax.f32 %v4752, 0.0
    %v4785 = vmax.f32 %v4753, 0.0
    %v4786 = vmax.f32 %v4754, 0.0
    %v4787 = vmax.f32 %v4755, 0.0
    %v4788 = vmax.f32 %v4756, 0.0
    %v4789 = vmax.f32 %v4757, 0.0
    %v4790 = vmax.f32 %v4758, 0.0
    %v4791 = vmax.f32 %v4759, 0.0
    %v4792 = vmax.f32 %v4760, 0.0
    %v4793 = vmax.f32 %v4761, 0.0
    %v4794 = vmax.f32 %v4762, 0.0
    %v4795 = vmax.f32 %v4763, 0.0
    %v4796 = vmax.f32 %v4764, 0.0
    %v4797 = vmax.f32 %v4765, 0.0
    %v4798 = vmax.f32 %v4766, 0.0
    %v4799 = vmax.f32 %v4767, 0.0
    %v4800 = vmax.f32 %v4768, 0.0
    %v4801 = vmax.f32 %v4769, 0.0
    %v4802 = vmax.f32 %v4770, 0.0
    %v4803 = vmax.f32 %v4771, 0.0
    %v4804 = vmax.f32 %v4772, 0.0
    %v4805 = vmax.f32 %v4773, 0.0
    %v4806 = vld [vmem:[#allocation22] sm:$0xff]
    %v4807 = vld [vmem:[#allocation22 + $0x8] sm:$0xff]
    %v4808 = vld [vmem:[#allocation22 + $0x10] sm:$0xff]
    %v4809 = vld [vmem:[#allocation22 + $0x18] sm:$0xff]
    %v4810 = vld [vmem:[#allocation22 + $0x20] sm:$0xff]
    %v4811 = vld [vmem:[#allocation22 + $0x28] sm:$0xff]
    %v4812 = vld [vmem:[#allocation22 + $0x30] sm:$0xff]
    %v4813 = vld [vmem:[#allocation22 + $0x38] sm:$0xff]
    %v4814 = vld [vmem:[#allocation22 + $0x40] sm:$0xff]
    %v4815 = vld [vmem:[#allocation22 + $0x48] sm:$0xff]
    %v4816 = vld [vmem:[#allocation22 + $0x50] sm:$0xff]
    %v4817 = vld [vmem:[#allocation22 + $0x58] sm:$0xff]
    %v4818 = vld [vmem:[#allocation22 + $0x60] sm:$0xff]
    %v4819 = vld [vmem:[#allocation22 + $0x68] sm:$0xff]
    %v4820 = vld [vmem:[#allocation22 + $0x70] sm:$0xff]
    %v4821 = vld [vmem:[#allocation22 + $0x78] sm:$0xff]
    %v4822 = vld [vmem:[#allocation22 + $0x80] sm:$0xff]
    %v4823 = vld [vmem:[#allocation22 + $0x88] sm:$0xff]
    %v4824 = vld [vmem:[#allocation22 + $0x90] sm:$0xff]
    %v4825 = vld [vmem:[#allocation22 + $0x98] sm:$0xff]
    %v4826 = vld [vmem:[#allocation22 + $0xa0] sm:$0xff]
    %v4827 = vld [vmem:[#allocation22 + $0xa8] sm:$0xff]
    %v4828 = vld [vmem:[#allocation22 + $0xb0] sm:$0xff]
    %v4829 = vld [vmem:[#allocation22 + $0xb8] sm:$0xff]
    %v4830 = vld [vmem:[#allocation22 + $0xc0] sm:$0xff]
    %v4831 = vld [vmem:[#allocation22 + $0xc8] sm:$0xff]
    %v4832 = vld [vmem:[#allocation22 + $0xd0] sm:$0xff]
    %v4833 = vld [vmem:[#allocation22 + $0xd8] sm:$0xff]
    %v4834 = vld [vmem:[#allocation22 + $0xe0] sm:$0xff]
    %v4835 = vld [vmem:[#allocation22 + $0xe8] sm:$0xff]
    %v4836 = vld [vmem:[#allocation22 + $0xf0] sm:$0xff]
    %v4837 = vld [vmem:[#allocation22 + $0xf8] sm:$0xff]
    %v4838 = vpack.c.bf16 %v4776, %v4774
    %v4839 = vpack.c.bf16 %v4777, %v4775
    %v4840 = vpack.c.bf16 %v4780, %v4778
    %v4841 = vpack.c.bf16 %v4781, %v4779
    %v4842 = vpack.c.bf16 %v4784, %v4782
    %v4843 = vpack.c.bf16 %v4785, %v4783
    %v4844 = vpack.c.bf16 %v4788, %v4786
    %v4845 = vpack.c.bf16 %v4789, %v4787
    %v4846 = vpack.c.bf16 %v4792, %v4790
    %v4847 = vpack.c.bf16 %v4793, %v4791
    %v4848 = vpack.c.bf16 %v4796, %v4794
    %v4849 = vpack.c.bf16 %v4797, %v4795
    %v4850 = vpack.c.bf16 %v4800, %v4798
    %v4851 = vpack.c.bf16 %v4801, %v4799
    %v4852 = vpack.c.bf16 %v4804, %v4802
    %v4853 = vpack.c.bf16 %v4805, %v4803
    %v4886 = vunpack.c.l.b16 %v4806
    %v4887 = vunpack.c.h.b16 %v4806
    %v4888 = vunpack.c.l.b16 %v4807
    %v4889 = vunpack.c.h.b16 %v4807
    %v4890 = vunpack.c.l.b16 %v4808
    %v4891 = vunpack.c.h.b16 %v4808
    %v4892 = vunpack.c.l.b16 %v4809
    %v4893 = vunpack.c.h.b16 %v4809
    %v4894 = vunpack.c.l.b16 %v4810
    %v4895 = vunpack.c.h.b16 %v4810
    %v4896 = vunpack.c.l.b16 %v4811
    %v4897 = vunpack.c.h.b16 %v4811
    %v4898 = vunpack.c.l.b16 %v4812
    %v4899 = vunpack.c.h.b16 %v4812
    %v4900 = vunpack.c.l.b16 %v4813
    %v4901 = vunpack.c.h.b16 %v4813
    %v4902 = vunpack.c.l.b16 %v4814
    %v4903 = vunpack.c.h.b16 %v4814
    %v4904 = vunpack.c.l.b16 %v4815
    %v4905 = vunpack.c.h.b16 %v4815
    %v4906 = vunpack.c.l.b16 %v4816
    %v4907 = vunpack.c.h.b16 %v4816
    %v4908 = vunpack.c.l.b16 %v4817
    %v4909 = vunpack.c.h.b16 %v4817
    %v4910 = vunpack.c.l.b16 %v4818
    %v4911 = vunpack.c.h.b16 %v4818
    %v4912 = vunpack.c.l.b16 %v4819
    %v4913 = vunpack.c.h.b16 %v4819
    %v4914 = vunpack.c.l.b16 %v4820
    %v4915 = vunpack.c.h.b16 %v4820
    %v4916 = vunpack.c.l.b16 %v4821
    %v4917 = vunpack.c.h.b16 %v4821
    %v4918 = vunpack.c.l.b16 %v4822
    %v4919 = vunpack.c.h.b16 %v4822
    %v4920 = vunpack.c.l.b16 %v4823
    %v4921 = vunpack.c.h.b16 %v4823
    %v4922 = vunpack.c.l.b16 %v4824
    %v4923 = vunpack.c.h.b16 %v4824
    %v4924 = vunpack.c.l.b16 %v4825
    %v4925 = vunpack.c.h.b16 %v4825
    %v4926 = vunpack.c.l.b16 %v4826
    %v4927 = vunpack.c.h.b16 %v4826
    %v4928 = vunpack.c.l.b16 %v4827
    %v4929 = vunpack.c.h.b16 %v4827
    %v4930 = vunpack.c.l.b16 %v4828
    %v4931 = vunpack.c.h.b16 %v4828
    %v4932 = vunpack.c.l.b16 %v4829
    %v4933 = vunpack.c.h.b16 %v4829
    %v4934 = vunpack.c.l.b16 %v4830
    %v4935 = vunpack.c.h.b16 %v4830
    %v4936 = vunpack.c.l.b16 %v4831
    %v4937 = vunpack.c.h.b16 %v4831
    %v4938 = vunpack.c.l.b16 %v4832
    %v4939 = vunpack.c.h.b16 %v4832
    %v4940 = vunpack.c.l.b16 %v4833
    %v4941 = vunpack.c.h.b16 %v4833
    %v4942 = vunpack.c.l.b16 %v4834
    %v4943 = vunpack.c.h.b16 %v4834
    %v4944 = vunpack.c.l.b16 %v4835
    %v4945 = vunpack.c.h.b16 %v4835
    %v4946 = vunpack.c.l.b16 %v4836
    %v4947 = vunpack.c.h.b16 %v4836
    %v4948 = vunpack.c.l.b16 %v4837
    %v4949 = vunpack.c.h.b16 %v4837
    %v4950 = vpack.c.b16 %v4888, %v4886
    %v4951 = vpack.c.b16 %v4889, %v4887
    %v4952 = vpack.c.b16 %v4892, %v4890
    %v4953 = vpack.c.b16 %v4893, %v4891
    %v4954 = vpack.c.b16 %v4896, %v4894
    %v4955 = vpack.c.b16 %v4897, %v4895
    %v4956 = vpack.c.b16 %v4900, %v4898
    %v4957 = vpack.c.b16 %v4901, %v4899
    %v4958 = vpack.c.b16 %v4904, %v4902
    %v4959 = vpack.c.b16 %v4905, %v4903
    %v4960 = vpack.c.b16 %v4908, %v4906
    %v4961 = vpack.c.b16 %v4909, %v4907
    %v4962 = vpack.c.b16 %v4912, %v4910
    %v4963 = vpack.c.b16 %v4913, %v4911
    %v4964 = vpack.c.b16 %v4916, %v4914
    %v4965 = vpack.c.b16 %v4917, %v4915
    %v4966 = vpack.c.b16 %v4920, %v4918
    %v4967 = vpack.c.b16 %v4921, %v4919
    %v4968 = vpack.c.b16 %v4924, %v4922
    %v4969 = vpack.c.b16 %v4925, %v4923
    %v4970 = vpack.c.b16 %v4928, %v4926
    %v4971 = vpack.c.b16 %v4929, %v4927
    %v4972 = vpack.c.b16 %v4932, %v4930
    %v4973 = vpack.c.b16 %v4933, %v4931
    %v4974 = vpack.c.b16 %v4936, %v4934
    %v4975 = vpack.c.b16 %v4937, %v4935
    %v4976 = vpack.c.b16 %v4940, %v4938
    %v4977 = vpack.c.b16 %v4941, %v4939
    %v4978 = vpack.c.b16 %v4944, %v4942
    %v4979 = vpack.c.b16 %v4945, %v4943
    %v4980 = vpack.c.b16 %v4948, %v4946
    %v4981 = vpack.c.b16 %v4949, %v4947
    %5014 = vmatprep.subr.bf16.mxu0 %v4965
    %5015 = vmatpush1.bf16.msra.mxu0 %v4964
    %5016 = vmatprep.subr.bf16.mxu0 %v4963
    %5017 = vmatpush1.bf16.msra.mxu0 %v4962
    %5018 = vmatprep.subr.bf16.mxu0 %v4961
    %5019 = vmatpush1.bf16.msra.mxu0 %v4960
    %5020 = vmatprep.subr.bf16.mxu0 %v4959
    %5021 = vmatpush1.bf16.msra.mxu0 %v4958
    %5022 = vmatprep.subr.bf16.mxu0 %v4957
    %5023 = vmatpush1.bf16.msra.mxu0 %v4956
    %5024 = vmatprep.subr.bf16.mxu0 %v4955
    %5025 = vmatpush1.bf16.msra.mxu0 %v4954
    %5026 = vmatprep.subr.bf16.mxu0 %v4953
    %5027 = vmatpush1.bf16.msra.mxu0 %v4952
    %5028 = vmatprep.subr.bf16.mxu0 %v4951
    %5029 = vmatpush1.bf16.msra.mxu0 %v4950
    %5030 = vmatprep.subr.bf16.mxu0 %v4981
    %5031 = vmatpush2.bf16.msra.mxu0 %v4980
    %5032 = vmatprep.subr.bf16.mxu0 %v4979
    %5033 = vmatpush2.bf16.msra.mxu0 %v4978
    %5034 = vmatprep.subr.bf16.mxu0 %v4977
    %5035 = vmatpush2.bf16.msra.mxu0 %v4976
    %5036 = vmatprep.subr.bf16.mxu0 %v4975
    %5037 = vmatpush2.bf16.msra.mxu0 %v4974
    %5038 = vmatprep.subr.bf16.mxu0 %v4973
    %5039 = vmatpush2.bf16.msra.mxu0 %v4972
    %5040 = vmatprep.subr.bf16.mxu0 %v4971
    %5041 = vmatpush2.bf16.msra.mxu0 %v4970
    %5042 = vmatprep.subr.bf16.mxu0 %v4969
    %5043 = vmatpush2.bf16.msra.mxu0 %v4968
    %5044 = vmatprep.subr.bf16.mxu0 %v4967
    %5045 = vmatpush2.bf16.msra.mxu0 %v4966
    %5046 = vmatprep.mubr.bf16.mxu0 %v4839
    %5047 = vmatmul.mubr.bf16.gmra.mxu0 %v4838
    %v5048 = vpop.f32.mrf.mxu0
    %v5049 = vadd.f32 0.0, %v5048
    %v5050 = vpop.f32.mrf.mxu0
    %v5051 = vadd.f32 0.0, %v5050
    %v5052 = vpop.f32.mrf.mxu0
    %v5053 = vadd.f32 0.0, %v5052
    %v5054 = vpop.f32.mrf.mxu0
    %v5055 = vadd.f32 0.0, %v5054
    %5056 = vmatprep.mubr.bf16.mxu0 %v4841
    %5057 = vmatmul.mubr.bf16.gmra.mxu0 %v4840
    %v5058 = vpop.f32.mrf.mxu0
    %v5059 = vadd.f32 0.0, %v5058
    %v5060 = vpop.f32.mrf.mxu0
    %v5061 = vadd.f32 0.0, %v5060
    %v5062 = vpop.f32.mrf.mxu0
    %v5063 = vadd.f32 0.0, %v5062
    %v5064 = vpop.f32.mrf.mxu0
    %v5065 = vadd.f32 0.0, %v5064
    %5066 = vmatprep.mubr.bf16.mxu0 %v4843
    %5067 = vmatmul.mubr.bf16.gmra.mxu0 %v4842
    %v5068 = vpop.f32.mrf.mxu0
    %v5069 = vadd.f32 0.0, %v5068
    %v5070 = vpop.f32.mrf.mxu0
    %v5071 = vadd.f32 0.0, %v5070
    %v5072 = vpop.f32.mrf.mxu0
    %v5073 = vadd.f32 0.0, %v5072
    %v5074 = vpop.f32.mrf.mxu0
    %v5075 = vadd.f32 0.0, %v5074
    %5076 = vmatprep.mubr.bf16.mxu0 %v4845
    %5077 = vmatmul.mubr.bf16.gmra.mxu0 %v4844
    %v5078 = vpop.f32.mrf.mxu0
    %v5079 = vadd.f32 0.0, %v5078
    %v5080 = vpop.f32.mrf.mxu0
    %v5081 = vadd.f32 0.0, %v5080
    %v5082 = vpop.f32.mrf.mxu0
    %v5083 = vadd.f32 0.0, %v5082
    %v5084 = vpop.f32.mrf.mxu0
    %v5085 = vadd.f32 0.0, %v5084
    %5086 = vmatprep.mubr.bf16.mxu0 %v4847
    %5087 = vmatmul.mubr.bf16.gmra.mxu0 %v4846
    %v5088 = vpop.f32.mrf.mxu0
    %v5089 = vadd.f32 0.0, %v5088
    %v5090 = vpop.f32.mrf.mxu0
    %v5091 = vadd.f32 0.0, %v5090
    %v5092 = vpop.f32.mrf.mxu0
    %v5093 = vadd.f32 0.0, %v5092
    %v5094 = vpop.f32.mrf.mxu0
    %v5095 = vadd.f32 0.0, %v5094
    %5096 = vmatprep.mubr.bf16.mxu0 %v4849
    %5097 = vmatmul.mubr.bf16.gmra.mxu0 %v4848
    %v5098 = vpop.f32.mrf.mxu0
    %v5099 = vadd.f32 0.0, %v5098
    %v5100 = vpop.f32.mrf.mxu0
    %v5101 = vadd.f32 0.0, %v5100
    %v5102 = vpop.f32.mrf.mxu0
    %v5103 = vadd.f32 0.0, %v5102
    %v5104 = vpop.f32.mrf.mxu0
    %v5105 = vadd.f32 0.0, %v5104
    %5106 = vmatprep.mubr.bf16.mxu0 %v4851
    %5107 = vmatmul.mubr.bf16.gmra.mxu0 %v4850
    %v5108 = vpop.f32.mrf.mxu0
    %v5109 = vadd.f32 0.0, %v5108
    %v5110 = vpop.f32.mrf.mxu0
    %v5111 = vadd.f32 0.0, %v5110
    %v5112 = vpop.f32.mrf.mxu0
    %v5113 = vadd.f32 0.0, %v5112
    %v5114 = vpop.f32.mrf.mxu0
    %v5115 = vadd.f32 0.0, %v5114
    %5116 = vmatprep.mubr.bf16.mxu0 %v4853
    %5117 = vmatmul.mubr.bf16.gmra.mxu0 %v4852
    %v5118 = vpop.f32.mrf.mxu0
    %v5119 = vadd.f32 0.0, %v5118
    %v5120 = vpop.f32.mrf.mxu0
    %v5121 = vadd.f32 0.0, %v5120
    %v5122 = vpop.f32.mrf.mxu0
    %v5123 = vadd.f32 0.0, %v5122
    %v5124 = vpop.f32.mrf.mxu0
    %v5125 = vadd.f32 0.0, %v5124
    %5126 = vdwg.mxu0
    %v5127 = vld [vmem:[%s53] sm:$0x3]
    %v5128 = vld [vmem:[%s55] sm:$0x3]
    %v5129 = vadd.f32 %v5049, %v5053
    %v5130 = vadd.f32 %v5129, %v5059
    %v5131 = vadd.f32 %v5130, %v5063
    %v5132 = vadd.f32 %v5131, %v5069
    %v5133 = vadd.f32 %v5132, %v5073
    %v5134 = vadd.f32 %v5133, %v5079
    %v5135 = vadd.f32 %v5134, %v5083
    %v5136 = vadd.f32 %v5135, %v5089
    %v5137 = vadd.f32 %v5136, %v5093
    %v5138 = vadd.f32 %v5137, %v5099
    %v5139 = vadd.f32 %v5138, %v5103
    %v5140 = vadd.f32 %v5139, %v5109
    %v5141 = vadd.f32 %v5140, %v5113
    %v5142 = vadd.f32 %v5141, %v5119
    %v5143 = vadd.f32 %v5142, %v5123
    %v5144 = vrot.slane %v5143, 4
    %v5145 = vadd.f32 %v5143, %v5144
    %v5146 = vrot.slane %v5145, 2
    %v5147 = vadd.f32 %v5145, %v5146
    %v5148 = vrot.slane %v5147, 1
    %v5149 = vadd.f32 %v5147, %v5148
    %v5150 = vadd.f32 %v5051, %v5055
    %v5151 = vadd.f32 %v5150, %v5061
    %v5152 = vadd.f32 %v5151, %v5065
    %v5153 = vadd.f32 %v5152, %v5071
    %v5154 = vadd.f32 %v5153, %v5075
    %v5155 = vadd.f32 %v5154, %v5081
    %v5156 = vadd.f32 %v5155, %v5085
    %v5157 = vadd.f32 %v5156, %v5091
    %v5158 = vadd.f32 %v5157, %v5095
    %v5159 = vadd.f32 %v5158, %v5101
    %v5160 = vadd.f32 %v5159, %v5105
    %v5161 = vadd.f32 %v5160, %v5111
    %v5162 = vadd.f32 %v5161, %v5115
    %v5163 = vadd.f32 %v5162, %v5121
    %v5164 = vadd.f32 %v5163, %v5125
    %v5165 = vrot.slane %v5164, 4
    %v5166 = vadd.f32 %v5164, %v5165
    %v5167 = vrot.slane %v5166, 2
    %v5168 = vadd.f32 %v5166, %v5167
    %v5169 = vrot.slane %v5168, 1
    %v5170 = vadd.f32 %v5168, %v5169
    %v5171 = vmul.f32 %v5149, %v637
    %v5172 = vmul.f32 %v5170, %v637
    %v5173 = vmul.f32 %v5049, %v5049
    %v5174 = vmul.f32 %v5051, %v5051
    %v5175 = vmul.f32 %v5053, %v5053
    %v5176 = vmul.f32 %v5055, %v5055
    %v5177 = vmul.f32 %v5059, %v5059
    %v5178 = vmul.f32 %v5061, %v5061
    %v5179 = vmul.f32 %v5063, %v5063
    %v5180 = vmul.f32 %v5065, %v5065
    %v5181 = vmul.f32 %v5069, %v5069
    %v5182 = vmul.f32 %v5071, %v5071
    %v5183 = vmul.f32 %v5073, %v5073
    %v5184 = vmul.f32 %v5075, %v5075
    %v5185 = vmul.f32 %v5079, %v5079
    %v5186 = vmul.f32 %v5081, %v5081
    %v5187 = vmul.f32 %v5083, %v5083
    %v5188 = vmul.f32 %v5085, %v5085
    %v5189 = vmul.f32 %v5089, %v5089
    %v5190 = vmul.f32 %v5091, %v5091
    %v5191 = vmul.f32 %v5093, %v5093
    %v5192 = vmul.f32 %v5095, %v5095
    %v5193 = vmul.f32 %v5099, %v5099
    %v5194 = vmul.f32 %v5101, %v5101
    %v5195 = vmul.f32 %v5103, %v5103
    %v5196 = vmul.f32 %v5105, %v5105
    %v5197 = vmul.f32 %v5109, %v5109
    %v5198 = vmul.f32 %v5111, %v5111
    %v5199 = vmul.f32 %v5113, %v5113
    %v5200 = vmul.f32 %v5115, %v5115
    %v5201 = vmul.f32 %v5119, %v5119
    %v5202 = vmul.f32 %v5121, %v5121
    %v5203 = vmul.f32 %v5123, %v5123
    %v5204 = vmul.f32 %v5125, %v5125
    %v5205 = vadd.f32 %v5173, %v5175
    %v5206 = vadd.f32 %v5205, %v5177
    %v5207 = vadd.f32 %v5206, %v5179
    %v5208 = vadd.f32 %v5207, %v5181
    %v5209 = vadd.f32 %v5208, %v5183
    %v5210 = vadd.f32 %v5209, %v5185
    %v5211 = vadd.f32 %v5210, %v5187
    %v5212 = vadd.f32 %v5211, %v5189
    %v5213 = vadd.f32 %v5212, %v5191
    %v5214 = vadd.f32 %v5213, %v5193
    %v5215 = vadd.f32 %v5214, %v5195
    %v5216 = vadd.f32 %v5215, %v5197
    %v5217 = vadd.f32 %v5216, %v5199
    %v5218 = vadd.f32 %v5217, %v5201
    %v5219 = vadd.f32 %v5218, %v5203
    %v5220 = vrot.slane %v5219, 4
    %v5221 = vadd.f32 %v5219, %v5220
    %v5222 = vrot.slane %v5221, 2
    %v5223 = vadd.f32 %v5221, %v5222
    %v5224 = vrot.slane %v5223, 1
    %v5225 = vadd.f32 %v5223, %v5224
    %v5226 = vadd.f32 %v5174, %v5176
    %v5227 = vadd.f32 %v5226, %v5178
    %v5228 = vadd.f32 %v5227, %v5180
    %v5229 = vadd.f32 %v5228, %v5182
    %v5230 = vadd.f32 %v5229, %v5184
    %v5231 = vadd.f32 %v5230, %v5186
    %v5232 = vadd.f32 %v5231, %v5188
    %v5233 = vadd.f32 %v5232, %v5190
    %v5234 = vadd.f32 %v5233, %v5192
    %v5235 = vadd.f32 %v5234, %v5194
    %v5236 = vadd.f32 %v5235, %v5196
    %v5237 = vadd.f32 %v5236, %v5198
    %v5238 = vadd.f32 %v5237, %v5200
    %v5239 = vadd.f32 %v5238, %v5202
    %v5240 = vadd.f32 %v5239, %v5204
    %v5241 = vrot.slane %v5240, 4
    %v5242 = vadd.f32 %v5240, %v5241
    %v5243 = vrot.slane %v5242, 2
    %v5244 = vadd.f32 %v5242, %v5243
    %v5245 = vrot.slane %v5244, 1
    %v5246 = vadd.f32 %v5244, %v5245
    %v5247 = vmul.f32 %v5225, %v637
    %v5248 = vmul.f32 %v5246, %v637
    %v5249 = vmul.f32 %v5171, %v5171
    %v5250 = vmul.f32 %v5172, %v5172
    %v5251 = vsub.f32 %v5247, %v5249
    %v5252 = vsub.f32 %v5248, %v5250
    %v5253 = vmax.f32 %v5251, 0.0
    %v5254 = vmax.f32 %v5252, 0.0
    %v5255 = vadd.f32 %v5253, 0.001
    %v5256 = vadd.f32 %v5254, 0.001
    %v5257 = vrsqrt.pop %v5255
    %v5258 = vrsqrt.pop %v5256
    %v5261 = vcombine.low %v5257, %v5258
    %v5263 = vunpack.c.l.s4 1966171168
    %v5264 = vunpack.c.0.s8 %v5263
    %v5265 = vlaneseq
    %v5266 = vshrl.u32 %v5265, 7
    %v5267 = vsub.s32 %v5264, %v5266
    %v5268 = vrot.slane %v5261, %v5267
    %v5270 = vunpack.c.l.s4 1966171168
    %v5271 = vunpack.c.0.s8 %v5270
    %v5272 = vlaneseq
    %v5273 = vshrl.u32 %v5272, 7
    %v5274 = vsub.s32 %v5271, %v5273
    %v5275 = vrot.slane %v5268, %v5274
    %v5277 = vmul.f32 %v5127, %v5275
    %v5279 = vlaneseq
    %v5280 = vshrl.u32 %v5279, 7
    %v5281 = vsub.s32 0, %v5280
    %v5282 = vrot.slane %v5277, %v5281
    %v5283 = vlaneseq
    %v5284 = vshrl.u32 %v5283, 7
    %v5285 = vsub.s32 1, %v5284
    %v5286 = vrot.slane %v5277, %v5285
    %v5289 = vmul.f32 %v5171, %v5282
    %v5290 = vmul.f32 %v5172, %v5286
    %v5293 = vcombine.low %v5289, %v5290
    %v5295 = vunpack.c.l.s4 1966171168
    %v5296 = vunpack.c.0.s8 %v5295
    %v5297 = vlaneseq
    %v5298 = vshrl.u32 %v5297, 7
    %v5299 = vsub.s32 %v5296, %v5298
    %v5300 = vrot.slane %v5293, %v5299
    %v5302 = vunpack.c.l.s4 1966171168
    %v5303 = vunpack.c.0.s8 %v5302
    %v5304 = vlaneseq
    %v5305 = vshrl.u32 %v5304, 7
    %v5306 = vsub.s32 %v5303, %v5305
    %v5307 = vrot.slane %v5300, %v5306
    %v5309 = vsub.f32 %v5128, %v5307
    %v5310 = vmul.f32 %v5049, %v5282
    %v5311 = vmul.f32 %v5051, %v5286
    %v5312 = vmul.f32 %v5053, %v5282
    %v5313 = vmul.f32 %v5055, %v5286
    %v5314 = vmul.f32 %v5059, %v5282
    %v5315 = vmul.f32 %v5061, %v5286
    %v5316 = vmul.f32 %v5063, %v5282
    %v5317 = vmul.f32 %v5065, %v5286
    %v5318 = vmul.f32 %v5069, %v5282
    %v5319 = vmul.f32 %v5071, %v5286
    %v5320 = vmul.f32 %v5073, %v5282
    %v5321 = vmul.f32 %v5075, %v5286
    %v5322 = vmul.f32 %v5079, %v5282
    %v5323 = vmul.f32 %v5081, %v5286
    %v5324 = vmul.f32 %v5083, %v5282
    %v5325 = vmul.f32 %v5085, %v5286
    %v5326 = vmul.f32 %v5089, %v5282
    %v5327 = vmul.f32 %v5091, %v5286
    %v5328 = vmul.f32 %v5093, %v5282
    %v5329 = vmul.f32 %v5095, %v5286
    %v5330 = vmul.f32 %v5099, %v5282
    %v5331 = vmul.f32 %v5101, %v5286
    %v5332 = vmul.f32 %v5103, %v5282
    %v5333 = vmul.f32 %v5105, %v5286
    %v5334 = vmul.f32 %v5109, %v5282
    %v5335 = vmul.f32 %v5111, %v5286
    %v5336 = vmul.f32 %v5113, %v5282
    %v5337 = vmul.f32 %v5115, %v5286
    %v5338 = vmul.f32 %v5119, %v5282
    %v5339 = vmul.f32 %v5121, %v5286
    %v5340 = vmul.f32 %v5123, %v5282
    %v5341 = vmul.f32 %v5125, %v5286
    %v5343 = vlaneseq
    %v5344 = vshrl.u32 %v5343, 7
    %v5345 = vsub.s32 0, %v5344
    %v5346 = vrot.slane %v5309, %v5345
    %v5347 = vlaneseq
    %v5348 = vshrl.u32 %v5347, 7
    %v5349 = vsub.s32 1, %v5348
    %v5350 = vrot.slane %v5309, %v5349
    %v5353 = vadd.f32 %v5310, %v5346
    %v5354 = vadd.f32 %v5311, %v5350
    %v5355 = vadd.f32 %v5312, %v5346
    %v5356 = vadd.f32 %v5313, %v5350
    %v5357 = vadd.f32 %v5314, %v5346
    %v5358 = vadd.f32 %v5315, %v5350
    %v5359 = vadd.f32 %v5316, %v5346
    %v5360 = vadd.f32 %v5317, %v5350
    %v5361 = vadd.f32 %v5318, %v5346
    %v5362 = vadd.f32 %v5319, %v5350
    %v5363 = vadd.f32 %v5320, %v5346
    %v5364 = vadd.f32 %v5321, %v5350
    %v5365 = vadd.f32 %v5322, %v5346
    %v5366 = vadd.f32 %v5323, %v5350
    %v5367 = vadd.f32 %v5324, %v5346
    %v5368 = vadd.f32 %v5325, %v5350
    %v5369 = vadd.f32 %v5326, %v5346
    %v5370 = vadd.f32 %v5327, %v5350
    %v5371 = vadd.f32 %v5328, %v5346
    %v5372 = vadd.f32 %v5329, %v5350
    %v5373 = vadd.f32 %v5330, %v5346
    %v5374 = vadd.f32 %v5331, %v5350
    %v5375 = vadd.f32 %v5332, %v5346
    %v5376 = vadd.f32 %v5333, %v5350
    %v5377 = vadd.f32 %v5334, %v5346
    %v5378 = vadd.f32 %v5335, %v5350
    %v5379 = vadd.f32 %v5336, %v5346
    %v5380 = vadd.f32 %v5337, %v5350
    %v5381 = vadd.f32 %v5338, %v5346
    %v5382 = vadd.f32 %v5339, %v5350
    %v5383 = vadd.f32 %v5340, %v5346
    %v5384 = vadd.f32 %v5341, %v5350
    %v5385 = vmax.f32 %v5353, 0.0
    %v5386 = vmax.f32 %v5354, 0.0
    %v5387 = vmax.f32 %v5355, 0.0
    %v5388 = vmax.f32 %v5356, 0.0
    %v5389 = vmax.f32 %v5357, 0.0
    %v5390 = vmax.f32 %v5358, 0.0
    %v5391 = vmax.f32 %v5359, 0.0
    %v5392 = vmax.f32 %v5360, 0.0
    %v5393 = vmax.f32 %v5361, 0.0
    %v5394 = vmax.f32 %v5362, 0.0
    %v5395 = vmax.f32 %v5363, 0.0
    %v5396 = vmax.f32 %v5364, 0.0
    %v5397 = vmax.f32 %v5365, 0.0
    %v5398 = vmax.f32 %v5366, 0.0
    %v5399 = vmax.f32 %v5367, 0.0
    %v5400 = vmax.f32 %v5368, 0.0
    %v5401 = vmax.f32 %v5369, 0.0
    %v5402 = vmax.f32 %v5370, 0.0
    %v5403 = vmax.f32 %v5371, 0.0
    %v5404 = vmax.f32 %v5372, 0.0
    %v5405 = vmax.f32 %v5373, 0.0
    %v5406 = vmax.f32 %v5374, 0.0
    %v5407 = vmax.f32 %v5375, 0.0
    %v5408 = vmax.f32 %v5376, 0.0
    %v5409 = vmax.f32 %v5377, 0.0
    %v5410 = vmax.f32 %v5378, 0.0
    %v5411 = vmax.f32 %v5379, 0.0
    %v5412 = vmax.f32 %v5380, 0.0
    %v5413 = vmax.f32 %v5381, 0.0
    %v5414 = vmax.f32 %v5382, 0.0
    %v5415 = vmax.f32 %v5383, 0.0
    %v5416 = vmax.f32 %v5384, 0.0
    %v5417 = vld [vmem:[#allocation23] sm:$0xff]
    %v5418 = vld [vmem:[#allocation23 + $0x8] sm:$0xff]
    %v5419 = vld [vmem:[#allocation23 + $0x10] sm:$0xff]
    %v5420 = vld [vmem:[#allocation23 + $0x18] sm:$0xff]
    %v5421 = vld [vmem:[#allocation23 + $0x20] sm:$0xff]
    %v5422 = vld [vmem:[#allocation23 + $0x28] sm:$0xff]
    %v5423 = vld [vmem:[#allocation23 + $0x30] sm:$0xff]
    %v5424 = vld [vmem:[#allocation23 + $0x38] sm:$0xff]
    %v5425 = vld [vmem:[#allocation23 + $0x40] sm:$0xff]
    %v5426 = vld [vmem:[#allocation23 + $0x48] sm:$0xff]
    %v5427 = vld [vmem:[#allocation23 + $0x50] sm:$0xff]
    %v5428 = vld [vmem:[#allocation23 + $0x58] sm:$0xff]
    %v5429 = vld [vmem:[#allocation23 + $0x60] sm:$0xff]
    %v5430 = vld [vmem:[#allocation23 + $0x68] sm:$0xff]
    %v5431 = vld [vmem:[#allocation23 + $0x70] sm:$0xff]
    %v5432 = vld [vmem:[#allocation23 + $0x78] sm:$0xff]
    %v5433 = vld [vmem:[#allocation23 + $0x80] sm:$0xff]
    %v5434 = vld [vmem:[#allocation23 + $0x88] sm:$0xff]
    %v5435 = vld [vmem:[#allocation23 + $0x90] sm:$0xff]
    %v5436 = vld [vmem:[#allocation23 + $0x98] sm:$0xff]
    %v5437 = vld [vmem:[#allocation23 + $0xa0] sm:$0xff]
    %v5438 = vld [vmem:[#allocation23 + $0xa8] sm:$0xff]
    %v5439 = vld [vmem:[#allocation23 + $0xb0] sm:$0xff]
    %v5440 = vld [vmem:[#allocation23 + $0xb8] sm:$0xff]
    %v5441 = vld [vmem:[#allocation23 + $0xc0] sm:$0xff]
    %v5442 = vld [vmem:[#allocation23 + $0xc8] sm:$0xff]
    %v5443 = vld [vmem:[#allocation23 + $0xd0] sm:$0xff]
    %v5444 = vld [vmem:[#allocation23 + $0xd8] sm:$0xff]
    %v5445 = vld [vmem:[#allocation23 + $0xe0] sm:$0xff]
    %v5446 = vld [vmem:[#allocation23 + $0xe8] sm:$0xff]
    %v5447 = vld [vmem:[#allocation23 + $0xf0] sm:$0xff]
    %v5448 = vld [vmem:[#allocation23 + $0xf8] sm:$0xff]
    %v5449 = vpack.c.bf16 %v5387, %v5385
    %v5450 = vpack.c.bf16 %v5388, %v5386
    %v5451 = vpack.c.bf16 %v5391, %v5389
    %v5452 = vpack.c.bf16 %v5392, %v5390
    %v5453 = vpack.c.bf16 %v5395, %v5393
    %v5454 = vpack.c.bf16 %v5396, %v5394
    %v5455 = vpack.c.bf16 %v5399, %v5397
    %v5456 = vpack.c.bf16 %v5400, %v5398
    %v5457 = vpack.c.bf16 %v5403, %v5401
    %v5458 = vpack.c.bf16 %v5404, %v5402
    %v5459 = vpack.c.bf16 %v5407, %v5405
    %v5460 = vpack.c.bf16 %v5408, %v5406
    %v5461 = vpack.c.bf16 %v5411, %v5409
    %v5462 = vpack.c.bf16 %v5412, %v5410
    %v5463 = vpack.c.bf16 %v5415, %v5413
    %v5464 = vpack.c.bf16 %v5416, %v5414
    %v5497 = vunpack.c.l.b16 %v5417
    %v5498 = vunpack.c.h.b16 %v5417
    %v5499 = vunpack.c.l.b16 %v5418
    %v5500 = vunpack.c.h.b16 %v5418
    %v5501 = vunpack.c.l.b16 %v5419
    %v5502 = vunpack.c.h.b16 %v5419
    %v5503 = vunpack.c.l.b16 %v5420
    %v5504 = vunpack.c.h.b16 %v5420
    %v5505 = vunpack.c.l.b16 %v5421
    %v5506 = vunpack.c.h.b16 %v5421
    %v5507 = vunpack.c.l.b16 %v5422
    %v5508 = vunpack.c.h.b16 %v5422
    %v5509 = vunpack.c.l.b16 %v5423
    %v5510 = vunpack.c.h.b16 %v5423
    %v5511 = vunpack.c.l.b16 %v5424
    %v5512 = vunpack.c.h.b16 %v5424
    %v5513 = vunpack.c.l.b16 %v5425
    %v5514 = vunpack.c.h.b16 %v5425
    %v5515 = vunpack.c.l.b16 %v5426
    %v5516 = vunpack.c.h.b16 %v5426
    %v5517 = vunpack.c.l.b16 %v5427
    %v5518 = vunpack.c.h.b16 %v5427
    %v5519 = vunpack.c.l.b16 %v5428
    %v5520 = vunpack.c.h.b16 %v5428
    %v5521 = vunpack.c.l.b16 %v5429
    %v5522 = vunpack.c.h.b16 %v5429
    %v5523 = vunpack.c.l.b16 %v5430
    %v5524 = vunpack.c.h.b16 %v5430
    %v5525 = vunpack.c.l.b16 %v5431
    %v5526 = vunpack.c.h.b16 %v5431
    %v5527 = vunpack.c.l.b16 %v5432
    %v5528 = vunpack.c.h.b16 %v5432
    %v5529 = vunpack.c.l.b16 %v5433
    %v5530 = vunpack.c.h.b16 %v5433
    %v5531 = vunpack.c.l.b16 %v5434
    %v5532 = vunpack.c.h.b16 %v5434
    %v5533 = vunpack.c.l.b16 %v5435
    %v5534 = vunpack.c.h.b16 %v5435
    %v5535 = vunpack.c.l.b16 %v5436
    %v5536 = vunpack.c.h.b16 %v5436
    %v5537 = vunpack.c.l.b16 %v5437
    %v5538 = vunpack.c.h.b16 %v5437
    %v5539 = vunpack.c.l.b16 %v5438
    %v5540 = vunpack.c.h.b16 %v5438
    %v5541 = vunpack.c.l.b16 %v5439
    %v5542 = vunpack.c.h.b16 %v5439
    %v5543 = vunpack.c.l.b16 %v5440
    %v5544 = vunpack.c.h.b16 %v5440
    %v5545 = vunpack.c.l.b16 %v5441
    %v5546 = vunpack.c.h.b16 %v5441
    %v5547 = vunpack.c.l.b16 %v5442
    %v5548 = vunpack.c.h.b16 %v5442
    %v5549 = vunpack.c.l.b16 %v5443
    %v5550 = vunpack.c.h.b16 %v5443
    %v5551 = vunpack.c.l.b16 %v5444
    %v5552 = vunpack.c.h.b16 %v5444
    %v5553 = vunpack.c.l.b16 %v5445
    %v5554 = vunpack.c.h.b16 %v5445
    %v5555 = vunpack.c.l.b16 %v5446
    %v5556 = vunpack.c.h.b16 %v5446
    %v5557 = vunpack.c.l.b16 %v5447
    %v5558 = vunpack.c.h.b16 %v5447
    %v5559 = vunpack.c.l.b16 %v5448
    %v5560 = vunpack.c.h.b16 %v5448
    %v5561 = vpack.c.b16 %v5499, %v5497
    %v5562 = vpack.c.b16 %v5500, %v5498
    %v5563 = vpack.c.b16 %v5503, %v5501
    %v5564 = vpack.c.b16 %v5504, %v5502
    %v5565 = vpack.c.b16 %v5507, %v5505
    %v5566 = vpack.c.b16 %v5508, %v5506
    %v5567 = vpack.c.b16 %v5511, %v5509
    %v5568 = vpack.c.b16 %v5512, %v5510
    %v5569 = vpack.c.b16 %v5515, %v5513
    %v5570 = vpack.c.b16 %v5516, %v5514
    %v5571 = vpack.c.b16 %v5519, %v5517
    %v5572 = vpack.c.b16 %v5520, %v5518
    %v5573 = vpack.c.b16 %v5523, %v5521
    %v5574 = vpack.c.b16 %v5524, %v5522
    %v5575 = vpack.c.b16 %v5527, %v5525
    %v5576 = vpack.c.b16 %v5528, %v5526
    %v5577 = vpack.c.b16 %v5531, %v5529
    %v5578 = vpack.c.b16 %v5532, %v5530
    %v5579 = vpack.c.b16 %v5535, %v5533
    %v5580 = vpack.c.b16 %v5536, %v5534
    %v5581 = vpack.c.b16 %v5539, %v5537
    %v5582 = vpack.c.b16 %v5540, %v5538
    %v5583 = vpack.c.b16 %v5543, %v5541
    %v5584 = vpack.c.b16 %v5544, %v5542
    %v5585 = vpack.c.b16 %v5547, %v5545
    %v5586 = vpack.c.b16 %v5548, %v5546
    %v5587 = vpack.c.b16 %v5551, %v5549
    %v5588 = vpack.c.b16 %v5552, %v5550
    %v5589 = vpack.c.b16 %v5555, %v5553
    %v5590 = vpack.c.b16 %v5556, %v5554
    %v5591 = vpack.c.b16 %v5559, %v5557
    %v5592 = vpack.c.b16 %v5560, %v5558
    %5625 = vmatprep.subr.bf16.mxu0 %v5576
    %5626 = vmatpush1.bf16.msra.mxu0 %v5575
    %5627 = vmatprep.subr.bf16.mxu0 %v5574
    %5628 = vmatpush1.bf16.msra.mxu0 %v5573
    %5629 = vmatprep.subr.bf16.mxu0 %v5572
    %5630 = vmatpush1.bf16.msra.mxu0 %v5571
    %5631 = vmatprep.subr.bf16.mxu0 %v5570
    %5632 = vmatpush1.bf16.msra.mxu0 %v5569
    %5633 = vmatprep.subr.bf16.mxu0 %v5568
    %5634 = vmatpush1.bf16.msra.mxu0 %v5567
    %5635 = vmatprep.subr.bf16.mxu0 %v5566
    %5636 = vmatpush1.bf16.msra.mxu0 %v5565
    %5637 = vmatprep.subr.bf16.mxu0 %v5564
    %5638 = vmatpush1.bf16.msra.mxu0 %v5563
    %5639 = vmatprep.subr.bf16.mxu0 %v5562
    %5640 = vmatpush1.bf16.msra.mxu0 %v5561
    %5641 = vmatprep.subr.bf16.mxu0 %v5592
    %5642 = vmatpush2.bf16.msra.mxu0 %v5591
    %5643 = vmatprep.subr.bf16.mxu0 %v5590
    %5644 = vmatpush2.bf16.msra.mxu0 %v5589
    %5645 = vmatprep.subr.bf16.mxu0 %v5588
    %5646 = vmatpush2.bf16.msra.mxu0 %v5587
    %5647 = vmatprep.subr.bf16.mxu0 %v5586
    %5648 = vmatpush2.bf16.msra.mxu0 %v5585
    %5649 = vmatprep.subr.bf16.mxu0 %v5584
    %5650 = vmatpush2.bf16.msra.mxu0 %v5583
    %5651 = vmatprep.subr.bf16.mxu0 %v5582
    %5652 = vmatpush2.bf16.msra.mxu0 %v5581
    %5653 = vmatprep.subr.bf16.mxu0 %v5580
    %5654 = vmatpush2.bf16.msra.mxu0 %v5579
    %5655 = vmatprep.subr.bf16.mxu0 %v5578
    %5656 = vmatpush2.bf16.msra.mxu0 %v5577
    %5657 = vmatprep.mubr.bf16.mxu0 %v5450
    %5658 = vmatmul.mubr.bf16.gmra.mxu0 %v5449
    %v5659 = vpop.f32.mrf.mxu0
    %v5660 = vadd.f32 0.0, %v5659
    %v5661 = vpop.f32.mrf.mxu0
    %v5662 = vadd.f32 0.0, %v5661
    %v5663 = vpop.f32.mrf.mxu0
    %v5664 = vadd.f32 0.0, %v5663
    %v5665 = vpop.f32.mrf.mxu0
    %v5666 = vadd.f32 0.0, %v5665
    %5667 = vmatprep.mubr.bf16.mxu0 %v5452
    %5668 = vmatmul.mubr.bf16.gmra.mxu0 %v5451
    %v5669 = vpop.f32.mrf.mxu0
    %v5670 = vadd.f32 0.0, %v5669
    %v5671 = vpop.f32.mrf.mxu0
    %v5672 = vadd.f32 0.0, %v5671
    %v5673 = vpop.f32.mrf.mxu0
    %v5674 = vadd.f32 0.0, %v5673
    %v5675 = vpop.f32.mrf.mxu0
    %v5676 = vadd.f32 0.0, %v5675
    %5677 = vmatprep.mubr.bf16.mxu0 %v5454
    %5678 = vmatmul.mubr.bf16.gmra.mxu0 %v5453
    %v5679 = vpop.f32.mrf.mxu0
    %v5680 = vadd.f32 0.0, %v5679
    %v5681 = vpop.f32.mrf.mxu0
    %v5682 = vadd.f32 0.0, %v5681
    %v5683 = vpop.f32.mrf.mxu0
    %v5684 = vadd.f32 0.0, %v5683
    %v5685 = vpop.f32.mrf.mxu0
    %v5686 = vadd.f32 0.0, %v5685
    %5687 = vmatprep.mubr.bf16.mxu0 %v5456
    %5688 = vmatmul.mubr.bf16.gmra.mxu0 %v5455
    %v5689 = vpop.f32.mrf.mxu0
    %v5690 = vadd.f32 0.0, %v5689
    %v5691 = vpop.f32.mrf.mxu0
    %v5692 = vadd.f32 0.0, %v5691
    %v5693 = vpop.f32.mrf.mxu0
    %v5694 = vadd.f32 0.0, %v5693
    %v5695 = vpop.f32.mrf.mxu0
    %v5696 = vadd.f32 0.0, %v5695
    %5697 = vmatprep.mubr.bf16.mxu0 %v5458
    %5698 = vmatmul.mubr.bf16.gmra.mxu0 %v5457
    %v5699 = vpop.f32.mrf.mxu0
    %v5700 = vadd.f32 0.0, %v5699
    %v5701 = vpop.f32.mrf.mxu0
    %v5702 = vadd.f32 0.0, %v5701
    %v5703 = vpop.f32.mrf.mxu0
    %v5704 = vadd.f32 0.0, %v5703
    %v5705 = vpop.f32.mrf.mxu0
    %v5706 = vadd.f32 0.0, %v5705
    %5707 = vmatprep.mubr.bf16.mxu0 %v5460
    %5708 = vmatmul.mubr.bf16.gmra.mxu0 %v5459
    %v5709 = vpop.f32.mrf.mxu0
    %v5710 = vadd.f32 0.0, %v5709
    %v5711 = vpop.f32.mrf.mxu0
    %v5712 = vadd.f32 0.0, %v5711
    %v5713 = vpop.f32.mrf.mxu0
    %v5714 = vadd.f32 0.0, %v5713
    %v5715 = vpop.f32.mrf.mxu0
    %v5716 = vadd.f32 0.0, %v5715
    %5717 = vmatprep.mubr.bf16.mxu0 %v5462
    %5718 = vmatmul.mubr.bf16.gmra.mxu0 %v5461
    %v5719 = vpop.f32.mrf.mxu0
    %v5720 = vadd.f32 0.0, %v5719
    %v5721 = vpop.f32.mrf.mxu0
    %v5722 = vadd.f32 0.0, %v5721
    %v5723 = vpop.f32.mrf.mxu0
    %v5724 = vadd.f32 0.0, %v5723
    %v5725 = vpop.f32.mrf.mxu0
    %v5726 = vadd.f32 0.0, %v5725
    %5727 = vmatprep.mubr.bf16.mxu0 %v5464
    %5728 = vmatmul.mubr.bf16.gmra.mxu0 %v5463
    %v5729 = vpop.f32.mrf.mxu0
    %v5730 = vadd.f32 0.0, %v5729
    %v5731 = vpop.f32.mrf.mxu0
    %v5732 = vadd.f32 0.0, %v5731
    %v5733 = vpop.f32.mrf.mxu0
    %v5734 = vadd.f32 0.0, %v5733
    %v5735 = vpop.f32.mrf.mxu0
    %v5736 = vadd.f32 0.0, %v5735
    %5737 = vdwg.mxu0
    %v5738 = vld [vmem:[%s59] sm:$0x3]
    %v5739 = vld [vmem:[%s61] sm:$0x3]
    %v5740 = vadd.f32 %v5660, %v5664
    %v5741 = vadd.f32 %v5740, %v5670
    %v5742 = vadd.f32 %v5741, %v5674
    %v5743 = vadd.f32 %v5742, %v5680
    %v5744 = vadd.f32 %v5743, %v5684
    %v5745 = vadd.f32 %v5744, %v5690
    %v5746 = vadd.f32 %v5745, %v5694
    %v5747 = vadd.f32 %v5746, %v5700
    %v5748 = vadd.f32 %v5747, %v5704
    %v5749 = vadd.f32 %v5748, %v5710
    %v5750 = vadd.f32 %v5749, %v5714
    %v5751 = vadd.f32 %v5750, %v5720
    %v5752 = vadd.f32 %v5751, %v5724
    %v5753 = vadd.f32 %v5752, %v5730
    %v5754 = vadd.f32 %v5753, %v5734
    %v5755 = vrot.slane %v5754, 4
    %v5756 = vadd.f32 %v5754, %v5755
    %v5757 = vrot.slane %v5756, 2
    %v5758 = vadd.f32 %v5756, %v5757
    %v5759 = vrot.slane %v5758, 1
    %v5760 = vadd.f32 %v5758, %v5759
    %v5761 = vadd.f32 %v5662, %v5666
    %v5762 = vadd.f32 %v5761, %v5672
    %v5763 = vadd.f32 %v5762, %v5676
    %v5764 = vadd.f32 %v5763, %v5682
    %v5765 = vadd.f32 %v5764, %v5686
    %v5766 = vadd.f32 %v5765, %v5692
    %v5767 = vadd.f32 %v5766, %v5696
    %v5768 = vadd.f32 %v5767, %v5702
    %v5769 = vadd.f32 %v5768, %v5706
    %v5770 = vadd.f32 %v5769, %v5712
    %v5771 = vadd.f32 %v5770, %v5716
    %v5772 = vadd.f32 %v5771, %v5722
    %v5773 = vadd.f32 %v5772, %v5726
    %v5774 = vadd.f32 %v5773, %v5732
    %v5775 = vadd.f32 %v5774, %v5736
    %v5776 = vrot.slane %v5775, 4
    %v5777 = vadd.f32 %v5775, %v5776
    %v5778 = vrot.slane %v5777, 2
    %v5779 = vadd.f32 %v5777, %v5778
    %v5780 = vrot.slane %v5779, 1
    %v5781 = vadd.f32 %v5779, %v5780
    %v5782 = vmul.f32 %v5760, %v637
    %v5783 = vmul.f32 %v5781, %v637
    %v5784 = vmul.f32 %v5660, %v5660
    %v5785 = vmul.f32 %v5662, %v5662
    %v5786 = vmul.f32 %v5664, %v5664
    %v5787 = vmul.f32 %v5666, %v5666
    %v5788 = vmul.f32 %v5670, %v5670
    %v5789 = vmul.f32 %v5672, %v5672
    %v5790 = vmul.f32 %v5674, %v5674
    %v5791 = vmul.f32 %v5676, %v5676
    %v5792 = vmul.f32 %v5680, %v5680
    %v5793 = vmul.f32 %v5682, %v5682
    %v5794 = vmul.f32 %v5684, %v5684
    %v5795 = vmul.f32 %v5686, %v5686
    %v5796 = vmul.f32 %v5690, %v5690
    %v5797 = vmul.f32 %v5692, %v5692
    %v5798 = vmul.f32 %v5694, %v5694
    %v5799 = vmul.f32 %v5696, %v5696
    %v5800 = vmul.f32 %v5700, %v5700
    %v5801 = vmul.f32 %v5702, %v5702
    %v5802 = vmul.f32 %v5704, %v5704
    %v5803 = vmul.f32 %v5706, %v5706
    %v5804 = vmul.f32 %v5710, %v5710
    %v5805 = vmul.f32 %v5712, %v5712
    %v5806 = vmul.f32 %v5714, %v5714
    %v5807 = vmul.f32 %v5716, %v5716
    %v5808 = vmul.f32 %v5720, %v5720
    %v5809 = vmul.f32 %v5722, %v5722
    %v5810 = vmul.f32 %v5724, %v5724
    %v5811 = vmul.f32 %v5726, %v5726
    %v5812 = vmul.f32 %v5730, %v5730
    %v5813 = vmul.f32 %v5732, %v5732
    %v5814 = vmul.f32 %v5734, %v5734
    %v5815 = vmul.f32 %v5736, %v5736
    %v5816 = vadd.f32 %v5784, %v5786
    %v5817 = vadd.f32 %v5816, %v5788
    %v5818 = vadd.f32 %v5817, %v5790
    %v5819 = vadd.f32 %v5818, %v5792
    %v5820 = vadd.f32 %v5819, %v5794
    %v5821 = vadd.f32 %v5820, %v5796
    %v5822 = vadd.f32 %v5821, %v5798
    %v5823 = vadd.f32 %v5822, %v5800
    %v5824 = vadd.f32 %v5823, %v5802
    %v5825 = vadd.f32 %v5824, %v5804
    %v5826 = vadd.f32 %v5825, %v5806
    %v5827 = vadd.f32 %v5826, %v5808
    %v5828 = vadd.f32 %v5827, %v5810
    %v5829 = vadd.f32 %v5828, %v5812
    %v5830 = vadd.f32 %v5829, %v5814
    %v5831 = vrot.slane %v5830, 4
    %v5832 = vadd.f32 %v5830, %v5831
    %v5833 = vrot.slane %v5832, 2
    %v5834 = vadd.f32 %v5832, %v5833
    %v5835 = vrot.slane %v5834, 1
    %v5836 = vadd.f32 %v5834, %v5835
    %v5837 = vadd.f32 %v5785, %v5787
    %v5838 = vadd.f32 %v5837, %v5789
    %v5839 = vadd.f32 %v5838, %v5791
    %v5840 = vadd.f32 %v5839, %v5793
    %v5841 = vadd.f32 %v5840, %v5795
    %v5842 = vadd.f32 %v5841, %v5797
    %v5843 = vadd.f32 %v5842, %v5799
    %v5844 = vadd.f32 %v5843, %v5801
    %v5845 = vadd.f32 %v5844, %v5803
    %v5846 = vadd.f32 %v5845, %v5805
    %v5847 = vadd.f32 %v5846, %v5807
    %v5848 = vadd.f32 %v5847, %v5809
    %v5849 = vadd.f32 %v5848, %v5811
    %v5850 = vadd.f32 %v5849, %v5813
    %v5851 = vadd.f32 %v5850, %v5815
    %v5852 = vrot.slane %v5851, 4
    %v5853 = vadd.f32 %v5851, %v5852
    %v5854 = vrot.slane %v5853, 2
    %v5855 = vadd.f32 %v5853, %v5854
    %v5856 = vrot.slane %v5855, 1
    %v5857 = vadd.f32 %v5855, %v5856
    %v5858 = vmul.f32 %v5836, %v637
    %v5859 = vmul.f32 %v5857, %v637
    %v5860 = vmul.f32 %v5782, %v5782
    %v5861 = vmul.f32 %v5783, %v5783
    %v5862 = vsub.f32 %v5858, %v5860
    %v5863 = vsub.f32 %v5859, %v5861
    %v5864 = vmax.f32 %v5862, 0.0
    %v5865 = vmax.f32 %v5863, 0.0
    %v5866 = vadd.f32 %v5864, 0.001
    %v5867 = vadd.f32 %v5865, 0.001
    %v5868 = vrsqrt.pop %v5866
    %v5869 = vrsqrt.pop %v5867
    %v5872 = vcombine.low %v5868, %v5869
    %v5874 = vunpack.c.l.s4 1966171168
    %v5875 = vunpack.c.0.s8 %v5874
    %v5876 = vlaneseq
    %v5877 = vshrl.u32 %v5876, 7
    %v5878 = vsub.s32 %v5875, %v5877
    %v5879 = vrot.slane %v5872, %v5878
    %v5881 = vunpack.c.l.s4 1966171168
    %v5882 = vunpack.c.0.s8 %v5881
    %v5883 = vlaneseq
    %v5884 = vshrl.u32 %v5883, 7
    %v5885 = vsub.s32 %v5882, %v5884
    %v5886 = vrot.slane %v5879, %v5885
    %v5888 = vmul.f32 %v5738, %v5886
    %v5890 = vlaneseq
    %v5891 = vshrl.u32 %v5890, 7
    %v5892 = vsub.s32 0, %v5891
    %v5893 = vrot.slane %v5888, %v5892
    %v5894 = vlaneseq
    %v5895 = vshrl.u32 %v5894, 7
    %v5896 = vsub.s32 1, %v5895
    %v5897 = vrot.slane %v5888, %v5896
    %v5900 = vmul.f32 %v5782, %v5893
    %v5901 = vmul.f32 %v5783, %v5897
    %v5904 = vcombine.low %v5900, %v5901
    %v5906 = vunpack.c.l.s4 1966171168
    %v5907 = vunpack.c.0.s8 %v5906
    %v5908 = vlaneseq
    %v5909 = vshrl.u32 %v5908, 7
    %v5910 = vsub.s32 %v5907, %v5909
    %v5911 = vrot.slane %v5904, %v5910
    %v5913 = vunpack.c.l.s4 1966171168
    %v5914 = vunpack.c.0.s8 %v5913
    %v5915 = vlaneseq
    %v5916 = vshrl.u32 %v5915, 7
    %v5917 = vsub.s32 %v5914, %v5916
    %v5918 = vrot.slane %v5911, %v5917
    %v5920 = vsub.f32 %v5739, %v5918
    %v5921 = vmul.f32 %v5660, %v5893
    %v5922 = vmul.f32 %v5662, %v5897
    %v5923 = vmul.f32 %v5664, %v5893
    %v5924 = vmul.f32 %v5666, %v5897
    %v5925 = vmul.f32 %v5670, %v5893
    %v5926 = vmul.f32 %v5672, %v5897
    %v5927 = vmul.f32 %v5674, %v5893
    %v5928 = vmul.f32 %v5676, %v5897
    %v5929 = vmul.f32 %v5680, %v5893
    %v5930 = vmul.f32 %v5682, %v5897
    %v5931 = vmul.f32 %v5684, %v5893
    %v5932 = vmul.f32 %v5686, %v5897
    %v5933 = vmul.f32 %v5690, %v5893
    %v5934 = vmul.f32 %v5692, %v5897
    %v5935 = vmul.f32 %v5694, %v5893
    %v5936 = vmul.f32 %v5696, %v5897
    %v5937 = vmul.f32 %v5700, %v5893
    %v5938 = vmul.f32 %v5702, %v5897
    %v5939 = vmul.f32 %v5704, %v5893
    %v5940 = vmul.f32 %v5706, %v5897
    %v5941 = vmul.f32 %v5710, %v5893
    %v5942 = vmul.f32 %v5712, %v5897
    %v5943 = vmul.f32 %v5714, %v5893
    %v5944 = vmul.f32 %v5716, %v5897
    %v5945 = vmul.f32 %v5720, %v5893
    %v5946 = vmul.f32 %v5722, %v5897
    %v5947 = vmul.f32 %v5724, %v5893
    %v5948 = vmul.f32 %v5726, %v5897
    %v5949 = vmul.f32 %v5730, %v5893
    %v5950 = vmul.f32 %v5732, %v5897
    %v5951 = vmul.f32 %v5734, %v5893
    %v5952 = vmul.f32 %v5736, %v5897
    %v5954 = vlaneseq
    %v5955 = vshrl.u32 %v5954, 7
    %v5956 = vsub.s32 0, %v5955
    %v5957 = vrot.slane %v5920, %v5956
    %v5958 = vlaneseq
    %v5959 = vshrl.u32 %v5958, 7
    %v5960 = vsub.s32 1, %v5959
    %v5961 = vrot.slane %v5920, %v5960
    %v5964 = vadd.f32 %v5921, %v5957
    %v5965 = vadd.f32 %v5922, %v5961
    %v5966 = vadd.f32 %v5923, %v5957
    %v5967 = vadd.f32 %v5924, %v5961
    %v5968 = vadd.f32 %v5925, %v5957
    %v5969 = vadd.f32 %v5926, %v5961
    %v5970 = vadd.f32 %v5927, %v5957
    %v5971 = vadd.f32 %v5928, %v5961
    %v5972 = vadd.f32 %v5929, %v5957
    %v5973 = vadd.f32 %v5930, %v5961
    %v5974 = vadd.f32 %v5931, %v5957
    %v5975 = vadd.f32 %v5932, %v5961
    %v5976 = vadd.f32 %v5933, %v5957
    %v5977 = vadd.f32 %v5934, %v5961
    %v5978 = vadd.f32 %v5935, %v5957
    %v5979 = vadd.f32 %v5936, %v5961
    %v5980 = vadd.f32 %v5937, %v5957
    %v5981 = vadd.f32 %v5938, %v5961
    %v5982 = vadd.f32 %v5939, %v5957
    %v5983 = vadd.f32 %v5940, %v5961
    %v5984 = vadd.f32 %v5941, %v5957
    %v5985 = vadd.f32 %v5942, %v5961
    %v5986 = vadd.f32 %v5943, %v5957
    %v5987 = vadd.f32 %v5944, %v5961
    %v5988 = vadd.f32 %v5945, %v5957
    %v5989 = vadd.f32 %v5946, %v5961
    %v5990 = vadd.f32 %v5947, %v5957
    %v5991 = vadd.f32 %v5948, %v5961
    %v5992 = vadd.f32 %v5949, %v5957
    %v5993 = vadd.f32 %v5950, %v5961
    %v5994 = vadd.f32 %v5951, %v5957
    %v5995 = vadd.f32 %v5952, %v5961
    %v5996 = vmax.f32 %v5964, 0.0
    %v5997 = vmax.f32 %v5965, 0.0
    %v5998 = vmax.f32 %v5966, 0.0
    %v5999 = vmax.f32 %v5967, 0.0
    %v6000 = vmax.f32 %v5968, 0.0
    %v6001 = vmax.f32 %v5969, 0.0
    %v6002 = vmax.f32 %v5970, 0.0
    %v6003 = vmax.f32 %v5971, 0.0
    %v6004 = vmax.f32 %v5972, 0.0
    %v6005 = vmax.f32 %v5973, 0.0
    %v6006 = vmax.f32 %v5974, 0.0
    %v6007 = vmax.f32 %v5975, 0.0
    %v6008 = vmax.f32 %v5976, 0.0
    %v6009 = vmax.f32 %v5977, 0.0
    %v6010 = vmax.f32 %v5978, 0.0
    %v6011 = vmax.f32 %v5979, 0.0
    %v6012 = vmax.f32 %v5980, 0.0
    %v6013 = vmax.f32 %v5981, 0.0
    %v6014 = vmax.f32 %v5982, 0.0
    %v6015 = vmax.f32 %v5983, 0.0
    %v6016 = vmax.f32 %v5984, 0.0
    %v6017 = vmax.f32 %v5985, 0.0
    %v6018 = vmax.f32 %v5986, 0.0
    %v6019 = vmax.f32 %v5987, 0.0
    %v6020 = vmax.f32 %v5988, 0.0
    %v6021 = vmax.f32 %v5989, 0.0
    %v6022 = vmax.f32 %v5990, 0.0
    %v6023 = vmax.f32 %v5991, 0.0
    %v6024 = vmax.f32 %v5992, 0.0
    %v6025 = vmax.f32 %v5993, 0.0
    %v6026 = vmax.f32 %v5994, 0.0
    %v6027 = vmax.f32 %v5995, 0.0
    %v6028 = vld [vmem:[#allocation25] sm:$0xff]
    %v6029 = vld [vmem:[#allocation25 + $0x8] sm:$0xff]
    %v6030 = vld [vmem:[#allocation25 + $0x10] sm:$0xff]
    %v6031 = vld [vmem:[#allocation25 + $0x18] sm:$0xff]
    %v6032 = vld [vmem:[#allocation25 + $0x20] sm:$0xff]
    %v6033 = vld [vmem:[#allocation25 + $0x28] sm:$0xff]
    %v6034 = vld [vmem:[#allocation25 + $0x30] sm:$0xff]
    %v6035 = vld [vmem:[#allocation25 + $0x38] sm:$0xff]
    %v6036 = vld [vmem:[#allocation25 + $0x40] sm:$0xff]
    %v6037 = vld [vmem:[#allocation25 + $0x48] sm:$0xff]
    %v6038 = vld [vmem:[#allocation25 + $0x50] sm:$0xff]
    %v6039 = vld [vmem:[#allocation25 + $0x58] sm:$0xff]
    %v6040 = vld [vmem:[#allocation25 + $0x60] sm:$0xff]
    %v6041 = vld [vmem:[#allocation25 + $0x68] sm:$0xff]
    %v6042 = vld [vmem:[#allocation25 + $0x70] sm:$0xff]
    %v6043 = vld [vmem:[#allocation25 + $0x78] sm:$0xff]
    %v6044 = vld [vmem:[#allocation25 + $0x80] sm:$0xff]
    %v6045 = vld [vmem:[#allocation25 + $0x88] sm:$0xff]
    %v6046 = vld [vmem:[#allocation25 + $0x90] sm:$0xff]
    %v6047 = vld [vmem:[#allocation25 + $0x98] sm:$0xff]
    %v6048 = vld [vmem:[#allocation25 + $0xa0] sm:$0xff]
    %v6049 = vld [vmem:[#allocation25 + $0xa8] sm:$0xff]
    %v6050 = vld [vmem:[#allocation25 + $0xb0] sm:$0xff]
    %v6051 = vld [vmem:[#allocation25 + $0xb8] sm:$0xff]
    %v6052 = vld [vmem:[#allocation25 + $0xc0] sm:$0xff]
    %v6053 = vld [vmem:[#allocation25 + $0xc8] sm:$0xff]
    %v6054 = vld [vmem:[#allocation25 + $0xd0] sm:$0xff]
    %v6055 = vld [vmem:[#allocation25 + $0xd8] sm:$0xff]
    %v6056 = vld [vmem:[#allocation25 + $0xe0] sm:$0xff]
    %v6057 = vld [vmem:[#allocation25 + $0xe8] sm:$0xff]
    %v6058 = vld [vmem:[#allocation25 + $0xf0] sm:$0xff]
    %v6059 = vld [vmem:[#allocation25 + $0xf8] sm:$0xff]
    %v6060 = vpack.c.bf16 %v5998, %v5996
    %v6061 = vpack.c.bf16 %v5999, %v5997
    %v6062 = vpack.c.bf16 %v6002, %v6000
    %v6063 = vpack.c.bf16 %v6003, %v6001
    %v6064 = vpack.c.bf16 %v6006, %v6004
    %v6065 = vpack.c.bf16 %v6007, %v6005
    %v6066 = vpack.c.bf16 %v6010, %v6008
    %v6067 = vpack.c.bf16 %v6011, %v6009
    %v6068 = vpack.c.bf16 %v6014, %v6012
    %v6069 = vpack.c.bf16 %v6015, %v6013
    %v6070 = vpack.c.bf16 %v6018, %v6016
    %v6071 = vpack.c.bf16 %v6019, %v6017
    %v6072 = vpack.c.bf16 %v6022, %v6020
    %v6073 = vpack.c.bf16 %v6023, %v6021
    %v6074 = vpack.c.bf16 %v6026, %v6024
    %v6075 = vpack.c.bf16 %v6027, %v6025
    %v6108 = vunpack.c.l.b16 %v6028
    %v6109 = vunpack.c.h.b16 %v6028
    %v6110 = vunpack.c.l.b16 %v6029
    %v6111 = vunpack.c.h.b16 %v6029
    %v6112 = vunpack.c.l.b16 %v6030
    %v6113 = vunpack.c.h.b16 %v6030
    %v6114 = vunpack.c.l.b16 %v6031
    %v6115 = vunpack.c.h.b16 %v6031
    %v6116 = vunpack.c.l.b16 %v6032
    %v6117 = vunpack.c.h.b16 %v6032
    %v6118 = vunpack.c.l.b16 %v6033
    %v6119 = vunpack.c.h.b16 %v6033
    %v6120 = vunpack.c.l.b16 %v6034
    %v6121 = vunpack.c.h.b16 %v6034
    %v6122 = vunpack.c.l.b16 %v6035
    %v6123 = vunpack.c.h.b16 %v6035
    %v6124 = vunpack.c.l.b16 %v6036
    %v6125 = vunpack.c.h.b16 %v6036
    %v6126 = vunpack.c.l.b16 %v6037
    %v6127 = vunpack.c.h.b16 %v6037
    %v6128 = vunpack.c.l.b16 %v6038
    %v6129 = vunpack.c.h.b16 %v6038
    %v6130 = vunpack.c.l.b16 %v6039
    %v6131 = vunpack.c.h.b16 %v6039
    %v6132 = vunpack.c.l.b16 %v6040
    %v6133 = vunpack.c.h.b16 %v6040
    %v6134 = vunpack.c.l.b16 %v6041
    %v6135 = vunpack.c.h.b16 %v6041
    %v6136 = vunpack.c.l.b16 %v6042
    %v6137 = vunpack.c.h.b16 %v6042
    %v6138 = vunpack.c.l.b16 %v6043
    %v6139 = vunpack.c.h.b16 %v6043
    %v6140 = vunpack.c.l.b16 %v6044
    %v6141 = vunpack.c.h.b16 %v6044
    %v6142 = vunpack.c.l.b16 %v6045
    %v6143 = vunpack.c.h.b16 %v6045
    %v6144 = vunpack.c.l.b16 %v6046
    %v6145 = vunpack.c.h.b16 %v6046
    %v6146 = vunpack.c.l.b16 %v6047
    %v6147 = vunpack.c.h.b16 %v6047
    %v6148 = vunpack.c.l.b16 %v6048
    %v6149 = vunpack.c.h.b16 %v6048
    %v6150 = vunpack.c.l.b16 %v6049
    %v6151 = vunpack.c.h.b16 %v6049
    %v6152 = vunpack.c.l.b16 %v6050
    %v6153 = vunpack.c.h.b16 %v6050
    %v6154 = vunpack.c.l.b16 %v6051
    %v6155 = vunpack.c.h.b16 %v6051
    %v6156 = vunpack.c.l.b16 %v6052
    %v6157 = vunpack.c.h.b16 %v6052
    %v6158 = vunpack.c.l.b16 %v6053
    %v6159 = vunpack.c.h.b16 %v6053
    %v6160 = vunpack.c.l.b16 %v6054
    %v6161 = vunpack.c.h.b16 %v6054
    %v6162 = vunpack.c.l.b16 %v6055
    %v6163 = vunpack.c.h.b16 %v6055
    %v6164 = vunpack.c.l.b16 %v6056
    %v6165 = vunpack.c.h.b16 %v6056
    %v6166 = vunpack.c.l.b16 %v6057
    %v6167 = vunpack.c.h.b16 %v6057
    %v6168 = vunpack.c.l.b16 %v6058
    %v6169 = vunpack.c.h.b16 %v6058
    %v6170 = vunpack.c.l.b16 %v6059
    %v6171 = vunpack.c.h.b16 %v6059
    %v6172 = vpack.c.b16 %v6110, %v6108
    %v6173 = vpack.c.b16 %v6111, %v6109
    %v6174 = vpack.c.b16 %v6114, %v6112
    %v6175 = vpack.c.b16 %v6115, %v6113
    %v6176 = vpack.c.b16 %v6118, %v6116
    %v6177 = vpack.c.b16 %v6119, %v6117
    %v6178 = vpack.c.b16 %v6122, %v6120
    %v6179 = vpack.c.b16 %v6123, %v6121
    %v6180 = vpack.c.b16 %v6126, %v6124
    %v6181 = vpack.c.b16 %v6127, %v6125
    %v6182 = vpack.c.b16 %v6130, %v6128
    %v6183 = vpack.c.b16 %v6131, %v6129
    %v6184 = vpack.c.b16 %v6134, %v6132
    %v6185 = vpack.c.b16 %v6135, %v6133
    %v6186 = vpack.c.b16 %v6138, %v6136
    %v6187 = vpack.c.b16 %v6139, %v6137
    %v6188 = vpack.c.b16 %v6142, %v6140
    %v6189 = vpack.c.b16 %v6143, %v6141
    %v6190 = vpack.c.b16 %v6146, %v6144
    %v6191 = vpack.c.b16 %v6147, %v6145
    %v6192 = vpack.c.b16 %v6150, %v6148
    %v6193 = vpack.c.b16 %v6151, %v6149
    %v6194 = vpack.c.b16 %v6154, %v6152
    %v6195 = vpack.c.b16 %v6155, %v6153
    %v6196 = vpack.c.b16 %v6158, %v6156
    %v6197 = vpack.c.b16 %v6159, %v6157
    %v6198 = vpack.c.b16 %v6162, %v6160
    %v6199 = vpack.c.b16 %v6163, %v6161
    %v6200 = vpack.c.b16 %v6166, %v6164
    %v6201 = vpack.c.b16 %v6167, %v6165
    %v6202 = vpack.c.b16 %v6170, %v6168
    %v6203 = vpack.c.b16 %v6171, %v6169
    %6236 = vmatprep.subr.bf16.mxu0 %v6187
    %6237 = vmatpush1.bf16.msra.mxu0 %v6186
    %6238 = vmatprep.subr.bf16.mxu0 %v6185
    %6239 = vmatpush1.bf16.msra.mxu0 %v6184
    %6240 = vmatprep.subr.bf16.mxu0 %v6183
    %6241 = vmatpush1.bf16.msra.mxu0 %v6182
    %6242 = vmatprep.subr.bf16.mxu0 %v6181
    %6243 = vmatpush1.bf16.msra.mxu0 %v6180
    %6244 = vmatprep.subr.bf16.mxu0 %v6179
    %6245 = vmatpush1.bf16.msra.mxu0 %v6178
    %6246 = vmatprep.subr.bf16.mxu0 %v6177
    %6247 = vmatpush1.bf16.msra.mxu0 %v6176
    %6248 = vmatprep.subr.bf16.mxu0 %v6175
    %6249 = vmatpush1.bf16.msra.mxu0 %v6174
    %6250 = vmatprep.subr.bf16.mxu0 %v6173
    %6251 = vmatpush1.bf16.msra.mxu0 %v6172
    %6252 = vmatprep.subr.bf16.mxu0 %v6203
    %6253 = vmatpush2.bf16.msra.mxu0 %v6202
    %6254 = vmatprep.subr.bf16.mxu0 %v6201
    %6255 = vmatpush2.bf16.msra.mxu0 %v6200
    %6256 = vmatprep.subr.bf16.mxu0 %v6199
    %6257 = vmatpush2.bf16.msra.mxu0 %v6198
    %6258 = vmatprep.subr.bf16.mxu0 %v6197
    %6259 = vmatpush2.bf16.msra.mxu0 %v6196
    %6260 = vmatprep.subr.bf16.mxu0 %v6195
    %6261 = vmatpush2.bf16.msra.mxu0 %v6194
    %6262 = vmatprep.subr.bf16.mxu0 %v6193
    %6263 = vmatpush2.bf16.msra.mxu0 %v6192
    %6264 = vmatprep.subr.bf16.mxu0 %v6191
    %6265 = vmatpush2.bf16.msra.mxu0 %v6190
    %6266 = vmatprep.subr.bf16.mxu0 %v6189
    %6267 = vmatpush2.bf16.msra.mxu0 %v6188
    %6268 = vmatprep.mubr.bf16.mxu0 %v6061
    %6269 = vmatmul.mubr.bf16.gmra.mxu0 %v6060
    %v6270 = vpop.f32.mrf.mxu0
    %v6271 = vadd.f32 0.0, %v6270
    %v6272 = vpop.f32.mrf.mxu0
    %v6273 = vadd.f32 0.0, %v6272
    %v6274 = vpop.f32.mrf.mxu0
    %v6275 = vadd.f32 0.0, %v6274
    %v6276 = vpop.f32.mrf.mxu0
    %v6277 = vadd.f32 0.0, %v6276
    %6278 = vmatprep.mubr.bf16.mxu0 %v6063
    %6279 = vmatmul.mubr.bf16.gmra.mxu0 %v6062
    %v6280 = vpop.f32.mrf.mxu0
    %v6281 = vadd.f32 0.0, %v6280
    %v6282 = vpop.f32.mrf.mxu0
    %v6283 = vadd.f32 0.0, %v6282
    %v6284 = vpop.f32.mrf.mxu0
    %v6285 = vadd.f32 0.0, %v6284
    %v6286 = vpop.f32.mrf.mxu0
    %v6287 = vadd.f32 0.0, %v6286
    %6288 = vmatprep.mubr.bf16.mxu0 %v6065
    %6289 = vmatmul.mubr.bf16.gmra.mxu0 %v6064
    %v6290 = vpop.f32.mrf.mxu0
    %v6291 = vadd.f32 0.0, %v6290
    %v6292 = vpop.f32.mrf.mxu0
    %v6293 = vadd.f32 0.0, %v6292
    %v6294 = vpop.f32.mrf.mxu0
    %v6295 = vadd.f32 0.0, %v6294
    %v6296 = vpop.f32.mrf.mxu0
    %v6297 = vadd.f32 0.0, %v6296
    %6298 = vmatprep.mubr.bf16.mxu0 %v6067
    %6299 = vmatmul.mubr.bf16.gmra.mxu0 %v6066
    %v6300 = vpop.f32.mrf.mxu0
    %v6301 = vadd.f32 0.0, %v6300
    %v6302 = vpop.f32.mrf.mxu0
    %v6303 = vadd.f32 0.0, %v6302
    %v6304 = vpop.f32.mrf.mxu0
    %v6305 = vadd.f32 0.0, %v6304
    %v6306 = vpop.f32.mrf.mxu0
    %v6307 = vadd.f32 0.0, %v6306
    %6308 = vmatprep.mubr.bf16.mxu0 %v6069
    %6309 = vmatmul.mubr.bf16.gmra.mxu0 %v6068
    %v6310 = vpop.f32.mrf.mxu0
    %v6311 = vadd.f32 0.0, %v6310
    %v6312 = vpop.f32.mrf.mxu0
    %v6313 = vadd.f32 0.0, %v6312
    %v6314 = vpop.f32.mrf.mxu0
    %v6315 = vadd.f32 0.0, %v6314
    %v6316 = vpop.f32.mrf.mxu0
    %v6317 = vadd.f32 0.0, %v6316
    %6318 = vmatprep.mubr.bf16.mxu0 %v6071
    %6319 = vmatmul.mubr.bf16.gmra.mxu0 %v6070
    %v6320 = vpop.f32.mrf.mxu0
    %v6321 = vadd.f32 0.0, %v6320
    %v6322 = vpop.f32.mrf.mxu0
    %v6323 = vadd.f32 0.0, %v6322
    %v6324 = vpop.f32.mrf.mxu0
    %v6325 = vadd.f32 0.0, %v6324
    %v6326 = vpop.f32.mrf.mxu0
    %v6327 = vadd.f32 0.0, %v6326
    %6328 = vmatprep.mubr.bf16.mxu0 %v6073
    %6329 = vmatmul.mubr.bf16.gmra.mxu0 %v6072
    %v6330 = vpop.f32.mrf.mxu0
    %v6331 = vadd.f32 0.0, %v6330
    %v6332 = vpop.f32.mrf.mxu0
    %v6333 = vadd.f32 0.0, %v6332
    %v6334 = vpop.f32.mrf.mxu0
    %v6335 = vadd.f32 0.0, %v6334
    %v6336 = vpop.f32.mrf.mxu0
    %v6337 = vadd.f32 0.0, %v6336
    %6338 = vmatprep.mubr.bf16.mxu0 %v6075
    %6339 = vmatmul.mubr.bf16.gmra.mxu0 %v6074
    %v6340 = vpop.f32.mrf.mxu0
    %v6341 = vadd.f32 0.0, %v6340
    %v6342 = vpop.f32.mrf.mxu0
    %v6343 = vadd.f32 0.0, %v6342
    %v6344 = vpop.f32.mrf.mxu0
    %v6345 = vadd.f32 0.0, %v6344
    %v6346 = vpop.f32.mrf.mxu0
    %v6347 = vadd.f32 0.0, %v6346
    %6348 = vdwg.mxu0
    %v6349 = vld [vmem:[%s65] sm:$0x3]
    %v6350 = vld [vmem:[%s67] sm:$0x3]
    %v6351 = vadd.f32 %v6271, %v6275
    %v6352 = vadd.f32 %v6351, %v6281
    %v6353 = vadd.f32 %v6352, %v6285
    %v6354 = vadd.f32 %v6353, %v6291
    %v6355 = vadd.f32 %v6354, %v6295
    %v6356 = vadd.f32 %v6355, %v6301
    %v6357 = vadd.f32 %v6356, %v6305
    %v6358 = vadd.f32 %v6357, %v6311
    %v6359 = vadd.f32 %v6358, %v6315
    %v6360 = vadd.f32 %v6359, %v6321
    %v6361 = vadd.f32 %v6360, %v6325
    %v6362 = vadd.f32 %v6361, %v6331
    %v6363 = vadd.f32 %v6362, %v6335
    %v6364 = vadd.f32 %v6363, %v6341
    %v6365 = vadd.f32 %v6364, %v6345
    %v6366 = vrot.slane %v6365, 4
    %v6367 = vadd.f32 %v6365, %v6366
    %v6368 = vrot.slane %v6367, 2
    %v6369 = vadd.f32 %v6367, %v6368
    %v6370 = vrot.slane %v6369, 1
    %v6371 = vadd.f32 %v6369, %v6370
    %v6372 = vadd.f32 %v6273, %v6277
    %v6373 = vadd.f32 %v6372, %v6283
    %v6374 = vadd.f32 %v6373, %v6287
    %v6375 = vadd.f32 %v6374, %v6293
    %v6376 = vadd.f32 %v6375, %v6297
    %v6377 = vadd.f32 %v6376, %v6303
    %v6378 = vadd.f32 %v6377, %v6307
    %v6379 = vadd.f32 %v6378, %v6313
    %v6380 = vadd.f32 %v6379, %v6317
    %v6381 = vadd.f32 %v6380, %v6323
    %v6382 = vadd.f32 %v6381, %v6327
    %v6383 = vadd.f32 %v6382, %v6333
    %v6384 = vadd.f32 %v6383, %v6337
    %v6385 = vadd.f32 %v6384, %v6343
    %v6386 = vadd.f32 %v6385, %v6347
    %v6387 = vrot.slane %v6386, 4
    %v6388 = vadd.f32 %v6386, %v6387
    %v6389 = vrot.slane %v6388, 2
    %v6390 = vadd.f32 %v6388, %v6389
    %v6391 = vrot.slane %v6390, 1
    %v6392 = vadd.f32 %v6390, %v6391
    %v6393 = vmul.f32 %v6371, %v637
    %v6394 = vmul.f32 %v6392, %v637
    %v6395 = vmul.f32 %v6271, %v6271
    %v6396 = vmul.f32 %v6273, %v6273
    %v6397 = vmul.f32 %v6275, %v6275
    %v6398 = vmul.f32 %v6277, %v6277
    %v6399 = vmul.f32 %v6281, %v6281
    %v6400 = vmul.f32 %v6283, %v6283
    %v6401 = vmul.f32 %v6285, %v6285
    %v6402 = vmul.f32 %v6287, %v6287
    %v6403 = vmul.f32 %v6291, %v6291
    %v6404 = vmul.f32 %v6293, %v6293
    %v6405 = vmul.f32 %v6295, %v6295
    %v6406 = vmul.f32 %v6297, %v6297
    %v6407 = vmul.f32 %v6301, %v6301
    %v6408 = vmul.f32 %v6303, %v6303
    %v6409 = vmul.f32 %v6305, %v6305
    %v6410 = vmul.f32 %v6307, %v6307
    %v6411 = vmul.f32 %v6311, %v6311
    %v6412 = vmul.f32 %v6313, %v6313
    %v6413 = vmul.f32 %v6315, %v6315
    %v6414 = vmul.f32 %v6317, %v6317
    %v6415 = vmul.f32 %v6321, %v6321
    %v6416 = vmul.f32 %v6323, %v6323
    %v6417 = vmul.f32 %v6325, %v6325
    %v6418 = vmul.f32 %v6327, %v6327
    %v6419 = vmul.f32 %v6331, %v6331
    %v6420 = vmul.f32 %v6333, %v6333
    %v6421 = vmul.f32 %v6335, %v6335
    %v6422 = vmul.f32 %v6337, %v6337
    %v6423 = vmul.f32 %v6341, %v6341
    %v6424 = vmul.f32 %v6343, %v6343
    %v6425 = vmul.f32 %v6345, %v6345
    %v6426 = vmul.f32 %v6347, %v6347
    %v6427 = vadd.f32 %v6395, %v6397
    %v6428 = vadd.f32 %v6427, %v6399
    %v6429 = vadd.f32 %v6428, %v6401
    %v6430 = vadd.f32 %v6429, %v6403
    %v6431 = vadd.f32 %v6430, %v6405
    %v6432 = vadd.f32 %v6431, %v6407
    %v6433 = vadd.f32 %v6432, %v6409
    %v6434 = vadd.f32 %v6433, %v6411
    %v6435 = vadd.f32 %v6434, %v6413
    %v6436 = vadd.f32 %v6435, %v6415
    %v6437 = vadd.f32 %v6436, %v6417
    %v6438 = vadd.f32 %v6437, %v6419
    %v6439 = vadd.f32 %v6438, %v6421
    %v6440 = vadd.f32 %v6439, %v6423
    %v6441 = vadd.f32 %v6440, %v6425
    %v6442 = vrot.slane %v6441, 4
    %v6443 = vadd.f32 %v6441, %v6442
    %v6444 = vrot.slane %v6443, 2
    %v6445 = vadd.f32 %v6443, %v6444
    %v6446 = vrot.slane %v6445, 1
    %v6447 = vadd.f32 %v6445, %v6446
    %v6448 = vadd.f32 %v6396, %v6398
    %v6449 = vadd.f32 %v6448, %v6400
    %v6450 = vadd.f32 %v6449, %v6402
    %v6451 = vadd.f32 %v6450, %v6404
    %v6452 = vadd.f32 %v6451, %v6406
    %v6453 = vadd.f32 %v6452, %v6408
    %v6454 = vadd.f32 %v6453, %v6410
    %v6455 = vadd.f32 %v6454, %v6412
    %v6456 = vadd.f32 %v6455, %v6414
    %v6457 = vadd.f32 %v6456, %v6416
    %v6458 = vadd.f32 %v6457, %v6418
    %v6459 = vadd.f32 %v6458, %v6420
    %v6460 = vadd.f32 %v6459, %v6422
    %v6461 = vadd.f32 %v6460, %v6424
    %v6462 = vadd.f32 %v6461, %v6426
    %v6463 = vrot.slane %v6462, 4
    %v6464 = vadd.f32 %v6462, %v6463
    %v6465 = vrot.slane %v6464, 2
    %v6466 = vadd.f32 %v6464, %v6465
    %v6467 = vrot.slane %v6466, 1
    %v6468 = vadd.f32 %v6466, %v6467
    %v6469 = vmul.f32 %v6447, %v637
    %v6470 = vmul.f32 %v6468, %v637
    %v6471 = vmul.f32 %v6393, %v6393
    %v6472 = vmul.f32 %v6394, %v6394
    %v6473 = vsub.f32 %v6469, %v6471
    %v6474 = vsub.f32 %v6470, %v6472
    %v6475 = vmax.f32 %v6473, 0.0
    %v6476 = vmax.f32 %v6474, 0.0
    %v6477 = vadd.f32 %v6475, 0.001
    %v6478 = vadd.f32 %v6476, 0.001
    %v6479 = vrsqrt.pop %v6477
    %v6480 = vrsqrt.pop %v6478
    %v6483 = vcombine.low %v6479, %v6480
    %v6485 = vunpack.c.l.s4 1966171168
    %v6486 = vunpack.c.0.s8 %v6485
    %v6487 = vlaneseq
    %v6488 = vshrl.u32 %v6487, 7
    %v6489 = vsub.s32 %v6486, %v6488
    %v6490 = vrot.slane %v6483, %v6489
    %v6492 = vunpack.c.l.s4 1966171168
    %v6493 = vunpack.c.0.s8 %v6492
    %v6494 = vlaneseq
    %v6495 = vshrl.u32 %v6494, 7
    %v6496 = vsub.s32 %v6493, %v6495
    %v6497 = vrot.slane %v6490, %v6496
    %v6499 = vmul.f32 %v6349, %v6497
    %v6501 = vlaneseq
    %v6502 = vshrl.u32 %v6501, 7
    %v6503 = vsub.s32 0, %v6502
    %v6504 = vrot.slane %v6499, %v6503
    %v6505 = vlaneseq
    %v6506 = vshrl.u32 %v6505, 7
    %v6507 = vsub.s32 1, %v6506
    %v6508 = vrot.slane %v6499, %v6507
    %v6511 = vmul.f32 %v6393, %v6504
    %v6512 = vmul.f32 %v6394, %v6508
    %v6515 = vcombine.low %v6511, %v6512
    %v6517 = vunpack.c.l.s4 1966171168
    %v6518 = vunpack.c.0.s8 %v6517
    %v6519 = vlaneseq
    %v6520 = vshrl.u32 %v6519, 7
    %v6521 = vsub.s32 %v6518, %v6520
    %v6522 = vrot.slane %v6515, %v6521
    %v6524 = vunpack.c.l.s4 1966171168
    %v6525 = vunpack.c.0.s8 %v6524
    %v6526 = vlaneseq
    %v6527 = vshrl.u32 %v6526, 7
    %v6528 = vsub.s32 %v6525, %v6527
    %v6529 = vrot.slane %v6522, %v6528
    %v6531 = vsub.f32 %v6350, %v6529
    %v6532 = vmul.f32 %v6271, %v6504
    %v6533 = vmul.f32 %v6273, %v6508
    %v6534 = vmul.f32 %v6275, %v6504
    %v6535 = vmul.f32 %v6277, %v6508
    %v6536 = vmul.f32 %v6281, %v6504
    %v6537 = vmul.f32 %v6283, %v6508
    %v6538 = vmul.f32 %v6285, %v6504
    %v6539 = vmul.f32 %v6287, %v6508
    %v6540 = vmul.f32 %v6291, %v6504
    %v6541 = vmul.f32 %v6293, %v6508
    %v6542 = vmul.f32 %v6295, %v6504
    %v6543 = vmul.f32 %v6297, %v6508
    %v6544 = vmul.f32 %v6301, %v6504
    %v6545 = vmul.f32 %v6303, %v6508
    %v6546 = vmul.f32 %v6305, %v6504
    %v6547 = vmul.f32 %v6307, %v6508
    %v6548 = vmul.f32 %v6311, %v6504
    %v6549 = vmul.f32 %v6313, %v6508
    %v6550 = vmul.f32 %v6315, %v6504
    %v6551 = vmul.f32 %v6317, %v6508
    %v6552 = vmul.f32 %v6321, %v6504
    %v6553 = vmul.f32 %v6323, %v6508
    %v6554 = vmul.f32 %v6325, %v6504
    %v6555 = vmul.f32 %v6327, %v6508
    %v6556 = vmul.f32 %v6331, %v6504
    %v6557 = vmul.f32 %v6333, %v6508
    %v6558 = vmul.f32 %v6335, %v6504
    %v6559 = vmul.f32 %v6337, %v6508
    %v6560 = vmul.f32 %v6341, %v6504
    %v6561 = vmul.f32 %v6343, %v6508
    %v6562 = vmul.f32 %v6345, %v6504
    %v6563 = vmul.f32 %v6347, %v6508
    %v6565 = vlaneseq
    %v6566 = vshrl.u32 %v6565, 7
    %v6567 = vsub.s32 0, %v6566
    %v6568 = vrot.slane %v6531, %v6567
    %v6569 = vlaneseq
    %v6570 = vshrl.u32 %v6569, 7
    %v6571 = vsub.s32 1, %v6570
    %v6572 = vrot.slane %v6531, %v6571
    %v6575 = vadd.f32 %v6532, %v6568
    %v6576 = vadd.f32 %v6533, %v6572
    %v6577 = vadd.f32 %v6534, %v6568
    %v6578 = vadd.f32 %v6535, %v6572
    %v6579 = vadd.f32 %v6536, %v6568
    %v6580 = vadd.f32 %v6537, %v6572
    %v6581 = vadd.f32 %v6538, %v6568
    %v6582 = vadd.f32 %v6539, %v6572
    %v6583 = vadd.f32 %v6540, %v6568
    %v6584 = vadd.f32 %v6541, %v6572
    %v6585 = vadd.f32 %v6542, %v6568
    %v6586 = vadd.f32 %v6543, %v6572
    %v6587 = vadd.f32 %v6544, %v6568
    %v6588 = vadd.f32 %v6545, %v6572
    %v6589 = vadd.f32 %v6546, %v6568
    %v6590 = vadd.f32 %v6547, %v6572
    %v6591 = vadd.f32 %v6548, %v6568
    %v6592 = vadd.f32 %v6549, %v6572
    %v6593 = vadd.f32 %v6550, %v6568
    %v6594 = vadd.f32 %v6551, %v6572
    %v6595 = vadd.f32 %v6552, %v6568
    %v6596 = vadd.f32 %v6553, %v6572
    %v6597 = vadd.f32 %v6554, %v6568
    %v6598 = vadd.f32 %v6555, %v6572
    %v6599 = vadd.f32 %v6556, %v6568
    %v6600 = vadd.f32 %v6557, %v6572
    %v6601 = vadd.f32 %v6558, %v6568
    %v6602 = vadd.f32 %v6559, %v6572
    %v6603 = vadd.f32 %v6560, %v6568
    %v6604 = vadd.f32 %v6561, %v6572
    %v6605 = vadd.f32 %v6562, %v6568
    %v6606 = vadd.f32 %v6563, %v6572
    %v6607 = vmax.f32 %v6575, 0.0
    %v6608 = vmax.f32 %v6576, 0.0
    %v6609 = vmax.f32 %v6577, 0.0
    %v6610 = vmax.f32 %v6578, 0.0
    %v6611 = vmax.f32 %v6579, 0.0
    %v6612 = vmax.f32 %v6580, 0.0
    %v6613 = vmax.f32 %v6581, 0.0
    %v6614 = vmax.f32 %v6582, 0.0
    %v6615 = vmax.f32 %v6583, 0.0
    %v6616 = vmax.f32 %v6584, 0.0
    %v6617 = vmax.f32 %v6585, 0.0
    %v6618 = vmax.f32 %v6586, 0.0
    %v6619 = vmax.f32 %v6587, 0.0
    %v6620 = vmax.f32 %v6588, 0.0
    %v6621 = vmax.f32 %v6589, 0.0
    %v6622 = vmax.f32 %v6590, 0.0
    %v6623 = vmax.f32 %v6591, 0.0
    %v6624 = vmax.f32 %v6592, 0.0
    %v6625 = vmax.f32 %v6593, 0.0
    %v6626 = vmax.f32 %v6594, 0.0
    %v6627 = vmax.f32 %v6595, 0.0
    %v6628 = vmax.f32 %v6596, 0.0
    %v6629 = vmax.f32 %v6597, 0.0
    %v6630 = vmax.f32 %v6598, 0.0
    %v6631 = vmax.f32 %v6599, 0.0
    %v6632 = vmax.f32 %v6600, 0.0
    %v6633 = vmax.f32 %v6601, 0.0
    %v6634 = vmax.f32 %v6602, 0.0
    %v6635 = vmax.f32 %v6603, 0.0
    %v6636 = vmax.f32 %v6604, 0.0
    %v6637 = vmax.f32 %v6605, 0.0
    %v6638 = vmax.f32 %v6606, 0.0
    %v6639 = vld [vmem:[#allocation26] sm:$0xf]
    %v6640 = vld [vmem:[#allocation26 + $0x4] sm:$0xf]
    %v6641 = vld [vmem:[#allocation26 + $0x8] sm:$0xf]
    %v6642 = vld [vmem:[#allocation26 + $0xc] sm:$0xf]
    %v6643 = vld [vmem:[#allocation26 + $0x10] sm:$0xf]
    %v6644 = vld [vmem:[#allocation26 + $0x14] sm:$0xf]
    %v6645 = vld [vmem:[#allocation26 + $0x18] sm:$0xf]
    %v6646 = vld [vmem:[#allocation26 + $0x1c] sm:$0xf]
    %v6647 = vld [vmem:[#allocation26 + $0x20] sm:$0xf]
    %v6648 = vld [vmem:[#allocation26 + $0x24] sm:$0xf]
    %v6649 = vld [vmem:[#allocation26 + $0x28] sm:$0xf]
    %v6650 = vld [vmem:[#allocation26 + $0x2c] sm:$0xf]
    %v6651 = vld [vmem:[#allocation26 + $0x30] sm:$0xf]
    %v6652 = vld [vmem:[#allocation26 + $0x34] sm:$0xf]
    %v6653 = vld [vmem:[#allocation26 + $0x38] sm:$0xf]
    %v6654 = vld [vmem:[#allocation26 + $0x3c] sm:$0xf]
    %v6655 = vld [vmem:[#allocation26 + $0x40] sm:$0xf]
    %v6656 = vld [vmem:[#allocation26 + $0x44] sm:$0xf]
    %v6657 = vld [vmem:[#allocation26 + $0x48] sm:$0xf]
    %v6658 = vld [vmem:[#allocation26 + $0x4c] sm:$0xf]
    %v6659 = vld [vmem:[#allocation26 + $0x50] sm:$0xf]
    %v6660 = vld [vmem:[#allocation26 + $0x54] sm:$0xf]
    %v6661 = vld [vmem:[#allocation26 + $0x58] sm:$0xf]
    %v6662 = vld [vmem:[#allocation26 + $0x5c] sm:$0xf]
    %v6663 = vld [vmem:[#allocation26 + $0x60] sm:$0xf]
    %v6664 = vld [vmem:[#allocation26 + $0x64] sm:$0xf]
    %v6665 = vld [vmem:[#allocation26 + $0x68] sm:$0xf]
    %v6666 = vld [vmem:[#allocation26 + $0x6c] sm:$0xf]
    %v6667 = vld [vmem:[#allocation26 + $0x70] sm:$0xf]
    %v6668 = vld [vmem:[#allocation26 + $0x74] sm:$0xf]
    %v6669 = vld [vmem:[#allocation26 + $0x78] sm:$0xf]
    %v6670 = vld [vmem:[#allocation26 + $0x7c] sm:$0xf]
    %v6671 = vpack.c.bf16 %v6609, %v6607
    %v6672 = vpack.c.bf16 %v6610, %v6608
    %v6673 = vpack.c.bf16 %v6613, %v6611
    %v6674 = vpack.c.bf16 %v6614, %v6612
    %v6675 = vpack.c.bf16 %v6617, %v6615
    %v6676 = vpack.c.bf16 %v6618, %v6616
    %v6677 = vpack.c.bf16 %v6621, %v6619
    %v6678 = vpack.c.bf16 %v6622, %v6620
    %v6679 = vpack.c.bf16 %v6625, %v6623
    %v6680 = vpack.c.bf16 %v6626, %v6624
    %v6681 = vpack.c.bf16 %v6629, %v6627
    %v6682 = vpack.c.bf16 %v6630, %v6628
    %v6683 = vpack.c.bf16 %v6633, %v6631
    %v6684 = vpack.c.bf16 %v6634, %v6632
    %v6685 = vpack.c.bf16 %v6637, %v6635
    %v6686 = vpack.c.bf16 %v6638, %v6636
    %v6687 = vld [vmem:[%s71] sm:$0x1]
    %v6689 = vlaneseq
    %v6690 = vshrl.u32 %v6689, 7
    %v6691 = vsub.s32 0, %v6690
    %v6692 = vrot.slane %v6687, %v6691
    %v6726 = vunpack.c.l.b16 %v6639
    %v6727 = vunpack.c.l.b16 %v6640
    %v6728 = vunpack.c.l.b16 %v6641
    %v6729 = vunpack.c.l.b16 %v6642
    %v6730 = vunpack.c.l.b16 %v6643
    %v6731 = vunpack.c.l.b16 %v6644
    %v6732 = vunpack.c.l.b16 %v6645
    %v6733 = vunpack.c.l.b16 %v6646
    %v6734 = vunpack.c.l.b16 %v6647
    %v6735 = vunpack.c.l.b16 %v6648
    %v6736 = vunpack.c.l.b16 %v6649
    %v6737 = vunpack.c.l.b16 %v6650
    %v6738 = vunpack.c.l.b16 %v6651
    %v6739 = vunpack.c.l.b16 %v6652
    %v6740 = vunpack.c.l.b16 %v6653
    %v6741 = vunpack.c.l.b16 %v6654
    %v6742 = vunpack.c.l.b16 %v6655
    %v6743 = vunpack.c.l.b16 %v6656
    %v6744 = vunpack.c.l.b16 %v6657
    %v6745 = vunpack.c.l.b16 %v6658
    %v6746 = vunpack.c.l.b16 %v6659
    %v6747 = vunpack.c.l.b16 %v6660
    %v6748 = vunpack.c.l.b16 %v6661
    %v6749 = vunpack.c.l.b16 %v6662
    %v6750 = vunpack.c.l.b16 %v6663
    %v6751 = vunpack.c.l.b16 %v6664
    %v6752 = vunpack.c.l.b16 %v6665
    %v6753 = vunpack.c.l.b16 %v6666
    %v6754 = vunpack.c.l.b16 %v6667
    %v6755 = vunpack.c.l.b16 %v6668
    %v6756 = vunpack.c.l.b16 %v6669
    %v6757 = vunpack.c.l.b16 %v6670
    %v6758 = vpack.c.b16 %v6727, %v6726
    %v6759 = vpack.c.b16 %v6729, %v6728
    %v6760 = vpack.c.b16 %v6731, %v6730
    %v6761 = vpack.c.b16 %v6733, %v6732
    %v6762 = vpack.c.b16 %v6735, %v6734
    %v6763 = vpack.c.b16 %v6737, %v6736
    %v6764 = vpack.c.b16 %v6739, %v6738
    %v6765 = vpack.c.b16 %v6741, %v6740
    %v6766 = vpack.c.b16 %v6743, %v6742
    %v6767 = vpack.c.b16 %v6745, %v6744
    %v6768 = vpack.c.b16 %v6747, %v6746
    %v6769 = vpack.c.b16 %v6749, %v6748
    %v6770 = vpack.c.b16 %v6751, %v6750
    %v6771 = vpack.c.b16 %v6753, %v6752
    %v6772 = vpack.c.b16 %v6755, %v6754
    %v6773 = vpack.c.b16 %v6757, %v6756
    %6790 = vmatprep.subr.bf16.mxu0 0
    %6791 = vmatpush1.bf16.msra.mxu0 %v6765
    %6792 = vmatprep.subr.bf16.mxu0 0
    %6793 = vmatpush1.bf16.msra.mxu0 %v6764
    %6794 = vmatprep.subr.bf16.mxu0 0
    %6795 = vmatpush1.bf16.msra.mxu0 %v6763
    %6796 = vmatprep.subr.bf16.mxu0 0
    %6797 = vmatpush1.bf16.msra.mxu0 %v6762
    %6798 = vmatprep.subr.bf16.mxu0 0
    %6799 = vmatpush1.bf16.msra.mxu0 %v6761
    %6800 = vmatprep.subr.bf16.mxu0 0
    %6801 = vmatpush1.bf16.msra.mxu0 %v6760
    %6802 = vmatprep.subr.bf16.mxu0 0
    %6803 = vmatpush1.bf16.msra.mxu0 %v6759
    %6804 = vmatprep.subr.bf16.mxu0 0
    %6805 = vmatpush1.bf16.msra.mxu0 %v6758
    %6806 = vmatprep.subr.bf16.mxu0 0
    %6807 = vmatpush2.bf16.msra.mxu0 %v6773
    %6808 = vmatprep.subr.bf16.mxu0 0
    %6809 = vmatpush2.bf16.msra.mxu0 %v6772
    %6810 = vmatprep.subr.bf16.mxu0 0
    %6811 = vmatpush2.bf16.msra.mxu0 %v6771
    %6812 = vmatprep.subr.bf16.mxu0 0
    %6813 = vmatpush2.bf16.msra.mxu0 %v6770
    %6814 = vmatprep.subr.bf16.mxu0 0
    %6815 = vmatpush2.bf16.msra.mxu0 %v6769
    %6816 = vmatprep.subr.bf16.mxu0 0
    %6817 = vmatpush2.bf16.msra.mxu0 %v6768
    %6818 = vmatprep.subr.bf16.mxu0 0
    %6819 = vmatpush2.bf16.msra.mxu0 %v6767
    %6820 = vmatprep.subr.bf16.mxu0 0
    %6821 = vmatpush2.bf16.msra.mxu0 %v6766
    %6822 = vmatprep.mubr.bf16.mxu0 %v6672
    %6823 = vmatmul.mubr.bf16.gmra.mxu0 %v6671
    %v6824 = vpop.f32.mrf.mxu0
    %v6825 = vadd.f32 %v6692, %v6824
    %v6826 = vpop.f32.mrf.mxu0
    %v6827 = vpop.f32.mrf.mxu0
    %v6828 = vadd.f32 %v6692, %v6827
    %v6829 = vpop.f32.mrf.mxu0
    %6830 = vmatprep.mubr.bf16.mxu0 %v6674
    %6831 = vmatmul.mubr.bf16.gmra.mxu0 %v6673
    %v6832 = vpop.f32.mrf.mxu0
    %v6833 = vadd.f32 %v6692, %v6832
    %v6834 = vpop.f32.mrf.mxu0
    %v6835 = vpop.f32.mrf.mxu0
    %v6836 = vadd.f32 %v6692, %v6835
    %v6837 = vpop.f32.mrf.mxu0
    %6838 = vmatprep.mubr.bf16.mxu0 %v6676
    %6839 = vmatmul.mubr.bf16.gmra.mxu0 %v6675
    %v6840 = vpop.f32.mrf.mxu0
    %v6841 = vadd.f32 %v6692, %v6840
    %v6842 = vpop.f32.mrf.mxu0
    %v6843 = vpop.f32.mrf.mxu0
    %v6844 = vadd.f32 %v6692, %v6843
    %v6845 = vpop.f32.mrf.mxu0
    %6846 = vmatprep.mubr.bf16.mxu0 %v6678
    %6847 = vmatmul.mubr.bf16.gmra.mxu0 %v6677
    %v6848 = vpop.f32.mrf.mxu0
    %v6849 = vadd.f32 %v6692, %v6848
    %v6850 = vpop.f32.mrf.mxu0
    %v6851 = vpop.f32.mrf.mxu0
    %v6852 = vadd.f32 %v6692, %v6851
    %v6853 = vpop.f32.mrf.mxu0
    %6854 = vmatprep.mubr.bf16.mxu0 %v6680
    %6855 = vmatmul.mubr.bf16.gmra.mxu0 %v6679
    %v6856 = vpop.f32.mrf.mxu0
    %v6857 = vadd.f32 %v6692, %v6856
    %v6858 = vpop.f32.mrf.mxu0
    %v6859 = vpop.f32.mrf.mxu0
    %v6860 = vadd.f32 %v6692, %v6859
    %v6861 = vpop.f32.mrf.mxu0
    %6862 = vmatprep.mubr.bf16.mxu0 %v6682
    %6863 = vmatmul.mubr.bf16.gmra.mxu0 %v6681
    %v6864 = vpop.f32.mrf.mxu0
    %v6865 = vadd.f32 %v6692, %v6864
    %v6866 = vpop.f32.mrf.mxu0
    %v6867 = vpop.f32.mrf.mxu0
    %v6868 = vadd.f32 %v6692, %v6867
    %v6869 = vpop.f32.mrf.mxu0
    %6870 = vmatprep.mubr.bf16.mxu0 %v6684
    %6871 = vmatmul.mubr.bf16.gmra.mxu0 %v6683
    %v6872 = vpop.f32.mrf.mxu0
    %v6873 = vadd.f32 %v6692, %v6872
    %v6874 = vpop.f32.mrf.mxu0
    %v6875 = vpop.f32.mrf.mxu0
    %v6876 = vadd.f32 %v6692, %v6875
    %v6877 = vpop.f32.mrf.mxu0
    %6878 = vmatprep.mubr.bf16.mxu0 %v6686
    %6879 = vmatmul.mubr.bf16.gmra.mxu0 %v6685
    %v6880 = vpop.f32.mrf.mxu0
    %v6881 = vadd.f32 %v6692, %v6880
    %v6882 = vpop.f32.mrf.mxu0
    %v6883 = vpop.f32.mrf.mxu0
    %v6884 = vadd.f32 %v6692, %v6883
    %v6885 = vpop.f32.mrf.mxu0
    %6886 = vdwg.mxu0
    %6887 = vst [vmem:[#allocation28] sm:$0xff] %v6825
    %6888 = vst [vmem:[#allocation28 + $0x8] sm:$0xff] %v6828
    %6889 = vst [vmem:[#allocation28 + $0x10] sm:$0xff] %v6833
    %6890 = vst [vmem:[#allocation28 + $0x18] sm:$0xff] %v6836
    %6891 = vst [vmem:[#allocation28 + $0x20] sm:$0xff] %v6841
    %6892 = vst [vmem:[#allocation28 + $0x28] sm:$0xff] %v6844
    %6893 = vst [vmem:[#allocation28 + $0x30] sm:$0xff] %v6849
    %6894 = vst [vmem:[#allocation28 + $0x38] sm:$0xff] %v6852
    %6895 = vst [vmem:[#allocation28 + $0x40] sm:$0xff] %v6857
    %6896 = vst [vmem:[#allocation28 + $0x48] sm:$0xff] %v6860
    %6897 = vst [vmem:[#allocation28 + $0x50] sm:$0xff] %v6865
    %6898 = vst [vmem:[#allocation28 + $0x58] sm:$0xff] %v6868
    %6899 = vst [vmem:[#allocation28 + $0x60] sm:$0xff] %v6873
    %6900 = vst [vmem:[#allocation28 + $0x68] sm:$0xff] %v6876
    %6901 = vst [vmem:[#allocation28 + $0x70] sm:$0xff] %v6881
    %6902 = vst [vmem:[#allocation28 + $0x78] sm:$0xff] %v6884
    // Predicated region
    $region210: #{aenet_forward.1} parent=1 // pred_check
      _
    $region211: #{aenet_forward.1} parent=1 // pred_check_branch
      %6904 = sbr.rel (0) target = $region213
    $region212: #{aenet_forward.1} parent=1 // pred_region
      %s6906 = ssub.s32 2048, 2048
      %6907 = vsyncadd [#allocation4], %s6906
      %s6908 = sshll.u32 [#allocation28], 4
      %s6909 = int_to_ptr.vmem [resolvable:$true] %s6908
      %6914 = dma.vmem_to_hbm [thread:$0]  %s6909, 2048, %s73, [#allocation4], 128, 128, 8
    $region213: #{aenet_forward.1} parent=1 // pred_fallthru
      _
    // Predicated region
    $region214: #{aenet_forward.1} parent=1 // pred_check
      _
    $region215: #{aenet_forward.1} parent=1 // pred_check_branch
      %6916 = sbr.rel (0) target = $region217
    $region216: #{aenet_forward.1} parent=1 // pred_region
      _
    $region217: #{aenet_forward.1} parent=1 // pred_fallthru
      _
    // Predicated region
    $region218: #{aenet_forward.1} parent=1 // pred_check
      _
    $region219: #{aenet_forward.1} parent=1 // pred_check_branch
      %6918 = sbr.rel (0) target = $region221
    $region220: #{aenet_forward.1} parent=1 // pred_region
      %6919 = dma.done [#allocation4], 2048
    $region221: #{aenet_forward.1} parent=1 // pred_fallthru
      _
    // Predicated region
    $region222: #{aenet_forward.1} parent=1 // pred_check
      _
    $region223: #{aenet_forward.1} parent=1 // pred_check_branch
      %6921 = sbr.rel (0) target = $region225
    $region224: #{aenet_forward.1} parent=1 // pred_region
      _
    $region225: #{aenet_forward.1} parent=1 // pred_fallthru
      _
    %6922 = vsyncpa [#allocation3], 1
    %6923 = vsyncpa [#allocation6], 1
    %6924 = vsyncpa [#allocation9], 1
    %6925 = vsyncpa [#allocation12], 1
    %6926 = vsyncpa [#allocation15], 1
    %6927 = vsyncpa [#allocation18], 1
    %6928 = vsyncpa [#allocation21], 1
    %6929 = vsyncpa [#allocation24], 1
    %6930 = vsyncpa [#allocation27], 1
    %6931 = vsyncpa [#allocation4], 1

</llo_original>
